<compile_context>
chip_gen: v5e
topology: v5e:2x2
jax: 0.10.0
libtpu: 0.0.40
codegen_flags: <defaults>
</compile_context>

<pallas_src>
import math
from functools import partial

import jax
import jax.numpy as jnp
from jax.experimental import pallas as pl
from jax.experimental.pallas import tpu as pltpu

_VMEM_LIMIT = 32 * 1024 * 1024  # sized for v7x's smaller VMEM as well


def _cparams(*sem):
    return pltpu.CompilerParams(dimension_semantics=sem,
                                vmem_limit_bytes=_VMEM_LIMIT)


def _round_up(x, m):
    return ((x + m - 1) // m) * m


def _row_tiles(M, target=256):
    tm = _round_up(M, 8) if M <= target else target
    return tm, _round_up(M, tm)


def _pad_rows(x, Mp):
    M = x.shape[0]
    if Mp == M:
        return x
    return jnp.pad(x, ((0, Mp - M),) + ((0, 0),) * (x.ndim - 1))


# ----------------------------------------------------------------------------
# Pallas kernels
# ----------------------------------------------------------------------------

def _ln(x, g, b):
    mu = jnp.mean(x, axis=-1, keepdims=True)
    var = jnp.mean((x - mu) ** 2, axis=-1, keepdims=True)
    return (x - mu) * jax.lax.rsqrt(var + 1e-5) * g + b


def _ln_inproj_kernel(x_ref, g_ref, b_ref, w_ref, xn_ref, xp_ref):
    # LayerNorm fused with the (block-diagonal, chunk-shared) in_proj matmul.
    xn = _ln(x_ref[...], g_ref[...], b_ref[...])
    xn_ref[...] = xn
    xp_ref[...] = jnp.dot(xn.astype(jnp.bfloat16), w_ref[...],
                          preferred_element_type=jnp.float32)


def _matmul_kernel(x_ref, w_ref, o_ref):
    # bias-free matmul (bf16 operands, f32 accumulate)
    o_ref[...] = jnp.dot(x_ref[...].astype(jnp.bfloat16), w_ref[...],
                         preferred_element_type=jnp.float32)


def _ln_matmul_kernel(x_ref, g_ref, b_ref, w_ref, o_ref):
    # out_norm LayerNorm fused with out_proj (no bias)
    xn = _ln(x_ref[...], g_ref[...], b_ref[...])
    o_ref[...] = jnp.dot(xn.astype(jnp.bfloat16), w_ref[...],
                         preferred_element_type=jnp.float32)


def _skip_ln_proj_kernel(s_ref, y_ref, xn_ref, g_ref, b_ref, w_ref, bias_ref,
                         o_ref):
    # skip-scale add + final LayerNorm + output projection (with bias), fused.
    t = y_ref[...] + s_ref[0] * xn_ref[...]
    tn = _ln(t, g_ref[...], b_ref[...])
    o_ref[...] = (jnp.dot(tn.astype(jnp.bfloat16), w_ref[...],
                          preferred_element_type=jnp.float32) + bias_ref[...])


def _dwconv3_silu_kernel(x_ref, w_ref, b_ref, o_ref, *, H, W, C):
    # Depthwise 3x3 conv (padding=1) fused with SiLU, on an (H, W*C)
    # lane-flattened layout so the output store is lane-dense.
    xv = x_ref[...]                                   # (H+2, (W+2)*C)
    acc = jnp.zeros((H, W * C), jnp.float32)
    for ki in range(3):
        for kj in range(3):
            tap = w_ref[ki * 3 + kj:ki * 3 + kj + 1, :]      # (1, W*C)
            acc = acc + xv[ki:ki + H, kj * C:(kj + W) * C] * tap
    acc = acc + b_ref[...]
    o_ref[...] = acc * jax.nn.sigmoid(acc)


def _softplus(x):
    return jnp.where(x > 20.0, x, jnp.log1p(jnp.exp(jnp.minimum(x, 20.0))))


def _scan_kernel(u_ref, dt_ref, bx_ref, cx_ref, A_ref, Ds_ref, dtb_ref, o_ref,
                 h_ref, *, TC):
    # Lane-dense selective scan.
    # u/dt/o: (LB, GD), bx/cx: (LB, N, GD) [bf16], A: (N, GD), Ds/dtb: (1, GD)
    # State h: (N, GD) VMEM scratch carried across L-blocks.
    @pl.when(pl.program_id(1) == 0)
    def _init():
        h_ref[...] = jnp.zeros_like(h_ref)

    A = A_ref[...]
    Ds = Ds_ref[...]
    dtb = dtb_ref[...]
    h = h_ref[...]
    LB = u_ref.shape[0]

    for c0 in range(0, LB, TC):
        u_c = u_ref[c0:c0 + TC, :]                              # (TC, GD)
        dt_c = dt_ref[c0:c0 + TC, :]                            # (TC, GD)
        bx_c = bx_ref[c0:c0 + TC, :, :].astype(jnp.float32)     # (TC, N, GD)
        cx_c = cx_ref[c0:c0 + TC, :, :].astype(jnp.float32)     # (TC, N, GD)
        # hoisted, vectorized non-recurrent math
        dt_sp = _softplus(dt_c + dtb)                           # (TC, GD)
        dA = jnp.exp(dt_sp[:, None, :] * A[None, :, :])         # (TC, N, GD)
        inp = (dt_sp * u_c)[:, None, :] * bx_c                  # (TC, N, GD)
        y_skip = Ds * u_c                                       # (TC, GD)
        rows = []
        for t in range(TC):                                     # unrolled
            h = dA[t] * h + inp[t]
            rows.append(jnp.sum(h * cx_c[t], axis=0, keepdims=True))
        o_ref[c0:c0 + TC, :] = jnp.concatenate(rows, axis=0) + y_skip

    h_ref[...] = h


# ----------------------------------------------------------------------------
# pallas_call wrappers
# ----------------------------------------------------------------------------

def ln_inproj(x2d, gamma, beta, w_bd):
    M, C = x2d.shape
    Dout = w_bd.shape[1]
    tm, Mp = _row_tiles(M)
    xn, xp = pl.pallas_call(
        _ln_inproj_kernel,
        out_shape=(jax.ShapeDtypeStruct((Mp, C), jnp.float32),
                   jax.ShapeDtypeStruct((Mp, Dout), jnp.float32)),
        grid=(Mp // tm,),
        in_specs=[pl.BlockSpec((tm, C), lambda i: (i, 0)),
                  pl.BlockSpec((1, C), lambda i: (0, 0)),
                  pl.BlockSpec((1, C), lambda i: (0, 0)),
                  pl.BlockSpec((C, Dout), lambda i: (0, 0))],
        out_specs=(pl.BlockSpec((tm, C), lambda i: (i, 0)),
                   pl.BlockSpec((tm, Dout), lambda i: (i, 0))),
        compiler_params=_cparams("parallel"),
    )(_pad_rows(x2d, Mp), gamma.reshape(1, C), beta.reshape(1, C),
      w_bd.astype(jnp.bfloat16))
    return xn[:M], xp[:M]


def matmul(x2d, w):
    M, Din = x2d.shape
    Dout = w.shape[1]
    tm, Mp = _row_tiles(M)
    out = pl.pallas_call(
        _matmul_kernel,
        out_shape=jax.ShapeDtypeStruct((Mp, Dout), jnp.float32),
        grid=(Mp // tm,),
        in_specs=[pl.BlockSpec((tm, Din), lambda i: (i, 0)),
                  pl.BlockSpec((Din, Dout), lambda i: (0, 0))],
        out_specs=pl.BlockSpec((tm, Dout), lambda i: (i, 0)),
        compiler_params=_cparams("parallel"),
    )(_pad_rows(x2d, Mp), w.astype(jnp.bfloat16))
    return out[:M]


def ln_matmul(x2d, gamma, beta, w):
    M, C = x2d.shape
    Dout = w.shape[1]
    tm, Mp = _row_tiles(M)
    out = pl.pallas_call(
        _ln_matmul_kernel,
        out_shape=jax.ShapeDtypeStruct((Mp, Dout), jnp.float32),
        grid=(Mp // tm,),
        in_specs=[pl.BlockSpec((tm, C), lambda i: (i, 0)),
                  pl.BlockSpec((1, C), lambda i: (0, 0)),
                  pl.BlockSpec((1, C), lambda i: (0, 0)),
                  pl.BlockSpec((C, Dout), lambda i: (0, 0))],
        out_specs=pl.BlockSpec((tm, Dout), lambda i: (i, 0)),
        compiler_params=_cparams("parallel"),
    )(_pad_rows(x2d, Mp), gamma.reshape(1, C), beta.reshape(1, C),
      w.astype(jnp.bfloat16))
    return out[:M]


def skip_ln_proj(y2d, xn2d, skip, gamma, beta, w, bias):
    M, C = y2d.shape
    Dout = w.shape[1]
    tm, Mp = _row_tiles(M)
    out = pl.pallas_call(
        _skip_ln_proj_kernel,
        out_shape=jax.ShapeDtypeStruct((Mp, Dout), jnp.float32),
        grid=(Mp // tm,),
        in_specs=[pl.BlockSpec(memory_space=pltpu.MemorySpace.SMEM),
                  pl.BlockSpec((tm, C), lambda i: (i, 0)),
                  pl.BlockSpec((tm, C), lambda i: (i, 0)),
                  pl.BlockSpec((1, C), lambda i: (0, 0)),
                  pl.BlockSpec((1, C), lambda i: (0, 0)),
                  pl.BlockSpec((C, Dout), lambda i: (0, 0)),
                  pl.BlockSpec((1, Dout), lambda i: (0, 0))],
        out_specs=pl.BlockSpec((tm, Dout), lambda i: (i, 0)),
        compiler_params=_cparams("parallel"),
    )(skip.reshape(1).astype(jnp.float32), _pad_rows(y2d, Mp),
      _pad_rows(xn2d, Mp), gamma.reshape(1, C), beta.reshape(1, C),
      w.astype(jnp.bfloat16), bias.reshape(1, Dout))
    return out[:M]


def dwconv3x3_silu(x, w9, bias):
    # x: (Bt, H, W, C); w9: (9, C); bias: (C,)
    Bt, H, W, C = x.shape
    xp = jnp.pad(x, ((0, 0), (1, 1), (1, 1), (0, 0))).reshape(Bt, H + 2,
                                                              (W + 2) * C)
    w_flat = jnp.tile(w9[:, None, :], (1, W, 1)).reshape(9, W * C)
    b_flat = jnp.tile(bias[None, None, :], (1, W, 1)).reshape(1, W * C)
    # TODO(synk): for large images, additionally tile the H axis.
    out = pl.pallas_call(
        partial(_dwconv3_silu_kernel, H=H, W=W, C=C),
        out_shape=jax.ShapeDtypeStruct((Bt, H, W * C), jnp.float32),
        grid=(Bt,),
        in_specs=[pl.BlockSpec((None, H + 2, (W + 2) * C), lambda b: (b, 0, 0)),
                  pl.BlockSpec((9, W * C), lambda b: (0, 0)),
                  pl.BlockSpec((1, W * C), lambda b: (0, 0))],
        out_specs=pl.BlockSpec((None, H, W * C), lambda b: (b, 0, 0)),
        compiler_params=_cparams("parallel"),
    )(xp, w_flat, b_flat)
    return out.reshape(Bt, H, W, C)


def selective_scan(u, dt, bx, cx, A_sc, Ds_sc, dtb_sc):
    # u/dt: (NB, L, GD); bx/cx: (NB, L, N, GD) bf16; A: (N, GD); Ds/dtb: (1,GD)
    NB, L, GD = u.shape
    N = A_sc.shape[0]
    LB = 512 if (L > 512 and L % 512 == 0) else L
    TC = 8
    while LB % TC:
        TC //= 2
    nlb = L // LB
    return pl.pallas_call(
        partial(_scan_kernel, TC=TC),
        out_shape=jax.ShapeDtypeStruct((NB, L, GD), jnp.float32),
        grid=(NB, nlb),
        in_specs=[
            pl.BlockSpec((None, LB, GD), lambda b, l: (b, l, 0)),
            pl.BlockSpec((None, LB, GD), lambda b, l: (b, l, 0)),
            pl.BlockSpec((None, LB, N, GD), lambda b, l: (b, l, 0, 0)),
            pl.BlockSpec((None, LB, N, GD), lambda b, l: (b, l, 0, 0)),
            pl.BlockSpec((N, GD), lambda b, l: (0, 0)),
            pl.BlockSpec((1, GD), lambda b, l: (0, 0)),
            pl.BlockSpec((1, GD), lambda b, l: (0, 0)),
        ],
        out_specs=pl.BlockSpec((None, LB, GD), lambda b, l: (b, l, 0)),
        scratch_shapes=[pltpu.VMEM((N, GD), jnp.float32)],
        compiler_params=_cparams("parallel", "arbitrary"),
    )(u, dt, bx, cx, A_sc, Ds_sc, dtb_sc)


# ----------------------------------------------------------------------------
# Model: parameters + forward (glue in plain JAX, hot paths in Pallas)
# ----------------------------------------------------------------------------

def init_params(key, input_dim, output_dim, d_state=16, ssm_ratio=2,
                dt_min=0.001, dt_max=0.1, dt_init_floor=1e-4):
    d_model = input_dim // 4
    d_inner = ssm_ratio * d_model
    dt_rank = math.ceil(d_model / 16)
    K = 4
    ks = jax.random.split(key, 8)
    p = {
        "norm_g": jnp.ones((input_dim,), jnp.float32),
        "norm_b": jnp.zeros((input_dim,), jnp.float32),
        "skip_scale": jnp.ones((1,), jnp.float32),
        "proj_w": 0.05 * jax.random.normal(ks[0], (input_dim, output_dim), jnp.float32),
        "proj_b": jnp.zeros((output_dim,), jnp.float32),
        # SS2D (shared across the 4 channel chunks)
        "in_proj_w": 0.1 * jax.random.normal(ks[1], (d_model, d_inner), jnp.float32),
        "conv_w": 0.1 * jax.random.normal(ks[2], (9, d_inner), jnp.float32),
        "conv_b": jnp.zeros((d_inner,), jnp.float32),
        "x_proj_w": 0.1 * jax.random.normal(
            ks[3], (K, d_inner, dt_rank + 2 * d_state), jnp.float32),
        "out_norm_g": jnp.ones((d_inner,), jnp.float32),
        "out_norm_b": jnp.zeros((d_inner,), jnp.float32),
        "out_proj_w": 0.1 * jax.random.normal(ks[6], (d_inner, d_model), jnp.float32),
    }
    s = dt_rank ** -0.5
    p["dt_w"] = jax.random.uniform(ks[4], (K, dt_rank, d_inner), jnp.float32, -s, s)
    dt = jnp.exp(jax.random.uniform(ks[5], (K, d_inner), jnp.float32)
                 * (math.log(dt_max) - math.log(dt_min)) + math.log(dt_min))
    dt = jnp.maximum(dt, dt_init_floor)
    p["dt_b"] = dt + jnp.log(-jnp.expm1(-dt))
    A = jnp.tile(jnp.arange(1, d_state + 1, dtype=jnp.float32)[None, :], (d_inner, 1))
    p["A_log"] = jnp.tile(jnp.log(A)[None], (K, 1, 1))       # (K, d_inner, N)
    p["Ds"] = jnp.ones((K, d_inner), jnp.float32)
    dims = dict(d_model=d_model, d_inner=d_inner, d_state=d_state,
                dt_rank=dt_rank, K=K)
    return p, dims


def build_scan_operands(x_conv, proj, p, dims, H, W, BB):
    Bt = x_conv.shape[0]
    di = dims["d_inner"]; N = dims["d_state"]; K = dims["K"]
    L = H * W
    NB = Bt // BB
    G = BB * K
    GD = G * di

    x_tok = x_conv.reshape(Bt, L, di)
    dts_tok = proj[..., :K * di].reshape(Bt, L, K, di)
    Bs_tok = proj[..., K * di:K * (di + N)].reshape(Bt, L, K, N)
    Cs_tok = proj[..., K * (di + N):].reshape(Bt, L, K, N)

    def perm(a, k):  # a: (Bt, L, F) row-major tokens -> direction-k order
        if k == 0:
            return a
        if k == 1:
            F = a.shape[-1]
            return a.reshape(Bt, H, W, F).transpose(0, 2, 1, 3).reshape(Bt, L, F)
        if k == 2:
            return a[:, ::-1]
        return perm(a, 1)[:, ::-1]

    u_all = jnp.stack([perm(x_tok, k) for k in range(K)], axis=2)
    dt_all = jnp.stack([perm(dts_tok[:, :, k, :], k) for k in range(K)], axis=2)
    B_all = jnp.stack([perm(Bs_tok[:, :, k, :], k) for k in range(K)], axis=2)
    C_all = jnp.stack([perm(Cs_tok[:, :, k, :], k) for k in range(K)], axis=2)

    def fold(a):  # (Bt, L, K, F) -> (NB, L, G*F)
        F = a.shape[-1]
        return a.reshape(NB, BB, L, K, F).transpose(0, 2, 1, 3, 4).reshape(
            NB, L, BB * K * F)

    # TODO(synk): B/C are expanded over d_inner in the wrapper (N x HBM blowup
    # for the scan inputs); an in-kernel lane expansion would keep them compact.
    def expand(a):  # (Bt, L, K, N) -> (NB, L, N, G*di), bf16
        a = a.reshape(NB, BB, L, K, N).transpose(0, 2, 4, 1, 3)   # (NB,L,N,BB,K)
        a = jnp.broadcast_to(a[..., None], (NB, L, N, BB, K, di))
        return a.reshape(NB, L, N, GD).astype(jnp.bfloat16)

    u_sc = fold(u_all)
    dt_sc = fold(dt_all)
    bx = expand(B_all)
    cx = expand(C_all)

    A = -jnp.exp(p["A_log"])                                  # (K, di, N)
    A_t = jnp.transpose(A, (2, 0, 1))                         # (N, K, di)
    A_sc = jnp.broadcast_to(A_t[:, None], (N, BB, K, di)).reshape(N, GD)
    Ds_sc = jnp.broadcast_to(p["Ds"][None], (BB, K, di)).reshape(1, GD)
    dtb_sc = jnp.broadcast_to(p["dt_b"][None], (BB, K, di)).reshape(1, GD)
    return u_sc, dt_sc, bx, cx, A_sc, Ds_sc, dtb_sc


def cross_merge(y_sc, Bt, BB, H, W, di, K):
    NB, L, _ = y_sc.shape
    y_all = y_sc.reshape(NB, L, BB, K, di).transpose(0, 2, 1, 3, 4).reshape(
        Bt, L, K, di)

    def unperm(a, k):  # direction-k order -> row-major token order
        if k == 0:
            return a
        if k == 1:
            return a.reshape(Bt, W, H, di).transpose(0, 2, 1, 3).reshape(Bt, L, di)
        if k == 2:
            return a[:, ::-1]
        return unperm(a[:, ::-1], 1)

    return sum(unperm(y_all[:, :, k, :], k) for k in range(K))   # (Bt, L, di)


def pvm_forward(x_nchw, p, dims, output_dim):
    x = x_nchw.astype(jnp.float32)
    B, C, H, W = x.shape
    dm = dims["d_model"]; di = dims["d_inner"]
    N = dims["d_state"]; R = dims["dt_rank"]; K = dims["K"]
    L = H * W
    M0 = B * H * W
    x2d = jnp.transpose(x, (0, 2, 3, 1)).reshape(M0, C)

    # fused LayerNorm + chunk-shared in_proj (block-diagonal weight)
    w_bd = jnp.kron(jnp.eye(4, dtype=jnp.float32), p["in_proj_w"])  # (C, 4*di)
    xn, xp = ln_inproj(x2d, p["norm_g"], p["norm_b"], w_bd)

    Bt = 4 * B
    x_in = xp.reshape(B, H, W, 4, di).transpose(3, 0, 1, 2, 4).reshape(Bt, H, W, di)

    # depthwise 3x3 conv + SiLU (lane-flattened W*C layout)
    x_conv = dwconv3x3_silu(x_in, p["conv_w"], p["conv_b"])

    # one fused projection for (dt, B, C) of all 4 directions, on un-permuted
    # tokens (dt_proj composed into x_proj since both are bias-free linears)
    dt_full_w = jnp.einsum("kdr,krD->kdD", p["x_proj_w"][:, :, :R], p["dt_w"])
    w_comb = jnp.concatenate(
        [jnp.concatenate([dt_full_w[k] for k in range(K)], axis=1),
         jnp.concatenate([p["x_proj_w"][k][:, R:R + N] for k in range(K)], axis=1),
         jnp.concatenate([p["x_proj_w"][k][:, R + N:] for k in range(K)], axis=1)],
        axis=1)                                              # (di, K*(di+2N))
    proj = matmul(x_conv.reshape(Bt * L, di), w_comb).reshape(
        Bt, L, K * (di + 2 * N))

    # lane fold: (BB batches x K directions x d_inner) onto the 128-lane axis
    BB = 1
    for c in (2, 4, 8):
        if Bt % c == 0 and c * K * di <= 128:
            BB = c
    u_sc, dt_sc, bx, cx, A_sc, Ds_sc, dtb_sc = build_scan_operands(
        x_conv, proj, p, dims, H, W, BB)
    y_sc = selective_scan(u_sc, dt_sc, bx, cx, A_sc, Ds_sc, dtb_sc)
    y_tok = cross_merge(y_sc, Bt, BB, H, W, di, K)           # (Bt, L, di)

    # fused out_norm LayerNorm + out_proj
    y_out = ln_matmul(y_tok.reshape(Bt * L, di), p["out_norm_g"],
                      p["out_norm_b"], p["out_proj_w"])       # (Bt*L, dm)
    y_cat = y_out.reshape(4, B, H, W, dm).transpose(1, 2, 3, 0, 4).reshape(M0, C)

    # fused skip-add + final LayerNorm + proj (with bias)
    out = skip_ln_proj(y_cat, xn, p["skip_scale"], p["norm_g"], p["norm_b"],
                       p["proj_w"], p["proj_b"])              # (M0, Cout)
    return jnp.transpose(out.reshape(B, H, W, output_dim), (0, 3, 1, 2))


if __name__ == "__main__":
    key = jax.random.PRNGKey(0)
    kx, kp = jax.random.split(key)
    B, C, H, W = 2, 32, 8, 8               # input_dim=32 -> d_model=8, d_inner=16
    input_dim, output_dim = C, C
    x = jax.random.normal(kx, (B, C, H, W), jnp.float32)
    params, dims = init_params(kp, input_dim, output_dim)

    fwd = jax.jit(lambda inp: pvm_forward(inp, params, dims, output_dim))
    out = jax.block_until_ready(fwd(x))

    assert out.shape == (B, output_dim, H, W), out.shape
    assert bool(jnp.all(jnp.isfinite(out)))
    print("KERNEL_OK")
</pallas_src>

<mosaic_0001>
module attributes {stable_mosaic.version = 11 : i64} {
  func.func @_ln_inproj_kernel(%arg0: i32, %arg1: memref<128x32xf32, #tpu.memory_space<vmem>>, %arg2: memref<1x32xf32, #tpu.memory_space<vmem>>, %arg3: memref<1x32xf32, #tpu.memory_space<vmem>>, %arg4: memref<32x64xbf16, #tpu.memory_space<vmem>>, %arg5: memref<128x32xf32, #tpu.memory_space<vmem>>, %arg6: memref<128x64xf32, #tpu.memory_space<vmem>>) attributes {dimension_semantics = [#tpu.dimension_semantics<parallel>], iteration_bounds = array<i64: 1>, scalar_prefetch = 0 : i64, scratch_operands = 0 : i64, tpu.core_type = #tpu.core_type<tc>, window_params = [{transform_indices = @transform_0, window_bounds = array<i64: 128, 32>}, {pipeline_mode = #tpu.pipeline_mode<synchronous>, transform_indices = @transform_1, window_bounds = array<i64: 1, 32>}, {pipeline_mode = #tpu.pipeline_mode<synchronous>, transform_indices = @transform_2, window_bounds = array<i64: 1, 32>}, {pipeline_mode = #tpu.pipeline_mode<synchronous>, transform_indices = @transform_3, window_bounds = array<i64: 32, 64>}, {transform_indices = @transform_4, window_bounds = array<i64: 128, 32>}, {transform_indices = @transform_5, window_bounds = array<i64: 128, 64>}]} {
    %c0 = arith.constant 0 : index
    %c0_0 = arith.constant 0 : index
    %0 = vector.load %arg1[%c0, %c0_0] : memref<128x32xf32, #tpu.memory_space<vmem>>, vector<128x32xf32>
    %c0_1 = arith.constant 0 : index
    %c0_2 = arith.constant 0 : index
    %1 = vector.load %arg2[%c0_1, %c0_2] : memref<1x32xf32, #tpu.memory_space<vmem>>, vector<1x32xf32>
    %c0_3 = arith.constant 0 : index
    %c0_4 = arith.constant 0 : index
    %2 = vector.load %arg3[%c0_3, %c0_4] : memref<1x32xf32, #tpu.memory_space<vmem>>, vector<1x32xf32>
    %cst = arith.constant dense<0.000000e+00> : vector<128xf32>
    %3 = vector.multi_reduction <add>, %0, %cst [1] : vector<128x32xf32> to vector<128xf32>
    %4 = vector.shape_cast %3 : vector<128xf32> to vector<128x1xf32>
    %cst_5 = arith.constant 3.200000e+01 : f32
    %5 = vector.broadcast %cst_5 : f32 to vector<128x1xf32>
    %6 = arith.divf %4, %5 : vector<128x1xf32>
    %7 = vector.broadcast %6 : vector<128x1xf32> to vector<128x32xf32>
    %8 = arith.subf %0, %7 : vector<128x32xf32>
    %9 = arith.mulf %8, %8 : vector<128x32xf32>
    %cst_6 = arith.constant dense<0.000000e+00> : vector<128xf32>
    %10 = vector.multi_reduction <add>, %9, %cst_6 [1] : vector<128x32xf32> to vector<128xf32>
    %11 = vector.shape_cast %10 : vector<128xf32> to vector<128x1xf32>
    %cst_7 = arith.constant 3.200000e+01 : f32
    %12 = vector.broadcast %cst_7 : f32 to vector<128x1xf32>
    %13 = arith.divf %11, %12 : vector<128x1xf32>
    %14 = vector.broadcast %6 : vector<128x1xf32> to vector<128x32xf32>
    %15 = arith.subf %0, %14 : vector<128x32xf32>
    %cst_8 = arith.constant 9.99999974E-6 : f32
    %16 = vector.broadcast %cst_8 : f32 to vector<128x1xf32>
    %17 = arith.addf %13, %16 : vector<128x1xf32>
    %18 = math.rsqrt %17 : vector<128x1xf32>
    %19 = vector.broadcast %18 : vector<128x1xf32> to vector<128x32xf32>
    %20 = arith.mulf %15, %19 : vector<128x32xf32>
    %21 = vector.broadcast %1 : vector<1x32xf32> to vector<128x32xf32>
    %22 = arith.mulf %20, %21 : vector<128x32xf32>
    %23 = vector.broadcast %2 : vector<1x32xf32> to vector<128x32xf32>
    %24 = arith.addf %22, %23 : vector<128x32xf32>
    %c0_9 = arith.constant 0 : index
    %c0_10 = arith.constant 0 : index
    %25 = vector.load %arg5[%c0_9, %c0_10] : memref<128x32xf32, #tpu.memory_space<vmem>>, vector<128x32xf32>
    tpu.vector_store %arg5[%c0_9, %c0_10], %24 {strides = array<i32>} : memref<128x32xf32, #tpu.memory_space<vmem>>, vector<128x32xf32>,
    %26 = arith.truncf %24 : vector<128x32xf32> to vector<128x32xbf16>
    %c0_11 = arith.constant 0 : index
    %c0_12 = arith.constant 0 : index
    %27 = vector.load %arg4[%c0_11, %c0_12] : memref<32x64xbf16, #tpu.memory_space<vmem>>, vector<32x64xbf16>
    %cst_13 = arith.constant dense<0.000000e+00> : vector<128x64xf32>
    %28 = tpu.matmul %26, %27, %cst_13 {dimension_numbers = #tpu.dot_dimension_numbers<[1], [0], [0], [1], [0, 0, 1, 1], [], []>} : vector<128x32xbf16>, vector<32x64xbf16>, vector<128x64xf32> -> vector<128x64xf32>
    %c0_14 = arith.constant 0 : index
    %c0_15 = arith.constant 0 : index
    %29 = vector.load %arg6[%c0_14, %c0_15] : memref<128x64xf32, #tpu.memory_space<vmem>>, vector<128x64xf32>
    tpu.vector_store %arg6[%c0_14, %c0_15], %28 {strides = array<i32>} : memref<128x64xf32, #tpu.memory_space<vmem>>, vector<128x64xf32>,
    return
  }
  func.func @transform_0(%arg0: i32) -> (i32, i32) {
    %c0_i32 = arith.constant 0 : i32
    %c0_i32_0 = arith.constant 0 : i32
    return %arg0, %c0_i32 : i32, i32
  }
  func.func @transform_1(%arg0: i32) -> (i32, i32) {
    %c0_i32 = arith.constant 0 : i32
    %c0_i32_0 = arith.constant 0 : i32
    %c0_i32_1 = arith.constant 0 : i32
    return %c0_i32, %c0_i32_0 : i32, i32
  }
  func.func @transform_2(%arg0: i32) -> (i32, i32) {
    %c0_i32 = arith.constant 0 : i32
    %c0_i32_0 = arith.constant 0 : i32
    %c0_i32_1 = arith.constant 0 : i32
    return %c0_i32, %c0_i32_0 : i32, i32
  }
  func.func @transform_3(%arg0: i32) -> (i32, i32) {
    %c0_i32 = arith.constant 0 : i32
    %c0_i32_0 = arith.constant 0 : i32
    %c0_i32_1 = arith.constant 0 : i32
    return %c0_i32, %c0_i32_0 : i32, i32
  }
  func.func @transform_4(%arg0: i32) -> (i32, i32) {
    %c0_i32 = arith.constant 0 : i32
    %c0_i32_0 = arith.constant 0 : i32
    return %arg0, %c0_i32 : i32, i32
  }
  func.func @transform_5(%arg0: i32) -> (i32, i32) {
    %c0_i32 = arith.constant 0 : i32
    %c0_i32_0 = arith.constant 0 : i32
    return %arg0, %c0_i32 : i32, i32
  }
}

module attributes {stable_mosaic.version = 11 : i64} {
  func.func @_dwconv3_silu_kernel(%arg0: i32, %arg1: memref<1x10x160xf32, #tpu.memory_space<vmem>>, %arg2: memref<9x128xf32, #tpu.memory_space<vmem>>, %arg3: memref<1x128xf32, #tpu.memory_space<vmem>>, %arg4: memref<1x8x128xf32, #tpu.memory_space<vmem>>) attributes {dimension_semantics = [#tpu.dimension_semantics<parallel>], iteration_bounds = array<i64: 8>, scalar_prefetch = 0 : i64, scratch_operands = 0 : i64, tpu.core_type = #tpu.core_type<tc>, window_params = [{transform_indices = @transform_0, window_bounds = array<i64: 1, 10, 160>}, {pipeline_mode = #tpu.pipeline_mode<synchronous>, transform_indices = @transform_1, window_bounds = array<i64: 9, 128>}, {pipeline_mode = #tpu.pipeline_mode<synchronous>, transform_indices = @transform_2, window_bounds = array<i64: 1, 128>}, {transform_indices = @transform_3, window_bounds = array<i64: 1, 8, 128>}]} {
    %c0 = arith.constant 0 : index
    %c0_0 = arith.constant 0 : index
    %c0_1 = arith.constant 0 : index
    %0 = vector.load %arg1[%c0, %c0_0, %c0_1] : memref<1x10x160xf32, #tpu.memory_space<vmem>>, vector<1x10x160xf32>
    %1 = vector.shape_cast %0 : vector<1x10x160xf32> to vector<10x160xf32>
    %cst = arith.constant 0.000000e+00 : f32
    %2 = vector.broadcast %cst : f32 to vector<8x128xf32>
    %c0_2 = arith.constant 0 : index
    %c0_3 = arith.constant 0 : index
    %3 = vector.load %arg2[%c0_2, %c0_3] : memref<9x128xf32, #tpu.memory_space<vmem>>, vector<1x128xf32>
    %4 = vector.extract_strided_slice %1 {offsets = [0, 0], sizes = [8, 128], strides = [1, 1]} : vector<10x160xf32> to vector<8x128xf32>
    %5 = vector.broadcast %3 : vector<1x128xf32> to vector<8x128xf32>
    %6 = arith.mulf %4, %5 : vector<8x128xf32>
    %7 = arith.addf %2, %6 : vector<8x128xf32>
    %c1 = arith.constant 1 : index
    %c0_4 = arith.constant 0 : index
    %8 = vector.load %arg2[%c1, %c0_4] : memref<9x128xf32, #tpu.memory_space<vmem>>, vector<1x128xf32>
    %9 = vector.extract_strided_slice %1 {offsets = [0, 16], sizes = [8, 128], strides = [1, 1]} : vector<10x160xf32> to vector<8x128xf32>
    %10 = vector.broadcast %8 : vector<1x128xf32> to vector<8x128xf32>
    %11 = arith.mulf %9, %10 : vector<8x128xf32>
    %12 = arith.addf %7, %11 : vector<8x128xf32>
    %c2 = arith.constant 2 : index
    %c0_5 = arith.constant 0 : index
    %13 = vector.load %arg2[%c2, %c0_5] : memref<9x128xf32, #tpu.memory_space<vmem>>, vector<1x128xf32>
    %14 = vector.extract_strided_slice %1 {offsets = [0, 32], sizes = [8, 128], strides = [1, 1]} : vector<10x160xf32> to vector<8x128xf32>
    %15 = vector.broadcast %13 : vector<1x128xf32> to vector<8x128xf32>
    %16 = arith.mulf %14, %15 : vector<8x128xf32>
    %17 = arith.addf %12, %16 : vector<8x128xf32>
    %c3 = arith.constant 3 : index
    %c0_6 = arith.constant 0 : index
    %18 = vector.load %arg2[%c3, %c0_6] : memref<9x128xf32, #tpu.memory_space<vmem>>, vector<1x128xf32>
    %19 = vector.extract_strided_slice %1 {offsets = [1, 0], sizes = [8, 128], strides = [1, 1]} : vector<10x160xf32> to vector<8x128xf32>
    %20 = vector.broadcast %18 : vector<1x128xf32> to vector<8x128xf32>
    %21 = arith.mulf %19, %20 : vector<8x128xf32>
    %22 = arith.addf %17, %21 : vector<8x128xf32>
    %c4 = arith.constant 4 : index
    %c0_7 = arith.constant 0 : index
    %23 = vector.load %arg2[%c4, %c0_7] : memref<9x128xf32, #tpu.memory_space<vmem>>, vector<1x128xf32>
    %24 = vector.extract_strided_slice %1 {offsets = [1, 16], sizes = [8, 128], strides = [1, 1]} : vector<10x160xf32> to vector<8x128xf32>
    %25 = vector.broadcast %23 : vector<1x128xf32> to vector<8x128xf32>
    %26 = arith.mulf %24, %25 : vector<8x128xf32>
    %27 = arith.addf %22, %26 : vector<8x128xf32>
    %c5 = arith.constant 5 : index
    %c0_8 = arith.constant 0 : index
    %28 = vector.load %arg2[%c5, %c0_8] : memref<9x128xf32, #tpu.memory_space<vmem>>, vector<1x128xf32>
    %29 = vector.extract_strided_slice %1 {offsets = [1, 32], sizes = [8, 128], strides = [1, 1]} : vector<10x160xf32> to vector<8x128xf32>
    %30 = vector.broadcast %28 : vector<1x128xf32> to vector<8x128xf32>
    %31 = arith.mulf %29, %30 : vector<8x128xf32>
    %32 = arith.addf %27, %31 : vector<8x128xf32>
    %c6 = arith.constant 6 : index
    %c0_9 = arith.constant 0 : index
    %33 = vector.load %arg2[%c6, %c0_9] : memref<9x128xf32, #tpu.memory_space<vmem>>, vector<1x128xf32>
    %34 = vector.extract_strided_slice %1 {offsets = [2, 0], sizes = [8, 128], strides = [1, 1]} : vector<10x160xf32> to vector<8x128xf32>
    %35 = vector.broadcast %33 : vector<1x128xf32> to vector<8x128xf32>
    %36 = arith.mulf %34, %35 : vector<8x128xf32>
    %37 = arith.addf %32, %36 : vector<8x128xf32>
    %c7 = arith.constant 7 : index
    %c0_10 = arith.constant 0 : index
    %38 = vector.load %arg2[%c7, %c0_10] : memref<9x128xf32, #tpu.memory_space<vmem>>, vector<1x128xf32>
    %39 = vector.extract_strided_slice %1 {offsets = [2, 16], sizes = [8, 128], strides = [1, 1]} : vector<10x160xf32> to vector<8x128xf32>
    %40 = vector.broadcast %38 : vector<1x128xf32> to vector<8x128xf32>
    %41 = arith.mulf %39, %40 : vector<8x128xf32>
    %42 = arith.addf %37, %41 : vector<8x128xf32>
    %c8 = arith.constant 8 : index
    %c0_11 = arith.constant 0 : index
    %43 = vector.load %arg2[%c8, %c0_11] : memref<9x128xf32, #tpu.memory_space<vmem>>, vector<1x128xf32>
    %44 = vector.extract_strided_slice %1 {offsets = [2, 32], sizes = [8, 128], strides = [1, 1]} : vector<10x160xf32> to vector<8x128xf32>
    %45 = vector.broadcast %43 : vector<1x128xf32> to vector<8x128xf32>
    %46 = arith.mulf %44, %45 : vector<8x128xf32>
    %47 = arith.addf %42, %46 : vector<8x128xf32>
    %c0_12 = arith.constant 0 : index
    %c0_13 = arith.constant 0 : index
    %48 = vector.load %arg3[%c0_12, %c0_13] : memref<1x128xf32, #tpu.memory_space<vmem>>, vector<1x128xf32>
    %49 = vector.broadcast %48 : vector<1x128xf32> to vector<8x128xf32>
    %50 = arith.addf %47, %49 : vector<8x128xf32>
    %51 = arith.negf %50 : vector<8x128xf32>
    %52 = math.exp %51 : vector<8x128xf32>
    %cst_14 = arith.constant 1.000000e+00 : f32
    %53 = vector.broadcast %cst_14 : f32 to vector<8x128xf32>
    %54 = arith.addf %53, %52 : vector<8x128xf32>
    %55 = arith.divf %53, %54 : vector<8x128xf32>
    %56 = arith.mulf %50, %55 : vector<8x128xf32>
    %c0_15 = arith.constant 0 : index
    %c0_16 = arith.constant 0 : index
    %c0_17 = arith.constant 0 : index
    %57 = vector.load %arg4[%c0_15, %c0_16, %c0_17] : memref<1x8x128xf32, #tpu.memory_space<vmem>>, vector<1x8x128xf32>
    %58 = vector.shape_cast %57 : vector<1x8x128xf32> to vector<8x128xf32>
    %59 = vector.shape_cast %56 : vector<8x128xf32> to vector<1x8x128xf32>
    tpu.vector_store %arg4[%c0_15, %c0_16, %c0_17], %59 {strides = array<i32>} : memref<1x8x128xf32, #tpu.memory_space<vmem>>, vector<1x8x128xf32>,
    return
  }
  func.func @transform_0(%arg0: i32) -> (i32, i32, i32) {
    %c0_i32 = arith.constant 0 : i32
    %c0_i32_0 = arith.constant 0 : i32
    %c0_i32_1 = arith.constant 0 : i32
    return %arg0, %c0_i32, %c0_i32_0 : i32, i32, i32
  }
  func.func @transform_1(%arg0: i32) -> (i32, i32) {
    %c0_i32 = arith.constant 0 : i32
    %c0_i32_0 = arith.constant 0 : i32
    %c0_i32_1 = arith.constant 0 : i32
    return %c0_i32, %c0_i32_0 : i32, i32
  }
  func.func @transform_2(%arg0: i32) -> (i32, i32) {
    %c0_i32 = arith.constant 0 : i32
    %c0_i32_0 = arith.constant 0 : i32
    %c0_i32_1 = arith.constant 0 : i32
    return %c0_i32, %c0_i32_0 : i32, i32
  }
  func.func @transform_3(%arg0: i32) -> (i32, i32, i32) {
    %c0_i32 = arith.constant 0 : i32
    %c0_i32_0 = arith.constant 0 : i32
    %c0_i32_1 = arith.constant 0 : i32
    return %arg0, %c0_i32, %c0_i32_0 : i32, i32, i32
  }
}

module attributes {stable_mosaic.version = 11 : i64} {
  func.func @_matmul_kernel(%arg0: i32, %arg1: memref<256x16xf32, #tpu.memory_space<vmem>>, %arg2: memref<16x192xbf16, #tpu.memory_space<vmem>>, %arg3: memref<256x192xf32, #tpu.memory_space<vmem>>) attributes {dimension_semantics = [#tpu.dimension_semantics<parallel>], iteration_bounds = array<i64: 2>, scalar_prefetch = 0 : i64, scratch_operands = 0 : i64, tpu.core_type = #tpu.core_type<tc>, window_params = [{transform_indices = @transform_0, window_bounds = array<i64: 256, 16>}, {pipeline_mode = #tpu.pipeline_mode<synchronous>, transform_indices = @transform_1, window_bounds = array<i64: 16, 192>}, {transform_indices = @transform_2, window_bounds = array<i64: 256, 192>}]} {
    %c0 = arith.constant 0 : index
    %c0_0 = arith.constant 0 : index
    %0 = vector.load %arg1[%c0, %c0_0] : memref<256x16xf32, #tpu.memory_space<vmem>>, vector<256x16xf32>
    %1 = arith.truncf %0 : vector<256x16xf32> to vector<256x16xbf16>
    %c0_1 = arith.constant 0 : index
    %c0_2 = arith.constant 0 : index
    %2 = vector.load %arg2[%c0_1, %c0_2] : memref<16x192xbf16, #tpu.memory_space<vmem>>, vector<16x192xbf16>
    %cst = arith.constant dense<0.000000e+00> : vector<256x192xf32>
    %3 = tpu.matmul %1, %2, %cst {dimension_numbers = #tpu.dot_dimension_numbers<[1], [0], [0], [1], [0, 0, 1, 1], [], []>} : vector<256x16xbf16>, vector<16x192xbf16>, vector<256x192xf32> -> vector<256x192xf32>
    %c0_3 = arith.constant 0 : index
    %c0_4 = arith.constant 0 : index
    %4 = vector.load %arg3[%c0_3, %c0_4] : memref<256x192xf32, #tpu.memory_space<vmem>>, vector<256x192xf32>
    tpu.vector_store %arg3[%c0_3, %c0_4], %3 {strides = array<i32>} : memref<256x192xf32, #tpu.memory_space<vmem>>, vector<256x192xf32>,
    return
  }
  func.func @transform_0(%arg0: i32) -> (i32, i32) {
    %c0_i32 = arith.constant 0 : i32
    %c0_i32_0 = arith.constant 0 : i32
    return %arg0, %c0_i32 : i32, i32
  }
  func.func @transform_1(%arg0: i32) -> (i32, i32) {
    %c0_i32 = arith.constant 0 : i32
    %c0_i32_0 = arith.constant 0 : i32
    %c0_i32_1 = arith.constant 0 : i32
    return %c0_i32, %c0_i32_0 : i32, i32
  }
  func.func @transform_2(%arg0: i32) -> (i32, i32) {
    %c0_i32 = arith.constant 0 : i32
    %c0_i32_0 = arith.constant 0 : i32
    return %arg0, %c0_i32 : i32, i32
  }
}

module attributes {stable_mosaic.version = 11 : i64} {
  func.func @_scan_kernel(%arg0: i32, %arg1: i32, %arg2: memref<1x64x128xf32, #tpu.memory_space<vmem>>, %arg3: memref<1x64x128xf32, #tpu.memory_space<vmem>>, %arg4: memref<1x64x16x128xbf16, #tpu.memory_space<vmem>>, %arg5: memref<1x64x16x128xbf16, #tpu.memory_space<vmem>>, %arg6: memref<16x128xf32, #tpu.memory_space<vmem>>, %arg7: memref<1x128xf32, #tpu.memory_space<vmem>>, %arg8: memref<1x128xf32, #tpu.memory_space<vmem>>, %arg9: memref<1x64x128xf32, #tpu.memory_space<vmem>>, %arg10: memref<16x128xf32, #tpu.memory_space<vmem>>) attributes {dimension_semantics = [#tpu.dimension_semantics<parallel>, #tpu.dimension_semantics<arbitrary>], iteration_bounds = array<i64: 4, 1>, scalar_prefetch = 0 : i64, scratch_operands = 1 : i64, tpu.core_type = #tpu.core_type<tc>, window_params = [{transform_indices = @transform_0, window_bounds = array<i64: 1, 64, 128>}, {transform_indices = @transform_1, window_bounds = array<i64: 1, 64, 128>}, {transform_indices = @transform_2, window_bounds = array<i64: 1, 64, 16, 128>}, {transform_indices = @transform_3, window_bounds = array<i64: 1, 64, 16, 128>}, {pipeline_mode = #tpu.pipeline_mode<synchronous>, transform_indices = @transform_4, window_bounds = array<i64: 16, 128>}, {pipeline_mode = #tpu.pipeline_mode<synchronous>, transform_indices = @transform_5, window_bounds = array<i64: 1, 128>}, {pipeline_mode = #tpu.pipeline_mode<synchronous>, transform_indices = @transform_6, window_bounds = array<i64: 1, 128>}, {transform_indices = @transform_7, window_bounds = array<i64: 1, 64, 128>}]} {
    %c0_i32 = arith.constant 0 : i32
    %0 = arith.cmpi eq, %arg1, %c0_i32 : i32
    %1 = arith.extui %0 : i1 to i32
    %c0_i32_0 = arith.constant 0 : i32
    %2 = arith.cmpi ne, %1, %c0_i32_0 : i32
    scf.if %2 {
      %cst_218 = arith.constant 0.000000e+00 : f32
      %1000 = vector.broadcast %cst_218 : f32 to vector<16x128xf32>
      %c0_219 = arith.constant 0 : index
      %c0_220 = arith.constant 0 : index
      %1001 = vector.load %arg10[%c0_219, %c0_220] : memref<16x128xf32, #tpu.memory_space<vmem>>, vector<16x128xf32>
      tpu.vector_store %arg10[%c0_219, %c0_220], %1000 {strides = array<i32>} : memref<16x128xf32, #tpu.memory_space<vmem>>, vector<16x128xf32>,
    } else {
    }
    %c0 = arith.constant 0 : index
    %c0_1 = arith.constant 0 : index
    %3 = vector.load %arg6[%c0, %c0_1] : memref<16x128xf32, #tpu.memory_space<vmem>>, vector<16x128xf32>
    %c0_2 = arith.constant 0 : index
    %c0_3 = arith.constant 0 : index
    %4 = vector.load %arg7[%c0_2, %c0_3] : memref<1x128xf32, #tpu.memory_space<vmem>>, vector<1x128xf32>
    %c0_4 = arith.constant 0 : index
    %c0_5 = arith.constant 0 : index
    %5 = vector.load %arg8[%c0_4, %c0_5] : memref<1x128xf32, #tpu.memory_space<vmem>>, vector<1x128xf32>
    %c0_6 = arith.constant 0 : index
    %c0_7 = arith.constant 0 : index
    %6 = vector.load %arg10[%c0_6, %c0_7] : memref<16x128xf32, #tpu.memory_space<vmem>>, vector<16x128xf32>
    %c0_8 = arith.constant 0 : index
    %c0_9 = arith.constant 0 : index
    %c0_10 = arith.constant 0 : index
    %7 = vector.load %arg2[%c0_8, %c0_9, %c0_10] : memref<1x64x128xf32, #tpu.memory_space<vmem>>, vector<1x8x128xf32>
    %8 = vector.shape_cast %7 : vector<1x8x128xf32> to vector<8x128xf32>
    %c0_11 = arith.constant 0 : index
    %c0_12 = arith.constant 0 : index
    %c0_13 = arith.constant 0 : index
    %9 = vector.load %arg3[%c0_11, %c0_12, %c0_13] : memref<1x64x128xf32, #tpu.memory_space<vmem>>, vector<1x8x128xf32>
    %10 = vector.shape_cast %9 : vector<1x8x128xf32> to vector<8x128xf32>
    %c0_14 = arith.constant 0 : index
    %c0_15 = arith.constant 0 : index
    %c0_16 = arith.constant 0 : index
    %c0_17 = arith.constant 0 : index
    %11 = vector.load %arg4[%c0_14, %c0_15, %c0_16, %c0_17] : memref<1x64x16x128xbf16, #tpu.memory_space<vmem>>, vector<1x8x16x128xbf16>
    %12 = vector.shape_cast %11 : vector<1x8x16x128xbf16> to vector<8x16x128xbf16>
    %13 = arith.extf %12 : vector<8x16x128xbf16> to vector<8x16x128xf32>
    %c0_18 = arith.constant 0 : index
    %c0_19 = arith.constant 0 : index
    %c0_20 = arith.constant 0 : index
    %c0_21 = arith.constant 0 : index
    %14 = vector.load %arg5[%c0_18, %c0_19, %c0_20, %c0_21] : memref<1x64x16x128xbf16, #tpu.memory_space<vmem>>, vector<1x8x16x128xbf16>
    %15 = vector.shape_cast %14 : vector<1x8x16x128xbf16> to vector<8x16x128xbf16>
    %16 = arith.extf %15 : vector<8x16x128xbf16> to vector<8x16x128xf32>
    %17 = vector.broadcast %5 : vector<1x128xf32> to vector<8x128xf32>
    %18 = arith.addf %10, %17 : vector<8x128xf32>
    %cst = arith.constant 2.000000e+01 : f32
    %19 = vector.broadcast %cst : f32 to vector<8x128xf32>
    %20 = arith.cmpf ogt, %18, %19 : vector<8x128xf32>
    %cst_22 = arith.constant 2.000000e+01 : f32
    %21 = vector.broadcast %cst_22 : f32 to vector<8x128xf32>
    %22 = arith.minimumf %18, %21 : vector<8x128xf32>
    %23 = math.exp %22 : vector<8x128xf32>
    %24 = math.log1p %23 : vector<8x128xf32>
    %25 = arith.select %20, %18, %24 : vector<8x128xi1>, vector<8x128xf32>
    %26 = vector.shape_cast %25 : vector<8x128xf32> to vector<8x1x128xf32>
    %27 = vector.shape_cast %3 : vector<16x128xf32> to vector<1x16x128xf32>
    %28 = vector.broadcast %26 : vector<8x1x128xf32> to vector<8x16x128xf32>
    %29 = vector.broadcast %27 : vector<1x16x128xf32> to vector<8x16x128xf32>
    %30 = arith.mulf %28, %29 : vector<8x16x128xf32>
    %31 = math.exp %30 : vector<8x16x128xf32>
    %32 = arith.mulf %25, %8 : vector<8x128xf32>
    %33 = vector.shape_cast %32 : vector<8x128xf32> to vector<8x1x128xf32>
    %34 = vector.broadcast %33 : vector<8x1x128xf32> to vector<8x16x128xf32>
    %35 = arith.mulf %34, %13 : vector<8x16x128xf32>
    %36 = vector.broadcast %4 : vector<1x128xf32> to vector<8x128xf32>
    %37 = arith.mulf %36, %8 : vector<8x128xf32>
    %38 = vector.extract_strided_slice %31 {offsets = [0, 0, 0], sizes = [1, 16, 128], strides = [1, 1, 1]} : vector<8x16x128xf32> to vector<1x16x128xf32>
    %39 = vector.shape_cast %38 : vector<1x16x128xf32> to vector<16x128xf32>
    %40 = arith.mulf %39, %6 : vector<16x128xf32>
    %41 = vector.extract_strided_slice %35 {offsets = [0, 0, 0], sizes = [1, 16, 128], strides = [1, 1, 1]} : vector<8x16x128xf32> to vector<1x16x128xf32>
    %42 = vector.shape_cast %41 : vector<1x16x128xf32> to vector<16x128xf32>
    %43 = arith.addf %40, %42 : vector<16x128xf32>
    %44 = vector.extract_strided_slice %16 {offsets = [0, 0, 0], sizes = [1, 16, 128], strides = [1, 1, 1]} : vector<8x16x128xf32> to vector<1x16x128xf32>
    %45 = vector.shape_cast %44 : vector<1x16x128xf32> to vector<16x128xf32>
    %46 = arith.mulf %43, %45 : vector<16x128xf32>
    %cst_23 = arith.constant dense<0.000000e+00> : vector<128xf32>
    %47 = vector.multi_reduction <add>, %46, %cst_23 [0] : vector<16x128xf32> to vector<128xf32>
    %48 = vector.shape_cast %47 : vector<128xf32> to vector<1x128xf32>
    %49 = vector.extract_strided_slice %31 {offsets = [1, 0, 0], sizes = [1, 16, 128], strides = [1, 1, 1]} : vector<8x16x128xf32> to vector<1x16x128xf32>
    %50 = vector.shape_cast %49 : vector<1x16x128xf32> to vector<16x128xf32>
    %51 = arith.mulf %50, %43 : vector<16x128xf32>
    %52 = vector.extract_strided_slice %35 {offsets = [1, 0, 0], sizes = [1, 16, 128], strides = [1, 1, 1]} : vector<8x16x128xf32> to vector<1x16x128xf32>
    %53 = vector.shape_cast %52 : vector<1x16x128xf32> to vector<16x128xf32>
    %54 = arith.addf %51, %53 : vector<16x128xf32>
    %55 = vector.extract_strided_slice %16 {offsets = [1, 0, 0], sizes = [1, 16, 128], strides = [1, 1, 1]} : vector<8x16x128xf32> to vector<1x16x128xf32>
    %56 = vector.shape_cast %55 : vector<1x16x128xf32> to vector<16x128xf32>
    %57 = arith.mulf %54, %56 : vector<16x128xf32>
    %cst_24 = arith.constant dense<0.000000e+00> : vector<128xf32>
    %58 = vector.multi_reduction <add>, %57, %cst_24 [0] : vector<16x128xf32> to vector<128xf32>
    %59 = vector.shape_cast %58 : vector<128xf32> to vector<1x128xf32>
    %60 = vector.extract_strided_slice %31 {offsets = [2, 0, 0], sizes = [1, 16, 128], strides = [1, 1, 1]} : vector<8x16x128xf32> to vector<1x16x128xf32>
    %61 = vector.shape_cast %60 : vector<1x16x128xf32> to vector<16x128xf32>
    %62 = arith.mulf %61, %54 : vector<16x128xf32>
    %63 = vector.extract_strided_slice %35 {offsets = [2, 0, 0], sizes = [1, 16, 128], strides = [1, 1, 1]} : vector<8x16x128xf32> to vector<1x16x128xf32>
    %64 = vector.shape_cast %63 : vector<1x16x128xf32> to vector<16x128xf32>
    %65 = arith.addf %62, %64 : vector<16x128xf32>
    %66 = vector.extract_strided_slice %16 {offsets = [2, 0, 0], sizes = [1, 16, 128], strides = [1, 1, 1]} : vector<8x16x128xf32> to vector<1x16x128xf32>
    %67 = vector.shape_cast %66 : vector<1x16x128xf32> to vector<16x128xf32>
    %68 = arith.mulf %65, %67 : vector<16x128xf32>
    %cst_25 = arith.constant dense<0.000000e+00> : vector<128xf32>
    %69 = vector.multi_reduction <add>, %68, %cst_25 [0] : vector<16x128xf32> to vector<128xf32>
    %70 = vector.shape_cast %69 : vector<128xf32> to vector<1x128xf32>
    %71 = vector.extract_strided_slice %31 {offsets = [3, 0, 0], sizes = [1, 16, 128], strides = [1, 1, 1]} : vector<8x16x128xf32> to vector<1x16x128xf32>
    %72 = vector.shape_cast %71 : vector<1x16x128xf32> to vector<16x128xf32>
    %73 = arith.mulf %72, %65 : vector<16x128xf32>
    %74 = vector.extract_strided_slice %35 {offsets = [3, 0, 0], sizes = [1, 16, 128], strides = [1, 1, 1]} : vector<8x16x128xf32> to vector<1x16x128xf32>
    %75 = vector.shape_cast %74 : vector<1x16x128xf32> to vector<16x128xf32>
    %76 = arith.addf %73, %75 : vector<16x128xf32>
    %77 = vector.extract_strided_slice %16 {offsets = [3, 0, 0], sizes = [1, 16, 128], strides = [1, 1, 1]} : vector<8x16x128xf32> to vector<1x16x128xf32>
    %78 = vector.shape_cast %77 : vector<1x16x128xf32> to vector<16x128xf32>
    %79 = arith.mulf %76, %78 : vector<16x128xf32>
    %cst_26 = arith.constant dense<0.000000e+00> : vector<128xf32>
    %80 = vector.multi_reduction <add>, %79, %cst_26 [0] : vector<16x128xf32> to vector<128xf32>
    %81 = vector.shape_cast %80 : vector<128xf32> to vector<1x128xf32>
    %82 = vector.extract_strided_slice %31 {offsets = [4, 0, 0], sizes = [1, 16, 128], strides = [1, 1, 1]} : vector<8x16x128xf32> to vector<1x16x128xf32>
    %83 = vector.shape_cast %82 : vector<1x16x128xf32> to vector<16x128xf32>
    %84 = arith.mulf %83, %76 : vector<16x128xf32>
    %85 = vector.extract_strided_slice %35 {offsets = [4, 0, 0], sizes = [1, 16, 128], strides = [1, 1, 1]} : vector<8x16x128xf32> to vector<1x16x128xf32>
    %86 = vector.shape_cast %85 : vector<1x16x128xf32> to vector<16x128xf32>
    %87 = arith.addf %84, %86 : vector<16x128xf32>
    %88 = vector.extract_strided_slice %16 {offsets = [4, 0, 0], sizes = [1, 16, 128], strides = [1, 1, 1]} : vector<8x16x128xf32> to vector<1x16x128xf32>
    %89 = vector.shape_cast %88 : vector<1x16x128xf32> to vector<16x128xf32>
    %90 = arith.mulf %87, %89 : vector<16x128xf32>
    %cst_27 = arith.constant dense<0.000000e+00> : vector<128xf32>
    %91 = vector.multi_reduction <add>, %90, %cst_27 [0] : vector<16x128xf32> to vector<128xf32>
    %92 = vector.shape_cast %91 : vector<128xf32> to vector<1x128xf32>
    %93 = vector.extract_strided_slice %31 {offsets = [5, 0, 0], sizes = [1, 16, 128], strides = [1, 1, 1]} : vector<8x16x128xf32> to vector<1x16x128xf32>
    %94 = vector.shape_cast %93 : vector<1x16x128xf32> to vector<16x128xf32>
    %95 = arith.mulf %94, %87 : vector<16x128xf32>
    %96 = vector.extract_strided_slice %35 {offsets = [5, 0, 0], sizes = [1, 16, 128], strides = [1, 1, 1]} : vector<8x16x128xf32> to vector<1x16x128xf32>
    %97 = vector.shape_cast %96 : vector<1x16x128xf32> to vector<16x128xf32>
    %98 = arith.addf %95, %97 : vector<16x128xf32>
    %99 = vector.extract_strided_slice %16 {offsets = [5, 0, 0], sizes = [1, 16, 128], strides = [1, 1, 1]} : vector<8x16x128xf32> to vector<1x16x128xf32>
    %100 = vector.shape_cast %99 : vector<1x16x128xf32> to vector<16x128xf32>
    %101 = arith.mulf %98, %100 : vector<16x128xf32>
    %cst_28 = arith.constant dense<0.000000e+00> : vector<128xf32>
    %102 = vector.multi_reduction <add>, %101, %cst_28 [0] : vector<16x128xf32> to vector<128xf32>
    %103 = vector.shape_cast %102 : vector<128xf32> to vector<1x128xf32>
    %104 = vector.extract_strided_slice %31 {offsets = [6, 0, 0], sizes = [1, 16, 128], strides = [1, 1, 1]} : vector<8x16x128xf32> to vector<1x16x128xf32>
    %105 = vector.shape_cast %104 : vector<1x16x128xf32> to vector<16x128xf32>
    %106 = arith.mulf %105, %98 : vector<16x128xf32>
    %107 = vector.extract_strided_slice %35 {offsets = [6, 0, 0], sizes = [1, 16, 128], strides = [1, 1, 1]} : vector<8x16x128xf32> to vector<1x16x128xf32>
    %108 = vector.shape_cast %107 : vector<1x16x128xf32> to vector<16x128xf32>
    %109 = arith.addf %106, %108 : vector<16x128xf32>
    %110 = vector.extract_strided_slice %16 {offsets = [6, 0, 0], sizes = [1, 16, 128], strides = [1, 1, 1]} : vector<8x16x128xf32> to vector<1x16x128xf32>
    %111 = vector.shape_cast %110 : vector<1x16x128xf32> to vector<16x128xf32>
    %112 = arith.mulf %109, %111 : vector<16x128xf32>
    %cst_29 = arith.constant dense<0.000000e+00> : vector<128xf32>
    %113 = vector.multi_reduction <add>, %112, %cst_29 [0] : vector<16x128xf32> to vector<128xf32>
    %114 = vector.shape_cast %113 : vector<128xf32> to vector<1x128xf32>
    %115 = vector.extract_strided_slice %31 {offsets = [7, 0, 0], sizes = [1, 16, 128], strides = [1, 1, 1]} : vector<8x16x128xf32> to vector<1x16x128xf32>
    %116 = vector.shape_cast %115 : vector<1x16x128xf32> to vector<16x128xf32>
    %117 = arith.mulf %116, %109 : vector<16x128xf32>
    %118 = vector.extract_strided_slice %35 {offsets = [7, 0, 0], sizes = [1, 16, 128], strides = [1, 1, 1]} : vector<8x16x128xf32> to vector<1x16x128xf32>
    %119 = vector.shape_cast %118 : vector<1x16x128xf32> to vector<16x128xf32>
    %120 = arith.addf %117, %119 : vector<16x128xf32>
    %121 = vector.extract_strided_slice %16 {offsets = [7, 0, 0], sizes = [1, 16, 128], strides = [1, 1, 1]} : vector<8x16x128xf32> to vector<1x16x128xf32>
    %122 = vector.shape_cast %121 : vector<1x16x128xf32> to vector<16x128xf32>
    %123 = arith.mulf %120, %122 : vector<16x128xf32>
    %cst_30 = arith.constant dense<0.000000e+00> : vector<128xf32>
    %124 = vector.multi_reduction <add>, %123, %cst_30 [0] : vector<16x128xf32> to vector<128xf32>
    %125 = vector.shape_cast %124 : vector<128xf32> to vector<1x128xf32>
    %126 = tpu.concatenate %48, %59, %70, %81, %92, %103, %114, %125 in 0 : vector<1x128xf32>, vector<1x128xf32>, vector<1x128xf32>, vector<1x128xf32>, vector<1x128xf32>, vector<1x128xf32>, vector<1x128xf32>, vector<1x128xf32> -> vector<8x128xf32>
    %127 = arith.addf %126, %37 : vector<8x128xf32>
    %c0_31 = arith.constant 0 : index
    %c0_32 = arith.constant 0 : index
    %c0_33 = arith.constant 0 : index
    %128 = vector.load %arg9[%c0_31, %c0_32, %c0_33] : memref<1x64x128xf32, #tpu.memory_space<vmem>>, vector<1x8x128xf32>
    %129 = vector.shape_cast %128 : vector<1x8x128xf32> to vector<8x128xf32>
    %130 = vector.shape_cast %127 : vector<8x128xf32> to vector<1x8x128xf32>
    tpu.vector_store %arg9[%c0_31, %c0_32, %c0_33], %130 {strides = array<i32>} : memref<1x64x128xf32, #tpu.memory_space<vmem>>, vector<1x8x128xf32>,
    %c0_34 = arith.constant 0 : index
    %c8 = arith.constant 8 : index
    %c0_35 = arith.constant 0 : index
    %131 = vector.load %arg2[%c0_34, %c8, %c0_35] : memref<1x64x128xf32, #tpu.memory_space<vmem>>, vector<1x8x128xf32>
    %132 = vector.shape_cast %131 : vector<1x8x128xf32> to vector<8x128xf32>
    %c0_36 = arith.constant 0 : index
    %c8_37 = arith.constant 8 : index
    %c0_38 = arith.constant 0 : index
    %133 = vector.load %arg3[%c0_36, %c8_37, %c0_38] : memref<1x64x128xf32, #tpu.memory_space<vmem>>, vector<1x8x128xf32>
    %134 = vector.shape_cast %133 : vector<1x8x128xf32> to vector<8x128xf32>
    %c0_39 = arith.constant 0 : index
    %c8_40 = arith.constant 8 : index
    %c0_41 = arith.constant 0 : index
    %c0_42 = arith.constant 0 : index
    %135 = vector.load %arg4[%c0_39, %c8_40, %c0_41, %c0_42] : memref<1x64x16x128xbf16, #tpu.memory_space<vmem>>, vector<1x8x16x128xbf16>
    %136 = vector.shape_cast %135 : vector<1x8x16x128xbf16> to vector<8x16x128xbf16>
    %137 = arith.extf %136 : vector<8x16x128xbf16> to vector<8x16x128xf32>
    %c0_43 = arith.constant 0 : index
    %c8_44 = arith.constant 8 : index
    %c0_45 = arith.constant 0 : index
    %c0_46 = arith.constant 0 : index
    %138 = vector.load %arg5[%c0_43, %c8_44, %c0_45, %c0_46] : memref<1x64x16x128xbf16, #tpu.memory_space<vmem>>, vector<1x8x16x128xbf16>
    %139 = vector.shape_cast %138 : vector<1x8x16x128xbf16> to vector<8x16x128xbf16>
    %140 = arith.extf %139 : vector<8x16x128xbf16> to vector<8x16x128xf32>
    %141 = vector.broadcast %5 : vector<1x128xf32> to vector<8x128xf32>
    %142 = arith.addf %134, %141 : vector<8x128xf32>
    %cst_47 = arith.constant 2.000000e+01 : f32
    %143 = vector.broadcast %cst_47 : f32 to vector<8x128xf32>
    %144 = arith.cmpf ogt, %142, %143 : vector<8x128xf32>
    %cst_48 = arith.constant 2.000000e+01 : f32
    %145 = vector.broadcast %cst_48 : f32 to vector<8x128xf32>
    %146 = arith.minimumf %142, %145 : vector<8x128xf32>
    %147 = math.exp %146 : vector<8x128xf32>
    %148 = math.log1p %147 : vector<8x128xf32>
    %149 = arith.select %144, %142, %148 : vector<8x128xi1>, vector<8x128xf32>
    %150 = vector.shape_cast %149 : vector<8x128xf32> to vector<8x1x128xf32>
    %151 = vector.shape_cast %3 : vector<16x128xf32> to vector<1x16x128xf32>
    %152 = vector.broadcast %150 : vector<8x1x128xf32> to vector<8x16x128xf32>
    %153 = vector.broadcast %151 : vector<1x16x128xf32> to vector<8x16x128xf32>
    %154 = arith.mulf %152, %153 : vector<8x16x128xf32>
    %155 = math.exp %154 : vector<8x16x128xf32>
    %156 = arith.mulf %149, %132 : vector<8x128xf32>
    %157 = vector.shape_cast %156 : vector<8x128xf32> to vector<8x1x128xf32>
    %158 = vector.broadcast %157 : vector<8x1x128xf32> to vector<8x16x128xf32>
    %159 = arith.mulf %158, %137 : vector<8x16x128xf32>
    %160 = vector.broadcast %4 : vector<1x128xf32> to vector<8x128xf32>
    %161 = arith.mulf %160, %132 : vector<8x128xf32>
    %162 = vector.extract_strided_slice %155 {offsets = [0, 0, 0], sizes = [1, 16, 128], strides = [1, 1, 1]} : vector<8x16x128xf32> to vector<1x16x128xf32>
    %163 = vector.shape_cast %162 : vector<1x16x128xf32> to vector<16x128xf32>
    %164 = arith.mulf %163, %120 : vector<16x128xf32>
    %165 = vector.extract_strided_slice %159 {offsets = [0, 0, 0], sizes = [1, 16, 128], strides = [1, 1, 1]} : vector<8x16x128xf32> to vector<1x16x128xf32>
    %166 = vector.shape_cast %165 : vector<1x16x128xf32> to vector<16x128xf32>
    %167 = arith.addf %164, %166 : vector<16x128xf32>
    %168 = vector.extract_strided_slice %140 {offsets = [0, 0, 0], sizes = [1, 16, 128], strides = [1, 1, 1]} : vector<8x16x128xf32> to vector<1x16x128xf32>
    %169 = vector.shape_cast %168 : vector<1x16x128xf32> to vector<16x128xf32>
    %170 = arith.mulf %167, %169 : vector<16x128xf32>
    %cst_49 = arith.constant dense<0.000000e+00> : vector<128xf32>
    %171 = vector.multi_reduction <add>, %170, %cst_49 [0] : vector<16x128xf32> to vector<128xf32>
    %172 = vector.shape_cast %171 : vector<128xf32> to vector<1x128xf32>
    %173 = vector.extract_strided_slice %155 {offsets = [1, 0, 0], sizes = [1, 16, 128], strides = [1, 1, 1]} : vector<8x16x128xf32> to vector<1x16x128xf32>
    %174 = vector.shape_cast %173 : vector<1x16x128xf32> to vector<16x128xf32>
    %175 = arith.mulf %174, %167 : vector<16x128xf32>
    %176 = vector.extract_strided_slice %159 {offsets = [1, 0, 0], sizes = [1, 16, 128], strides = [1, 1, 1]} : vector<8x16x128xf32> to vector<1x16x128xf32>
    %177 = vector.shape_cast %176 : vector<1x16x128xf32> to vector<16x128xf32>
    %178 = arith.addf %175, %177 : vector<16x128xf32>
    %179 = vector.extract_strided_slice %140 {offsets = [1, 0, 0], sizes = [1, 16, 128], strides = [1, 1, 1]} : vector<8x16x128xf32> to vector<1x16x128xf32>
    %180 = vector.shape_cast %179 : vector<1x16x128xf32> to vector<16x128xf32>
    %181 = arith.mulf %178, %180 : vector<16x128xf32>
    %cst_50 = arith.constant dense<0.000000e+00> : vector<128xf32>
    %182 = vector.multi_reduction <add>, %181, %cst_50 [0] : vector<16x128xf32> to vector<128xf32>
    %183 = vector.shape_cast %182 : vector<128xf32> to vector<1x128xf32>
    %184 = vector.extract_strided_slice %155 {offsets = [2, 0, 0], sizes = [1, 16, 128], strides = [1, 1, 1]} : vector<8x16x128xf32> to vector<1x16x128xf32>
    %185 = vector.shape_cast %184 : vector<1x16x128xf32> to vector<16x128xf32>
    %186 = arith.mulf %185, %178 : vector<16x128xf32>
    %187 = vector.extract_strided_slice %159 {offsets = [2, 0, 0], sizes = [1, 16, 128], strides = [1, 1, 1]} : vector<8x16x128xf32> to vector<1x16x128xf32>
    %188 = vector.shape_cast %187 : vector<1x16x128xf32> to vector<16x128xf32>
    %189 = arith.addf %186, %188 : vector<16x128xf32>
    %190 = vector.extract_strided_slice %140 {offsets = [2, 0, 0], sizes = [1, 16, 128], strides = [1, 1, 1]} : vector<8x16x128xf32> to vector<1x16x128xf32>
    %191 = vector.shape_cast %190 : vector<1x16x128xf32> to vector<16x128xf32>
    %192 = arith.mulf %189, %191 : vector<16x128xf32>
    %cst_51 = arith.constant dense<0.000000e+00> : vector<128xf32>
    %193 = vector.multi_reduction <add>, %192, %cst_51 [0] : vector<16x128xf32> to vector<128xf32>
    %194 = vector.shape_cast %193 : vector<128xf32> to vector<1x128xf32>
    %195 = vector.extract_strided_slice %155 {offsets = [3, 0, 0], sizes = [1, 16, 128], strides = [1, 1, 1]} : vector<8x16x128xf32> to vector<1x16x128xf32>
    %196 = vector.shape_cast %195 : vector<1x16x128xf32> to vector<16x128xf32>
    %197 = arith.mulf %196, %189 : vector<16x128xf32>
    %198 = vector.extract_strided_slice %159 {offsets = [3, 0, 0], sizes = [1, 16, 128], strides = [1, 1, 1]} : vector<8x16x128xf32> to vector<1x16x128xf32>
    %199 = vector.shape_cast %198 : vector<1x16x128xf32> to vector<16x128xf32>
    %200 = arith.addf %197, %199 : vector<16x128xf32>
    %201 = vector.extract_strided_slice %140 {offsets = [3, 0, 0], sizes = [1, 16, 128], strides = [1, 1, 1]} : vector<8x16x128xf32> to vector<1x16x128xf32>
    %202 = vector.shape_cast %201 : vector<1x16x128xf32> to vector<16x128xf32>
    %203 = arith.mulf %200, %202 : vector<16x128xf32>
    %cst_52 = arith.constant dense<0.000000e+00> : vector<128xf32>
    %204 = vector.multi_reduction <add>, %203, %cst_52 [0] : vector<16x128xf32> to vector<128xf32>
    %205 = vector.shape_cast %204 : vector<128xf32> to vector<1x128xf32>
    %206 = vector.extract_strided_slice %155 {offsets = [4, 0, 0], sizes = [1, 16, 128], strides = [1, 1, 1]} : vector<8x16x128xf32> to vector<1x16x128xf32>
    %207 = vector.shape_cast %206 : vector<1x16x128xf32> to vector<16x128xf32>
    %208 = arith.mulf %207, %200 : vector<16x128xf32>
    %209 = vector.extract_strided_slice %159 {offsets = [4, 0, 0], sizes = [1, 16, 128], strides = [1, 1, 1]} : vector<8x16x128xf32> to vector<1x16x128xf32>
    %210 = vector.shape_cast %209 : vector<1x16x128xf32> to vector<16x128xf32>
    %211 = arith.addf %208, %210 : vector<16x128xf32>
    %212 = vector.extract_strided_slice %140 {offsets = [4, 0, 0], sizes = [1, 16, 128], strides = [1, 1, 1]} : vector<8x16x128xf32> to vector<1x16x128xf32>
    %213 = vector.shape_cast %212 : vector<1x16x128xf32> to vector<16x128xf32>
    %214 = arith.mulf %211, %213 : vector<16x128xf32>
    %cst_53 = arith.constant dense<0.000000e+00> : vector<128xf32>
    %215 = vector.multi_reduction <add>, %214, %cst_53 [0] : vector<16x128xf32> to vector<128xf32>
    %216 = vector.shape_cast %215 : vector<128xf32> to vector<1x128xf32>
    %217 = vector.extract_strided_slice %155 {offsets = [5, 0, 0], sizes = [1, 16, 128], strides = [1, 1, 1]} : vector<8x16x128xf32> to vector<1x16x128xf32>
    %218 = vector.shape_cast %217 : vector<1x16x128xf32> to vector<16x128xf32>
    %219 = arith.mulf %218, %211 : vector<16x128xf32>
    %220 = vector.extract_strided_slice %159 {offsets = [5, 0, 0], sizes = [1, 16, 128], strides = [1, 1, 1]} : vector<8x16x128xf32> to vector<1x16x128xf32>
    %221 = vector.shape_cast %220 : vector<1x16x128xf32> to vector<16x128xf32>
    %222 = arith.addf %219, %221 : vector<16x128xf32>
    %223 = vector.extract_strided_slice %140 {offsets = [5, 0, 0], sizes = [1, 16, 128], strides = [1, 1, 1]} : vector<8x16x128xf32> to vector<1x16x128xf32>
    %224 = vector.shape_cast %223 : vector<1x16x128xf32> to vector<16x128xf32>
    %225 = arith.mulf %222, %224 : vector<16x128xf32>
    %cst_54 = arith.constant dense<0.000000e+00> : vector<128xf32>
    %226 = vector.multi_reduction <add>, %225, %cst_54 [0] : vector<16x128xf32> to vector<128xf32>
    %227 = vector.shape_cast %226 : vector<128xf32> to vector<1x128xf32>
    %228 = vector.extract_strided_slice %155 {offsets = [6, 0, 0], sizes = [1, 16, 128], strides = [1, 1, 1]} : vector<8x16x128xf32> to vector<1x16x128xf32>
    %229 = vector.shape_cast %228 : vector<1x16x128xf32> to vector<16x128xf32>
    %230 = arith.mulf %229, %222 : vector<16x128xf32>
    %231 = vector.extract_strided_slice %159 {offsets = [6, 0, 0], sizes = [1, 16, 128], strides = [1, 1, 1]} : vector<8x16x128xf32> to vector<1x16x128xf32>
    %232 = vector.shape_cast %231 : vector<1x16x128xf32> to vector<16x128xf32>
    %233 = arith.addf %230, %232 : vector<16x128xf32>
    %234 = vector.extract_strided_slice %140 {offsets = [6, 0, 0], sizes = [1, 16, 128], strides = [1, 1, 1]} : vector<8x16x128xf32> to vector<1x16x128xf32>
    %235 = vector.shape_cast %234 : vector<1x16x128xf32> to vector<16x128xf32>
    %236 = arith.mulf %233, %235 : vector<16x128xf32>
    %cst_55 = arith.constant dense<0.000000e+00> : vector<128xf32>
    %237 = vector.multi_reduction <add>, %236, %cst_55 [0] : vector<16x128xf32> to vector<128xf32>
    %238 = vector.shape_cast %237 : vector<128xf32> to vector<1x128xf32>
    %239 = vector.extract_strided_slice %155 {offsets = [7, 0, 0], sizes = [1, 16, 128], strides = [1, 1, 1]} : vector<8x16x128xf32> to vector<1x16x128xf32>
    %240 = vector.shape_cast %239 : vector<1x16x128xf32> to vector<16x128xf32>
    %241 = arith.mulf %240, %233 : vector<16x128xf32>
    %242 = vector.extract_strided_slice %159 {offsets = [7, 0, 0], sizes = [1, 16, 128], strides = [1, 1, 1]} : vector<8x16x128xf32> to vector<1x16x128xf32>
    %243 = vector.shape_cast %242 : vector<1x16x128xf32> to vector<16x128xf32>
    %244 = arith.addf %241, %243 : vector<16x128xf32>
    %245 = vector.extract_strided_slice %140 {offsets = [7, 0, 0], sizes = [1, 16, 128], strides = [1, 1, 1]} : vector<8x16x128xf32> to vector<1x16x128xf32>
    %246 = vector.shape_cast %245 : vector<1x16x128xf32> to vector<16x128xf32>
    %247 = arith.mulf %244, %246 : vector<16x128xf32>
    %cst_56 = arith.constant dense<0.000000e+00> : vector<128xf32>
    %248 = vector.multi_reduction <add>, %247, %cst_56 [0] : vector<16x128xf32> to vector<128xf32>
    %249 = vector.shape_cast %248 : vector<128xf32> to vector<1x128xf32>
    %250 = tpu.concatenate %172, %183, %194, %205, %216, %227, %238, %249 in 0 : vector<1x128xf32>, vector<1x128xf32>, vector<1x128xf32>, vector<1x128xf32>, vector<1x128xf32>, vector<1x128xf32>, vector<1x128xf32>, vector<1x128xf32> -> vector<8x128xf32>
    %251 = arith.addf %250, %161 : vector<8x128xf32>
    %c0_57 = arith.constant 0 : index
    %c8_58 = arith.constant 8 : index
    %c0_59 = arith.constant 0 : index
    %252 = vector.load %arg9[%c0_57, %c8_58, %c0_59] : memref<1x64x128xf32, #tpu.memory_space<vmem>>, vector<1x8x128xf32>
    %253 = vector.shape_cast %252 : vector<1x8x128xf32> to vector<8x128xf32>
    %254 = vector.shape_cast %251 : vector<8x128xf32> to vector<1x8x128xf32>
    tpu.vector_store %arg9[%c0_57, %c8_58, %c0_59], %254 {strides = array<i32>} : memref<1x64x128xf32, #tpu.memory_space<vmem>>, vector<1x8x128xf32>,
    %c0_60 = arith.constant 0 : index
    %c16 = arith.constant 16 : index
    %c0_61 = arith.constant 0 : index
    %255 = vector.load %arg2[%c0_60, %c16, %c0_61] : memref<1x64x128xf32, #tpu.memory_space<vmem>>, vector<1x8x128xf32>
    %256 = vector.shape_cast %255 : vector<1x8x128xf32> to vector<8x128xf32>
    %c0_62 = arith.constant 0 : index
    %c16_63 = arith.constant 16 : index
    %c0_64 = arith.constant 0 : index
    %257 = vector.load %arg3[%c0_62, %c16_63, %c0_64] : memref<1x64x128xf32, #tpu.memory_space<vmem>>, vector<1x8x128xf32>
    %258 = vector.shape_cast %257 : vector<1x8x128xf32> to vector<8x128xf32>
    %c0_65 = arith.constant 0 : index
    %c16_66 = arith.constant 16 : index
    %c0_67 = arith.constant 0 : index
    %c0_68 = arith.constant 0 : index
    %259 = vector.load %arg4[%c0_65, %c16_66, %c0_67, %c0_68] : memref<1x64x16x128xbf16, #tpu.memory_space<vmem>>, vector<1x8x16x128xbf16>
    %260 = vector.shape_cast %259 : vector<1x8x16x128xbf16> to vector<8x16x128xbf16>
    %261 = arith.extf %260 : vector<8x16x128xbf16> to vector<8x16x128xf32>
    %c0_69 = arith.constant 0 : index
    %c16_70 = arith.constant 16 : index
    %c0_71 = arith.constant 0 : index
    %c0_72 = arith.constant 0 : index
    %262 = vector.load %arg5[%c0_69, %c16_70, %c0_71, %c0_72] : memref<1x64x16x128xbf16, #tpu.memory_space<vmem>>, vector<1x8x16x128xbf16>
    %263 = vector.shape_cast %262 : vector<1x8x16x128xbf16> to vector<8x16x128xbf16>
    %264 = arith.extf %263 : vector<8x16x128xbf16> to vector<8x16x128xf32>
    %265 = vector.broadcast %5 : vector<1x128xf32> to vector<8x128xf32>
    %266 = arith.addf %258, %265 : vector<8x128xf32>
    %cst_73 = arith.constant 2.000000e+01 : f32
    %267 = vector.broadcast %cst_73 : f32 to vector<8x128xf32>
    %268 = arith.cmpf ogt, %266, %267 : vector<8x128xf32>
    %cst_74 = arith.constant 2.000000e+01 : f32
    %269 = vector.broadcast %cst_74 : f32 to vector<8x128xf32>
    %270 = arith.minimumf %266, %269 : vector<8x128xf32>
    %271 = math.exp %270 : vector<8x128xf32>
    %272 = math.log1p %271 : vector<8x128xf32>
    %273 = arith.select %268, %266, %272 : vector<8x128xi1>, vector<8x128xf32>
    %274 = vector.shape_cast %273 : vector<8x128xf32> to vector<8x1x128xf32>
    %275 = vector.shape_cast %3 : vector<16x128xf32> to vector<1x16x128xf32>
    %276 = vector.broadcast %274 : vector<8x1x128xf32> to vector<8x16x128xf32>
    %277 = vector.broadcast %275 : vector<1x16x128xf32> to vector<8x16x128xf32>
    %278 = arith.mulf %276, %277 : vector<8x16x128xf32>
    %279 = math.exp %278 : vector<8x16x128xf32>
    %280 = arith.mulf %273, %256 : vector<8x128xf32>
    %281 = vector.shape_cast %280 : vector<8x128xf32> to vector<8x1x128xf32>
    %282 = vector.broadcast %281 : vector<8x1x128xf32> to vector<8x16x128xf32>
    %283 = arith.mulf %282, %261 : vector<8x16x128xf32>
    %284 = vector.broadcast %4 : vector<1x128xf32> to vector<8x128xf32>
    %285 = arith.mulf %284, %256 : vector<8x128xf32>
    %286 = vector.extract_strided_slice %279 {offsets = [0, 0, 0], sizes = [1, 16, 128], strides = [1, 1, 1]} : vector<8x16x128xf32> to vector<1x16x128xf32>
    %287 = vector.shape_cast %286 : vector<1x16x128xf32> to vector<16x128xf32>
    %288 = arith.mulf %287, %244 : vector<16x128xf32>
    %289 = vector.extract_strided_slice %283 {offsets = [0, 0, 0], sizes = [1, 16, 128], strides = [1, 1, 1]} : vector<8x16x128xf32> to vector<1x16x128xf32>
    %290 = vector.shape_cast %289 : vector<1x16x128xf32> to vector<16x128xf32>
    %291 = arith.addf %288, %290 : vector<16x128xf32>
    %292 = vector.extract_strided_slice %264 {offsets = [0, 0, 0], sizes = [1, 16, 128], strides = [1, 1, 1]} : vector<8x16x128xf32> to vector<1x16x128xf32>
    %293 = vector.shape_cast %292 : vector<1x16x128xf32> to vector<16x128xf32>
    %294 = arith.mulf %291, %293 : vector<16x128xf32>
    %cst_75 = arith.constant dense<0.000000e+00> : vector<128xf32>
    %295 = vector.multi_reduction <add>, %294, %cst_75 [0] : vector<16x128xf32> to vector<128xf32>
    %296 = vector.shape_cast %295 : vector<128xf32> to vector<1x128xf32>
    %297 = vector.extract_strided_slice %279 {offsets = [1, 0, 0], sizes = [1, 16, 128], strides = [1, 1, 1]} : vector<8x16x128xf32> to vector<1x16x128xf32>
    %298 = vector.shape_cast %297 : vector<1x16x128xf32> to vector<16x128xf32>
    %299 = arith.mulf %298, %291 : vector<16x128xf32>
    %300 = vector.extract_strided_slice %283 {offsets = [1, 0, 0], sizes = [1, 16, 128], strides = [1, 1, 1]} : vector<8x16x128xf32> to vector<1x16x128xf32>
    %301 = vector.shape_cast %300 : vector<1x16x128xf32> to vector<16x128xf32>
    %302 = arith.addf %299, %301 : vector<16x128xf32>
    %303 = vector.extract_strided_slice %264 {offsets = [1, 0, 0], sizes = [1, 16, 128], strides = [1, 1, 1]} : vector<8x16x128xf32> to vector<1x16x128xf32>
    %304 = vector.shape_cast %303 : vector<1x16x128xf32> to vector<16x128xf32>
    %305 = arith.mulf %302, %304 : vector<16x128xf32>
    %cst_76 = arith.constant dense<0.000000e+00> : vector<128xf32>
    %306 = vector.multi_reduction <add>, %305, %cst_76 [0] : vector<16x128xf32> to vector<128xf32>
    %307 = vector.shape_cast %306 : vector<128xf32> to vector<1x128xf32>
    %308 = vector.extract_strided_slice %279 {offsets = [2, 0, 0], sizes = [1, 16, 128], strides = [1, 1, 1]} : vector<8x16x128xf32> to vector<1x16x128xf32>
    %309 = vector.shape_cast %308 : vector<1x16x128xf32> to vector<16x128xf32>
    %310 = arith.mulf %309, %302 : vector<16x128xf32>
    %311 = vector.extract_strided_slice %283 {offsets = [2, 0, 0], sizes = [1, 16, 128], strides = [1, 1, 1]} : vector<8x16x128xf32> to vector<1x16x128xf32>
    %312 = vector.shape_cast %311 : vector<1x16x128xf32> to vector<16x128xf32>
    %313 = arith.addf %310, %312 : vector<16x128xf32>
    %314 = vector.extract_strided_slice %264 {offsets = [2, 0, 0], sizes = [1, 16, 128], strides = [1, 1, 1]} : vector<8x16x128xf32> to vector<1x16x128xf32>
    %315 = vector.shape_cast %314 : vector<1x16x128xf32> to vector<16x128xf32>
    %316 = arith.mulf %313, %315 : vector<16x128xf32>
    %cst_77 = arith.constant dense<0.000000e+00> : vector<128xf32>
    %317 = vector.multi_reduction <add>, %316, %cst_77 [0] : vector<16x128xf32> to vector<128xf32>
    %318 = vector.shape_cast %317 : vector<128xf32> to vector<1x128xf32>
    %319 = vector.extract_strided_slice %279 {offsets = [3, 0, 0], sizes = [1, 16, 128], strides = [1, 1, 1]} : vector<8x16x128xf32> to vector<1x16x128xf32>
    %320 = vector.shape_cast %319 : vector<1x16x128xf32> to vector<16x128xf32>
    %321 = arith.mulf %320, %313 : vector<16x128xf32>
    %322 = vector.extract_strided_slice %283 {offsets = [3, 0, 0], sizes = [1, 16, 128], strides = [1, 1, 1]} : vector<8x16x128xf32> to vector<1x16x128xf32>
    %323 = vector.shape_cast %322 : vector<1x16x128xf32> to vector<16x128xf32>
    %324 = arith.addf %321, %323 : vector<16x128xf32>
    %325 = vector.extract_strided_slice %264 {offsets = [3, 0, 0], sizes = [1, 16, 128], strides = [1, 1, 1]} : vector<8x16x128xf32> to vector<1x16x128xf32>
    %326 = vector.shape_cast %325 : vector<1x16x128xf32> to vector<16x128xf32>
    %327 = arith.mulf %324, %326 : vector<16x128xf32>
    %cst_78 = arith.constant dense<0.000000e+00> : vector<128xf32>
    %328 = vector.multi_reduction <add>, %327, %cst_78 [0] : vector<16x128xf32> to vector<128xf32>
    %329 = vector.shape_cast %328 : vector<128xf32> to vector<1x128xf32>
    %330 = vector.extract_strided_slice %279 {offsets = [4, 0, 0], sizes = [1, 16, 128], strides = [1, 1, 1]} : vector<8x16x128xf32> to vector<1x16x128xf32>
    %331 = vector.shape_cast %330 : vector<1x16x128xf32> to vector<16x128xf32>
    %332 = arith.mulf %331, %324 : vector<16x128xf32>
    %333 = vector.extract_strided_slice %283 {offsets = [4, 0, 0], sizes = [1, 16, 128], strides = [1, 1, 1]} : vector<8x16x128xf32> to vector<1x16x128xf32>
    %334 = vector.shape_cast %333 : vector<1x16x128xf32> to vector<16x128xf32>
    %335 = arith.addf %332, %334 : vector<16x128xf32>
    %336 = vector.extract_strided_slice %264 {offsets = [4, 0, 0], sizes = [1, 16, 128], strides = [1, 1, 1]} : vector<8x16x128xf32> to vector<1x16x128xf32>
    %337 = vector.shape_cast %336 : vector<1x16x128xf32> to vector<16x128xf32>
    %338 = arith.mulf %335, %337 : vector<16x128xf32>
    %cst_79 = arith.constant dense<0.000000e+00> : vector<128xf32>
    %339 = vector.multi_reduction <add>, %338, %cst_79 [0] : vector<16x128xf32> to vector<128xf32>
    %340 = vector.shape_cast %339 : vector<128xf32> to vector<1x128xf32>
    %341 = vector.extract_strided_slice %279 {offsets = [5, 0, 0], sizes = [1, 16, 128], strides = [1, 1, 1]} : vector<8x16x128xf32> to vector<1x16x128xf32>
    %342 = vector.shape_cast %341 : vector<1x16x128xf32> to vector<16x128xf32>
    %343 = arith.mulf %342, %335 : vector<16x128xf32>
    %344 = vector.extract_strided_slice %283 {offsets = [5, 0, 0], sizes = [1, 16, 128], strides = [1, 1, 1]} : vector<8x16x128xf32> to vector<1x16x128xf32>
    %345 = vector.shape_cast %344 : vector<1x16x128xf32> to vector<16x128xf32>
    %346 = arith.addf %343, %345 : vector<16x128xf32>
    %347 = vector.extract_strided_slice %264 {offsets = [5, 0, 0], sizes = [1, 16, 128], strides = [1, 1, 1]} : vector<8x16x128xf32> to vector<1x16x128xf32>
    %348 = vector.shape_cast %347 : vector<1x16x128xf32> to vector<16x128xf32>
    %349 = arith.mulf %346, %348 : vector<16x128xf32>
    %cst_80 = arith.constant dense<0.000000e+00> : vector<128xf32>
    %350 = vector.multi_reduction <add>, %349, %cst_80 [0] : vector<16x128xf32> to vector<128xf32>
    %351 = vector.shape_cast %350 : vector<128xf32> to vector<1x128xf32>
    %352 = vector.extract_strided_slice %279 {offsets = [6, 0, 0], sizes = [1, 16, 128], strides = [1, 1, 1]} : vector<8x16x128xf32> to vector<1x16x128xf32>
    %353 = vector.shape_cast %352 : vector<1x16x128xf32> to vector<16x128xf32>
    %354 = arith.mulf %353, %346 : vector<16x128xf32>
    %355 = vector.extract_strided_slice %283 {offsets = [6, 0, 0], sizes = [1, 16, 128], strides = [1, 1, 1]} : vector<8x16x128xf32> to vector<1x16x128xf32>
    %356 = vector.shape_cast %355 : vector<1x16x128xf32> to vector<16x128xf32>
    %357 = arith.addf %354, %356 : vector<16x128xf32>
    %358 = vector.extract_strided_slice %264 {offsets = [6, 0, 0], sizes = [1, 16, 128], strides = [1, 1, 1]} : vector<8x16x128xf32> to vector<1x16x128xf32>
    %359 = vector.shape_cast %358 : vector<1x16x128xf32> to vector<16x128xf32>
    %360 = arith.mulf %357, %359 : vector<16x128xf32>
    %cst_81 = arith.constant dense<0.000000e+00> : vector<128xf32>
    %361 = vector.multi_reduction <add>, %360, %cst_81 [0] : vector<16x128xf32> to vector<128xf32>
    %362 = vector.shape_cast %361 : vector<128xf32> to vector<1x128xf32>
    %363 = vector.extract_strided_slice %279 {offsets = [7, 0, 0], sizes = [1, 16, 128], strides = [1, 1, 1]} : vector<8x16x128xf32> to vector<1x16x128xf32>
    %364 = vector.shape_cast %363 : vector<1x16x128xf32> to vector<16x128xf32>
    %365 = arith.mulf %364, %357 : vector<16x128xf32>
    %366 = vector.extract_strided_slice %283 {offsets = [7, 0, 0], sizes = [1, 16, 128], strides = [1, 1, 1]} : vector<8x16x128xf32> to vector<1x16x128xf32>
    %367 = vector.shape_cast %366 : vector<1x16x128xf32> to vector<16x128xf32>
    %368 = arith.addf %365, %367 : vector<16x128xf32>
    %369 = vector.extract_strided_slice %264 {offsets = [7, 0, 0], sizes = [1, 16, 128], strides = [1, 1, 1]} : vector<8x16x128xf32> to vector<1x16x128xf32>
    %370 = vector.shape_cast %369 : vector<1x16x128xf32> to vector<16x128xf32>
    %371 = arith.mulf %368, %370 : vector<16x128xf32>
    %cst_82 = arith.constant dense<0.000000e+00> : vector<128xf32>
    %372 = vector.multi_reduction <add>, %371, %cst_82 [0] : vector<16x128xf32> to vector<128xf32>
    %373 = vector.shape_cast %372 : vector<128xf32> to vector<1x128xf32>
    %374 = tpu.concatenate %296, %307, %318, %329, %340, %351, %362, %373 in 0 : vector<1x128xf32>, vector<1x128xf32>, vector<1x128xf32>, vector<1x128xf32>, vector<1x128xf32>, vector<1x128xf32>, vector<1x128xf32>, vector<1x128xf32> -> vector<8x128xf32>
    %375 = arith.addf %374, %285 : vector<8x128xf32>
    %c0_83 = arith.constant 0 : index
    %c16_84 = arith.constant 16 : index
    %c0_85 = arith.constant 0 : index
    %376 = vector.load %arg9[%c0_83, %c16_84, %c0_85] : memref<1x64x128xf32, #tpu.memory_space<vmem>>, vector<1x8x128xf32>
    %377 = vector.shape_cast %376 : vector<1x8x128xf32> to vector<8x128xf32>
    %378 = vector.shape_cast %375 : vector<8x128xf32> to vector<1x8x128xf32>
    tpu.vector_store %arg9[%c0_83, %c16_84, %c0_85], %378 {strides = array<i32>} : memref<1x64x128xf32, #tpu.memory_space<vmem>>, vector<1x8x128xf32>,
    %c0_86 = arith.constant 0 : index
    %c24 = arith.constant 24 : index
    %c0_87 = arith.constant 0 : index
    %379 = vector.load %arg2[%c0_86, %c24, %c0_87] : memref<1x64x128xf32, #tpu.memory_space<vmem>>, vector<1x8x128xf32>
    %380 = vector.shape_cast %379 : vector<1x8x128xf32> to vector<8x128xf32>
    %c0_88 = arith.constant 0 : index
    %c24_89 = arith.constant 24 : index
    %c0_90 = arith.constant 0 : index
    %381 = vector.load %arg3[%c0_88, %c24_89, %c0_90] : memref<1x64x128xf32, #tpu.memory_space<vmem>>, vector<1x8x128xf32>
    %382 = vector.shape_cast %381 : vector<1x8x128xf32> to vector<8x128xf32>
    %c0_91 = arith.constant 0 : index
    %c24_92 = arith.constant 24 : index
    %c0_93 = arith.constant 0 : index
    %c0_94 = arith.constant 0 : index
    %383 = vector.load %arg4[%c0_91, %c24_92, %c0_93, %c0_94] : memref<1x64x16x128xbf16, #tpu.memory_space<vmem>>, vector<1x8x16x128xbf16>
    %384 = vector.shape_cast %383 : vector<1x8x16x128xbf16> to vector<8x16x128xbf16>
    %385 = arith.extf %384 : vector<8x16x128xbf16> to vector<8x16x128xf32>
    %c0_95 = arith.constant 0 : index
    %c24_96 = arith.constant 24 : index
    %c0_97 = arith.constant 0 : index
    %c0_98 = arith.constant 0 : index
    %386 = vector.load %arg5[%c0_95, %c24_96, %c0_97, %c0_98] : memref<1x64x16x128xbf16, #tpu.memory_space<vmem>>, vector<1x8x16x128xbf16>
    %387 = vector.shape_cast %386 : vector<1x8x16x128xbf16> to vector<8x16x128xbf16>
    %388 = arith.extf %387 : vector<8x16x128xbf16> to vector<8x16x128xf32>
    %389 = vector.broadcast %5 : vector<1x128xf32> to vector<8x128xf32>
    %390 = arith.addf %382, %389 : vector<8x128xf32>
    %cst_99 = arith.constant 2.000000e+01 : f32
    %391 = vector.broadcast %cst_99 : f32 to vector<8x128xf32>
    %392 = arith.cmpf ogt, %390, %391 : vector<8x128xf32>
    %cst_100 = arith.constant 2.000000e+01 : f32
    %393 = vector.broadcast %cst_100 : f32 to vector<8x128xf32>
    %394 = arith.minimumf %390, %393 : vector<8x128xf32>
    %395 = math.exp %394 : vector<8x128xf32>
    %396 = math.log1p %395 : vector<8x128xf32>
    %397 = arith.select %392, %390, %396 : vector<8x128xi1>, vector<8x128xf32>
    %398 = vector.shape_cast %397 : vector<8x128xf32> to vector<8x1x128xf32>
    %399 = vector.shape_cast %3 : vector<16x128xf32> to vector<1x16x128xf32>
    %400 = vector.broadcast %398 : vector<8x1x128xf32> to vector<8x16x128xf32>
    %401 = vector.broadcast %399 : vector<1x16x128xf32> to vector<8x16x128xf32>
    %402 = arith.mulf %400, %401 : vector<8x16x128xf32>
    %403 = math.exp %402 : vector<8x16x128xf32>
    %404 = arith.mulf %397, %380 : vector<8x128xf32>
    %405 = vector.shape_cast %404 : vector<8x128xf32> to vector<8x1x128xf32>
    %406 = vector.broadcast %405 : vector<8x1x128xf32> to vector<8x16x128xf32>
    %407 = arith.mulf %406, %385 : vector<8x16x128xf32>
    %408 = vector.broadcast %4 : vector<1x128xf32> to vector<8x128xf32>
    %409 = arith.mulf %408, %380 : vector<8x128xf32>
    %410 = vector.extract_strided_slice %403 {offsets = [0, 0, 0], sizes = [1, 16, 128], strides = [1, 1, 1]} : vector<8x16x128xf32> to vector<1x16x128xf32>
    %411 = vector.shape_cast %410 : vector<1x16x128xf32> to vector<16x128xf32>
    %412 = arith.mulf %411, %368 : vector<16x128xf32>
    %413 = vector.extract_strided_slice %407 {offsets = [0, 0, 0], sizes = [1, 16, 128], strides = [1, 1, 1]} : vector<8x16x128xf32> to vector<1x16x128xf32>
    %414 = vector.shape_cast %413 : vector<1x16x128xf32> to vector<16x128xf32>
    %415 = arith.addf %412, %414 : vector<16x128xf32>
    %416 = vector.extract_strided_slice %388 {offsets = [0, 0, 0], sizes = [1, 16, 128], strides = [1, 1, 1]} : vector<8x16x128xf32> to vector<1x16x128xf32>
    %417 = vector.shape_cast %416 : vector<1x16x128xf32> to vector<16x128xf32>
    %418 = arith.mulf %415, %417 : vector<16x128xf32>
    %cst_101 = arith.constant dense<0.000000e+00> : vector<128xf32>
    %419 = vector.multi_reduction <add>, %418, %cst_101 [0] : vector<16x128xf32> to vector<128xf32>
    %420 = vector.shape_cast %419 : vector<128xf32> to vector<1x128xf32>
    %421 = vector.extract_strided_slice %403 {offsets = [1, 0, 0], sizes = [1, 16, 128], strides = [1, 1, 1]} : vector<8x16x128xf32> to vector<1x16x128xf32>
    %422 = vector.shape_cast %421 : vector<1x16x128xf32> to vector<16x128xf32>
    %423 = arith.mulf %422, %415 : vector<16x128xf32>
    %424 = vector.extract_strided_slice %407 {offsets = [1, 0, 0], sizes = [1, 16, 128], strides = [1, 1, 1]} : vector<8x16x128xf32> to vector<1x16x128xf32>
    %425 = vector.shape_cast %424 : vector<1x16x128xf32> to vector<16x128xf32>
    %426 = arith.addf %423, %425 : vector<16x128xf32>
    %427 = vector.extract_strided_slice %388 {offsets = [1, 0, 0], sizes = [1, 16, 128], strides = [1, 1, 1]} : vector<8x16x128xf32> to vector<1x16x128xf32>
    %428 = vector.shape_cast %427 : vector<1x16x128xf32> to vector<16x128xf32>
    %429 = arith.mulf %426, %428 : vector<16x128xf32>
    %cst_102 = arith.constant dense<0.000000e+00> : vector<128xf32>
    %430 = vector.multi_reduction <add>, %429, %cst_102 [0] : vector<16x128xf32> to vector<128xf32>
    %431 = vector.shape_cast %430 : vector<128xf32> to vector<1x128xf32>
    %432 = vector.extract_strided_slice %403 {offsets = [2, 0, 0], sizes = [1, 16, 128], strides = [1, 1, 1]} : vector<8x16x128xf32> to vector<1x16x128xf32>
    %433 = vector.shape_cast %432 : vector<1x16x128xf32> to vector<16x128xf32>
    %434 = arith.mulf %433, %426 : vector<16x128xf32>
    %435 = vector.extract_strided_slice %407 {offsets = [2, 0, 0], sizes = [1, 16, 128], strides = [1, 1, 1]} : vector<8x16x128xf32> to vector<1x16x128xf32>
    %436 = vector.shape_cast %435 : vector<1x16x128xf32> to vector<16x128xf32>
    %437 = arith.addf %434, %436 : vector<16x128xf32>
    %438 = vector.extract_strided_slice %388 {offsets = [2, 0, 0], sizes = [1, 16, 128], strides = [1, 1, 1]} : vector<8x16x128xf32> to vector<1x16x128xf32>
    %439 = vector.shape_cast %438 : vector<1x16x128xf32> to vector<16x128xf32>
    %440 = arith.mulf %437, %439 : vector<16x128xf32>
    %cst_103 = arith.constant dense<0.000000e+00> : vector<128xf32>
    %441 = vector.multi_reduction <add>, %440, %cst_103 [0] : vector<16x128xf32> to vector<128xf32>
    %442 = vector.shape_cast %441 : vector<128xf32> to vector<1x128xf32>
    %443 = vector.extract_strided_slice %403 {offsets = [3, 0, 0], sizes = [1, 16, 128], strides = [1, 1, 1]} : vector<8x16x128xf32> to vector<1x16x128xf32>
    %444 = vector.shape_cast %443 : vector<1x16x128xf32> to vector<16x128xf32>
    %445 = arith.mulf %444, %437 : vector<16x128xf32>
    %446 = vector.extract_strided_slice %407 {offsets = [3, 0, 0], sizes = [1, 16, 128], strides = [1, 1, 1]} : vector<8x16x128xf32> to vector<1x16x128xf32>
    %447 = vector.shape_cast %446 : vector<1x16x128xf32> to vector<16x128xf32>
    %448 = arith.addf %445, %447 : vector<16x128xf32>
    %449 = vector.extract_strided_slice %388 {offsets = [3, 0, 0], sizes = [1, 16, 128], strides = [1, 1, 1]} : vector<8x16x128xf32> to vector<1x16x128xf32>
    %450 = vector.shape_cast %449 : vector<1x16x128xf32> to vector<16x128xf32>
    %451 = arith.mulf %448, %450 : vector<16x128xf32>
    %cst_104 = arith.constant dense<0.000000e+00> : vector<128xf32>
    %452 = vector.multi_reduction <add>, %451, %cst_104 [0] : vector<16x128xf32> to vector<128xf32>
    %453 = vector.shape_cast %452 : vector<128xf32> to vector<1x128xf32>
    %454 = vector.extract_strided_slice %403 {offsets = [4, 0, 0], sizes = [1, 16, 128], strides = [1, 1, 1]} : vector<8x16x128xf32> to vector<1x16x128xf32>
    %455 = vector.shape_cast %454 : vector<1x16x128xf32> to vector<16x128xf32>
    %456 = arith.mulf %455, %448 : vector<16x128xf32>
    %457 = vector.extract_strided_slice %407 {offsets = [4, 0, 0], sizes = [1, 16, 128], strides = [1, 1, 1]} : vector<8x16x128xf32> to vector<1x16x128xf32>
    %458 = vector.shape_cast %457 : vector<1x16x128xf32> to vector<16x128xf32>
    %459 = arith.addf %456, %458 : vector<16x128xf32>
    %460 = vector.extract_strided_slice %388 {offsets = [4, 0, 0], sizes = [1, 16, 128], strides = [1, 1, 1]} : vector<8x16x128xf32> to vector<1x16x128xf32>
    %461 = vector.shape_cast %460 : vector<1x16x128xf32> to vector<16x128xf32>
    %462 = arith.mulf %459, %461 : vector<16x128xf32>
    %cst_105 = arith.constant dense<0.000000e+00> : vector<128xf32>
    %463 = vector.multi_reduction <add>, %462, %cst_105 [0] : vector<16x128xf32> to vector<128xf32>
    %464 = vector.shape_cast %463 : vector<128xf32> to vector<1x128xf32>
    %465 = vector.extract_strided_slice %403 {offsets = [5, 0, 0], sizes = [1, 16, 128], strides = [1, 1, 1]} : vector<8x16x128xf32> to vector<1x16x128xf32>
    %466 = vector.shape_cast %465 : vector<1x16x128xf32> to vector<16x128xf32>
    %467 = arith.mulf %466, %459 : vector<16x128xf32>
    %468 = vector.extract_strided_slice %407 {offsets = [5, 0, 0], sizes = [1, 16, 128], strides = [1, 1, 1]} : vector<8x16x128xf32> to vector<1x16x128xf32>
    %469 = vector.shape_cast %468 : vector<1x16x128xf32> to vector<16x128xf32>
    %470 = arith.addf %467, %469 : vector<16x128xf32>
    %471 = vector.extract_strided_slice %388 {offsets = [5, 0, 0], sizes = [1, 16, 128], strides = [1, 1, 1]} : vector<8x16x128xf32> to vector<1x16x128xf32>
    %472 = vector.shape_cast %471 : vector<1x16x128xf32> to vector<16x128xf32>
    %473 = arith.mulf %470, %472 : vector<16x128xf32>
    %cst_106 = arith.constant dense<0.000000e+00> : vector<128xf32>
    %474 = vector.multi_reduction <add>, %473, %cst_106 [0] : vector<16x128xf32> to vector<128xf32>
    %475 = vector.shape_cast %474 : vector<128xf32> to vector<1x128xf32>
    %476 = vector.extract_strided_slice %403 {offsets = [6, 0, 0], sizes = [1, 16, 128], strides = [1, 1, 1]} : vector<8x16x128xf32> to vector<1x16x128xf32>
    %477 = vector.shape_cast %476 : vector<1x16x128xf32> to vector<16x128xf32>
    %478 = arith.mulf %477, %470 : vector<16x128xf32>
    %479 = vector.extract_strided_slice %407 {offsets = [6, 0, 0], sizes = [1, 16, 128], strides = [1, 1, 1]} : vector<8x16x128xf32> to vector<1x16x128xf32>
    %480 = vector.shape_cast %479 : vector<1x16x128xf32> to vector<16x128xf32>
    %481 = arith.addf %478, %480 : vector<16x128xf32>
    %482 = vector.extract_strided_slice %388 {offsets = [6, 0, 0], sizes = [1, 16, 128], strides = [1, 1, 1]} : vector<8x16x128xf32> to vector<1x16x128xf32>
    %483 = vector.shape_cast %482 : vector<1x16x128xf32> to vector<16x128xf32>
    %484 = arith.mulf %481, %483 : vector<16x128xf32>
    %cst_107 = arith.constant dense<0.000000e+00> : vector<128xf32>
    %485 = vector.multi_reduction <add>, %484, %cst_107 [0] : vector<16x128xf32> to vector<128xf32>
    %486 = vector.shape_cast %485 : vector<128xf32> to vector<1x128xf32>
    %487 = vector.extract_strided_slice %403 {offsets = [7, 0, 0], sizes = [1, 16, 128], strides = [1, 1, 1]} : vector<8x16x128xf32> to vector<1x16x128xf32>
    %488 = vector.shape_cast %487 : vector<1x16x128xf32> to vector<16x128xf32>
    %489 = arith.mulf %488, %481 : vector<16x128xf32>
    %490 = vector.extract_strided_slice %407 {offsets = [7, 0, 0], sizes = [1, 16, 128], strides = [1, 1, 1]} : vector<8x16x128xf32> to vector<1x16x128xf32>
    %491 = vector.shape_cast %490 : vector<1x16x128xf32> to vector<16x128xf32>
    %492 = arith.addf %489, %491 : vector<16x128xf32>
    %493 = vector.extract_strided_slice %388 {offsets = [7, 0, 0], sizes = [1, 16, 128], strides = [1, 1, 1]} : vector<8x16x128xf32> to vector<1x16x128xf32>
    %494 = vector.shape_cast %493 : vector<1x16x128xf32> to vector<16x128xf32>
    %495 = arith.mulf %492, %494 : vector<16x128xf32>
    %cst_108 = arith.constant dense<0.000000e+00> : vector<128xf32>
    %496 = vector.multi_reduction <add>, %495, %cst_108 [0] : vector<16x128xf32> to vector<128xf32>
    %497 = vector.shape_cast %496 : vector<128xf32> to vector<1x128xf32>
    %498 = tpu.concatenate %420, %431, %442, %453, %464, %475, %486, %497 in 0 : vector<1x128xf32>, vector<1x128xf32>, vector<1x128xf32>, vector<1x128xf32>, vector<1x128xf32>, vector<1x128xf32>, vector<1x128xf32>, vector<1x128xf32> -> vector<8x128xf32>
    %499 = arith.addf %498, %409 : vector<8x128xf32>
    %c0_109 = arith.constant 0 : index
    %c24_110 = arith.constant 24 : index
    %c0_111 = arith.constant 0 : index
    %500 = vector.load %arg9[%c0_109, %c24_110, %c0_111] : memref<1x64x128xf32, #tpu.memory_space<vmem>>, vector<1x8x128xf32>
    %501 = vector.shape_cast %500 : vector<1x8x128xf32> to vector<8x128xf32>
    %502 = vector.shape_cast %499 : vector<8x128xf32> to vector<1x8x128xf32>
    tpu.vector_store %arg9[%c0_109, %c24_110, %c0_111], %502 {strides = array<i32>} : memref<1x64x128xf32, #tpu.memory_space<vmem>>, vector<1x8x128xf32>,
    %c0_112 = arith.constant 0 : index
    %c32 = arith.constant 32 : index
    %c0_113 = arith.constant 0 : index
    %503 = vector.load %arg2[%c0_112, %c32, %c0_113] : memref<1x64x128xf32, #tpu.memory_space<vmem>>, vector<1x8x128xf32>
    %504 = vector.shape_cast %503 : vector<1x8x128xf32> to vector<8x128xf32>
    %c0_114 = arith.constant 0 : index
    %c32_115 = arith.constant 32 : index
    %c0_116 = arith.constant 0 : index
    %505 = vector.load %arg3[%c0_114, %c32_115, %c0_116] : memref<1x64x128xf32, #tpu.memory_space<vmem>>, vector<1x8x128xf32>
    %506 = vector.shape_cast %505 : vector<1x8x128xf32> to vector<8x128xf32>
    %c0_117 = arith.constant 0 : index
    %c32_118 = arith.constant 32 : index
    %c0_119 = arith.constant 0 : index
    %c0_120 = arith.constant 0 : index
    %507 = vector.load %arg4[%c0_117, %c32_118, %c0_119, %c0_120] : memref<1x64x16x128xbf16, #tpu.memory_space<vmem>>, vector<1x8x16x128xbf16>
    %508 = vector.shape_cast %507 : vector<1x8x16x128xbf16> to vector<8x16x128xbf16>
    %509 = arith.extf %508 : vector<8x16x128xbf16> to vector<8x16x128xf32>
    %c0_121 = arith.constant 0 : index
    %c32_122 = arith.constant 32 : index
    %c0_123 = arith.constant 0 : index
    %c0_124 = arith.constant 0 : index
    %510 = vector.load %arg5[%c0_121, %c32_122, %c0_123, %c0_124] : memref<1x64x16x128xbf16, #tpu.memory_space<vmem>>, vector<1x8x16x128xbf16>
    %511 = vector.shape_cast %510 : vector<1x8x16x128xbf16> to vector<8x16x128xbf16>
    %512 = arith.extf %511 : vector<8x16x128xbf16> to vector<8x16x128xf32>
    %513 = vector.broadcast %5 : vector<1x128xf32> to vector<8x128xf32>
    %514 = arith.addf %506, %513 : vector<8x128xf32>
    %cst_125 = arith.constant 2.000000e+01 : f32
    %515 = vector.broadcast %cst_125 : f32 to vector<8x128xf32>
    %516 = arith.cmpf ogt, %514, %515 : vector<8x128xf32>
    %cst_126 = arith.constant 2.000000e+01 : f32
    %517 = vector.broadcast %cst_126 : f32 to vector<8x128xf32>
    %518 = arith.minimumf %514, %517 : vector<8x128xf32>
    %519 = math.exp %518 : vector<8x128xf32>
    %520 = math.log1p %519 : vector<8x128xf32>
    %521 = arith.select %516, %514, %520 : vector<8x128xi1>, vector<8x128xf32>
    %522 = vector.shape_cast %521 : vector<8x128xf32> to vector<8x1x128xf32>
    %523 = vector.shape_cast %3 : vector<16x128xf32> to vector<1x16x128xf32>
    %524 = vector.broadcast %522 : vector<8x1x128xf32> to vector<8x16x128xf32>
    %525 = vector.broadcast %523 : vector<1x16x128xf32> to vector<8x16x128xf32>
    %526 = arith.mulf %524, %525 : vector<8x16x128xf32>
    %527 = math.exp %526 : vector<8x16x128xf32>
    %528 = arith.mulf %521, %504 : vector<8x128xf32>
    %529 = vector.shape_cast %528 : vector<8x128xf32> to vector<8x1x128xf32>
    %530 = vector.broadcast %529 : vector<8x1x128xf32> to vector<8x16x128xf32>
    %531 = arith.mulf %530, %509 : vector<8x16x128xf32>
    %532 = vector.broadcast %4 : vector<1x128xf32> to vector<8x128xf32>
    %533 = arith.mulf %532, %504 : vector<8x128xf32>
    %534 = vector.extract_strided_slice %527 {offsets = [0, 0, 0], sizes = [1, 16, 128], strides = [1, 1, 1]} : vector<8x16x128xf32> to vector<1x16x128xf32>
    %535 = vector.shape_cast %534 : vector<1x16x128xf32> to vector<16x128xf32>
    %536 = arith.mulf %535, %492 : vector<16x128xf32>
    %537 = vector.extract_strided_slice %531 {offsets = [0, 0, 0], sizes = [1, 16, 128], strides = [1, 1, 1]} : vector<8x16x128xf32> to vector<1x16x128xf32>
    %538 = vector.shape_cast %537 : vector<1x16x128xf32> to vector<16x128xf32>
    %539 = arith.addf %536, %538 : vector<16x128xf32>
    %540 = vector.extract_strided_slice %512 {offsets = [0, 0, 0], sizes = [1, 16, 128], strides = [1, 1, 1]} : vector<8x16x128xf32> to vector<1x16x128xf32>
    %541 = vector.shape_cast %540 : vector<1x16x128xf32> to vector<16x128xf32>
    %542 = arith.mulf %539, %541 : vector<16x128xf32>
    %cst_127 = arith.constant dense<0.000000e+00> : vector<128xf32>
    %543 = vector.multi_reduction <add>, %542, %cst_127 [0] : vector<16x128xf32> to vector<128xf32>
    %544 = vector.shape_cast %543 : vector<128xf32> to vector<1x128xf32>
    %545 = vector.extract_strided_slice %527 {offsets = [1, 0, 0], sizes = [1, 16, 128], strides = [1, 1, 1]} : vector<8x16x128xf32> to vector<1x16x128xf32>
    %546 = vector.shape_cast %545 : vector<1x16x128xf32> to vector<16x128xf32>
    %547 = arith.mulf %546, %539 : vector<16x128xf32>
    %548 = vector.extract_strided_slice %531 {offsets = [1, 0, 0], sizes = [1, 16, 128], strides = [1, 1, 1]} : vector<8x16x128xf32> to vector<1x16x128xf32>
    %549 = vector.shape_cast %548 : vector<1x16x128xf32> to vector<16x128xf32>
    %550 = arith.addf %547, %549 : vector<16x128xf32>
    %551 = vector.extract_strided_slice %512 {offsets = [1, 0, 0], sizes = [1, 16, 128], strides = [1, 1, 1]} : vector<8x16x128xf32> to vector<1x16x128xf32>
    %552 = vector.shape_cast %551 : vector<1x16x128xf32> to vector<16x128xf32>
    %553 = arith.mulf %550, %552 : vector<16x128xf32>
    %cst_128 = arith.constant dense<0.000000e+00> : vector<128xf32>
    %554 = vector.multi_reduction <add>, %553, %cst_128 [0] : vector<16x128xf32> to vector<128xf32>
    %555 = vector.shape_cast %554 : vector<128xf32> to vector<1x128xf32>
    %556 = vector.extract_strided_slice %527 {offsets = [2, 0, 0], sizes = [1, 16, 128], strides = [1, 1, 1]} : vector<8x16x128xf32> to vector<1x16x128xf32>
    %557 = vector.shape_cast %556 : vector<1x16x128xf32> to vector<16x128xf32>
    %558 = arith.mulf %557, %550 : vector<16x128xf32>
    %559 = vector.extract_strided_slice %531 {offsets = [2, 0, 0], sizes = [1, 16, 128], strides = [1, 1, 1]} : vector<8x16x128xf32> to vector<1x16x128xf32>
    %560 = vector.shape_cast %559 : vector<1x16x128xf32> to vector<16x128xf32>
    %561 = arith.addf %558, %560 : vector<16x128xf32>
    %562 = vector.extract_strided_slice %512 {offsets = [2, 0, 0], sizes = [1, 16, 128], strides = [1, 1, 1]} : vector<8x16x128xf32> to vector<1x16x128xf32>
    %563 = vector.shape_cast %562 : vector<1x16x128xf32> to vector<16x128xf32>
    %564 = arith.mulf %561, %563 : vector<16x128xf32>
    %cst_129 = arith.constant dense<0.000000e+00> : vector<128xf32>
    %565 = vector.multi_reduction <add>, %564, %cst_129 [0] : vector<16x128xf32> to vector<128xf32>
    %566 = vector.shape_cast %565 : vector<128xf32> to vector<1x128xf32>
    %567 = vector.extract_strided_slice %527 {offsets = [3, 0, 0], sizes = [1, 16, 128], strides = [1, 1, 1]} : vector<8x16x128xf32> to vector<1x16x128xf32>
    %568 = vector.shape_cast %567 : vector<1x16x128xf32> to vector<16x128xf32>
    %569 = arith.mulf %568, %561 : vector<16x128xf32>
    %570 = vector.extract_strided_slice %531 {offsets = [3, 0, 0], sizes = [1, 16, 128], strides = [1, 1, 1]} : vector<8x16x128xf32> to vector<1x16x128xf32>
    %571 = vector.shape_cast %570 : vector<1x16x128xf32> to vector<16x128xf32>
    %572 = arith.addf %569, %571 : vector<16x128xf32>
    %573 = vector.extract_strided_slice %512 {offsets = [3, 0, 0], sizes = [1, 16, 128], strides = [1, 1, 1]} : vector<8x16x128xf32> to vector<1x16x128xf32>
    %574 = vector.shape_cast %573 : vector<1x16x128xf32> to vector<16x128xf32>
    %575 = arith.mulf %572, %574 : vector<16x128xf32>
    %cst_130 = arith.constant dense<0.000000e+00> : vector<128xf32>
    %576 = vector.multi_reduction <add>, %575, %cst_130 [0] : vector<16x128xf32> to vector<128xf32>
    %577 = vector.shape_cast %576 : vector<128xf32> to vector<1x128xf32>
    %578 = vector.extract_strided_slice %527 {offsets = [4, 0, 0], sizes = [1, 16, 128], strides = [1, 1, 1]} : vector<8x16x128xf32> to vector<1x16x128xf32>
    %579 = vector.shape_cast %578 : vector<1x16x128xf32> to vector<16x128xf32>
    %580 = arith.mulf %579, %572 : vector<16x128xf32>
    %581 = vector.extract_strided_slice %531 {offsets = [4, 0, 0], sizes = [1, 16, 128], strides = [1, 1, 1]} : vector<8x16x128xf32> to vector<1x16x128xf32>
    %582 = vector.shape_cast %581 : vector<1x16x128xf32> to vector<16x128xf32>
    %583 = arith.addf %580, %582 : vector<16x128xf32>
    %584 = vector.extract_strided_slice %512 {offsets = [4, 0, 0], sizes = [1, 16, 128], strides = [1, 1, 1]} : vector<8x16x128xf32> to vector<1x16x128xf32>
    %585 = vector.shape_cast %584 : vector<1x16x128xf32> to vector<16x128xf32>
    %586 = arith.mulf %583, %585 : vector<16x128xf32>
    %cst_131 = arith.constant dense<0.000000e+00> : vector<128xf32>
    %587 = vector.multi_reduction <add>, %586, %cst_131 [0] : vector<16x128xf32> to vector<128xf32>
    %588 = vector.shape_cast %587 : vector<128xf32> to vector<1x128xf32>
    %589 = vector.extract_strided_slice %527 {offsets = [5, 0, 0], sizes = [1, 16, 128], strides = [1, 1, 1]} : vector<8x16x128xf32> to vector<1x16x128xf32>
    %590 = vector.shape_cast %589 : vector<1x16x128xf32> to vector<16x128xf32>
    %591 = arith.mulf %590, %583 : vector<16x128xf32>
    %592 = vector.extract_strided_slice %531 {offsets = [5, 0, 0], sizes = [1, 16, 128], strides = [1, 1, 1]} : vector<8x16x128xf32> to vector<1x16x128xf32>
    %593 = vector.shape_cast %592 : vector<1x16x128xf32> to vector<16x128xf32>
    %594 = arith.addf %591, %593 : vector<16x128xf32>
    %595 = vector.extract_strided_slice %512 {offsets = [5, 0, 0], sizes = [1, 16, 128], strides = [1, 1, 1]} : vector<8x16x128xf32> to vector<1x16x128xf32>
    %596 = vector.shape_cast %595 : vector<1x16x128xf32> to vector<16x128xf32>
    %597 = arith.mulf %594, %596 : vector<16x128xf32>
    %cst_132 = arith.constant dense<0.000000e+00> : vector<128xf32>
    %598 = vector.multi_reduction <add>, %597, %cst_132 [0] : vector<16x128xf32> to vector<128xf32>
    %599 = vector.shape_cast %598 : vector<128xf32> to vector<1x128xf32>
    %600 = vector.extract_strided_slice %527 {offsets = [6, 0, 0], sizes = [1, 16, 128], strides = [1, 1, 1]} : vector<8x16x128xf32> to vector<1x16x128xf32>
    %601 = vector.shape_cast %600 : vector<1x16x128xf32> to vector<16x128xf32>
    %602 = arith.mulf %601, %594 : vector<16x128xf32>
    %603 = vector.extract_strided_slice %531 {offsets = [6, 0, 0], sizes = [1, 16, 128], strides = [1, 1, 1]} : vector<8x16x128xf32> to vector<1x16x128xf32>
    %604 = vector.shape_cast %603 : vector<1x16x128xf32> to vector<16x128xf32>
    %605 = arith.addf %602, %604 : vector<16x128xf32>
    %606 = vector.extract_strided_slice %512 {offsets = [6, 0, 0], sizes = [1, 16, 128], strides = [1, 1, 1]} : vector<8x16x128xf32> to vector<1x16x128xf32>
    %607 = vector.shape_cast %606 : vector<1x16x128xf32> to vector<16x128xf32>
    %608 = arith.mulf %605, %607 : vector<16x128xf32>
    %cst_133 = arith.constant dense<0.000000e+00> : vector<128xf32>
    %609 = vector.multi_reduction <add>, %608, %cst_133 [0] : vector<16x128xf32> to vector<128xf32>
    %610 = vector.shape_cast %609 : vector<128xf32> to vector<1x128xf32>
    %611 = vector.extract_strided_slice %527 {offsets = [7, 0, 0], sizes = [1, 16, 128], strides = [1, 1, 1]} : vector<8x16x128xf32> to vector<1x16x128xf32>
    %612 = vector.shape_cast %611 : vector<1x16x128xf32> to vector<16x128xf32>
    %613 = arith.mulf %612, %605 : vector<16x128xf32>
    %614 = vector.extract_strided_slice %531 {offsets = [7, 0, 0], sizes = [1, 16, 128], strides = [1, 1, 1]} : vector<8x16x128xf32> to vector<1x16x128xf32>
    %615 = vector.shape_cast %614 : vector<1x16x128xf32> to vector<16x128xf32>
    %616 = arith.addf %613, %615 : vector<16x128xf32>
    %617 = vector.extract_strided_slice %512 {offsets = [7, 0, 0], sizes = [1, 16, 128], strides = [1, 1, 1]} : vector<8x16x128xf32> to vector<1x16x128xf32>
    %618 = vector.shape_cast %617 : vector<1x16x128xf32> to vector<16x128xf32>
    %619 = arith.mulf %616, %618 : vector<16x128xf32>
    %cst_134 = arith.constant dense<0.000000e+00> : vector<128xf32>
    %620 = vector.multi_reduction <add>, %619, %cst_134 [0] : vector<16x128xf32> to vector<128xf32>
    %621 = vector.shape_cast %620 : vector<128xf32> to vector<1x128xf32>
    %622 = tpu.concatenate %544, %555, %566, %577, %588, %599, %610, %621 in 0 : vector<1x128xf32>, vector<1x128xf32>, vector<1x128xf32>, vector<1x128xf32>, vector<1x128xf32>, vector<1x128xf32>, vector<1x128xf32>, vector<1x128xf32> -> vector<8x128xf32>
    %623 = arith.addf %622, %533 : vector<8x128xf32>
    %c0_135 = arith.constant 0 : index
    %c32_136 = arith.constant 32 : index
    %c0_137 = arith.constant 0 : index
    %624 = vector.load %arg9[%c0_135, %c32_136, %c0_137] : memref<1x64x128xf32, #tpu.memory_space<vmem>>, vector<1x8x128xf32>
    %625 = vector.shape_cast %624 : vector<1x8x128xf32> to vector<8x128xf32>
    %626 = vector.shape_cast %623 : vector<8x128xf32> to vector<1x8x128xf32>
    tpu.vector_store %arg9[%c0_135, %c32_136, %c0_137], %626 {strides = array<i32>} : memref<1x64x128xf32, #tpu.memory_space<vmem>>, vector<1x8x128xf32>,
    %c0_138 = arith.constant 0 : index
    %c40 = arith.constant 40 : index
    %c0_139 = arith.constant 0 : index
    %627 = vector.load %arg2[%c0_138, %c40, %c0_139] : memref<1x64x128xf32, #tpu.memory_space<vmem>>, vector<1x8x128xf32>
    %628 = vector.shape_cast %627 : vector<1x8x128xf32> to vector<8x128xf32>
    %c0_140 = arith.constant 0 : index
    %c40_141 = arith.constant 40 : index
    %c0_142 = arith.constant 0 : index
    %629 = vector.load %arg3[%c0_140, %c40_141, %c0_142] : memref<1x64x128xf32, #tpu.memory_space<vmem>>, vector<1x8x128xf32>
    %630 = vector.shape_cast %629 : vector<1x8x128xf32> to vector<8x128xf32>
    %c0_143 = arith.constant 0 : index
    %c40_144 = arith.constant 40 : index
    %c0_145 = arith.constant 0 : index
    %c0_146 = arith.constant 0 : index
    %631 = vector.load %arg4[%c0_143, %c40_144, %c0_145, %c0_146] : memref<1x64x16x128xbf16, #tpu.memory_space<vmem>>, vector<1x8x16x128xbf16>
    %632 = vector.shape_cast %631 : vector<1x8x16x128xbf16> to vector<8x16x128xbf16>
    %633 = arith.extf %632 : vector<8x16x128xbf16> to vector<8x16x128xf32>
    %c0_147 = arith.constant 0 : index
    %c40_148 = arith.constant 40 : index
    %c0_149 = arith.constant 0 : index
    %c0_150 = arith.constant 0 : index
    %634 = vector.load %arg5[%c0_147, %c40_148, %c0_149, %c0_150] : memref<1x64x16x128xbf16, #tpu.memory_space<vmem>>, vector<1x8x16x128xbf16>
    %635 = vector.shape_cast %634 : vector<1x8x16x128xbf16> to vector<8x16x128xbf16>
    %636 = arith.extf %635 : vector<8x16x128xbf16> to vector<8x16x128xf32>
    %637 = vector.broadcast %5 : vector<1x128xf32> to vector<8x128xf32>
    %638 = arith.addf %630, %637 : vector<8x128xf32>
    %cst_151 = arith.constant 2.000000e+01 : f32
    %639 = vector.broadcast %cst_151 : f32 to vector<8x128xf32>
    %640 = arith.cmpf ogt, %638, %639 : vector<8x128xf32>
    %cst_152 = arith.constant 2.000000e+01 : f32
    %641 = vector.broadcast %cst_152 : f32 to vector<8x128xf32>
    %642 = arith.minimumf %638, %641 : vector<8x128xf32>
    %643 = math.exp %642 : vector<8x128xf32>
    %644 = math.log1p %643 : vector<8x128xf32>
    %645 = arith.select %640, %638, %644 : vector<8x128xi1>, vector<8x128xf32>
    %646 = vector.shape_cast %645 : vector<8x128xf32> to vector<8x1x128xf32>
    %647 = vector.shape_cast %3 : vector<16x128xf32> to vector<1x16x128xf32>
    %648 = vector.broadcast %646 : vector<8x1x128xf32> to vector<8x16x128xf32>
    %649 = vector.broadcast %647 : vector<1x16x128xf32> to vector<8x16x128xf32>
    %650 = arith.mulf %648, %649 : vector<8x16x128xf32>
    %651 = math.exp %650 : vector<8x16x128xf32>
    %652 = arith.mulf %645, %628 : vector<8x128xf32>
    %653 = vector.shape_cast %652 : vector<8x128xf32> to vector<8x1x128xf32>
    %654 = vector.broadcast %653 : vector<8x1x128xf32> to vector<8x16x128xf32>
    %655 = arith.mulf %654, %633 : vector<8x16x128xf32>
    %656 = vector.broadcast %4 : vector<1x128xf32> to vector<8x128xf32>
    %657 = arith.mulf %656, %628 : vector<8x128xf32>
    %658 = vector.extract_strided_slice %651 {offsets = [0, 0, 0], sizes = [1, 16, 128], strides = [1, 1, 1]} : vector<8x16x128xf32> to vector<1x16x128xf32>
    %659 = vector.shape_cast %658 : vector<1x16x128xf32> to vector<16x128xf32>
    %660 = arith.mulf %659, %616 : vector<16x128xf32>
    %661 = vector.extract_strided_slice %655 {offsets = [0, 0, 0], sizes = [1, 16, 128], strides = [1, 1, 1]} : vector<8x16x128xf32> to vector<1x16x128xf32>
    %662 = vector.shape_cast %661 : vector<1x16x128xf32> to vector<16x128xf32>
    %663 = arith.addf %660, %662 : vector<16x128xf32>
    %664 = vector.extract_strided_slice %636 {offsets = [0, 0, 0], sizes = [1, 16, 128], strides = [1, 1, 1]} : vector<8x16x128xf32> to vector<1x16x128xf32>
    %665 = vector.shape_cast %664 : vector<1x16x128xf32> to vector<16x128xf32>
    %666 = arith.mulf %663, %665 : vector<16x128xf32>
    %cst_153 = arith.constant dense<0.000000e+00> : vector<128xf32>
    %667 = vector.multi_reduction <add>, %666, %cst_153 [0] : vector<16x128xf32> to vector<128xf32>
    %668 = vector.shape_cast %667 : vector<128xf32> to vector<1x128xf32>
    %669 = vector.extract_strided_slice %651 {offsets = [1, 0, 0], sizes = [1, 16, 128], strides = [1, 1, 1]} : vector<8x16x128xf32> to vector<1x16x128xf32>
    %670 = vector.shape_cast %669 : vector<1x16x128xf32> to vector<16x128xf32>
    %671 = arith.mulf %670, %663 : vector<16x128xf32>
    %672 = vector.extract_strided_slice %655 {offsets = [1, 0, 0], sizes = [1, 16, 128], strides = [1, 1, 1]} : vector<8x16x128xf32> to vector<1x16x128xf32>
    %673 = vector.shape_cast %672 : vector<1x16x128xf32> to vector<16x128xf32>
    %674 = arith.addf %671, %673 : vector<16x128xf32>
    %675 = vector.extract_strided_slice %636 {offsets = [1, 0, 0], sizes = [1, 16, 128], strides = [1, 1, 1]} : vector<8x16x128xf32> to vector<1x16x128xf32>
    %676 = vector.shape_cast %675 : vector<1x16x128xf32> to vector<16x128xf32>
    %677 = arith.mulf %674, %676 : vector<16x128xf32>
    %cst_154 = arith.constant dense<0.000000e+00> : vector<128xf32>
    %678 = vector.multi_reduction <add>, %677, %cst_154 [0] : vector<16x128xf32> to vector<128xf32>
    %679 = vector.shape_cast %678 : vector<128xf32> to vector<1x128xf32>
    %680 = vector.extract_strided_slice %651 {offsets = [2, 0, 0], sizes = [1, 16, 128], strides = [1, 1, 1]} : vector<8x16x128xf32> to vector<1x16x128xf32>
    %681 = vector.shape_cast %680 : vector<1x16x128xf32> to vector<16x128xf32>
    %682 = arith.mulf %681, %674 : vector<16x128xf32>
    %683 = vector.extract_strided_slice %655 {offsets = [2, 0, 0], sizes = [1, 16, 128], strides = [1, 1, 1]} : vector<8x16x128xf32> to vector<1x16x128xf32>
    %684 = vector.shape_cast %683 : vector<1x16x128xf32> to vector<16x128xf32>
    %685 = arith.addf %682, %684 : vector<16x128xf32>
    %686 = vector.extract_strided_slice %636 {offsets = [2, 0, 0], sizes = [1, 16, 128], strides = [1, 1, 1]} : vector<8x16x128xf32> to vector<1x16x128xf32>
    %687 = vector.shape_cast %686 : vector<1x16x128xf32> to vector<16x128xf32>
    %688 = arith.mulf %685, %687 : vector<16x128xf32>
    %cst_155 = arith.constant dense<0.000000e+00> : vector<128xf32>
    %689 = vector.multi_reduction <add>, %688, %cst_155 [0] : vector<16x128xf32> to vector<128xf32>
    %690 = vector.shape_cast %689 : vector<128xf32> to vector<1x128xf32>
    %691 = vector.extract_strided_slice %651 {offsets = [3, 0, 0], sizes = [1, 16, 128], strides = [1, 1, 1]} : vector<8x16x128xf32> to vector<1x16x128xf32>
    %692 = vector.shape_cast %691 : vector<1x16x128xf32> to vector<16x128xf32>
    %693 = arith.mulf %692, %685 : vector<16x128xf32>
    %694 = vector.extract_strided_slice %655 {offsets = [3, 0, 0], sizes = [1, 16, 128], strides = [1, 1, 1]} : vector<8x16x128xf32> to vector<1x16x128xf32>
    %695 = vector.shape_cast %694 : vector<1x16x128xf32> to vector<16x128xf32>
    %696 = arith.addf %693, %695 : vector<16x128xf32>
    %697 = vector.extract_strided_slice %636 {offsets = [3, 0, 0], sizes = [1, 16, 128], strides = [1, 1, 1]} : vector<8x16x128xf32> to vector<1x16x128xf32>
    %698 = vector.shape_cast %697 : vector<1x16x128xf32> to vector<16x128xf32>
    %699 = arith.mulf %696, %698 : vector<16x128xf32>
    %cst_156 = arith.constant dense<0.000000e+00> : vector<128xf32>
    %700 = vector.multi_reduction <add>, %699, %cst_156 [0] : vector<16x128xf32> to vector<128xf32>
    %701 = vector.shape_cast %700 : vector<128xf32> to vector<1x128xf32>
    %702 = vector.extract_strided_slice %651 {offsets = [4, 0, 0], sizes = [1, 16, 128], strides = [1, 1, 1]} : vector<8x16x128xf32> to vector<1x16x128xf32>
    %703 = vector.shape_cast %702 : vector<1x16x128xf32> to vector<16x128xf32>
    %704 = arith.mulf %703, %696 : vector<16x128xf32>
    %705 = vector.extract_strided_slice %655 {offsets = [4, 0, 0], sizes = [1, 16, 128], strides = [1, 1, 1]} : vector<8x16x128xf32> to vector<1x16x128xf32>
    %706 = vector.shape_cast %705 : vector<1x16x128xf32> to vector<16x128xf32>
    %707 = arith.addf %704, %706 : vector<16x128xf32>
    %708 = vector.extract_strided_slice %636 {offsets = [4, 0, 0], sizes = [1, 16, 128], strides = [1, 1, 1]} : vector<8x16x128xf32> to vector<1x16x128xf32>
    %709 = vector.shape_cast %708 : vector<1x16x128xf32> to vector<16x128xf32>
    %710 = arith.mulf %707, %709 : vector<16x128xf32>
    %cst_157 = arith.constant dense<0.000000e+00> : vector<128xf32>
    %711 = vector.multi_reduction <add>, %710, %cst_157 [0] : vector<16x128xf32> to vector<128xf32>
    %712 = vector.shape_cast %711 : vector<128xf32> to vector<1x128xf32>
    %713 = vector.extract_strided_slice %651 {offsets = [5, 0, 0], sizes = [1, 16, 128], strides = [1, 1, 1]} : vector<8x16x128xf32> to vector<1x16x128xf32>
    %714 = vector.shape_cast %713 : vector<1x16x128xf32> to vector<16x128xf32>
    %715 = arith.mulf %714, %707 : vector<16x128xf32>
    %716 = vector.extract_strided_slice %655 {offsets = [5, 0, 0], sizes = [1, 16, 128], strides = [1, 1, 1]} : vector<8x16x128xf32> to vector<1x16x128xf32>
    %717 = vector.shape_cast %716 : vector<1x16x128xf32> to vector<16x128xf32>
    %718 = arith.addf %715, %717 : vector<16x128xf32>
    %719 = vector.extract_strided_slice %636 {offsets = [5, 0, 0], sizes = [1, 16, 128], strides = [1, 1, 1]} : vector<8x16x128xf32> to vector<1x16x128xf32>
    %720 = vector.shape_cast %719 : vector<1x16x128xf32> to vector<16x128xf32>
    %721 = arith.mulf %718, %720 : vector<16x128xf32>
    %cst_158 = arith.constant dense<0.000000e+00> : vector<128xf32>
    %722 = vector.multi_reduction <add>, %721, %cst_158 [0] : vector<16x128xf32> to vector<128xf32>
    %723 = vector.shape_cast %722 : vector<128xf32> to vector<1x128xf32>
    %724 = vector.extract_strided_slice %651 {offsets = [6, 0, 0], sizes = [1, 16, 128], strides = [1, 1, 1]} : vector<8x16x128xf32> to vector<1x16x128xf32>
    %725 = vector.shape_cast %724 : vector<1x16x128xf32> to vector<16x128xf32>
    %726 = arith.mulf %725, %718 : vector<16x128xf32>
    %727 = vector.extract_strided_slice %655 {offsets = [6, 0, 0], sizes = [1, 16, 128], strides = [1, 1, 1]} : vector<8x16x128xf32> to vector<1x16x128xf32>
    %728 = vector.shape_cast %727 : vector<1x16x128xf32> to vector<16x128xf32>
    %729 = arith.addf %726, %728 : vector<16x128xf32>
    %730 = vector.extract_strided_slice %636 {offsets = [6, 0, 0], sizes = [1, 16, 128], strides = [1, 1, 1]} : vector<8x16x128xf32> to vector<1x16x128xf32>
    %731 = vector.shape_cast %730 : vector<1x16x128xf32> to vector<16x128xf32>
    %732 = arith.mulf %729, %731 : vector<16x128xf32>
    %cst_159 = arith.constant dense<0.000000e+00> : vector<128xf32>
    %733 = vector.multi_reduction <add>, %732, %cst_159 [0] : vector<16x128xf32> to vector<128xf32>
    %734 = vector.shape_cast %733 : vector<128xf32> to vector<1x128xf32>
    %735 = vector.extract_strided_slice %651 {offsets = [7, 0, 0], sizes = [1, 16, 128], strides = [1, 1, 1]} : vector<8x16x128xf32> to vector<1x16x128xf32>
    %736 = vector.shape_cast %735 : vector<1x16x128xf32> to vector<16x128xf32>
    %737 = arith.mulf %736, %729 : vector<16x128xf32>
    %738 = vector.extract_strided_slice %655 {offsets = [7, 0, 0], sizes = [1, 16, 128], strides = [1, 1, 1]} : vector<8x16x128xf32> to vector<1x16x128xf32>
    %739 = vector.shape_cast %738 : vector<1x16x128xf32> to vector<16x128xf32>
    %740 = arith.addf %737, %739 : vector<16x128xf32>
    %741 = vector.extract_strided_slice %636 {offsets = [7, 0, 0], sizes = [1, 16, 128], strides = [1, 1, 1]} : vector<8x16x128xf32> to vector<1x16x128xf32>
    %742 = vector.shape_cast %741 : vector<1x16x128xf32> to vector<16x128xf32>
    %743 = arith.mulf %740, %742 : vector<16x128xf32>
    %cst_160 = arith.constant dense<0.000000e+00> : vector<128xf32>
    %744 = vector.multi_reduction <add>, %743, %cst_160 [0] : vector<16x128xf32> to vector<128xf32>
    %745 = vector.shape_cast %744 : vector<128xf32> to vector<1x128xf32>
    %746 = tpu.concatenate %668, %679, %690, %701, %712, %723, %734, %745 in 0 : vector<1x128xf32>, vector<1x128xf32>, vector<1x128xf32>, vector<1x128xf32>, vector<1x128xf32>, vector<1x128xf32>, vector<1x128xf32>, vector<1x128xf32> -> vector<8x128xf32>
    %747 = arith.addf %746, %657 : vector<8x128xf32>
    %c0_161 = arith.constant 0 : index
    %c40_162 = arith.constant 40 : index
    %c0_163 = arith.constant 0 : index
    %748 = vector.load %arg9[%c0_161, %c40_162, %c0_163] : memref<1x64x128xf32, #tpu.memory_space<vmem>>, vector<1x8x128xf32>
    %749 = vector.shape_cast %748 : vector<1x8x128xf32> to vector<8x128xf32>
    %750 = vector.shape_cast %747 : vector<8x128xf32> to vector<1x8x128xf32>
    tpu.vector_store %arg9[%c0_161, %c40_162, %c0_163], %750 {strides = array<i32>} : memref<1x64x128xf32, #tpu.memory_space<vmem>>, vector<1x8x128xf32>,
    %c0_164 = arith.constant 0 : index
    %c48 = arith.constant 48 : index
    %c0_165 = arith.constant 0 : index
    %751 = vector.load %arg2[%c0_164, %c48, %c0_165] : memref<1x64x128xf32, #tpu.memory_space<vmem>>, vector<1x8x128xf32>
    %752 = vector.shape_cast %751 : vector<1x8x128xf32> to vector<8x128xf32>
    %c0_166 = arith.constant 0 : index
    %c48_167 = arith.constant 48 : index
    %c0_168 = arith.constant 0 : index
    %753 = vector.load %arg3[%c0_166, %c48_167, %c0_168] : memref<1x64x128xf32, #tpu.memory_space<vmem>>, vector<1x8x128xf32>
    %754 = vector.shape_cast %753 : vector<1x8x128xf32> to vector<8x128xf32>
    %c0_169 = arith.constant 0 : index
    %c48_170 = arith.constant 48 : index
    %c0_171 = arith.constant 0 : index
    %c0_172 = arith.constant 0 : index
    %755 = vector.load %arg4[%c0_169, %c48_170, %c0_171, %c0_172] : memref<1x64x16x128xbf16, #tpu.memory_space<vmem>>, vector<1x8x16x128xbf16>
    %756 = vector.shape_cast %755 : vector<1x8x16x128xbf16> to vector<8x16x128xbf16>
    %757 = arith.extf %756 : vector<8x16x128xbf16> to vector<8x16x128xf32>
    %c0_173 = arith.constant 0 : index
    %c48_174 = arith.constant 48 : index
    %c0_175 = arith.constant 0 : index
    %c0_176 = arith.constant 0 : index
    %758 = vector.load %arg5[%c0_173, %c48_174, %c0_175, %c0_176] : memref<1x64x16x128xbf16, #tpu.memory_space<vmem>>, vector<1x8x16x128xbf16>
    %759 = vector.shape_cast %758 : vector<1x8x16x128xbf16> to vector<8x16x128xbf16>
    %760 = arith.extf %759 : vector<8x16x128xbf16> to vector<8x16x128xf32>
    %761 = vector.broadcast %5 : vector<1x128xf32> to vector<8x128xf32>
    %762 = arith.addf %754, %761 : vector<8x128xf32>
    %cst_177 = arith.constant 2.000000e+01 : f32
    %763 = vector.broadcast %cst_177 : f32 to vector<8x128xf32>
    %764 = arith.cmpf ogt, %762, %763 : vector<8x128xf32>
    %cst_178 = arith.constant 2.000000e+01 : f32
    %765 = vector.broadcast %cst_178 : f32 to vector<8x128xf32>
    %766 = arith.minimumf %762, %765 : vector<8x128xf32>
    %767 = math.exp %766 : vector<8x128xf32>
    %768 = math.log1p %767 : vector<8x128xf32>
    %769 = arith.select %764, %762, %768 : vector<8x128xi1>, vector<8x128xf32>
    %770 = vector.shape_cast %769 : vector<8x128xf32> to vector<8x1x128xf32>
    %771 = vector.shape_cast %3 : vector<16x128xf32> to vector<1x16x128xf32>
    %772 = vector.broadcast %770 : vector<8x1x128xf32> to vector<8x16x128xf32>
    %773 = vector.broadcast %771 : vector<1x16x128xf32> to vector<8x16x128xf32>
    %774 = arith.mulf %772, %773 : vector<8x16x128xf32>
    %775 = math.exp %774 : vector<8x16x128xf32>
    %776 = arith.mulf %769, %752 : vector<8x128xf32>
    %777 = vector.shape_cast %776 : vector<8x128xf32> to vector<8x1x128xf32>
    %778 = vector.broadcast %777 : vector<8x1x128xf32> to vector<8x16x128xf32>
    %779 = arith.mulf %778, %757 : vector<8x16x128xf32>
    %780 = vector.broadcast %4 : vector<1x128xf32> to vector<8x128xf32>
    %781 = arith.mulf %780, %752 : vector<8x128xf32>
    %782 = vector.extract_strided_slice %775 {offsets = [0, 0, 0], sizes = [1, 16, 128], strides = [1, 1, 1]} : vector<8x16x128xf32> to vector<1x16x128xf32>
    %783 = vector.shape_cast %782 : vector<1x16x128xf32> to vector<16x128xf32>
    %784 = arith.mulf %783, %740 : vector<16x128xf32>
    %785 = vector.extract_strided_slice %779 {offsets = [0, 0, 0], sizes = [1, 16, 128], strides = [1, 1, 1]} : vector<8x16x128xf32> to vector<1x16x128xf32>
    %786 = vector.shape_cast %785 : vector<1x16x128xf32> to vector<16x128xf32>
    %787 = arith.addf %784, %786 : vector<16x128xf32>
    %788 = vector.extract_strided_slice %760 {offsets = [0, 0, 0], sizes = [1, 16, 128], strides = [1, 1, 1]} : vector<8x16x128xf32> to vector<1x16x128xf32>
    %789 = vector.shape_cast %788 : vector<1x16x128xf32> to vector<16x128xf32>
    %790 = arith.mulf %787, %789 : vector<16x128xf32>
    %cst_179 = arith.constant dense<0.000000e+00> : vector<128xf32>
    %791 = vector.multi_reduction <add>, %790, %cst_179 [0] : vector<16x128xf32> to vector<128xf32>
    %792 = vector.shape_cast %791 : vector<128xf32> to vector<1x128xf32>
    %793 = vector.extract_strided_slice %775 {offsets = [1, 0, 0], sizes = [1, 16, 128], strides = [1, 1, 1]} : vector<8x16x128xf32> to vector<1x16x128xf32>
    %794 = vector.shape_cast %793 : vector<1x16x128xf32> to vector<16x128xf32>
    %795 = arith.mulf %794, %787 : vector<16x128xf32>
    %796 = vector.extract_strided_slice %779 {offsets = [1, 0, 0], sizes = [1, 16, 128], strides = [1, 1, 1]} : vector<8x16x128xf32> to vector<1x16x128xf32>
    %797 = vector.shape_cast %796 : vector<1x16x128xf32> to vector<16x128xf32>
    %798 = arith.addf %795, %797 : vector<16x128xf32>
    %799 = vector.extract_strided_slice %760 {offsets = [1, 0, 0], sizes = [1, 16, 128], strides = [1, 1, 1]} : vector<8x16x128xf32> to vector<1x16x128xf32>
    %800 = vector.shape_cast %799 : vector<1x16x128xf32> to vector<16x128xf32>
    %801 = arith.mulf %798, %800 : vector<16x128xf32>
    %cst_180 = arith.constant dense<0.000000e+00> : vector<128xf32>
    %802 = vector.multi_reduction <add>, %801, %cst_180 [0] : vector<16x128xf32> to vector<128xf32>
    %803 = vector.shape_cast %802 : vector<128xf32> to vector<1x128xf32>
    %804 = vector.extract_strided_slice %775 {offsets = [2, 0, 0], sizes = [1, 16, 128], strides = [1, 1, 1]} : vector<8x16x128xf32> to vector<1x16x128xf32>
    %805 = vector.shape_cast %804 : vector<1x16x128xf32> to vector<16x128xf32>
    %806 = arith.mulf %805, %798 : vector<16x128xf32>
    %807 = vector.extract_strided_slice %779 {offsets = [2, 0, 0], sizes = [1, 16, 128], strides = [1, 1, 1]} : vector<8x16x128xf32> to vector<1x16x128xf32>
    %808 = vector.shape_cast %807 : vector<1x16x128xf32> to vector<16x128xf32>
    %809 = arith.addf %806, %808 : vector<16x128xf32>
    %810 = vector.extract_strided_slice %760 {offsets = [2, 0, 0], sizes = [1, 16, 128], strides = [1, 1, 1]} : vector<8x16x128xf32> to vector<1x16x128xf32>
    %811 = vector.shape_cast %810 : vector<1x16x128xf32> to vector<16x128xf32>
    %812 = arith.mulf %809, %811 : vector<16x128xf32>
    %cst_181 = arith.constant dense<0.000000e+00> : vector<128xf32>
    %813 = vector.multi_reduction <add>, %812, %cst_181 [0] : vector<16x128xf32> to vector<128xf32>
    %814 = vector.shape_cast %813 : vector<128xf32> to vector<1x128xf32>
    %815 = vector.extract_strided_slice %775 {offsets = [3, 0, 0], sizes = [1, 16, 128], strides = [1, 1, 1]} : vector<8x16x128xf32> to vector<1x16x128xf32>
    %816 = vector.shape_cast %815 : vector<1x16x128xf32> to vector<16x128xf32>
    %817 = arith.mulf %816, %809 : vector<16x128xf32>
    %818 = vector.extract_strided_slice %779 {offsets = [3, 0, 0], sizes = [1, 16, 128], strides = [1, 1, 1]} : vector<8x16x128xf32> to vector<1x16x128xf32>
    %819 = vector.shape_cast %818 : vector<1x16x128xf32> to vector<16x128xf32>
    %820 = arith.addf %817, %819 : vector<16x128xf32>
    %821 = vector.extract_strided_slice %760 {offsets = [3, 0, 0], sizes = [1, 16, 128], strides = [1, 1, 1]} : vector<8x16x128xf32> to vector<1x16x128xf32>
    %822 = vector.shape_cast %821 : vector<1x16x128xf32> to vector<16x128xf32>
    %823 = arith.mulf %820, %822 : vector<16x128xf32>
    %cst_182 = arith.constant dense<0.000000e+00> : vector<128xf32>
    %824 = vector.multi_reduction <add>, %823, %cst_182 [0] : vector<16x128xf32> to vector<128xf32>
    %825 = vector.shape_cast %824 : vector<128xf32> to vector<1x128xf32>
    %826 = vector.extract_strided_slice %775 {offsets = [4, 0, 0], sizes = [1, 16, 128], strides = [1, 1, 1]} : vector<8x16x128xf32> to vector<1x16x128xf32>
    %827 = vector.shape_cast %826 : vector<1x16x128xf32> to vector<16x128xf32>
    %828 = arith.mulf %827, %820 : vector<16x128xf32>
    %829 = vector.extract_strided_slice %779 {offsets = [4, 0, 0], sizes = [1, 16, 128], strides = [1, 1, 1]} : vector<8x16x128xf32> to vector<1x16x128xf32>
    %830 = vector.shape_cast %829 : vector<1x16x128xf32> to vector<16x128xf32>
    %831 = arith.addf %828, %830 : vector<16x128xf32>
    %832 = vector.extract_strided_slice %760 {offsets = [4, 0, 0], sizes = [1, 16, 128], strides = [1, 1, 1]} : vector<8x16x128xf32> to vector<1x16x128xf32>
    %833 = vector.shape_cast %832 : vector<1x16x128xf32> to vector<16x128xf32>
    %834 = arith.mulf %831, %833 : vector<16x128xf32>
    %cst_183 = arith.constant dense<0.000000e+00> : vector<128xf32>
    %835 = vector.multi_reduction <add>, %834, %cst_183 [0] : vector<16x128xf32> to vector<128xf32>
    %836 = vector.shape_cast %835 : vector<128xf32> to vector<1x128xf32>
    %837 = vector.extract_strided_slice %775 {offsets = [5, 0, 0], sizes = [1, 16, 128], strides = [1, 1, 1]} : vector<8x16x128xf32> to vector<1x16x128xf32>
    %838 = vector.shape_cast %837 : vector<1x16x128xf32> to vector<16x128xf32>
    %839 = arith.mulf %838, %831 : vector<16x128xf32>
    %840 = vector.extract_strided_slice %779 {offsets = [5, 0, 0], sizes = [1, 16, 128], strides = [1, 1, 1]} : vector<8x16x128xf32> to vector<1x16x128xf32>
    %841 = vector.shape_cast %840 : vector<1x16x128xf32> to vector<16x128xf32>
    %842 = arith.addf %839, %841 : vector<16x128xf32>
    %843 = vector.extract_strided_slice %760 {offsets = [5, 0, 0], sizes = [1, 16, 128], strides = [1, 1, 1]} : vector<8x16x128xf32> to vector<1x16x128xf32>
    %844 = vector.shape_cast %843 : vector<1x16x128xf32> to vector<16x128xf32>
    %845 = arith.mulf %842, %844 : vector<16x128xf32>
    %cst_184 = arith.constant dense<0.000000e+00> : vector<128xf32>
    %846 = vector.multi_reduction <add>, %845, %cst_184 [0] : vector<16x128xf32> to vector<128xf32>
    %847 = vector.shape_cast %846 : vector<128xf32> to vector<1x128xf32>
    %848 = vector.extract_strided_slice %775 {offsets = [6, 0, 0], sizes = [1, 16, 128], strides = [1, 1, 1]} : vector<8x16x128xf32> to vector<1x16x128xf32>
    %849 = vector.shape_cast %848 : vector<1x16x128xf32> to vector<16x128xf32>
    %850 = arith.mulf %849, %842 : vector<16x128xf32>
    %851 = vector.extract_strided_slice %779 {offsets = [6, 0, 0], sizes = [1, 16, 128], strides = [1, 1, 1]} : vector<8x16x128xf32> to vector<1x16x128xf32>
    %852 = vector.shape_cast %851 : vector<1x16x128xf32> to vector<16x128xf32>
    %853 = arith.addf %850, %852 : vector<16x128xf32>
    %854 = vector.extract_strided_slice %760 {offsets = [6, 0, 0], sizes = [1, 16, 128], strides = [1, 1, 1]} : vector<8x16x128xf32> to vector<1x16x128xf32>
    %855 = vector.shape_cast %854 : vector<1x16x128xf32> to vector<16x128xf32>
    %856 = arith.mulf %853, %855 : vector<16x128xf32>
    %cst_185 = arith.constant dense<0.000000e+00> : vector<128xf32>
    %857 = vector.multi_reduction <add>, %856, %cst_185 [0] : vector<16x128xf32> to vector<128xf32>
    %858 = vector.shape_cast %857 : vector<128xf32> to vector<1x128xf32>
    %859 = vector.extract_strided_slice %775 {offsets = [7, 0, 0], sizes = [1, 16, 128], strides = [1, 1, 1]} : vector<8x16x128xf32> to vector<1x16x128xf32>
    %860 = vector.shape_cast %859 : vector<1x16x128xf32> to vector<16x128xf32>
    %861 = arith.mulf %860, %853 : vector<16x128xf32>
    %862 = vector.extract_strided_slice %779 {offsets = [7, 0, 0], sizes = [1, 16, 128], strides = [1, 1, 1]} : vector<8x16x128xf32> to vector<1x16x128xf32>
    %863 = vector.shape_cast %862 : vector<1x16x128xf32> to vector<16x128xf32>
    %864 = arith.addf %861, %863 : vector<16x128xf32>
    %865 = vector.extract_strided_slice %760 {offsets = [7, 0, 0], sizes = [1, 16, 128], strides = [1, 1, 1]} : vector<8x16x128xf32> to vector<1x16x128xf32>
    %866 = vector.shape_cast %865 : vector<1x16x128xf32> to vector<16x128xf32>
    %867 = arith.mulf %864, %866 : vector<16x128xf32>
    %cst_186 = arith.constant dense<0.000000e+00> : vector<128xf32>
    %868 = vector.multi_reduction <add>, %867, %cst_186 [0] : vector<16x128xf32> to vector<128xf32>
    %869 = vector.shape_cast %868 : vector<128xf32> to vector<1x128xf32>
    %870 = tpu.concatenate %792, %803, %814, %825, %836, %847, %858, %869 in 0 : vector<1x128xf32>, vector<1x128xf32>, vector<1x128xf32>, vector<1x128xf32>, vector<1x128xf32>, vector<1x128xf32>, vector<1x128xf32>, vector<1x128xf32> -> vector<8x128xf32>
    %871 = arith.addf %870, %781 : vector<8x128xf32>
    %c0_187 = arith.constant 0 : index
    %c48_188 = arith.constant 48 : index
    %c0_189 = arith.constant 0 : index
    %872 = vector.load %arg9[%c0_187, %c48_188, %c0_189] : memref<1x64x128xf32, #tpu.memory_space<vmem>>, vector<1x8x128xf32>
    %873 = vector.shape_cast %872 : vector<1x8x128xf32> to vector<8x128xf32>
    %874 = vector.shape_cast %871 : vector<8x128xf32> to vector<1x8x128xf32>
    tpu.vector_store %arg9[%c0_187, %c48_188, %c0_189], %874 {strides = array<i32>} : memref<1x64x128xf32, #tpu.memory_space<vmem>>, vector<1x8x128xf32>,
    %c0_190 = arith.constant 0 : index
    %c56 = arith.constant 56 : index
    %c0_191 = arith.constant 0 : index
    %875 = vector.load %arg2[%c0_190, %c56, %c0_191] : memref<1x64x128xf32, #tpu.memory_space<vmem>>, vector<1x8x128xf32>
    %876 = vector.shape_cast %875 : vector<1x8x128xf32> to vector<8x128xf32>
    %c0_192 = arith.constant 0 : index
    %c56_193 = arith.constant 56 : index
    %c0_194 = arith.constant 0 : index
    %877 = vector.load %arg3[%c0_192, %c56_193, %c0_194] : memref<1x64x128xf32, #tpu.memory_space<vmem>>, vector<1x8x128xf32>
    %878 = vector.shape_cast %877 : vector<1x8x128xf32> to vector<8x128xf32>
    %c0_195 = arith.constant 0 : index
    %c56_196 = arith.constant 56 : index
    %c0_197 = arith.constant 0 : index
    %c0_198 = arith.constant 0 : index
    %879 = vector.load %arg4[%c0_195, %c56_196, %c0_197, %c0_198] : memref<1x64x16x128xbf16, #tpu.memory_space<vmem>>, vector<1x8x16x128xbf16>
    %880 = vector.shape_cast %879 : vector<1x8x16x128xbf16> to vector<8x16x128xbf16>
    %881 = arith.extf %880 : vector<8x16x128xbf16> to vector<8x16x128xf32>
    %c0_199 = arith.constant 0 : index
    %c56_200 = arith.constant 56 : index
    %c0_201 = arith.constant 0 : index
    %c0_202 = arith.constant 0 : index
    %882 = vector.load %arg5[%c0_199, %c56_200, %c0_201, %c0_202] : memref<1x64x16x128xbf16, #tpu.memory_space<vmem>>, vector<1x8x16x128xbf16>
    %883 = vector.shape_cast %882 : vector<1x8x16x128xbf16> to vector<8x16x128xbf16>
    %884 = arith.extf %883 : vector<8x16x128xbf16> to vector<8x16x128xf32>
    %885 = vector.broadcast %5 : vector<1x128xf32> to vector<8x128xf32>
    %886 = arith.addf %878, %885 : vector<8x128xf32>
    %cst_203 = arith.constant 2.000000e+01 : f32
    %887 = vector.broadcast %cst_203 : f32 to vector<8x128xf32>
    %888 = arith.cmpf ogt, %886, %887 : vector<8x128xf32>
    %cst_204 = arith.constant 2.000000e+01 : f32
    %889 = vector.broadcast %cst_204 : f32 to vector<8x128xf32>
    %890 = arith.minimumf %886, %889 : vector<8x128xf32>
    %891 = math.exp %890 : vector<8x128xf32>
    %892 = math.log1p %891 : vector<8x128xf32>
    %893 = arith.select %888, %886, %892 : vector<8x128xi1>, vector<8x128xf32>
    %894 = vector.shape_cast %893 : vector<8x128xf32> to vector<8x1x128xf32>
    %895 = vector.shape_cast %3 : vector<16x128xf32> to vector<1x16x128xf32>
    %896 = vector.broadcast %894 : vector<8x1x128xf32> to vector<8x16x128xf32>
    %897 = vector.broadcast %895 : vector<1x16x128xf32> to vector<8x16x128xf32>
    %898 = arith.mulf %896, %897 : vector<8x16x128xf32>
    %899 = math.exp %898 : vector<8x16x128xf32>
    %900 = arith.mulf %893, %876 : vector<8x128xf32>
    %901 = vector.shape_cast %900 : vector<8x128xf32> to vector<8x1x128xf32>
    %902 = vector.broadcast %901 : vector<8x1x128xf32> to vector<8x16x128xf32>
    %903 = arith.mulf %902, %881 : vector<8x16x128xf32>
    %904 = vector.broadcast %4 : vector<1x128xf32> to vector<8x128xf32>
    %905 = arith.mulf %904, %876 : vector<8x128xf32>
    %906 = vector.extract_strided_slice %899 {offsets = [0, 0, 0], sizes = [1, 16, 128], strides = [1, 1, 1]} : vector<8x16x128xf32> to vector<1x16x128xf32>
    %907 = vector.shape_cast %906 : vector<1x16x128xf32> to vector<16x128xf32>
    %908 = arith.mulf %907, %864 : vector<16x128xf32>
    %909 = vector.extract_strided_slice %903 {offsets = [0, 0, 0], sizes = [1, 16, 128], strides = [1, 1, 1]} : vector<8x16x128xf32> to vector<1x16x128xf32>
    %910 = vector.shape_cast %909 : vector<1x16x128xf32> to vector<16x128xf32>
    %911 = arith.addf %908, %910 : vector<16x128xf32>
    %912 = vector.extract_strided_slice %884 {offsets = [0, 0, 0], sizes = [1, 16, 128], strides = [1, 1, 1]} : vector<8x16x128xf32> to vector<1x16x128xf32>
    %913 = vector.shape_cast %912 : vector<1x16x128xf32> to vector<16x128xf32>
    %914 = arith.mulf %911, %913 : vector<16x128xf32>
    %cst_205 = arith.constant dense<0.000000e+00> : vector<128xf32>
    %915 = vector.multi_reduction <add>, %914, %cst_205 [0] : vector<16x128xf32> to vector<128xf32>
    %916 = vector.shape_cast %915 : vector<128xf32> to vector<1x128xf32>
    %917 = vector.extract_strided_slice %899 {offsets = [1, 0, 0], sizes = [1, 16, 128], strides = [1, 1, 1]} : vector<8x16x128xf32> to vector<1x16x128xf32>
    %918 = vector.shape_cast %917 : vector<1x16x128xf32> to vector<16x128xf32>
    %919 = arith.mulf %918, %911 : vector<16x128xf32>
    %920 = vector.extract_strided_slice %903 {offsets = [1, 0, 0], sizes = [1, 16, 128], strides = [1, 1, 1]} : vector<8x16x128xf32> to vector<1x16x128xf32>
    %921 = vector.shape_cast %920 : vector<1x16x128xf32> to vector<16x128xf32>
    %922 = arith.addf %919, %921 : vector<16x128xf32>
    %923 = vector.extract_strided_slice %884 {offsets = [1, 0, 0], sizes = [1, 16, 128], strides = [1, 1, 1]} : vector<8x16x128xf32> to vector<1x16x128xf32>
    %924 = vector.shape_cast %923 : vector<1x16x128xf32> to vector<16x128xf32>
    %925 = arith.mulf %922, %924 : vector<16x128xf32>
    %cst_206 = arith.constant dense<0.000000e+00> : vector<128xf32>
    %926 = vector.multi_reduction <add>, %925, %cst_206 [0] : vector<16x128xf32> to vector<128xf32>
    %927 = vector.shape_cast %926 : vector<128xf32> to vector<1x128xf32>
    %928 = vector.extract_strided_slice %899 {offsets = [2, 0, 0], sizes = [1, 16, 128], strides = [1, 1, 1]} : vector<8x16x128xf32> to vector<1x16x128xf32>
    %929 = vector.shape_cast %928 : vector<1x16x128xf32> to vector<16x128xf32>
    %930 = arith.mulf %929, %922 : vector<16x128xf32>
    %931 = vector.extract_strided_slice %903 {offsets = [2, 0, 0], sizes = [1, 16, 128], strides = [1, 1, 1]} : vector<8x16x128xf32> to vector<1x16x128xf32>
    %932 = vector.shape_cast %931 : vector<1x16x128xf32> to vector<16x128xf32>
    %933 = arith.addf %930, %932 : vector<16x128xf32>
    %934 = vector.extract_strided_slice %884 {offsets = [2, 0, 0], sizes = [1, 16, 128], strides = [1, 1, 1]} : vector<8x16x128xf32> to vector<1x16x128xf32>
    %935 = vector.shape_cast %934 : vector<1x16x128xf32> to vector<16x128xf32>
    %936 = arith.mulf %933, %935 : vector<16x128xf32>
    %cst_207 = arith.constant dense<0.000000e+00> : vector<128xf32>
    %937 = vector.multi_reduction <add>, %936, %cst_207 [0] : vector<16x128xf32> to vector<128xf32>
    %938 = vector.shape_cast %937 : vector<128xf32> to vector<1x128xf32>
    %939 = vector.extract_strided_slice %899 {offsets = [3, 0, 0], sizes = [1, 16, 128], strides = [1, 1, 1]} : vector<8x16x128xf32> to vector<1x16x128xf32>
    %940 = vector.shape_cast %939 : vector<1x16x128xf32> to vector<16x128xf32>
    %941 = arith.mulf %940, %933 : vector<16x128xf32>
    %942 = vector.extract_strided_slice %903 {offsets = [3, 0, 0], sizes = [1, 16, 128], strides = [1, 1, 1]} : vector<8x16x128xf32> to vector<1x16x128xf32>
    %943 = vector.shape_cast %942 : vector<1x16x128xf32> to vector<16x128xf32>
    %944 = arith.addf %941, %943 : vector<16x128xf32>
    %945 = vector.extract_strided_slice %884 {offsets = [3, 0, 0], sizes = [1, 16, 128], strides = [1, 1, 1]} : vector<8x16x128xf32> to vector<1x16x128xf32>
    %946 = vector.shape_cast %945 : vector<1x16x128xf32> to vector<16x128xf32>
    %947 = arith.mulf %944, %946 : vector<16x128xf32>
    %cst_208 = arith.constant dense<0.000000e+00> : vector<128xf32>
    %948 = vector.multi_reduction <add>, %947, %cst_208 [0] : vector<16x128xf32> to vector<128xf32>
    %949 = vector.shape_cast %948 : vector<128xf32> to vector<1x128xf32>
    %950 = vector.extract_strided_slice %899 {offsets = [4, 0, 0], sizes = [1, 16, 128], strides = [1, 1, 1]} : vector<8x16x128xf32> to vector<1x16x128xf32>
    %951 = vector.shape_cast %950 : vector<1x16x128xf32> to vector<16x128xf32>
    %952 = arith.mulf %951, %944 : vector<16x128xf32>
    %953 = vector.extract_strided_slice %903 {offsets = [4, 0, 0], sizes = [1, 16, 128], strides = [1, 1, 1]} : vector<8x16x128xf32> to vector<1x16x128xf32>
    %954 = vector.shape_cast %953 : vector<1x16x128xf32> to vector<16x128xf32>
    %955 = arith.addf %952, %954 : vector<16x128xf32>
    %956 = vector.extract_strided_slice %884 {offsets = [4, 0, 0], sizes = [1, 16, 128], strides = [1, 1, 1]} : vector<8x16x128xf32> to vector<1x16x128xf32>
    %957 = vector.shape_cast %956 : vector<1x16x128xf32> to vector<16x128xf32>
    %958 = arith.mulf %955, %957 : vector<16x128xf32>
    %cst_209 = arith.constant dense<0.000000e+00> : vector<128xf32>
    %959 = vector.multi_reduction <add>, %958, %cst_209 [0] : vector<16x128xf32> to vector<128xf32>
    %960 = vector.shape_cast %959 : vector<128xf32> to vector<1x128xf32>
    %961 = vector.extract_strided_slice %899 {offsets = [5, 0, 0], sizes = [1, 16, 128], strides = [1, 1, 1]} : vector<8x16x128xf32> to vector<1x16x128xf32>
    %962 = vector.shape_cast %961 : vector<1x16x128xf32> to vector<16x128xf32>
    %963 = arith.mulf %962, %955 : vector<16x128xf32>
    %964 = vector.extract_strided_slice %903 {offsets = [5, 0, 0], sizes = [1, 16, 128], strides = [1, 1, 1]} : vector<8x16x128xf32> to vector<1x16x128xf32>
    %965 = vector.shape_cast %964 : vector<1x16x128xf32> to vector<16x128xf32>
    %966 = arith.addf %963, %965 : vector<16x128xf32>
    %967 = vector.extract_strided_slice %884 {offsets = [5, 0, 0], sizes = [1, 16, 128], strides = [1, 1, 1]} : vector<8x16x128xf32> to vector<1x16x128xf32>
    %968 = vector.shape_cast %967 : vector<1x16x128xf32> to vector<16x128xf32>
    %969 = arith.mulf %966, %968 : vector<16x128xf32>
    %cst_210 = arith.constant dense<0.000000e+00> : vector<128xf32>
    %970 = vector.multi_reduction <add>, %969, %cst_210 [0] : vector<16x128xf32> to vector<128xf32>
    %971 = vector.shape_cast %970 : vector<128xf32> to vector<1x128xf32>
    %972 = vector.extract_strided_slice %899 {offsets = [6, 0, 0], sizes = [1, 16, 128], strides = [1, 1, 1]} : vector<8x16x128xf32> to vector<1x16x128xf32>
    %973 = vector.shape_cast %972 : vector<1x16x128xf32> to vector<16x128xf32>
    %974 = arith.mulf %973, %966 : vector<16x128xf32>
    %975 = vector.extract_strided_slice %903 {offsets = [6, 0, 0], sizes = [1, 16, 128], strides = [1, 1, 1]} : vector<8x16x128xf32> to vector<1x16x128xf32>
    %976 = vector.shape_cast %975 : vector<1x16x128xf32> to vector<16x128xf32>
    %977 = arith.addf %974, %976 : vector<16x128xf32>
    %978 = vector.extract_strided_slice %884 {offsets = [6, 0, 0], sizes = [1, 16, 128], strides = [1, 1, 1]} : vector<8x16x128xf32> to vector<1x16x128xf32>
    %979 = vector.shape_cast %978 : vector<1x16x128xf32> to vector<16x128xf32>
    %980 = arith.mulf %977, %979 : vector<16x128xf32>
    %cst_211 = arith.constant dense<0.000000e+00> : vector<128xf32>
    %981 = vector.multi_reduction <add>, %980, %cst_211 [0] : vector<16x128xf32> to vector<128xf32>
    %982 = vector.shape_cast %981 : vector<128xf32> to vector<1x128xf32>
    %983 = vector.extract_strided_slice %899 {offsets = [7, 0, 0], sizes = [1, 16, 128], strides = [1, 1, 1]} : vector<8x16x128xf32> to vector<1x16x128xf32>
    %984 = vector.shape_cast %983 : vector<1x16x128xf32> to vector<16x128xf32>
    %985 = arith.mulf %984, %977 : vector<16x128xf32>
    %986 = vector.extract_strided_slice %903 {offsets = [7, 0, 0], sizes = [1, 16, 128], strides = [1, 1, 1]} : vector<8x16x128xf32> to vector<1x16x128xf32>
    %987 = vector.shape_cast %986 : vector<1x16x128xf32> to vector<16x128xf32>
    %988 = arith.addf %985, %987 : vector<16x128xf32>
    %989 = vector.extract_strided_slice %884 {offsets = [7, 0, 0], sizes = [1, 16, 128], strides = [1, 1, 1]} : vector<8x16x128xf32> to vector<1x16x128xf32>
    %990 = vector.shape_cast %989 : vector<1x16x128xf32> to vector<16x128xf32>
    %991 = arith.mulf %988, %990 : vector<16x128xf32>
    %cst_212 = arith.constant dense<0.000000e+00> : vector<128xf32>
    %992 = vector.multi_reduction <add>, %991, %cst_212 [0] : vector<16x128xf32> to vector<128xf32>
    %993 = vector.shape_cast %992 : vector<128xf32> to vector<1x128xf32>
    %994 = tpu.concatenate %916, %927, %938, %949, %960, %971, %982, %993 in 0 : vector<1x128xf32>, vector<1x128xf32>, vector<1x128xf32>, vector<1x128xf32>, vector<1x128xf32>, vector<1x128xf32>, vector<1x128xf32>, vector<1x128xf32> -> vector<8x128xf32>
    %995 = arith.addf %994, %905 : vector<8x128xf32>
    %c0_213 = arith.constant 0 : index
    %c56_214 = arith.constant 56 : index
    %c0_215 = arith.constant 0 : index
    %996 = vector.load %arg9[%c0_213, %c56_214, %c0_215] : memref<1x64x128xf32, #tpu.memory_space<vmem>>, vector<1x8x128xf32>
    %997 = vector.shape_cast %996 : vector<1x8x128xf32> to vector<8x128xf32>
    %998 = vector.shape_cast %995 : vector<8x128xf32> to vector<1x8x128xf32>
    tpu.vector_store %arg9[%c0_213, %c56_214, %c0_215], %998 {strides = array<i32>} : memref<1x64x128xf32, #tpu.memory_space<vmem>>, vector<1x8x128xf32>,
    %c0_216 = arith.constant 0 : index
    %c0_217 = arith.constant 0 : index
    %999 = vector.load %arg10[%c0_216, %c0_217] : memref<16x128xf32, #tpu.memory_space<vmem>>, vector<16x128xf32>
    tpu.vector_store %arg10[%c0_216, %c0_217], %988 {strides = array<i32>} : memref<16x128xf32, #tpu.memory_space<vmem>>, vector<16x128xf32>,
    return
  }
  func.func @transform_0(%arg0: i32, %arg1: i32) -> (i32, i32, i32) {
    %c0_i32 = arith.constant 0 : i32
    %c0_i32_0 = arith.constant 0 : i32
    return %arg0, %arg1, %c0_i32 : i32, i32, i32
  }
  func.func @transform_1(%arg0: i32, %arg1: i32) -> (i32, i32, i32) {
    %c0_i32 = arith.constant 0 : i32
    %c0_i32_0 = arith.constant 0 : i32
    return %arg0, %arg1, %c0_i32 : i32, i32, i32
  }
  func.func @transform_2(%arg0: i32, %arg1: i32) -> (i32, i32, i32, i32) {
    %c0_i32 = arith.constant 0 : i32
    %c0_i32_0 = arith.constant 0 : i32
    %c0_i32_1 = arith.constant 0 : i32
    return %arg0, %arg1, %c0_i32, %c0_i32_0 : i32, i32, i32, i32
  }
  func.func @transform_3(%arg0: i32, %arg1: i32) -> (i32, i32, i32, i32) {
    %c0_i32 = arith.constant 0 : i32
    %c0_i32_0 = arith.constant 0 : i32
    %c0_i32_1 = arith.constant 0 : i32
    return %arg0, %arg1, %c0_i32, %c0_i32_0 : i32, i32, i32, i32
  }
  func.func @transform_4(%arg0: i32, %arg1: i32) -> (i32, i32) {
    %c0_i32 = arith.constant 0 : i32
    %c0_i32_0 = arith.constant 0 : i32
    %c0_i32_1 = arith.constant 0 : i32
    return %c0_i32, %c0_i32_0 : i32, i32
  }
  func.func @transform_5(%arg0: i32, %arg1: i32) -> (i32, i32) {
    %c0_i32 = arith.constant 0 : i32
    %c0_i32_0 = arith.constant 0 : i32
    %c0_i32_1 = arith.constant 0 : i32
    return %c0_i32, %c0_i32_0 : i32, i32
  }
  func.func @transform_6(%arg0: i32, %arg1: i32) -> (i32, i32) {
    %c0_i32 = arith.constant 0 : i32
    %c0_i32_0 = arith.constant 0 : i32
    %c0_i32_1 = arith.constant 0 : i32
    return %c0_i32, %c0_i32_0 : i32, i32
  }
  func.func @transform_7(%arg0: i32, %arg1: i32) -> (i32, i32, i32) {
    %c0_i32 = arith.constant 0 : i32
    %c0_i32_0 = arith.constant 0 : i32
    return %arg0, %arg1, %c0_i32 : i32, i32, i32
  }
}

module attributes {stable_mosaic.version = 11 : i64} {
  func.func @_ln_matmul_kernel(%arg0: i32, %arg1: memref<256x16xf32, #tpu.memory_space<vmem>>, %arg2: memref<1x16xf32, #tpu.memory_space<vmem>>, %arg3: memref<1x16xf32, #tpu.memory_space<vmem>>, %arg4: memref<16x8xbf16, #tpu.memory_space<vmem>>, %arg5: memref<256x8xf32, #tpu.memory_space<vmem>>) attributes {dimension_semantics = [#tpu.dimension_semantics<parallel>], iteration_bounds = array<i64: 2>, scalar_prefetch = 0 : i64, scratch_operands = 0 : i64, tpu.core_type = #tpu.core_type<tc>, window_params = [{transform_indices = @transform_0, window_bounds = array<i64: 256, 16>}, {pipeline_mode = #tpu.pipeline_mode<synchronous>, transform_indices = @transform_1, window_bounds = array<i64: 1, 16>}, {pipeline_mode = #tpu.pipeline_mode<synchronous>, transform_indices = @transform_2, window_bounds = array<i64: 1, 16>}, {pipeline_mode = #tpu.pipeline_mode<synchronous>, transform_indices = @transform_3, window_bounds = array<i64: 16, 8>}, {transform_indices = @transform_4, window_bounds = array<i64: 256, 8>}]} {
    %c0 = arith.constant 0 : index
    %c0_0 = arith.constant 0 : index
    %0 = vector.load %arg1[%c0, %c0_0] : memref<256x16xf32, #tpu.memory_space<vmem>>, vector<256x16xf32>
    %c0_1 = arith.constant 0 : index
    %c0_2 = arith.constant 0 : index
    %1 = vector.load %arg2[%c0_1, %c0_2] : memref<1x16xf32, #tpu.memory_space<vmem>>, vector<1x16xf32>
    %c0_3 = arith.constant 0 : index
    %c0_4 = arith.constant 0 : index
    %2 = vector.load %arg3[%c0_3, %c0_4] : memref<1x16xf32, #tpu.memory_space<vmem>>, vector<1x16xf32>
    %cst = arith.constant dense<0.000000e+00> : vector<256xf32>
    %3 = vector.multi_reduction <add>, %0, %cst [1] : vector<256x16xf32> to vector<256xf32>
    %4 = vector.shape_cast %3 : vector<256xf32> to vector<256x1xf32>
    %cst_5 = arith.constant 1.600000e+01 : f32
    %5 = vector.broadcast %cst_5 : f32 to vector<256x1xf32>
    %6 = arith.divf %4, %5 : vector<256x1xf32>
    %7 = vector.broadcast %6 : vector<256x1xf32> to vector<256x16xf32>
    %8 = arith.subf %0, %7 : vector<256x16xf32>
    %9 = arith.mulf %8, %8 : vector<256x16xf32>
    %cst_6 = arith.constant dense<0.000000e+00> : vector<256xf32>
    %10 = vector.multi_reduction <add>, %9, %cst_6 [1] : vector<256x16xf32> to vector<256xf32>
    %11 = vector.shape_cast %10 : vector<256xf32> to vector<256x1xf32>
    %cst_7 = arith.constant 1.600000e+01 : f32
    %12 = vector.broadcast %cst_7 : f32 to vector<256x1xf32>
    %13 = arith.divf %11, %12 : vector<256x1xf32>
    %14 = vector.broadcast %6 : vector<256x1xf32> to vector<256x16xf32>
    %15 = arith.subf %0, %14 : vector<256x16xf32>
    %cst_8 = arith.constant 9.99999974E-6 : f32
    %16 = vector.broadcast %cst_8 : f32 to vector<256x1xf32>
    %17 = arith.addf %13, %16 : vector<256x1xf32>
    %18 = math.rsqrt %17 : vector<256x1xf32>
    %19 = vector.broadcast %18 : vector<256x1xf32> to vector<256x16xf32>
    %20 = arith.mulf %15, %19 : vector<256x16xf32>
    %21 = vector.broadcast %1 : vector<1x16xf32> to vector<256x16xf32>
    %22 = arith.mulf %20, %21 : vector<256x16xf32>
    %23 = vector.broadcast %2 : vector<1x16xf32> to vector<256x16xf32>
    %24 = arith.addf %22, %23 : vector<256x16xf32>
    %25 = arith.truncf %24 : vector<256x16xf32> to vector<256x16xbf16>
    %c0_9 = arith.constant 0 : index
    %c0_10 = arith.constant 0 : index
    %26 = vector.load %arg4[%c0_9, %c0_10] : memref<16x8xbf16, #tpu.memory_space<vmem>>, vector<16x8xbf16>
    %cst_11 = arith.constant dense<0.000000e+00> : vector<256x8xf32>
    %27 = tpu.matmul %25, %26, %cst_11 {dimension_numbers = #tpu.dot_dimension_numbers<[1], [0], [0], [1], [0, 0, 1, 1], [], []>} : vector<256x16xbf16>, vector<16x8xbf16>, vector<256x8xf32> -> vector<256x8xf32>
    %c0_12 = arith.constant 0 : index
    %c0_13 = arith.constant 0 : index
    %28 = vector.load %arg5[%c0_12, %c0_13] : memref<256x8xf32, #tpu.memory_space<vmem>>, vector<256x8xf32>
    tpu.vector_store %arg5[%c0_12, %c0_13], %27 {strides = array<i32>} : memref<256x8xf32, #tpu.memory_space<vmem>>, vector<256x8xf32>,
    return
  }
  func.func @transform_0(%arg0: i32) -> (i32, i32) {
    %c0_i32 = arith.constant 0 : i32
    %c0_i32_0 = arith.constant 0 : i32
    return %arg0, %c0_i32 : i32, i32
  }
  func.func @transform_1(%arg0: i32) -> (i32, i32) {
    %c0_i32 = arith.constant 0 : i32
    %c0_i32_0 = arith.constant 0 : i32
    %c0_i32_1 = arith.constant 0 : i32
    return %c0_i32, %c0_i32_0 : i32, i32
  }
  func.func @transform_2(%arg0: i32) -> (i32, i32) {
    %c0_i32 = arith.constant 0 : i32
    %c0_i32_0 = arith.constant 0 : i32
    %c0_i32_1 = arith.constant 0 : i32
    return %c0_i32, %c0_i32_0 : i32, i32
  }
  func.func @transform_3(%arg0: i32) -> (i32, i32) {
    %c0_i32 = arith.constant 0 : i32
    %c0_i32_0 = arith.constant 0 : i32
    %c0_i32_1 = arith.constant 0 : i32
    return %c0_i32, %c0_i32_0 : i32, i32
  }
  func.func @transform_4(%arg0: i32) -> (i32, i32) {
    %c0_i32 = arith.constant 0 : i32
    %c0_i32_0 = arith.constant 0 : i32
    return %arg0, %c0_i32 : i32, i32
  }
}

module attributes {stable_mosaic.version = 11 : i64} {
  func.func @_skip_ln_proj_kernel(%arg0: i32, %arg1: memref<1xf32, #tpu.memory_space<smem>>, %arg2: memref<128x32xf32, #tpu.memory_space<vmem>>, %arg3: memref<128x32xf32, #tpu.memory_space<vmem>>, %arg4: memref<1x32xf32, #tpu.memory_space<vmem>>, %arg5: memref<1x32xf32, #tpu.memory_space<vmem>>, %arg6: memref<32x32xbf16, #tpu.memory_space<vmem>>, %arg7: memref<1x32xf32, #tpu.memory_space<vmem>>, %arg8: memref<128x32xf32, #tpu.memory_space<vmem>>) attributes {dimension_semantics = [#tpu.dimension_semantics<parallel>], iteration_bounds = array<i64: 1>, scalar_prefetch = 0 : i64, scratch_operands = 0 : i64, tpu.core_type = #tpu.core_type<tc>, window_params = [{transform_indices = @transform_0, window_bounds = array<i64: 1>}, {transform_indices = @transform_1, window_bounds = array<i64: 128, 32>}, {transform_indices = @transform_2, window_bounds = array<i64: 128, 32>}, {pipeline_mode = #tpu.pipeline_mode<synchronous>, transform_indices = @transform_3, window_bounds = array<i64: 1, 32>}, {pipeline_mode = #tpu.pipeline_mode<synchronous>, transform_indices = @transform_4, window_bounds = array<i64: 1, 32>}, {pipeline_mode = #tpu.pipeline_mode<synchronous>, transform_indices = @transform_5, window_bounds = array<i64: 32, 32>}, {pipeline_mode = #tpu.pipeline_mode<synchronous>, transform_indices = @transform_6, window_bounds = array<i64: 1, 32>}, {transform_indices = @transform_7, window_bounds = array<i64: 128, 32>}]} {
    %c0 = arith.constant 0 : index
    %c0_0 = arith.constant 0 : index
    %0 = vector.load %arg2[%c0, %c0_0] : memref<128x32xf32, #tpu.memory_space<vmem>>, vector<128x32xf32>
    %c0_1 = arith.constant 0 : index
    %1 = memref.load %arg1[%c0_1] : memref<1xf32, #tpu.memory_space<smem>>
    %c0_2 = arith.constant 0 : index
    %c0_3 = arith.constant 0 : index
    %2 = vector.load %arg3[%c0_2, %c0_3] : memref<128x32xf32, #tpu.memory_space<vmem>>, vector<128x32xf32>
    %3 = vector.broadcast %1 : f32 to vector<128x32xf32>
    %4 = arith.mulf %3, %2 : vector<128x32xf32>
    %5 = arith.addf %0, %4 : vector<128x32xf32>
    %c0_4 = arith.constant 0 : index
    %c0_5 = arith.constant 0 : index
    %6 = vector.load %arg4[%c0_4, %c0_5] : memref<1x32xf32, #tpu.memory_space<vmem>>, vector<1x32xf32>
    %c0_6 = arith.constant 0 : index
    %c0_7 = arith.constant 0 : index
    %7 = vector.load %arg5[%c0_6, %c0_7] : memref<1x32xf32, #tpu.memory_space<vmem>>, vector<1x32xf32>
    %cst = arith.constant dense<0.000000e+00> : vector<128xf32>
    %8 = vector.multi_reduction <add>, %5, %cst [1] : vector<128x32xf32> to vector<128xf32>
    %9 = vector.shape_cast %8 : vector<128xf32> to vector<128x1xf32>
    %cst_8 = arith.constant 3.200000e+01 : f32
    %10 = vector.broadcast %cst_8 : f32 to vector<128x1xf32>
    %11 = arith.divf %9, %10 : vector<128x1xf32>
    %12 = vector.broadcast %11 : vector<128x1xf32> to vector<128x32xf32>
    %13 = arith.subf %5, %12 : vector<128x32xf32>
    %14 = arith.mulf %13, %13 : vector<128x32xf32>
    %cst_9 = arith.constant dense<0.000000e+00> : vector<128xf32>
    %15 = vector.multi_reduction <add>, %14, %cst_9 [1] : vector<128x32xf32> to vector<128xf32>
    %16 = vector.shape_cast %15 : vector<128xf32> to vector<128x1xf32>
    %cst_10 = arith.constant 3.200000e+01 : f32
    %17 = vector.broadcast %cst_10 : f32 to vector<128x1xf32>
    %18 = arith.divf %16, %17 : vector<128x1xf32>
    %19 = vector.broadcast %11 : vector<128x1xf32> to vector<128x32xf32>
    %20 = arith.subf %5, %19 : vector<128x32xf32>
    %cst_11 = arith.constant 9.99999974E-6 : f32
    %21 = vector.broadcast %cst_11 : f32 to vector<128x1xf32>
    %22 = arith.addf %18, %21 : vector<128x1xf32>
    %23 = math.rsqrt %22 : vector<128x1xf32>
    %24 = vector.broadcast %23 : vector<128x1xf32> to vector<128x32xf32>
    %25 = arith.mulf %20, %24 : vector<128x32xf32>
    %26 = vector.broadcast %6 : vector<1x32xf32> to vector<128x32xf32>
    %27 = arith.mulf %25, %26 : vector<128x32xf32>
    %28 = vector.broadcast %7 : vector<1x32xf32> to vector<128x32xf32>
    %29 = arith.addf %27, %28 : vector<128x32xf32>
    %30 = arith.truncf %29 : vector<128x32xf32> to vector<128x32xbf16>
    %c0_12 = arith.constant 0 : index
    %c0_13 = arith.constant 0 : index
    %31 = vector.load %arg6[%c0_12, %c0_13] : memref<32x32xbf16, #tpu.memory_space<vmem>>, vector<32x32xbf16>
    %cst_14 = arith.constant dense<0.000000e+00> : vector<128x32xf32>
    %32 = tpu.matmul %30, %31, %cst_14 {dimension_numbers = #tpu.dot_dimension_numbers<[1], [0], [0], [1], [0, 0, 1, 1], [], []>} : vector<128x32xbf16>, vector<32x32xbf16>, vector<128x32xf32> -> vector<128x32xf32>
    %c0_15 = arith.constant 0 : index
    %c0_16 = arith.constant 0 : index
    %33 = vector.load %arg7[%c0_15, %c0_16] : memref<1x32xf32, #tpu.memory_space<vmem>>, vector<1x32xf32>
    %34 = vector.broadcast %33 : vector<1x32xf32> to vector<128x32xf32>
    %35 = arith.addf %32, %34 : vector<128x32xf32>
    %c0_17 = arith.constant 0 : index
    %c0_18 = arith.constant 0 : index
    %36 = vector.load %arg8[%c0_17, %c0_18] : memref<128x32xf32, #tpu.memory_space<vmem>>, vector<128x32xf32>
    tpu.vector_store %arg8[%c0_17, %c0_18], %35 {strides = array<i32>} : memref<128x32xf32, #tpu.memory_space<vmem>>, vector<128x32xf32>,
    return
  }
  func.func @transform_0(%arg0: i32) -> i32 {
    %c0_i32 = arith.constant 0 : i32
    %c0_i32_0 = arith.constant 0 : i32
    return %c0_i32 : i32
  }
  func.func @transform_1(%arg0: i32) -> (i32, i32) {
    %c0_i32 = arith.constant 0 : i32
    %c0_i32_0 = arith.constant 0 : i32
    return %arg0, %c0_i32 : i32, i32
  }
  func.func @transform_2(%arg0: i32) -> (i32, i32) {
    %c0_i32 = arith.constant 0 : i32
    %c0_i32_0 = arith.constant 0 : i32
    return %arg0, %c0_i32 : i32, i32
  }
  func.func @transform_3(%arg0: i32) -> (i32, i32) {
    %c0_i32 = arith.constant 0 : i32
    %c0_i32_0 = arith.constant 0 : i32
    %c0_i32_1 = arith.constant 0 : i32
    return %c0_i32, %c0_i32_0 : i32, i32
  }
  func.func @transform_4(%arg0: i32) -> (i32, i32) {
    %c0_i32 = arith.constant 0 : i32
    %c0_i32_0 = arith.constant 0 : i32
    %c0_i32_1 = arith.constant 0 : i32
    return %c0_i32, %c0_i32_0 : i32, i32
  }
  func.func @transform_5(%arg0: i32) -> (i32, i32) {
    %c0_i32 = arith.constant 0 : i32
    %c0_i32_0 = arith.constant 0 : i32
    %c0_i32_1 = arith.constant 0 : i32
    return %c0_i32, %c0_i32_0 : i32, i32
  }
  func.func @transform_6(%arg0: i32) -> (i32, i32) {
    %c0_i32 = arith.constant 0 : i32
    %c0_i32_0 = arith.constant 0 : i32
    %c0_i32_1 = arith.constant 0 : i32
    return %c0_i32, %c0_i32_0 : i32, i32
  }
  func.func @transform_7(%arg0: i32) -> (i32, i32) {
    %c0_i32 = arith.constant 0 : i32
    %c0_i32_0 = arith.constant 0 : i32
    return %arg0, %c0_i32 : i32, i32
  }
}

</mosaic_0001>

<llo_original>
// kernel: tile.9
$region0: #{tile.9}
  %s0 = inlined_call_operand.vmem [shape: f32[9,8,1,1,16], index: 0, kind: input, shape index: {}]
  %s1 = inlined_call_operand.vmem [shape: f32[9,128], index: 1, kind: output, shape index: {}]
  %v2 = vld [vmem:[%s0] ss:$8 sm:$0xf]
  %v3 = vld [vmem:[%s0] ss:$8 sm:$0xf0]
  %vm4 = vcmask 1047556
  %v5 = vsel %vm4, %v3, %v2
  %vm6 = vcmask 130048
  %7 = vst.msk [vmem:[%s1] sm:$0xff] %vm6, %v5
  %s8 = scalar_lea.vmem %s0, 64
  %v9 = vld [vmem:[%s8] sm:$0x1]
  %vm10 = vcmask 130048
  %s11 = scalar_lea.vmem %s1, 8
  %12 = vst.msk [vmem:[%s11] sm:$0x1] %vm10, %v9
  %s13 = scalar_lea.vmem %s0, 7
  %v14 = vld [vmem:[%s13] ss:$8 sm:$0xf]
  %s15 = scalar_lea.vmem %s0, 7
  %v16 = vld [vmem:[%s15] ss:$8 sm:$0xf0]
  %vm17 = vcmask 1047556
  %v18 = vsel %vm17, %v16, %v14
  %19 = vrot.lane.b32.xlu0 %v18, 112
  %v20 = vpop.permute.xlu0 %19
  %vm21 = vcmask 1048448
  %22 = vst.msk [vmem:[%s1] sm:$0xff] %vm21, %v20
  %s23 = scalar_lea.vmem %s0, 71
  %v24 = vld [vmem:[%s23] sm:$0x1]
  %25 = vrot.lane.b32.xlu0 %v24, 112
  %v26 = vpop.permute.xlu0 %25
  %vm27 = vcmask 1048448
  %s28 = scalar_lea.vmem %s1, 8
  %29 = vst.msk [vmem:[%s28] sm:$0x1] %vm27, %v26
  %s30 = scalar_lea.vmem %s0, 6
  %v31 = vld [vmem:[%s30] ss:$8 sm:$0xf]
  %s32 = scalar_lea.vmem %s0, 6
  %v33 = vld [vmem:[%s32] ss:$8 sm:$0xf0]
  %vm34 = vcmask 1047556
  %v35 = vsel %vm34, %v33, %v31
  %36 = vrot.lane.b32.xlu0 %v35, 96
  %v37 = vpop.permute.xlu0 %36
  %vm38 = vcmask 917248
  %39 = vst.msk [vmem:[%s1] sm:$0xff] %vm38, %v37
  %s40 = scalar_lea.vmem %s0, 70
  %v41 = vld [vmem:[%s40] sm:$0x1]
  %42 = vrot.lane.b32.xlu0 %v41, 96
  %v43 = vpop.permute.xlu0 %42
  %vm44 = vcmask 917248
  %s45 = scalar_lea.vmem %s1, 8
  %46 = vst.msk [vmem:[%s45] sm:$0x1] %vm44, %v43
  %s47 = scalar_lea.vmem %s0, 5
  %v48 = vld [vmem:[%s47] ss:$8 sm:$0xf]
  %s49 = scalar_lea.vmem %s0, 5
  %v50 = vld [vmem:[%s49] ss:$8 sm:$0xf0]
  %vm51 = vcmask 1047556
  %v52 = vsel %vm51, %v50, %v48
  %53 = vrot.lane.b32.xlu0 %v52, 80
  %v54 = vpop.permute.xlu0 %53
  %vm55 = vcmask 786048
  %56 = vst.msk [vmem:[%s1] sm:$0xff] %vm55, %v54
  %s57 = scalar_lea.vmem %s0, 69
  %v58 = vld [vmem:[%s57] sm:$0x1]
  %59 = vrot.lane.b32.xlu0 %v58, 80
  %v60 = vpop.permute.xlu0 %59
  %vm61 = vcmask 786048
  %s62 = scalar_lea.vmem %s1, 8
  %63 = vst.msk [vmem:[%s62] sm:$0x1] %vm61, %v60
  %s64 = scalar_lea.vmem %s0, 4
  %v65 = vld [vmem:[%s64] ss:$8 sm:$0xf]
  %s66 = scalar_lea.vmem %s0, 4
  %v67 = vld [vmem:[%s66] ss:$8 sm:$0xf0]
  %vm68 = vcmask 1047556
  %v69 = vsel %vm68, %v67, %v65
  %70 = vrot.lane.b32.xlu0 %v69, 64
  %v71 = vpop.permute.xlu0 %70
  %vm72 = vcmask 654848
  %73 = vst.msk [vmem:[%s1] sm:$0xff] %vm72, %v71
  %s74 = scalar_lea.vmem %s0, 68
  %v75 = vld [vmem:[%s74] sm:$0x1]
  %76 = vrot.lane.b32.xlu0 %v75, 64
  %v77 = vpop.permute.xlu0 %76
  %vm78 = vcmask 654848
  %s79 = scalar_lea.vmem %s1, 8
  %80 = vst.msk [vmem:[%s79] sm:$0x1] %vm78, %v77
  %s81 = scalar_lea.vmem %s0, 3
  %v82 = vld [vmem:[%s81] ss:$8 sm:$0xf]
  %s83 = scalar_lea.vmem %s0, 3
  %v84 = vld [vmem:[%s83] ss:$8 sm:$0xf0]
  %vm85 = vcmask 1047556
  %v86 = vsel %vm85, %v84, %v82
  %87 = vrot.lane.b32.xlu0 %v86, 48
  %v88 = vpop.permute.xlu0 %87
  %vm89 = vcmask 523648
  %90 = vst.msk [vmem:[%s1] sm:$0xff] %vm89, %v88
  %s91 = scalar_lea.vmem %s0, 67
  %v92 = vld [vmem:[%s91] sm:$0x1]
  %93 = vrot.lane.b32.xlu0 %v92, 48
  %v94 = vpop.permute.xlu0 %93
  %vm95 = vcmask 523648
  %s96 = scalar_lea.vmem %s1, 8
  %97 = vst.msk [vmem:[%s96] sm:$0x1] %vm95, %v94
  %s98 = scalar_lea.vmem %s0, 2
  %v99 = vld [vmem:[%s98] ss:$8 sm:$0xf]
  %s100 = scalar_lea.vmem %s0, 2
  %v101 = vld [vmem:[%s100] ss:$8 sm:$0xf0]
  %vm102 = vcmask 1047556
  %v103 = vsel %vm102, %v101, %v99
  %104 = vrot.lane.b32.xlu0 %v103, 32
  %v105 = vpop.permute.xlu0 %104
  %vm106 = vcmask 392448
  %107 = vst.msk [vmem:[%s1] sm:$0xff] %vm106, %v105
  %s108 = scalar_lea.vmem %s0, 66
  %v109 = vld [vmem:[%s108] sm:$0x1]
  %110 = vrot.lane.b32.xlu0 %v109, 32
  %v111 = vpop.permute.xlu0 %110
  %vm112 = vcmask 392448
  %s113 = scalar_lea.vmem %s1, 8
  %114 = vst.msk [vmem:[%s113] sm:$0x1] %vm112, %v111
  %s115 = scalar_lea.vmem %s0, 1
  %v116 = vld [vmem:[%s115] ss:$8 sm:$0xf]
  %s117 = scalar_lea.vmem %s0, 1
  %v118 = vld [vmem:[%s117] ss:$8 sm:$0xf0]
  %vm119 = vcmask 1047556
  %v120 = vsel %vm119, %v118, %v116
  %121 = vrot.lane.b32.xlu0 %v120, 16
  %v122 = vpop.permute.xlu0 %121
  %vm123 = vcmask 261248
  %124 = vst.msk [vmem:[%s1] sm:$0xff] %vm123, %v122
  %s125 = scalar_lea.vmem %s0, 65
  %v126 = vld [vmem:[%s125] sm:$0x1]
  %127 = vrot.lane.b32.xlu0 %v126, 16
  %v128 = vpop.permute.xlu0 %127
  %vm129 = vcmask 261248
  %s130 = scalar_lea.vmem %s1, 8
  %131 = vst.msk [vmem:[%s130] sm:$0x1] %vm129, %v128

// kernel: tile.5
$region0: #{tile.5}
  #allocation0 [shape = 's32[1]{0}', space=sflag, size = 0x4, scoped, tag = 'scoped memory for tile.5']
  %s0 = inlined_call_operand.<no memory space> [shape: f32[], index: 0, kind: input, shape index: {}]
  %s1 = inlined_call_operand.vmem [shape: f32[1,128], index: 1, kind: output, shape index: {}]
  %v2 = vstv %s0
  %3 = vst [vmem:[%s1] sm:$0x1] %v2

// kernel: _lambda_.6
$region0: #{_lambda_.6}
  #allocation0 [shape = 'u32[]', space=smem, size = 0x4, offset = 0x4, fixed_abs, tag = 'smem constant byte address 0x4 - core index']
  #allocation1 [shape = 'u32[72,128]{1,0:T(1,128)}', space=vmem, size = 0x9000, scoped, tag = 'internal scratch']
  %s0 = inlined_call_operand.hbm [shape: f32[128,32], index: 0, kind: input, shape index: {}]
  %s1 = inlined_call_operand.vmem [shape: f32[1,32], index: 1, kind: input, shape index: {}]
  %s2 = inlined_call_operand.vmem [shape: f32[1,32], index: 2, kind: input, shape index: {}]
  %s3 = inlined_call_operand.vmem [shape: bf16[32,64], index: 3, kind: input, shape index: {}]
  %s4 = inlined_call_operand.vmem [shape: f32[128,32], index: 4, kind: output, shape index: {0}]
  %s5 = inlined_call_operand.vmem [shape: f32[128,64], index: 5, kind: output, shape index: {1}]
  %6 = xla_tuple %s4, %s5
  %s7 = sld [smem:[#allocation0]]
  $region38: #{_lambda_.6} parent=0
    _
  %s9 = ssub.s32 1, %s7
  %s10 = scalar_select 0, %s9, %s7
  $region1: #{_lambda_.6} parent=0
    #allocation2 [shape = 'u8[65536]{0}', space=vmem, size = 0x10000, scoped, tag = 'input window, operand 0, single buffered']
    #allocation3 [shape = 's32[1]{0}', space=sflag, size = 0x4, scoped, tag = 'scoped memory for _lambda_.6']
    %11 = vsyncpa [#allocation3], 0
    // Predicated region
    $region2: #{_lambda_.6} parent=1 // pred_check
      _
    $region3: #{_lambda_.6} parent=1 // pred_check_branch
      %13 = sbr.rel (0) target = $region5
    $region4: #{_lambda_.6} parent=1 // pred_region
      %15 = vsyncadd [#allocation3], 0
      %s16 = sshll.u32 %s0, 4
      %s17 = int_to_ptr.hbm [resolvable:$true] %s16
      %s18 = sshll.u32 [#allocation2], 4
      %s19 = int_to_ptr.vmem [resolvable:$true] %s18
      %24 = dma.hbm_to_vmem [thread:$0]  %s17, 2048, %s19, [#allocation3], 128, 128, 8
    $region5: #{_lambda_.6} parent=1 // pred_fallthru
      _
    // Predicated region
    $region6: #{_lambda_.6} parent=1 // pred_check
      _
    $region7: #{_lambda_.6} parent=1 // pred_check_branch
      %26 = sbr.rel (0) target = $region9
    $region8: #{_lambda_.6} parent=1 // pred_region
      _
    $region9: #{_lambda_.6} parent=1 // pred_fallthru
      _
    // Predicated region
    $region10: #{_lambda_.6} parent=1 // pred_check
      _
    $region11: #{_lambda_.6} parent=1 // pred_check_branch
      %28 = sbr.rel (0) target = $region13
    $region12: #{_lambda_.6} parent=1 // pred_region
      _
    $region13: #{_lambda_.6} parent=1 // pred_fallthru
      _
    // Predicated region
    $region14: #{_lambda_.6} parent=1 // pred_check
      _
    $region15: #{_lambda_.6} parent=1 // pred_check_branch
      %30 = sbr.rel (0) target = $region17
    $region16: #{_lambda_.6} parent=1 // pred_region
      _
    $region17: #{_lambda_.6} parent=1 // pred_fallthru
      _
    // Predicated region
    $region18: #{_lambda_.6} parent=1 // pred_check
      _
    $region19: #{_lambda_.6} parent=1 // pred_check_branch
      %32 = sbr.rel (0) target = $region21
    $region20: #{_lambda_.6} parent=1 // pred_region
      %34 = dma.done [#allocation3], 2048
    $region21: #{_lambda_.6} parent=1 // pred_fallthru
      _
    %v36 = vld [vmem:[#allocation2] sm:$0xff]
    %v37 = vld [vmem:[#allocation2 + $0x8] sm:$0xff]
    %v38 = vld [vmem:[#allocation2 + $0x10] sm:$0xff]
    %v39 = vld [vmem:[#allocation2 + $0x18] sm:$0xff]
    %v40 = vld [vmem:[#allocation2 + $0x20] sm:$0xff]
    %v41 = vld [vmem:[#allocation2 + $0x28] sm:$0xff]
    %v42 = vld [vmem:[#allocation2 + $0x30] sm:$0xff]
    %v43 = vld [vmem:[#allocation2 + $0x38] sm:$0xff]
    %v44 = vld [vmem:[#allocation2 + $0x40] sm:$0xff]
    %v45 = vld [vmem:[#allocation2 + $0x48] sm:$0xff]
    %v46 = vld [vmem:[#allocation2 + $0x50] sm:$0xff]
    %v47 = vld [vmem:[#allocation2 + $0x58] sm:$0xff]
    %v48 = vld [vmem:[#allocation2 + $0x60] sm:$0xff]
    %v49 = vld [vmem:[#allocation2 + $0x68] sm:$0xff]
    %v50 = vld [vmem:[#allocation2 + $0x70] sm:$0xff]
    %v51 = vld [vmem:[#allocation2 + $0x78] sm:$0xff]
    %v52 = vld [vmem:[%s1] sm:$0x1]
    %v53 = vld [vmem:[%s2] sm:$0x1]
    %vm54 = vcmask 261120
    %v55 = vsel %vm54, %v36, 0.0
    %56 = vadd.xlane.f32.xlu0 %v55
    %v57 = vpop.xlane.xlu0 %56
    %v58 = vsel %vm54, %v37, 0.0
    %59 = vadd.xlane.f32.xlu0 %v58
    %v60 = vpop.xlane.xlu0 %59
    %v61 = vsel %vm54, %v38, 0.0
    %62 = vadd.xlane.f32.xlu0 %v61
    %v63 = vpop.xlane.xlu0 %62
    %v64 = vsel %vm54, %v39, 0.0
    %65 = vadd.xlane.f32.xlu0 %v64
    %v66 = vpop.xlane.xlu0 %65
    %v67 = vsel %vm54, %v40, 0.0
    %68 = vadd.xlane.f32.xlu0 %v67
    %v69 = vpop.xlane.xlu0 %68
    %v70 = vsel %vm54, %v41, 0.0
    %71 = vadd.xlane.f32.xlu0 %v70
    %v72 = vpop.xlane.xlu0 %71
    %v73 = vsel %vm54, %v42, 0.0
    %74 = vadd.xlane.f32.xlu0 %v73
    %v75 = vpop.xlane.xlu0 %74
    %v76 = vsel %vm54, %v43, 0.0
    %77 = vadd.xlane.f32.xlu0 %v76
    %v78 = vpop.xlane.xlu0 %77
    %v79 = vsel %vm54, %v44, 0.0
    %80 = vadd.xlane.f32.xlu0 %v79
    %v81 = vpop.xlane.xlu0 %80
    %v82 = vsel %vm54, %v45, 0.0
    %83 = vadd.xlane.f32.xlu0 %v82
    %v84 = vpop.xlane.xlu0 %83
    %v85 = vsel %vm54, %v46, 0.0
    %86 = vadd.xlane.f32.xlu0 %v85
    %v87 = vpop.xlane.xlu0 %86
    %v88 = vsel %vm54, %v47, 0.0
    %89 = vadd.xlane.f32.xlu0 %v88
    %v90 = vpop.xlane.xlu0 %89
    %v91 = vsel %vm54, %v48, 0.0
    %92 = vadd.xlane.f32.xlu0 %v91
    %v93 = vpop.xlane.xlu0 %92
    %v94 = vsel %vm54, %v49, 0.0
    %95 = vadd.xlane.f32.xlu0 %v94
    %v96 = vpop.xlane.xlu0 %95
    %v97 = vsel %vm54, %v50, 0.0
    %98 = vadd.xlane.f32.xlu0 %v97
    %v99 = vpop.xlane.xlu0 %98
    %v100 = vsel %vm54, %v51, 0.0
    %101 = vadd.xlane.f32.xlu0 %v100
    %v102 = vpop.xlane.xlu0 %101
    %v103 = vrcp.pop 32.0
    %v104 = vmul.f32 32.0, %v103
    %v105 = vsub.f32 1.0, %v104
    %v106 = vmul.f32 %v103, %v105
    %v107 = vadd.f32 %v103, %v106
    %vm108 = vweird.f32 %v103
    %v109 = vsel %vm108, %v103, %v107
    %v110 = vmul.f32 %v57, %v109
    %v111 = vmul.f32 %v60, %v109
    %v112 = vmul.f32 %v63, %v109
    %v113 = vmul.f32 %v66, %v109
    %v114 = vmul.f32 %v69, %v109
    %v115 = vmul.f32 %v72, %v109
    %v116 = vmul.f32 %v75, %v109
    %v117 = vmul.f32 %v78, %v109
    %v118 = vmul.f32 %v81, %v109
    %v119 = vmul.f32 %v84, %v109
    %v120 = vmul.f32 %v87, %v109
    %v121 = vmul.f32 %v90, %v109
    %v122 = vmul.f32 %v93, %v109
    %v123 = vmul.f32 %v96, %v109
    %v124 = vmul.f32 %v99, %v109
    %v125 = vmul.f32 %v102, %v109
    %v126 = vsub.f32 %v36, %v110
    %v127 = vsub.f32 %v37, %v111
    %v128 = vsub.f32 %v38, %v112
    %v129 = vsub.f32 %v39, %v113
    %v130 = vsub.f32 %v40, %v114
    %v131 = vsub.f32 %v41, %v115
    %v132 = vsub.f32 %v42, %v116
    %v133 = vsub.f32 %v43, %v117
    %v134 = vsub.f32 %v44, %v118
    %v135 = vsub.f32 %v45, %v119
    %v136 = vsub.f32 %v46, %v120
    %v137 = vsub.f32 %v47, %v121
    %v138 = vsub.f32 %v48, %v122
    %v139 = vsub.f32 %v49, %v123
    %v140 = vsub.f32 %v50, %v124
    %v141 = vsub.f32 %v51, %v125
    %v142 = vmul.f32 %v126, %v126
    %v143 = vmul.f32 %v127, %v127
    %v144 = vmul.f32 %v128, %v128
    %v145 = vmul.f32 %v129, %v129
    %v146 = vmul.f32 %v130, %v130
    %v147 = vmul.f32 %v131, %v131
    %v148 = vmul.f32 %v132, %v132
    %v149 = vmul.f32 %v133, %v133
    %v150 = vmul.f32 %v134, %v134
    %v151 = vmul.f32 %v135, %v135
    %v152 = vmul.f32 %v136, %v136
    %v153 = vmul.f32 %v137, %v137
    %v154 = vmul.f32 %v138, %v138
    %v155 = vmul.f32 %v139, %v139
    %v156 = vmul.f32 %v140, %v140
    %v157 = vmul.f32 %v141, %v141
    %v158 = vsel %vm54, %v142, 0.0
    %159 = vadd.xlane.f32.xlu0 %v158
    %v160 = vpop.xlane.xlu0 %159
    %v161 = vsel %vm54, %v143, 0.0
    %162 = vadd.xlane.f32.xlu0 %v161
    %v163 = vpop.xlane.xlu0 %162
    %v164 = vsel %vm54, %v144, 0.0
    %165 = vadd.xlane.f32.xlu0 %v164
    %v166 = vpop.xlane.xlu0 %165
    %v167 = vsel %vm54, %v145, 0.0
    %168 = vadd.xlane.f32.xlu0 %v167
    %v169 = vpop.xlane.xlu0 %168
    %v170 = vsel %vm54, %v146, 0.0
    %171 = vadd.xlane.f32.xlu0 %v170
    %v172 = vpop.xlane.xlu0 %171
    %v173 = vsel %vm54, %v147, 0.0
    %174 = vadd.xlane.f32.xlu0 %v173
    %v175 = vpop.xlane.xlu0 %174
    %v176 = vsel %vm54, %v148, 0.0
    %177 = vadd.xlane.f32.xlu0 %v176
    %v178 = vpop.xlane.xlu0 %177
    %v179 = vsel %vm54, %v149, 0.0
    %180 = vadd.xlane.f32.xlu0 %v179
    %v181 = vpop.xlane.xlu0 %180
    %v182 = vsel %vm54, %v150, 0.0
    %183 = vadd.xlane.f32.xlu0 %v182
    %v184 = vpop.xlane.xlu0 %183
    %v185 = vsel %vm54, %v151, 0.0
    %186 = vadd.xlane.f32.xlu0 %v185
    %v187 = vpop.xlane.xlu0 %186
    %v188 = vsel %vm54, %v152, 0.0
    %189 = vadd.xlane.f32.xlu0 %v188
    %v190 = vpop.xlane.xlu0 %189
    %v191 = vsel %vm54, %v153, 0.0
    %192 = vadd.xlane.f32.xlu0 %v191
    %v193 = vpop.xlane.xlu0 %192
    %v194 = vsel %vm54, %v154, 0.0
    %195 = vadd.xlane.f32.xlu0 %v194
    %v196 = vpop.xlane.xlu0 %195
    %v197 = vsel %vm54, %v155, 0.0
    %198 = vadd.xlane.f32.xlu0 %v197
    %v199 = vpop.xlane.xlu0 %198
    %v200 = vsel %vm54, %v156, 0.0
    %201 = vadd.xlane.f32.xlu0 %v200
    %v202 = vpop.xlane.xlu0 %201
    %v203 = vsel %vm54, %v157, 0.0
    %204 = vadd.xlane.f32.xlu0 %v203
    %v205 = vpop.xlane.xlu0 %204
    %v206 = vmul.f32 %v160, %v109
    %v207 = vmul.f32 %v163, %v109
    %v208 = vmul.f32 %v166, %v109
    %v209 = vmul.f32 %v169, %v109
    %v210 = vmul.f32 %v172, %v109
    %v211 = vmul.f32 %v175, %v109
    %v212 = vmul.f32 %v178, %v109
    %v213 = vmul.f32 %v181, %v109
    %v214 = vmul.f32 %v184, %v109
    %v215 = vmul.f32 %v187, %v109
    %v216 = vmul.f32 %v190, %v109
    %v217 = vmul.f32 %v193, %v109
    %v218 = vmul.f32 %v196, %v109
    %v219 = vmul.f32 %v199, %v109
    %v220 = vmul.f32 %v202, %v109
    %v221 = vmul.f32 %v205, %v109
    %v222 = vadd.f32 %v206, 1e-05
    %v223 = vadd.f32 %v207, 1e-05
    %v224 = vadd.f32 %v208, 1e-05
    %v225 = vadd.f32 %v209, 1e-05
    %v226 = vadd.f32 %v210, 1e-05
    %v227 = vadd.f32 %v211, 1e-05
    %v228 = vadd.f32 %v212, 1e-05
    %v229 = vadd.f32 %v213, 1e-05
    %v230 = vadd.f32 %v214, 1e-05
    %v231 = vadd.f32 %v215, 1e-05
    %v232 = vadd.f32 %v216, 1e-05
    %v233 = vadd.f32 %v217, 1e-05
    %v234 = vadd.f32 %v218, 1e-05
    %v235 = vadd.f32 %v219, 1e-05
    %v236 = vadd.f32 %v220, 1e-05
    %v237 = vadd.f32 %v221, 1e-05
    %v238 = vrsqrt.pop %v222
    %v239 = vmul.f32 %v238, %v222
    %v240 = vmul.f32 %v239, %v238
    %v241 = vmul.f32 0.5, %v240
    %v242 = vsub.f32 1.5, %v241
    %v243 = vmul.f32 %v238, %v242
    %vm244 = vweird.f32 %v222
    %vm245 = vweird.f32 %v238
    %vm246 = vmor %vm244, %vm245
    %v247 = vsel %vm246, %v238, %v243
    %v248 = vrsqrt.pop %v223
    %v249 = vmul.f32 %v248, %v223
    %v250 = vmul.f32 %v249, %v248
    %v251 = vmul.f32 0.5, %v250
    %v252 = vsub.f32 1.5, %v251
    %v253 = vmul.f32 %v248, %v252
    %vm254 = vweird.f32 %v223
    %vm255 = vweird.f32 %v248
    %vm256 = vmor %vm254, %vm255
    %v257 = vsel %vm256, %v248, %v253
    %v258 = vrsqrt.pop %v224
    %v259 = vmul.f32 %v258, %v224
    %v260 = vmul.f32 %v259, %v258
    %v261 = vmul.f32 0.5, %v260
    %v262 = vsub.f32 1.5, %v261
    %v263 = vmul.f32 %v258, %v262
    %vm264 = vweird.f32 %v224
    %vm265 = vweird.f32 %v258
    %vm266 = vmor %vm264, %vm265
    %v267 = vsel %vm266, %v258, %v263
    %v268 = vrsqrt.pop %v225
    %v269 = vmul.f32 %v268, %v225
    %v270 = vmul.f32 %v269, %v268
    %v271 = vmul.f32 0.5, %v270
    %v272 = vsub.f32 1.5, %v271
    %v273 = vmul.f32 %v268, %v272
    %vm274 = vweird.f32 %v225
    %vm275 = vweird.f32 %v268
    %vm276 = vmor %vm274, %vm275
    %v277 = vsel %vm276, %v268, %v273
    %v278 = vrsqrt.pop %v226
    %v279 = vmul.f32 %v278, %v226
    %v280 = vmul.f32 %v279, %v278
    %v281 = vmul.f32 0.5, %v280
    %v282 = vsub.f32 1.5, %v281
    %v283 = vmul.f32 %v278, %v282
    %vm284 = vweird.f32 %v226
    %vm285 = vweird.f32 %v278
    %vm286 = vmor %vm284, %vm285
    %v287 = vsel %vm286, %v278, %v283
    %v288 = vrsqrt.pop %v227
    %v289 = vmul.f32 %v288, %v227
    %v290 = vmul.f32 %v289, %v288
    %v291 = vmul.f32 0.5, %v290
    %v292 = vsub.f32 1.5, %v291
    %v293 = vmul.f32 %v288, %v292
    %vm294 = vweird.f32 %v227
    %vm295 = vweird.f32 %v288
    %vm296 = vmor %vm294, %vm295
    %v297 = vsel %vm296, %v288, %v293
    %v298 = vrsqrt.pop %v228
    %v299 = vmul.f32 %v298, %v228
    %v300 = vmul.f32 %v299, %v298
    %v301 = vmul.f32 0.5, %v300
    %v302 = vsub.f32 1.5, %v301
    %v303 = vmul.f32 %v298, %v302
    %vm304 = vweird.f32 %v228
    %vm305 = vweird.f32 %v298
    %vm306 = vmor %vm304, %vm305
    %v307 = vsel %vm306, %v298, %v303
    %v308 = vrsqrt.pop %v229
    %v309 = vmul.f32 %v308, %v229
    %v310 = vmul.f32 %v309, %v308
    %v311 = vmul.f32 0.5, %v310
    %v312 = vsub.f32 1.5, %v311
    %v313 = vmul.f32 %v308, %v312
    %vm314 = vweird.f32 %v229
    %vm315 = vweird.f32 %v308
    %vm316 = vmor %vm314, %vm315
    %v317 = vsel %vm316, %v308, %v313
    %v318 = vrsqrt.pop %v230
    %v319 = vmul.f32 %v318, %v230
    %v320 = vmul.f32 %v319, %v318
    %v321 = vmul.f32 0.5, %v320
    %v322 = vsub.f32 1.5, %v321
    %v323 = vmul.f32 %v318, %v322
    %vm324 = vweird.f32 %v230
    %vm325 = vweird.f32 %v318
    %vm326 = vmor %vm324, %vm325
    %v327 = vsel %vm326, %v318, %v323
    %v328 = vrsqrt.pop %v231
    %v329 = vmul.f32 %v328, %v231
    %v330 = vmul.f32 %v329, %v328
    %v331 = vmul.f32 0.5, %v330
    %v332 = vsub.f32 1.5, %v331
    %v333 = vmul.f32 %v328, %v332
    %vm334 = vweird.f32 %v231
    %vm335 = vweird.f32 %v328
    %vm336 = vmor %vm334, %vm335
    %v337 = vsel %vm336, %v328, %v333
    %v338 = vrsqrt.pop %v232
    %v339 = vmul.f32 %v338, %v232
    %v340 = vmul.f32 %v339, %v338
    %v341 = vmul.f32 0.5, %v340
    %v342 = vsub.f32 1.5, %v341
    %v343 = vmul.f32 %v338, %v342
    %vm344 = vweird.f32 %v232
    %vm345 = vweird.f32 %v338
    %vm346 = vmor %vm344, %vm345
    %v347 = vsel %vm346, %v338, %v343
    %v348 = vrsqrt.pop %v233
    %v349 = vmul.f32 %v348, %v233
    %v350 = vmul.f32 %v349, %v348
    %v351 = vmul.f32 0.5, %v350
    %v352 = vsub.f32 1.5, %v351
    %v353 = vmul.f32 %v348, %v352
    %vm354 = vweird.f32 %v233
    %vm355 = vweird.f32 %v348
    %vm356 = vmor %vm354, %vm355
    %v357 = vsel %vm356, %v348, %v353
    %v358 = vrsqrt.pop %v234
    %v359 = vmul.f32 %v358, %v234
    %v360 = vmul.f32 %v359, %v358
    %v361 = vmul.f32 0.5, %v360
    %v362 = vsub.f32 1.5, %v361
    %v363 = vmul.f32 %v358, %v362
    %vm364 = vweird.f32 %v234
    %vm365 = vweird.f32 %v358
    %vm366 = vmor %vm364, %vm365
    %v367 = vsel %vm366, %v358, %v363
    %v368 = vrsqrt.pop %v235
    %v369 = vmul.f32 %v368, %v235
    %v370 = vmul.f32 %v369, %v368
    %v371 = vmul.f32 0.5, %v370
    %v372 = vsub.f32 1.5, %v371
    %v373 = vmul.f32 %v368, %v372
    %vm374 = vweird.f32 %v235
    %vm375 = vweird.f32 %v368
    %vm376 = vmor %vm374, %vm375
    %v377 = vsel %vm376, %v368, %v373
    %v378 = vrsqrt.pop %v236
    %v379 = vmul.f32 %v378, %v236
    %v380 = vmul.f32 %v379, %v378
    %v381 = vmul.f32 0.5, %v380
    %v382 = vsub.f32 1.5, %v381
    %v383 = vmul.f32 %v378, %v382
    %vm384 = vweird.f32 %v236
    %vm385 = vweird.f32 %v378
    %vm386 = vmor %vm384, %vm385
    %v387 = vsel %vm386, %v378, %v383
    %v388 = vrsqrt.pop %v237
    %v389 = vmul.f32 %v388, %v237
    %v390 = vmul.f32 %v389, %v388
    %v391 = vmul.f32 0.5, %v390
    %v392 = vsub.f32 1.5, %v391
    %v393 = vmul.f32 %v388, %v392
    %vm394 = vweird.f32 %v237
    %vm395 = vweird.f32 %v388
    %vm396 = vmor %vm394, %vm395
    %v397 = vsel %vm396, %v388, %v393
    %v398 = vmul.f32 %v126, %v247
    %v399 = vmul.f32 %v127, %v257
    %v400 = vmul.f32 %v128, %v267
    %v401 = vmul.f32 %v129, %v277
    %v402 = vmul.f32 %v130, %v287
    %v403 = vmul.f32 %v131, %v297
    %v404 = vmul.f32 %v132, %v307
    %v405 = vmul.f32 %v133, %v317
    %v406 = vmul.f32 %v134, %v327
    %v407 = vmul.f32 %v135, %v337
    %v408 = vmul.f32 %v136, %v347
    %v409 = vmul.f32 %v137, %v357
    %v410 = vmul.f32 %v138, %v367
    %v411 = vmul.f32 %v139, %v377
    %v412 = vmul.f32 %v140, %v387
    %v413 = vmul.f32 %v141, %v397
    %v415 = vperm.slane %v52, 0
    %v417 = vmul.f32 %v398, %v415
    %v418 = vmul.f32 %v399, %v415
    %v419 = vmul.f32 %v400, %v415
    %v420 = vmul.f32 %v401, %v415
    %v421 = vmul.f32 %v402, %v415
    %v422 = vmul.f32 %v403, %v415
    %v423 = vmul.f32 %v404, %v415
    %v424 = vmul.f32 %v405, %v415
    %v425 = vmul.f32 %v406, %v415
    %v426 = vmul.f32 %v407, %v415
    %v427 = vmul.f32 %v408, %v415
    %v428 = vmul.f32 %v409, %v415
    %v429 = vmul.f32 %v410, %v415
    %v430 = vmul.f32 %v411, %v415
    %v431 = vmul.f32 %v412, %v415
    %v432 = vmul.f32 %v413, %v415
    %v434 = vperm.slane %v53, 0
    %v436 = vadd.f32 %v417, %v434
    %v437 = vadd.f32 %v418, %v434
    %v438 = vadd.f32 %v419, %v434
    %v439 = vadd.f32 %v420, %v434
    %v440 = vadd.f32 %v421, %v434
    %v441 = vadd.f32 %v422, %v434
    %v442 = vadd.f32 %v423, %v434
    %v443 = vadd.f32 %v424, %v434
    %v444 = vadd.f32 %v425, %v434
    %v445 = vadd.f32 %v426, %v434
    %v446 = vadd.f32 %v427, %v434
    %v447 = vadd.f32 %v428, %v434
    %v448 = vadd.f32 %v429, %v434
    %v449 = vadd.f32 %v430, %v434
    %v450 = vadd.f32 %v431, %v434
    %v451 = vadd.f32 %v432, %v434
    %452 = vst.msk [vmem:[%s4] sm:$0xff] %vm54, %v436
    %453 = vst.msk [vmem:[%s4 + $0x8] sm:$0xff] %vm54, %v437
    %454 = vst.msk [vmem:[%s4 + $0x10] sm:$0xff] %vm54, %v438
    %455 = vst.msk [vmem:[%s4 + $0x18] sm:$0xff] %vm54, %v439
    %456 = vst.msk [vmem:[%s4 + $0x20] sm:$0xff] %vm54, %v440
    %457 = vst.msk [vmem:[%s4 + $0x28] sm:$0xff] %vm54, %v441
    %458 = vst.msk [vmem:[%s4 + $0x30] sm:$0xff] %vm54, %v442
    %459 = vst.msk [vmem:[%s4 + $0x38] sm:$0xff] %vm54, %v443
    %460 = vst.msk [vmem:[%s4 + $0x40] sm:$0xff] %vm54, %v444
    %461 = vst.msk [vmem:[%s4 + $0x48] sm:$0xff] %vm54, %v445
    %462 = vst.msk [vmem:[%s4 + $0x50] sm:$0xff] %vm54, %v446
    %463 = vst.msk [vmem:[%s4 + $0x58] sm:$0xff] %vm54, %v447
    %464 = vst.msk [vmem:[%s4 + $0x60] sm:$0xff] %vm54, %v448
    %465 = vst.msk [vmem:[%s4 + $0x68] sm:$0xff] %vm54, %v449
    %466 = vst.msk [vmem:[%s4 + $0x70] sm:$0xff] %vm54, %v450
    %467 = vst.msk [vmem:[%s4 + $0x78] sm:$0xff] %vm54, %v451
    %v468 = vpack.c.bf16 %v437, %v436
    %v469 = vpack.c.bf16 %v439, %v438
    %v470 = vpack.c.bf16 %v441, %v440
    %v471 = vpack.c.bf16 %v443, %v442
    %v472 = vpack.c.bf16 %v445, %v444
    %v473 = vpack.c.bf16 %v447, %v446
    %v474 = vpack.c.bf16 %v449, %v448
    %v475 = vpack.c.bf16 %v451, %v450
    %v476 = vld [vmem:[%s3] sm:$0xf]
    %v477 = vld [vmem:[%s3 + $0x4] sm:$0xf]
    %v478 = vld [vmem:[%s3 + $0x8] sm:$0xf]
    %v479 = vld [vmem:[%s3 + $0xc] sm:$0xf]
    %v484 = vunpack.c.l.b16 %v476
    %v485 = vunpack.c.l.b16 %v477
    %v486 = vunpack.c.l.b16 %v478
    %v487 = vunpack.c.l.b16 %v479
    %v488 = vpack.c.b16 %v485, %v484
    %v489 = vpack.c.b16 %v487, %v486
    %v493 = vsel %vm54, %v468, 0
    %v496 = vsel %vm54, %v469, 0
    %v499 = vsel %vm54, %v470, 0
    %v502 = vsel %vm54, %v471, 0
    %v505 = vsel %vm54, %v472, 0
    %v508 = vsel %vm54, %v473, 0
    %v511 = vsel %vm54, %v474, 0
    %v514 = vsel %vm54, %v475, 0
    %516 = vmatpush.bf16.msra.mxu0 0
    %517 = vmatpush.bf16.msra.mxu0 0
    %518 = vmatpush.bf16.msra.mxu0 0
    %519 = vmatpush.bf16.msra.mxu0 0
    %520 = vmatpush.bf16.msra.mxu0 0
    %521 = vmatpush.bf16.msra.mxu0 0
    %522 = vmatpush.bf16.msra.mxu0 %v489
    %523 = vmatpush.bf16.msra.mxu0 %v488
    %524 = vmatmul.bf16.gmra.mxu0 %v493
    %v525 = vpop.f32.mrf.mxu0
    %v526 = vadd.f32 0.0, %v525
    %v527 = vpop.f32.mrf.mxu0
    %v528 = vadd.f32 0.0, %v527
    %529 = vmatmul.bf16.gmra.mxu0 %v496
    %v530 = vpop.f32.mrf.mxu0
    %v531 = vadd.f32 0.0, %v530
    %v532 = vpop.f32.mrf.mxu0
    %v533 = vadd.f32 0.0, %v532
    %534 = vmatmul.bf16.gmra.mxu0 %v499
    %v535 = vpop.f32.mrf.mxu0
    %v536 = vadd.f32 0.0, %v535
    %v537 = vpop.f32.mrf.mxu0
    %v538 = vadd.f32 0.0, %v537
    %539 = vmatmul.bf16.gmra.mxu0 %v502
    %v540 = vpop.f32.mrf.mxu0
    %v541 = vadd.f32 0.0, %v540
    %v542 = vpop.f32.mrf.mxu0
    %v543 = vadd.f32 0.0, %v542
    %544 = vmatmul.bf16.gmra.mxu0 %v505
    %v545 = vpop.f32.mrf.mxu0
    %v546 = vadd.f32 0.0, %v545
    %v547 = vpop.f32.mrf.mxu0
    %v548 = vadd.f32 0.0, %v547
    %549 = vmatmul.bf16.gmra.mxu0 %v508
    %v550 = vpop.f32.mrf.mxu0
    %v551 = vadd.f32 0.0, %v550
    %v552 = vpop.f32.mrf.mxu0
    %v553 = vadd.f32 0.0, %v552
    %554 = vmatmul.bf16.gmra.mxu0 %v511
    %v555 = vpop.f32.mrf.mxu0
    %v556 = vadd.f32 0.0, %v555
    %v557 = vpop.f32.mrf.mxu0
    %v558 = vadd.f32 0.0, %v557
    %559 = vmatmul.bf16.gmra.mxu0 %v514
    %v560 = vpop.f32.mrf.mxu0
    %v561 = vadd.f32 0.0, %v560
    %v562 = vpop.f32.mrf.mxu0
    %v563 = vadd.f32 0.0, %v562
    %564 = vdwg.mxu0
    %vm565 = vcmask 523264
    %566 = vst.msk [vmem:[%s5] sm:$0xff] %vm565, %v526
    %567 = vst.msk [vmem:[%s5 + $0x8] sm:$0xff] %vm565, %v528
    %568 = vst.msk [vmem:[%s5 + $0x10] sm:$0xff] %vm565, %v531
    %569 = vst.msk [vmem:[%s5 + $0x18] sm:$0xff] %vm565, %v533
    %570 = vst.msk [vmem:[%s5 + $0x20] sm:$0xff] %vm565, %v536
    %571 = vst.msk [vmem:[%s5 + $0x28] sm:$0xff] %vm565, %v538
    %572 = vst.msk [vmem:[%s5 + $0x30] sm:$0xff] %vm565, %v541
    %573 = vst.msk [vmem:[%s5 + $0x38] sm:$0xff] %vm565, %v543
    %574 = vst.msk [vmem:[%s5 + $0x40] sm:$0xff] %vm565, %v546
    %575 = vst.msk [vmem:[%s5 + $0x48] sm:$0xff] %vm565, %v548
    %576 = vst.msk [vmem:[%s5 + $0x50] sm:$0xff] %vm565, %v551
    %577 = vst.msk [vmem:[%s5 + $0x58] sm:$0xff] %vm565, %v553
    %578 = vst.msk [vmem:[%s5 + $0x60] sm:$0xff] %vm565, %v556
    %579 = vst.msk [vmem:[%s5 + $0x68] sm:$0xff] %vm565, %v558
    %580 = vst.msk [vmem:[%s5 + $0x70] sm:$0xff] %vm565, %v561
    %581 = vst.msk [vmem:[%s5 + $0x78] sm:$0xff] %vm565, %v563
    // Predicated region
    $region22: #{_lambda_.6} parent=1 // pred_check
      _
    $region23: #{_lambda_.6} parent=1 // pred_check_branch
      %583 = sbr.rel (0) target = $region25
    $region24: #{_lambda_.6} parent=1 // pred_region
      _
    $region25: #{_lambda_.6} parent=1 // pred_fallthru
      _
    // Predicated region
    $region26: #{_lambda_.6} parent=1 // pred_check
      _
    $region27: #{_lambda_.6} parent=1 // pred_check_branch
      %585 = sbr.rel (0) target = $region29
    $region28: #{_lambda_.6} parent=1 // pred_region
      _
    $region29: #{_lambda_.6} parent=1 // pred_fallthru
      _
    // Predicated region
    $region30: #{_lambda_.6} parent=1 // pred_check
      _
    $region31: #{_lambda_.6} parent=1 // pred_check_branch
      %587 = sbr.rel (0) target = $region33
    $region32: #{_lambda_.6} parent=1 // pred_region
      _
    $region33: #{_lambda_.6} parent=1 // pred_fallthru
      _
    // Predicated region
    $region34: #{_lambda_.6} parent=1 // pred_check
      _
    $region35: #{_lambda_.6} parent=1 // pred_check_branch
      %589 = sbr.rel (0) target = $region37
    $region36: #{_lambda_.6} parent=1 // pred_region
      _
    $region37: #{_lambda_.6} parent=1 // pred_fallthru
      _
    %590 = vsyncpa [#allocation3], 1

// kernel: _lambda_.7
$region0: #{_lambda_.7}
  #allocation0 [shape = 'u32[]', space=smem, size = 0x4, offset = 0x4, fixed_abs, tag = 'smem constant byte address 0x4 - core index']
  #allocation1 [shape = 'u32[72,128]{1,0:T(1,128)}', space=vmem, size = 0x9000, scoped, tag = 'internal scratch']
  %s0 = inlined_call_operand.vmem [shape: f32[8,10,160], index: 0, kind: input, shape index: {}]
  %s1 = inlined_call_operand.vmem [shape: f32[9,128], index: 1, kind: input, shape index: {}]
  %s2 = inlined_call_operand.vmem [shape: f32[1,128], index: 2, kind: input, shape index: {}]
  %s3 = inlined_call_operand.vmem [shape: f32[8,8,128], index: 3, kind: output, shape index: {}]
  %s4 = sld [smem:[#allocation0]]
  $region45: #{_lambda_.7} parent=0
    _
  %s6 = ssub.s32 1, %s4
  %s7 = scalar_select 0, %s6, %s4
  loop: start=0, step=1, limit=10
  $region2: #{_lambda_.7} parent=0 // loop_pre_header
    _
  $region3: #{_lambda_.7} parent=0 // loop_header
    %s9 = sphi 0, %s13
    %p10 = scmp.ge.s32.totalorder %s9, 10
    %s19 = sphi 0, %s21
    %s22 = sphi 0, %s19
    %s23 = sphi 0, %s22
    %s39 = sphi 0, %s23
    %s43 = sphi 0, %s43
    %s45 = sphi 0, %s43
    %s46 = sphi 0, %s45
    %s60 = sphi 0, %s46
    %s64 = sphi 0, %s64
    %s66 = sphi 0, %s64
    %s67 = sphi 0, %s66
    %s81 = sphi 0, %s67
    %s87 = sphi 0, %s89
    %s90 = sphi 0, %s87
    %s91 = sphi 0, %s90
    %s107 = sphi 0, %s91
  $region4: #{_lambda_.7} parent=0 // loop_header_branch
    %12 = sbr.rel (%p10) target = $region8
  $region5: #{_lambda_.7} parent=0 // loop_body
    %s14 = ssub.s32 %s9, 1
    %s15 = ssub.s32 %s9, 2
    %s16 = sadd.s32 %s9, 1
    %s17 = ssub.s32 %s9, %s16
    %p18 = scmp.eq.s32.totalorder %s17, 0
    %s20 = sadd.s32 %s19, 1
    %s21 = scalar_select %p18, %s19, %s20
    %p24 = pneg %p18
    %p25 = scmp.eq.s32.totalorder %s9, 7
    %p26 = por %p24, %p25
    %p27 = scmp.ne.s32.totalorder %s19, %s22
    %p28 = scmp.eq.s32.totalorder %s9, 0
    %p29 = por %p27, %p28
    %p30 = scmp.ne.s32.totalorder %s19, %s22
    %p31 = scmp.eq.s32.totalorder %s14, 7
    %p32 = por %p30, %p31
    %p33 = scmp.ne.s32.totalorder %s22, %s23
    %p34 = scmp.eq.s32.totalorder %s14, 0
    %p35 = por %p33, %p34
    %p36 = scmp.ne.s32.totalorder %s22, %s23
    %p37 = scmp.eq.s32.totalorder %s15, 7
    %p38 = por %p36, %p37
    %p40 = scmp.ne.s32.totalorder %s23, %s39
    %p41 = scmp.eq.s32.totalorder %s15, 0
    %p42 = por %p40, %p41
    %s44 = sadd.s32 %s43, 1
    %p47 = scmp.eq.s32.totalorder %s9, 7
    %p48 = scmp.ne.s32.totalorder %s43, %s45
    %p49 = scmp.eq.s32.totalorder %s9, 0
    %p50 = por %p48, %p49
    %p51 = scmp.ne.s32.totalorder %s43, %s45
    %p52 = scmp.eq.s32.totalorder %s14, 7
    %p53 = por %p51, %p52
    %p54 = scmp.ne.s32.totalorder %s45, %s46
    %p55 = scmp.eq.s32.totalorder %s14, 0
    %p56 = por %p54, %p55
    %p57 = scmp.ne.s32.totalorder %s45, %s46
    %p58 = scmp.eq.s32.totalorder %s15, 7
    %p59 = por %p57, %p58
    %p61 = scmp.ne.s32.totalorder %s46, %s60
    %p62 = scmp.eq.s32.totalorder %s15, 0
    %p63 = por %p61, %p62
    %s65 = sadd.s32 %s64, 1
    %p68 = scmp.eq.s32.totalorder %s9, 7
    %p69 = scmp.ne.s32.totalorder %s64, %s66
    %p70 = scmp.eq.s32.totalorder %s9, 0
    %p71 = por %p69, %p70
    %p72 = scmp.ne.s32.totalorder %s64, %s66
    %p73 = scmp.eq.s32.totalorder %s14, 7
    %p74 = por %p72, %p73
    %p75 = scmp.ne.s32.totalorder %s66, %s67
    %p76 = scmp.eq.s32.totalorder %s14, 0
    %p77 = por %p75, %p76
    %p78 = scmp.ne.s32.totalorder %s66, %s67
    %p79 = scmp.eq.s32.totalorder %s15, 7
    %p80 = por %p78, %p79
    %p82 = scmp.ne.s32.totalorder %s67, %s81
    %p83 = scmp.eq.s32.totalorder %s15, 0
    %p84 = por %p82, %p83
    %s85 = ssub.s32 %s9, %s16
    %p86 = scmp.eq.s32.totalorder %s85, 0
    %s88 = sadd.s32 %s87, 1
    %s89 = scalar_select %p86, %s87, %s88
    %p92 = pneg %p86
    %p93 = scmp.eq.s32.totalorder %s9, 7
    %p94 = por %p92, %p93
    %p95 = scmp.ne.s32.totalorder %s87, %s90
    %p96 = scmp.eq.s32.totalorder %s9, 0
    %p97 = por %p95, %p96
    %p98 = scmp.ne.s32.totalorder %s87, %s90
    %p99 = scmp.eq.s32.totalorder %s14, 7
    %p100 = por %p98, %p99
    %p101 = scmp.ne.s32.totalorder %s90, %s91
    %p102 = scmp.eq.s32.totalorder %s14, 0
    %p103 = por %p101, %p102
    %p104 = scmp.ne.s32.totalorder %s90, %s91
    %p105 = scmp.eq.s32.totalorder %s15, 7
    %p106 = por %p104, %p105
    %p108 = scmp.ne.s32.totalorder %s91, %s107
    %p109 = scmp.eq.s32.totalorder %s15, 0
    %p110 = por %p108, %p109
    %p111 = scmp.le.s32.totalorder 1, %s9
    %p112 = scmp.lt.s32.totalorder %s9, 9
    %p113 = pnand %p111, %p112
    %p114 = pneg %p113
    // Predicated region
    $region9: #{_lambda_.7} parent=5 // pred_check
      _
    $region10: #{_lambda_.7} parent=5 // pred_check_branch
      %116 = sbr.rel (%p113) target = $region12
    $region11: #{_lambda_.7} parent=5 // pred_region
      %s117 = ssub.s32 %s9, 1
      // Predicated region
      $region13: #{_lambda_.7} parent=11 // pred_check
        %p118 = pneg %p56
      $region14: #{_lambda_.7} parent=11 // pred_check_branch
        %120 = sbr.rel (%p118) target = $region16
      $region15: #{_lambda_.7} parent=11 // pred_region
        _
      $region16: #{_lambda_.7} parent=11 // pred_fallthru
        _
      // Predicated region
      $region17: #{_lambda_.7} parent=11 // pred_check
        %p121 = pneg %p77
      $region18: #{_lambda_.7} parent=11 // pred_check_branch
        %123 = sbr.rel (%p121) target = $region20
      $region19: #{_lambda_.7} parent=11 // pred_region
        _
      $region20: #{_lambda_.7} parent=11 // pred_fallthru
        _
    $region12: #{_lambda_.7} parent=5 // pred_fallthru
      _
    %p124 = scmp.lt.s32.totalorder %s9, 8
    // Predicated region
    $region21: #{_lambda_.7} parent=5 // pred_check
      %p125 = pneg %p124
    $region22: #{_lambda_.7} parent=5 // pred_check_branch
      %127 = sbr.rel (%p125) target = $region24
    $region23: #{_lambda_.7} parent=5 // pred_region
      // Predicated region
      $region25: #{_lambda_.7} parent=23 // pred_check
        %p128 = pneg %p29
      $region26: #{_lambda_.7} parent=23 // pred_check_branch
        %130 = sbr.rel (%p128) target = $region28
      $region27: #{_lambda_.7} parent=23 // pred_region
        %p131 = scmp.lt.s32.totalorder %s9, 7
        %s132 = scalar_select %p131, %s9, 7
        %s133 = smul.addr %s132, 4
        %s134 = smul.addr %s133, 8
        %s135 = scalar_lea.vmem %s0, %s134
      $region28: #{_lambda_.7} parent=23 // pred_fallthru
        _
    $region24: #{_lambda_.7} parent=5 // pred_fallthru
      _
    %p136 = scmp.le.s32.totalorder 1, %s9
    %p137 = scmp.lt.s32.totalorder %s9, 9
    %p138 = pnand %p136, %p137
    %p139 = pneg %p138
    // Predicated region
    $region29: #{_lambda_.7} parent=5 // pred_check
      _
    $region30: #{_lambda_.7} parent=5 // pred_check_branch
      %141 = sbr.rel (%p138) target = $region32
    $region31: #{_lambda_.7} parent=5 // pred_region
      %s142 = ssub.s32 %s9, 1
      %p143 = scmp.lt.s32.totalorder %s14, 7
      %s144 = scalar_select %p143, %s14, 7
      %s145 = smul.addr %s144, 4
      %s146 = smul.addr %s145, 8
      %s147 = scalar_lea.vmem %s0, %s146
      %p148 = pneg %p35
      %p149 = pneg %p32
      %p150 = pneg %p56
      %p151 = pneg %p53
      %p152 = pneg %p77
      %p153 = pneg %p74
      %p154 = pneg %p103
      %p155 = pneg %p100
      %p156 = scmp.lt.s32.totalorder %s14, 7
      %s157 = scalar_select %p156, %s14, 7
      %s158 = smul.addr %s157, 8
      %s159 = scalar_lea.vmem %s3, %s158
      %p160 = scmp.lt.s32.totalorder %s14, 7
      %s161 = scalar_select %p160, %s14, 7
      %s162 = smul.addr %s161, 4
      %s163 = smul.addr %s162, 8
      %s164 = scalar_lea.vmem %s0, %s163
      %p165 = scmp.lt.s32.totalorder %s14, 7
      %s166 = scalar_select %p165, %s14, 7
      %s167 = smul.addr %s166, 8
      %s168 = scalar_lea.vmem %s3, %s167
      %v169 = vld [vmem:[%s164] sm:$0xff]
      %v170 = vld [vmem:[%s164 + $0x8] sm:$0xff]
      %v171 = vld [vmem:[%s164 + $0x10] sm:$0x3]
      %v172 = vld [vmem:[%s164 + $0x18] sm:$0x3]
      %v173 = vld [vmem:[%s1] sm:$0x1]
      %v174 = vperm.slane %v173, 0
      %v175 = vmul.f32 %v169, %v174
      %v176 = vadd.f32 %v175, 0.0
      %v177 = vld [vmem:[%s1 + $0x1] sm:$0x1]
      %v178 = vperm.slane %v177, 0
      %180 = vrot.lane.b32.xlu0 %v178, 16
      %v181 = vpop.permute.xlu0 %180
      %v183 = vmul.f32 %v169, %v181
      %v184 = vmul.f32 %v170, %v181
      %187 = vrot.lane.b32.xlu0 %v183, 112
      %v188 = vpop.permute.xlu0 %187
      %189 = vrot.lane.b32.xlu0 %v184, 112
      %v190 = vpop.permute.xlu0 %189
      %vm191 = vcmask 916480
      %v192 = vsel %vm191, %v188, %v190
      %v194 = vadd.f32 %v176, %v192
      %v195 = vld [vmem:[%s1 + $0x2] sm:$0x1]
      %v196 = vperm.slane %v195, 0
      %198 = vrot.lane.b32.xlu0 %v196, 32
      %v199 = vpop.permute.xlu0 %198
      %v201 = vmul.f32 %v169, %v199
      %v202 = vmul.f32 %v170, %v199
      %205 = vrot.lane.b32.xlu0 %v201, 96
      %v206 = vpop.permute.xlu0 %205
      %207 = vrot.lane.b32.xlu0 %v202, 96
      %v208 = vpop.permute.xlu0 %207
      %vm209 = vcmask 785408
      %v210 = vsel %vm209, %v206, %v208
      %v212 = vadd.f32 %v194, %v210
      %v213 = vld [vmem:[%s1 + $0x3] sm:$0x1]
      %v214 = vperm.slane %v213, 0
      %v215 = vmul.f32 %v169, %v214
      %v216 = vmul.f32 %v171, %v214
      %vm219 = vcmask 1046528
      %v220 = vrot.slane %v215, 1
      %v221 = vrot.slane %v216, 1
      %v222 = vsel %vm219, %v220, %v221
      %v224 = vadd.f32 %v212, %v222
      %v225 = vld [vmem:[%s1 + $0x4] sm:$0x1]
      %v226 = vperm.slane %v225, 0
      %228 = vrot.lane.b32.xlu0 %v226, 16
      %v229 = vpop.permute.xlu0 %228
      %v231 = vmul.f32 %v169, %v229
      %v232 = vmul.f32 %v170, %v229
      %v233 = vmul.f32 %v171, %v229
      %v234 = vmul.f32 %v172, %v229
      %v239 = vrot.slane %v231, 1
      %v240 = vrot.slane %v233, 1
      %v241 = vsel %vm219, %v239, %v240
      %v242 = vrot.slane %v232, 1
      %v243 = vrot.slane %v234, 1
      %v244 = vsel %vm219, %v242, %v243
      %245 = vrot.lane.b32.xlu0 %v241, 112
      %v246 = vpop.permute.xlu0 %245
      %247 = vrot.lane.b32.xlu0 %v244, 112
      %v248 = vpop.permute.xlu0 %247
      %v249 = vsel %vm191, %v246, %v248
      %v251 = vadd.f32 %v224, %v249
      %v252 = vld [vmem:[%s1 + $0x5] sm:$0x1]
      %v253 = vperm.slane %v252, 0
      %255 = vrot.lane.b32.xlu0 %v253, 32
      %v256 = vpop.permute.xlu0 %255
      %v258 = vmul.f32 %v169, %v256
      %v259 = vmul.f32 %v170, %v256
      %v260 = vmul.f32 %v171, %v256
      %v261 = vmul.f32 %v172, %v256
      %v266 = vrot.slane %v258, 1
      %v267 = vrot.slane %v260, 1
      %v268 = vsel %vm219, %v266, %v267
      %v269 = vrot.slane %v259, 1
      %v270 = vrot.slane %v261, 1
      %v271 = vsel %vm219, %v269, %v270
      %272 = vrot.lane.b32.xlu0 %v268, 96
      %v273 = vpop.permute.xlu0 %272
      %274 = vrot.lane.b32.xlu0 %v271, 96
      %v275 = vpop.permute.xlu0 %274
      %v276 = vsel %vm209, %v273, %v275
      %v278 = vadd.f32 %v251, %v276
      %v279 = vld [vmem:[%s1 + $0x6] sm:$0x1]
      %v280 = vperm.slane %v279, 0
      %v281 = vmul.f32 %v169, %v280
      %v282 = vmul.f32 %v171, %v280
      %vm285 = vcmask 1045504
      %v286 = vrot.slane %v281, 2
      %v287 = vrot.slane %v282, 2
      %v288 = vsel %vm285, %v286, %v287
      %v290 = vadd.f32 %v278, %v288
      %v291 = vld [vmem:[%s1 + $0x7] sm:$0x1]
      %v292 = vperm.slane %v291, 0
      %294 = vrot.lane.b32.xlu0 %v292, 16
      %v295 = vpop.permute.xlu0 %294
      %v297 = vmul.f32 %v169, %v295
      %v298 = vmul.f32 %v170, %v295
      %v299 = vmul.f32 %v171, %v295
      %v300 = vmul.f32 %v172, %v295
      %v305 = vrot.slane %v297, 2
      %v306 = vrot.slane %v299, 2
      %v307 = vsel %vm285, %v305, %v306
      %v308 = vrot.slane %v298, 2
      %v309 = vrot.slane %v300, 2
      %v310 = vsel %vm285, %v308, %v309
      %311 = vrot.lane.b32.xlu0 %v307, 112
      %v312 = vpop.permute.xlu0 %311
      %313 = vrot.lane.b32.xlu0 %v310, 112
      %v314 = vpop.permute.xlu0 %313
      %v315 = vsel %vm191, %v312, %v314
      %v317 = vadd.f32 %v290, %v315
      %v318 = vld [vmem:[%s1 + $0x8] sm:$0x1]
      %v319 = vperm.slane %v318, 0
      %321 = vrot.lane.b32.xlu0 %v319, 32
      %v322 = vpop.permute.xlu0 %321
      %v324 = vmul.f32 %v169, %v322
      %v325 = vmul.f32 %v170, %v322
      %v326 = vmul.f32 %v171, %v322
      %v327 = vmul.f32 %v172, %v322
      %v332 = vrot.slane %v324, 2
      %v333 = vrot.slane %v326, 2
      %v334 = vsel %vm285, %v332, %v333
      %v335 = vrot.slane %v325, 2
      %v336 = vrot.slane %v327, 2
      %v337 = vsel %vm285, %v335, %v336
      %338 = vrot.lane.b32.xlu0 %v334, 96
      %v339 = vpop.permute.xlu0 %338
      %340 = vrot.lane.b32.xlu0 %v337, 96
      %v341 = vpop.permute.xlu0 %340
      %v342 = vsel %vm209, %v339, %v341
      %v344 = vadd.f32 %v317, %v342
      %v345 = vld [vmem:[%s2] sm:$0x1]
      %v347 = vperm.slane %v345, 0
      %v349 = vadd.f32 %v344, %v347
      %v350 = vxor.u32 %v349, 2147483648
      %v351 = vmul.f32 %v350, 1.442695
      %v352 = vpow.pop %v351
      %v353 = vadd.f32 %v352, 1.0
      %v354 = vrcp.pop %v353
      %v355 = vmul.f32 %v353, %v354
      %v356 = vsub.f32 1.0, %v355
      %v357 = vmul.f32 %v354, %v356
      %v358 = vadd.f32 %v354, %v357
      %vm359 = vweird.f32 %v353
      %vm360 = vweird.f32 %v354
      %vm361 = vmor %vm359, %vm360
      %v362 = vsel %vm361, %v354, %v358
      %v363 = vand.u32 2147483647, %v353
      %vm364 = vcmp.eq.f32.partialorder %v363, 8.507059e+37
      %v365 = vand.u32 %v353, 2147483648
      %v366 = vor.u32 1.1754944e-38, %v365
      %v367 = vsel %vm364, %v366, %v362
      %v368 = vmul.f32 1.0, %v367
      %v369 = vmul.f32 %v349, %v368
      %370 = vst [vmem:[%s168] sm:$0xff] %v369
      %p371 = scmp.lt.s32.totalorder %s14, 7
      %s372 = scalar_select %p371, %s14, 7
      %s373 = smul.addr %s372, 8
      %s374 = scalar_lea.vmem %s3, %s373
      // Predicated region
      $region33: #{_lambda_.7} parent=31 // pred_check
        %p375 = pneg %p100
      $region34: #{_lambda_.7} parent=31 // pred_check_branch
        %377 = sbr.rel (%p375) target = $region36
      $region35: #{_lambda_.7} parent=31 // pred_region
        _
      $region36: #{_lambda_.7} parent=31 // pred_fallthru
        _
    $region32: #{_lambda_.7} parent=5 // pred_fallthru
      _
    %p378 = scmp.le.s32.totalorder 2, %s9
    // Predicated region
    $region37: #{_lambda_.7} parent=5 // pred_check
      %p379 = pneg %p378
    $region38: #{_lambda_.7} parent=5 // pred_check_branch
      %381 = sbr.rel (%p379) target = $region40
    $region39: #{_lambda_.7} parent=5 // pred_region
      %s382 = ssub.s32 %s9, 2
      // Predicated region
      $region41: #{_lambda_.7} parent=39 // pred_check
        %p383 = pneg %p106
      $region42: #{_lambda_.7} parent=39 // pred_check_branch
        %385 = sbr.rel (%p383) target = $region44
      $region43: #{_lambda_.7} parent=39 // pred_region
        %p386 = scmp.lt.s32.totalorder %s15, 7
        %s387 = scalar_select %p386, %s15, 7
        %s388 = smul.addr %s387, 8
        %s389 = scalar_lea.vmem %s3, %s388
      $region44: #{_lambda_.7} parent=39 // pred_fallthru
        _
    $region40: #{_lambda_.7} parent=5 // pred_fallthru
      _
  $region6: #{_lambda_.7} parent=0 // loop_footer
    %s13 = sadd.s32 1, %s9
  $region7: #{_lambda_.7} parent=0 // loop_footer_branch
    %8 = sbr.rel target = $region3
  $region8: #{_lambda_.7} parent=0 // loop_exit
    _

// kernel: _lambda_.8
$region0: #{_lambda_.8}
  #allocation0 [shape = 'u32[]', space=smem, size = 0x4, offset = 0x4, fixed_abs, tag = 'smem constant byte address 0x4 - core index']
  #allocation1 [shape = 'u32[72,128]{1,0:T(1,128)}', space=vmem, size = 0x9000, scoped, tag = 'internal scratch']
  %s0 = inlined_call_operand.vmem [shape: f32[512,16], index: 0, kind: input, shape index: {}]
  %s1 = inlined_call_operand.vmem [shape: bf16[16,192], index: 1, kind: input, shape index: {}]
  %s2 = inlined_call_operand.vmem [shape: f32[512,192], index: 2, kind: output, shape index: {}]
  %s3 = sld [smem:[#allocation0]]
  $region41: #{_lambda_.8} parent=0
    _
  %s5 = ssub.s32 1, %s3
  %s6 = scalar_select 0, %s5, %s3
  loop: start=0, step=1, limit=4
  $region2: #{_lambda_.8} parent=0 // loop_pre_header
    _
  $region3: #{_lambda_.8} parent=0 // loop_header
    %s8 = sphi 0, %s12
    %p9 = scmp.ge.s32.totalorder %s8, 4
    %s18 = sphi 0, %s20
    %s21 = sphi 0, %s18
    %s22 = sphi 0, %s21
    %s38 = sphi 0, %s22
    %s42 = sphi 0, %s42
    %s44 = sphi 0, %s42
    %s45 = sphi 0, %s44
    %s59 = sphi 0, %s45
    %s65 = sphi 0, %s67
    %s68 = sphi 0, %s65
    %s69 = sphi 0, %s68
    %s85 = sphi 0, %s69
  $region4: #{_lambda_.8} parent=0 // loop_header_branch
    %11 = sbr.rel (%p9) target = $region8
  $region5: #{_lambda_.8} parent=0 // loop_body
    %s13 = ssub.s32 %s8, 1
    %s14 = ssub.s32 %s8, 2
    %s15 = sadd.s32 %s8, 1
    %s16 = ssub.s32 %s8, %s15
    %p17 = scmp.eq.s32.totalorder %s16, 0
    %s19 = sadd.s32 %s18, 1
    %s20 = scalar_select %p17, %s18, %s19
    %p23 = pneg %p17
    %p24 = scmp.eq.s32.totalorder %s8, 1
    %p25 = por %p23, %p24
    %p26 = scmp.ne.s32.totalorder %s18, %s21
    %p27 = scmp.eq.s32.totalorder %s8, 0
    %p28 = por %p26, %p27
    %p29 = scmp.ne.s32.totalorder %s18, %s21
    %p30 = scmp.eq.s32.totalorder %s13, 1
    %p31 = por %p29, %p30
    %p32 = scmp.ne.s32.totalorder %s21, %s22
    %p33 = scmp.eq.s32.totalorder %s13, 0
    %p34 = por %p32, %p33
    %p35 = scmp.ne.s32.totalorder %s21, %s22
    %p36 = scmp.eq.s32.totalorder %s14, 1
    %p37 = por %p35, %p36
    %p39 = scmp.ne.s32.totalorder %s22, %s38
    %p40 = scmp.eq.s32.totalorder %s14, 0
    %p41 = por %p39, %p40
    %s43 = sadd.s32 %s42, 1
    %p46 = scmp.eq.s32.totalorder %s8, 1
    %p47 = scmp.ne.s32.totalorder %s42, %s44
    %p48 = scmp.eq.s32.totalorder %s8, 0
    %p49 = por %p47, %p48
    %p50 = scmp.ne.s32.totalorder %s42, %s44
    %p51 = scmp.eq.s32.totalorder %s13, 1
    %p52 = por %p50, %p51
    %p53 = scmp.ne.s32.totalorder %s44, %s45
    %p54 = scmp.eq.s32.totalorder %s13, 0
    %p55 = por %p53, %p54
    %p56 = scmp.ne.s32.totalorder %s44, %s45
    %p57 = scmp.eq.s32.totalorder %s14, 1
    %p58 = por %p56, %p57
    %p60 = scmp.ne.s32.totalorder %s45, %s59
    %p61 = scmp.eq.s32.totalorder %s14, 0
    %p62 = por %p60, %p61
    %s63 = ssub.s32 %s8, %s15
    %p64 = scmp.eq.s32.totalorder %s63, 0
    %s66 = sadd.s32 %s65, 1
    %s67 = scalar_select %p64, %s65, %s66
    %p70 = pneg %p64
    %p71 = scmp.eq.s32.totalorder %s8, 1
    %p72 = por %p70, %p71
    %p73 = scmp.ne.s32.totalorder %s65, %s68
    %p74 = scmp.eq.s32.totalorder %s8, 0
    %p75 = por %p73, %p74
    %p76 = scmp.ne.s32.totalorder %s65, %s68
    %p77 = scmp.eq.s32.totalorder %s13, 1
    %p78 = por %p76, %p77
    %p79 = scmp.ne.s32.totalorder %s68, %s69
    %p80 = scmp.eq.s32.totalorder %s13, 0
    %p81 = por %p79, %p80
    %p82 = scmp.ne.s32.totalorder %s68, %s69
    %p83 = scmp.eq.s32.totalorder %s14, 1
    %p84 = por %p82, %p83
    %p86 = scmp.ne.s32.totalorder %s69, %s85
    %p87 = scmp.eq.s32.totalorder %s14, 0
    %p88 = por %p86, %p87
    %p89 = scmp.le.s32.totalorder 1, %s8
    %p90 = scmp.lt.s32.totalorder %s8, 3
    %p91 = pnand %p89, %p90
    %p92 = pneg %p91
    // Predicated region
    $region9: #{_lambda_.8} parent=5 // pred_check
      _
    $region10: #{_lambda_.8} parent=5 // pred_check_branch
      %94 = sbr.rel (%p91) target = $region12
    $region11: #{_lambda_.8} parent=5 // pred_region
      %s95 = ssub.s32 %s8, 1
      // Predicated region
      $region13: #{_lambda_.8} parent=11 // pred_check
        %p96 = pneg %p55
      $region14: #{_lambda_.8} parent=11 // pred_check_branch
        %98 = sbr.rel (%p96) target = $region16
      $region15: #{_lambda_.8} parent=11 // pred_region
        _
      $region16: #{_lambda_.8} parent=11 // pred_fallthru
        _
    $region12: #{_lambda_.8} parent=5 // pred_fallthru
      _
    %p99 = scmp.lt.s32.totalorder %s8, 2
    // Predicated region
    $region17: #{_lambda_.8} parent=5 // pred_check
      %p100 = pneg %p99
    $region18: #{_lambda_.8} parent=5 // pred_check_branch
      %102 = sbr.rel (%p100) target = $region20
    $region19: #{_lambda_.8} parent=5 // pred_region
      // Predicated region
      $region21: #{_lambda_.8} parent=19 // pred_check
        %p103 = pneg %p28
      $region22: #{_lambda_.8} parent=19 // pred_check_branch
        %105 = sbr.rel (%p103) target = $region24
      $region23: #{_lambda_.8} parent=19 // pred_region
        %s106 = smul.u32 32, %s8
        %p107 = scmp.lt.s32.totalorder %s106, 63
        %s108 = scalar_select %p107, %s106, 63
        %s109 = smul.addr %s108, 8
        %s110 = scalar_lea.vmem %s0, %s109
        %s111 = smul.u32 32, %s8
      $region24: #{_lambda_.8} parent=19 // pred_fallthru
        _
    $region20: #{_lambda_.8} parent=5 // pred_fallthru
      _
    %p112 = scmp.le.s32.totalorder 1, %s8
    %p113 = scmp.lt.s32.totalorder %s8, 3
    %p114 = pnand %p112, %p113
    %p115 = pneg %p114
    // Predicated region
    $region25: #{_lambda_.8} parent=5 // pred_check
      _
    $region26: #{_lambda_.8} parent=5 // pred_check_branch
      %117 = sbr.rel (%p114) target = $region28
    $region27: #{_lambda_.8} parent=5 // pred_region
      %s118 = ssub.s32 %s8, 1
      %s119 = smul.u32 32, %s13
      %p120 = scmp.lt.s32.totalorder %s119, 63
      %s121 = scalar_select %p120, %s119, 63
      %s122 = smul.addr %s121, 8
      %s123 = scalar_lea.vmem %s0, %s122
      %p124 = pneg %p34
      %p125 = pneg %p31
      %p126 = pneg %p55
      %p127 = pneg %p52
      %p128 = pneg %p81
      %p129 = pneg %p78
      %s130 = smul.u32 32, %s13
      %p131 = scmp.lt.s32.totalorder %s130, 63
      %s132 = scalar_select %p131, %s130, 63
      %s133 = smul.addr %s132, 2
      %s134 = smul.addr %s133, 8
      %s135 = scalar_lea.vmem %s2, %s134
      %s136 = smul.u32 32, %s13
      %p137 = scmp.lt.s32.totalorder %s136, 63
      %s138 = scalar_select %p137, %s136, 63
      %s139 = smul.addr %s138, 8
      %s140 = scalar_lea.vmem %s0, %s139
      %s141 = smul.u32 32, %s13
      %s142 = smul.u32 32, %s13
      %p143 = scmp.lt.s32.totalorder %s142, 63
      %s144 = scalar_select %p143, %s142, 63
      %s145 = smul.addr %s144, 2
      %s146 = smul.addr %s145, 8
      %s147 = scalar_lea.vmem %s2, %s146
      %s148 = smul.u32 32, %s13
      %v150 = vld [vmem:[%s140] sm:$0xff]
      %v151 = vld [vmem:[%s140 + $0x8] sm:$0xff]
      %v152 = vld [vmem:[%s140 + $0x10] sm:$0xff]
      %v153 = vld [vmem:[%s140 + $0x18] sm:$0xff]
      %v154 = vld [vmem:[%s140 + $0x20] sm:$0xff]
      %v155 = vld [vmem:[%s140 + $0x28] sm:$0xff]
      %v156 = vld [vmem:[%s140 + $0x30] sm:$0xff]
      %v157 = vld [vmem:[%s140 + $0x38] sm:$0xff]
      %v158 = vld [vmem:[%s140 + $0x40] sm:$0xff]
      %v159 = vld [vmem:[%s140 + $0x48] sm:$0xff]
      %v160 = vld [vmem:[%s140 + $0x50] sm:$0xff]
      %v161 = vld [vmem:[%s140 + $0x58] sm:$0xff]
      %v162 = vld [vmem:[%s140 + $0x60] sm:$0xff]
      %v163 = vld [vmem:[%s140 + $0x68] sm:$0xff]
      %v164 = vld [vmem:[%s140 + $0x70] sm:$0xff]
      %v165 = vld [vmem:[%s140 + $0x78] sm:$0xff]
      %v166 = vld [vmem:[%s140 + $0x80] sm:$0xff]
      %v167 = vld [vmem:[%s140 + $0x88] sm:$0xff]
      %v168 = vld [vmem:[%s140 + $0x90] sm:$0xff]
      %v169 = vld [vmem:[%s140 + $0x98] sm:$0xff]
      %v170 = vld [vmem:[%s140 + $0xa0] sm:$0xff]
      %v171 = vld [vmem:[%s140 + $0xa8] sm:$0xff]
      %v172 = vld [vmem:[%s140 + $0xb0] sm:$0xff]
      %v173 = vld [vmem:[%s140 + $0xb8] sm:$0xff]
      %v174 = vld [vmem:[%s140 + $0xc0] sm:$0xff]
      %v175 = vld [vmem:[%s140 + $0xc8] sm:$0xff]
      %v176 = vld [vmem:[%s140 + $0xd0] sm:$0xff]
      %v177 = vld [vmem:[%s140 + $0xd8] sm:$0xff]
      %v178 = vld [vmem:[%s140 + $0xe0] sm:$0xff]
      %v179 = vld [vmem:[%s140 + $0xe8] sm:$0xff]
      %v180 = vld [vmem:[%s140 + $0xf0] sm:$0xff]
      %v181 = vld [vmem:[%s140 + $0xf8] sm:$0xff]
      %v182 = vpack.c.bf16 %v151, %v150
      %v183 = vpack.c.bf16 %v153, %v152
      %v184 = vpack.c.bf16 %v155, %v154
      %v185 = vpack.c.bf16 %v157, %v156
      %v186 = vpack.c.bf16 %v159, %v158
      %v187 = vpack.c.bf16 %v161, %v160
      %v188 = vpack.c.bf16 %v163, %v162
      %v189 = vpack.c.bf16 %v165, %v164
      %v190 = vpack.c.bf16 %v167, %v166
      %v191 = vpack.c.bf16 %v169, %v168
      %v192 = vpack.c.bf16 %v171, %v170
      %v193 = vpack.c.bf16 %v173, %v172
      %v194 = vpack.c.bf16 %v175, %v174
      %v195 = vpack.c.bf16 %v177, %v176
      %v196 = vpack.c.bf16 %v179, %v178
      %v197 = vpack.c.bf16 %v181, %v180
      %v198 = vld [vmem:[%s1] sm:$0xff]
      %v199 = vld [vmem:[%s1 + $0x8] sm:$0xff]
      %v202 = vunpack.c.l.b16 %v198
      %v203 = vunpack.c.h.b16 %v198
      %v204 = vunpack.c.l.b16 %v199
      %v205 = vunpack.c.h.b16 %v199
      %v206 = vpack.c.b16 %v204, %v202
      %v207 = vpack.c.b16 %v205, %v203
      %vm210 = vcmask 130048
      %v212 = vsel %vm210, %v182, 0
      %v215 = vsel %vm210, %v183, 0
      %v218 = vsel %vm210, %v184, 0
      %v221 = vsel %vm210, %v185, 0
      %v224 = vsel %vm210, %v186, 0
      %v227 = vsel %vm210, %v187, 0
      %v230 = vsel %vm210, %v188, 0
      %v233 = vsel %vm210, %v189, 0
      %v236 = vsel %vm210, %v190, 0
      %v239 = vsel %vm210, %v191, 0
      %v242 = vsel %vm210, %v192, 0
      %v245 = vsel %vm210, %v193, 0
      %v248 = vsel %vm210, %v194, 0
      %v251 = vsel %vm210, %v195, 0
      %v254 = vsel %vm210, %v196, 0
      %v257 = vsel %vm210, %v197, 0
      %259 = vmatpush.bf16.msra.mxu0 0
      %260 = vmatpush.bf16.msra.mxu0 0
      %261 = vmatpush.bf16.msra.mxu0 0
      %262 = vmatpush.bf16.msra.mxu0 0
      %263 = vmatpush.bf16.msra.mxu0 0
      %264 = vmatpush.bf16.msra.mxu0 0
      %265 = vmatpush.bf16.msra.mxu0 0
      %266 = vmatpush.bf16.msra.mxu0 %v206
      %267 = vmatmul.bf16.gmra.mxu0 %v212
      %v268 = vpop.f32.mrf.mxu0
      %v269 = vadd.f32 0.0, %v268
      %v270 = vpop.f32.mrf.mxu0
      %v271 = vadd.f32 0.0, %v270
      %272 = vmatmul.bf16.gmra.mxu0 %v215
      %v273 = vpop.f32.mrf.mxu0
      %v274 = vadd.f32 0.0, %v273
      %v275 = vpop.f32.mrf.mxu0
      %v276 = vadd.f32 0.0, %v275
      %277 = vmatmul.bf16.gmra.mxu0 %v218
      %v278 = vpop.f32.mrf.mxu0
      %v279 = vadd.f32 0.0, %v278
      %v280 = vpop.f32.mrf.mxu0
      %v281 = vadd.f32 0.0, %v280
      %282 = vmatmul.bf16.gmra.mxu0 %v221
      %v283 = vpop.f32.mrf.mxu0
      %v284 = vadd.f32 0.0, %v283
      %v285 = vpop.f32.mrf.mxu0
      %v286 = vadd.f32 0.0, %v285
      %287 = vmatmul.bf16.gmra.mxu0 %v224
      %v288 = vpop.f32.mrf.mxu0
      %v289 = vadd.f32 0.0, %v288
      %v290 = vpop.f32.mrf.mxu0
      %v291 = vadd.f32 0.0, %v290
      %292 = vmatmul.bf16.gmra.mxu0 %v227
      %v293 = vpop.f32.mrf.mxu0
      %v294 = vadd.f32 0.0, %v293
      %v295 = vpop.f32.mrf.mxu0
      %v296 = vadd.f32 0.0, %v295
      %297 = vmatmul.bf16.gmra.mxu0 %v230
      %v298 = vpop.f32.mrf.mxu0
      %v299 = vadd.f32 0.0, %v298
      %v300 = vpop.f32.mrf.mxu0
      %v301 = vadd.f32 0.0, %v300
      %302 = vmatmul.bf16.gmra.mxu0 %v233
      %v303 = vpop.f32.mrf.mxu0
      %v304 = vadd.f32 0.0, %v303
      %v305 = vpop.f32.mrf.mxu0
      %v306 = vadd.f32 0.0, %v305
      %307 = vmatmul.bf16.gmra.mxu0 %v236
      %v308 = vpop.f32.mrf.mxu0
      %v309 = vadd.f32 0.0, %v308
      %v310 = vpop.f32.mrf.mxu0
      %v311 = vadd.f32 0.0, %v310
      %312 = vmatmul.bf16.gmra.mxu0 %v239
      %v313 = vpop.f32.mrf.mxu0
      %v314 = vadd.f32 0.0, %v313
      %v315 = vpop.f32.mrf.mxu0
      %v316 = vadd.f32 0.0, %v315
      %317 = vmatmul.bf16.gmra.mxu0 %v242
      %v318 = vpop.f32.mrf.mxu0
      %v319 = vadd.f32 0.0, %v318
      %v320 = vpop.f32.mrf.mxu0
      %v321 = vadd.f32 0.0, %v320
      %322 = vmatmul.bf16.gmra.mxu0 %v245
      %v323 = vpop.f32.mrf.mxu0
      %v324 = vadd.f32 0.0, %v323
      %v325 = vpop.f32.mrf.mxu0
      %v326 = vadd.f32 0.0, %v325
      %327 = vmatmul.bf16.gmra.mxu0 %v248
      %v328 = vpop.f32.mrf.mxu0
      %v329 = vadd.f32 0.0, %v328
      %v330 = vpop.f32.mrf.mxu0
      %v331 = vadd.f32 0.0, %v330
      %332 = vmatmul.bf16.gmra.mxu0 %v251
      %v333 = vpop.f32.mrf.mxu0
      %v334 = vadd.f32 0.0, %v333
      %v335 = vpop.f32.mrf.mxu0
      %v336 = vadd.f32 0.0, %v335
      %337 = vmatmul.bf16.gmra.mxu0 %v254
      %v338 = vpop.f32.mrf.mxu0
      %v339 = vadd.f32 0.0, %v338
      %v340 = vpop.f32.mrf.mxu0
      %v341 = vadd.f32 0.0, %v340
      %342 = vmatmul.bf16.gmra.mxu0 %v257
      %v343 = vpop.f32.mrf.mxu0
      %v344 = vadd.f32 0.0, %v343
      %v345 = vpop.f32.mrf.mxu0
      %v346 = vadd.f32 0.0, %v345
      %347 = vdwg.mxu0
      %348 = vmatpush.bf16.msra.mxu0 0
      %349 = vmatpush.bf16.msra.mxu0 0
      %350 = vmatpush.bf16.msra.mxu0 0
      %351 = vmatpush.bf16.msra.mxu0 0
      %352 = vmatpush.bf16.msra.mxu0 0
      %353 = vmatpush.bf16.msra.mxu0 0
      %354 = vmatpush.bf16.msra.mxu0 0
      %355 = vmatpush.bf16.msra.mxu0 %v207
      %356 = vmatmul.bf16.gmra.mxu0 %v212
      %v357 = vpop.f32.mrf.mxu0
      %v358 = vadd.f32 0.0, %v357
      %v359 = vpop.f32.mrf.mxu0
      %v360 = vadd.f32 0.0, %v359
      %361 = vmatmul.bf16.gmra.mxu0 %v215
      %v362 = vpop.f32.mrf.mxu0
      %v363 = vadd.f32 0.0, %v362
      %v364 = vpop.f32.mrf.mxu0
      %v365 = vadd.f32 0.0, %v364
      %366 = vmatmul.bf16.gmra.mxu0 %v218
      %v367 = vpop.f32.mrf.mxu0
      %v368 = vadd.f32 0.0, %v367
      %v369 = vpop.f32.mrf.mxu0
      %v370 = vadd.f32 0.0, %v369
      %371 = vmatmul.bf16.gmra.mxu0 %v221
      %v372 = vpop.f32.mrf.mxu0
      %v373 = vadd.f32 0.0, %v372
      %v374 = vpop.f32.mrf.mxu0
      %v375 = vadd.f32 0.0, %v374
      %376 = vmatmul.bf16.gmra.mxu0 %v224
      %v377 = vpop.f32.mrf.mxu0
      %v378 = vadd.f32 0.0, %v377
      %v379 = vpop.f32.mrf.mxu0
      %v380 = vadd.f32 0.0, %v379
      %381 = vmatmul.bf16.gmra.mxu0 %v227
      %v382 = vpop.f32.mrf.mxu0
      %v383 = vadd.f32 0.0, %v382
      %v384 = vpop.f32.mrf.mxu0
      %v385 = vadd.f32 0.0, %v384
      %386 = vmatmul.bf16.gmra.mxu0 %v230
      %v387 = vpop.f32.mrf.mxu0
      %v388 = vadd.f32 0.0, %v387
      %v389 = vpop.f32.mrf.mxu0
      %v390 = vadd.f32 0.0, %v389
      %391 = vmatmul.bf16.gmra.mxu0 %v233
      %v392 = vpop.f32.mrf.mxu0
      %v393 = vadd.f32 0.0, %v392
      %v394 = vpop.f32.mrf.mxu0
      %v395 = vadd.f32 0.0, %v394
      %396 = vmatmul.bf16.gmra.mxu0 %v236
      %v397 = vpop.f32.mrf.mxu0
      %v398 = vadd.f32 0.0, %v397
      %v399 = vpop.f32.mrf.mxu0
      %v400 = vadd.f32 0.0, %v399
      %401 = vmatmul.bf16.gmra.mxu0 %v239
      %v402 = vpop.f32.mrf.mxu0
      %v403 = vadd.f32 0.0, %v402
      %v404 = vpop.f32.mrf.mxu0
      %v405 = vadd.f32 0.0, %v404
      %406 = vmatmul.bf16.gmra.mxu0 %v242
      %v407 = vpop.f32.mrf.mxu0
      %v408 = vadd.f32 0.0, %v407
      %v409 = vpop.f32.mrf.mxu0
      %v410 = vadd.f32 0.0, %v409
      %411 = vmatmul.bf16.gmra.mxu0 %v245
      %v412 = vpop.f32.mrf.mxu0
      %v413 = vadd.f32 0.0, %v412
      %v414 = vpop.f32.mrf.mxu0
      %v415 = vadd.f32 0.0, %v414
      %416 = vmatmul.bf16.gmra.mxu0 %v248
      %v417 = vpop.f32.mrf.mxu0
      %v418 = vadd.f32 0.0, %v417
      %v419 = vpop.f32.mrf.mxu0
      %v420 = vadd.f32 0.0, %v419
      %421 = vmatmul.bf16.gmra.mxu0 %v251
      %v422 = vpop.f32.mrf.mxu0
      %v423 = vadd.f32 0.0, %v422
      %v424 = vpop.f32.mrf.mxu0
      %v425 = vadd.f32 0.0, %v424
      %426 = vmatmul.bf16.gmra.mxu0 %v254
      %v427 = vpop.f32.mrf.mxu0
      %v428 = vadd.f32 0.0, %v427
      %v429 = vpop.f32.mrf.mxu0
      %v430 = vadd.f32 0.0, %v429
      %431 = vmatmul.bf16.gmra.mxu0 %v257
      %v432 = vpop.f32.mrf.mxu0
      %v433 = vadd.f32 0.0, %v432
      %v434 = vpop.f32.mrf.mxu0
      %v435 = vadd.f32 0.0, %v434
      %436 = vdwg.mxu0
      %437 = vst [vmem:[%s147] sm:$0xff] %v269
      %vm438 = vcmask 523264
      %439 = vst.msk [vmem:[%s147 + $0x8] sm:$0xff] %vm438, %v358
      %440 = vst [vmem:[%s147 + $0x10] sm:$0xff] %v271
      %441 = vst.msk [vmem:[%s147 + $0x18] sm:$0xff] %vm438, %v360
      %442 = vst [vmem:[%s147 + $0x20] sm:$0xff] %v274
      %443 = vst.msk [vmem:[%s147 + $0x28] sm:$0xff] %vm438, %v363
      %444 = vst [vmem:[%s147 + $0x30] sm:$0xff] %v276
      %445 = vst.msk [vmem:[%s147 + $0x38] sm:$0xff] %vm438, %v365
      %446 = vst [vmem:[%s147 + $0x40] sm:$0xff] %v279
      %447 = vst.msk [vmem:[%s147 + $0x48] sm:$0xff] %vm438, %v368
      %448 = vst [vmem:[%s147 + $0x50] sm:$0xff] %v281
      %449 = vst.msk [vmem:[%s147 + $0x58] sm:$0xff] %vm438, %v370
      %450 = vst [vmem:[%s147 + $0x60] sm:$0xff] %v284
      %451 = vst.msk [vmem:[%s147 + $0x68] sm:$0xff] %vm438, %v373
      %452 = vst [vmem:[%s147 + $0x70] sm:$0xff] %v286
      %453 = vst.msk [vmem:[%s147 + $0x78] sm:$0xff] %vm438, %v375
      %454 = vst [vmem:[%s147 + $0x80] sm:$0xff] %v289
      %455 = vst.msk [vmem:[%s147 + $0x88] sm:$0xff] %vm438, %v378
      %456 = vst [vmem:[%s147 + $0x90] sm:$0xff] %v291
      %457 = vst.msk [vmem:[%s147 + $0x98] sm:$0xff] %vm438, %v380
      %458 = vst [vmem:[%s147 + $0xa0] sm:$0xff] %v294
      %459 = vst.msk [vmem:[%s147 + $0xa8] sm:$0xff] %vm438, %v383
      %460 = vst [vmem:[%s147 + $0xb0] sm:$0xff] %v296
      %461 = vst.msk [vmem:[%s147 + $0xb8] sm:$0xff] %vm438, %v385
      %462 = vst [vmem:[%s147 + $0xc0] sm:$0xff] %v299
      %463 = vst.msk [vmem:[%s147 + $0xc8] sm:$0xff] %vm438, %v388
      %464 = vst [vmem:[%s147 + $0xd0] sm:$0xff] %v301
      %465 = vst.msk [vmem:[%s147 + $0xd8] sm:$0xff] %vm438, %v390
      %466 = vst [vmem:[%s147 + $0xe0] sm:$0xff] %v304
      %467 = vst.msk [vmem:[%s147 + $0xe8] sm:$0xff] %vm438, %v393
      %468 = vst [vmem:[%s147 + $0xf0] sm:$0xff] %v306
      %469 = vst.msk [vmem:[%s147 + $0xf8] sm:$0xff] %vm438, %v395
      %470 = vst [vmem:[%s147 + $0x100] sm:$0xff] %v309
      %471 = vst.msk [vmem:[%s147 + $0x108] sm:$0xff] %vm438, %v398
      %472 = vst [vmem:[%s147 + $0x110] sm:$0xff] %v311
      %473 = vst.msk [vmem:[%s147 + $0x118] sm:$0xff] %vm438, %v400
      %474 = vst [vmem:[%s147 + $0x120] sm:$0xff] %v314
      %475 = vst.msk [vmem:[%s147 + $0x128] sm:$0xff] %vm438, %v403
      %476 = vst [vmem:[%s147 + $0x130] sm:$0xff] %v316
      %477 = vst.msk [vmem:[%s147 + $0x138] sm:$0xff] %vm438, %v405
      %478 = vst [vmem:[%s147 + $0x140] sm:$0xff] %v319
      %479 = vst.msk [vmem:[%s147 + $0x148] sm:$0xff] %vm438, %v408
      %480 = vst [vmem:[%s147 + $0x150] sm:$0xff] %v321
      %481 = vst.msk [vmem:[%s147 + $0x158] sm:$0xff] %vm438, %v410
      %482 = vst [vmem:[%s147 + $0x160] sm:$0xff] %v324
      %483 = vst.msk [vmem:[%s147 + $0x168] sm:$0xff] %vm438, %v413
      %484 = vst [vmem:[%s147 + $0x170] sm:$0xff] %v326
      %485 = vst.msk [vmem:[%s147 + $0x178] sm:$0xff] %vm438, %v415
      %486 = vst [vmem:[%s147 + $0x180] sm:$0xff] %v329
      %487 = vst.msk [vmem:[%s147 + $0x188] sm:$0xff] %vm438, %v418
      %488 = vst [vmem:[%s147 + $0x190] sm:$0xff] %v331
      %489 = vst.msk [vmem:[%s147 + $0x198] sm:$0xff] %vm438, %v420
      %490 = vst [vmem:[%s147 + $0x1a0] sm:$0xff] %v334
      %491 = vst.msk [vmem:[%s147 + $0x1a8] sm:$0xff] %vm438, %v423
      %492 = vst [vmem:[%s147 + $0x1b0] sm:$0xff] %v336
      %493 = vst.msk [vmem:[%s147 + $0x1b8] sm:$0xff] %vm438, %v425
      %494 = vst [vmem:[%s147 + $0x1c0] sm:$0xff] %v339
      %495 = vst.msk [vmem:[%s147 + $0x1c8] sm:$0xff] %vm438, %v428
      %496 = vst [vmem:[%s147 + $0x1d0] sm:$0xff] %v341
      %497 = vst.msk [vmem:[%s147 + $0x1d8] sm:$0xff] %vm438, %v430
      %498 = vst [vmem:[%s147 + $0x1e0] sm:$0xff] %v344
      %499 = vst.msk [vmem:[%s147 + $0x1e8] sm:$0xff] %vm438, %v433
      %500 = vst [vmem:[%s147 + $0x1f0] sm:$0xff] %v346
      %501 = vst.msk [vmem:[%s147 + $0x1f8] sm:$0xff] %vm438, %v435
      %s502 = smul.u32 32, %s13
      %p503 = scmp.lt.s32.totalorder %s502, 63
      %s504 = scalar_select %p503, %s502, 63
      %s505 = smul.addr %s504, 2
      %s506 = smul.addr %s505, 8
      %s507 = scalar_lea.vmem %s2, %s506
      // Predicated region
      $region29: #{_lambda_.8} parent=27 // pred_check
        %p508 = pneg %p78
      $region30: #{_lambda_.8} parent=27 // pred_check_branch
        %510 = sbr.rel (%p508) target = $region32
      $region31: #{_lambda_.8} parent=27 // pred_region
        %s511 = smul.u32 32, %s13
      $region32: #{_lambda_.8} parent=27 // pred_fallthru
        _
    $region28: #{_lambda_.8} parent=5 // pred_fallthru
      _
    %p512 = scmp.le.s32.totalorder 2, %s8
    // Predicated region
    $region33: #{_lambda_.8} parent=5 // pred_check
      %p513 = pneg %p512
    $region34: #{_lambda_.8} parent=5 // pred_check_branch
      %515 = sbr.rel (%p513) target = $region36
    $region35: #{_lambda_.8} parent=5 // pred_region
      %s516 = ssub.s32 %s8, 2
      // Predicated region
      $region37: #{_lambda_.8} parent=35 // pred_check
        %p517 = pneg %p84
      $region38: #{_lambda_.8} parent=35 // pred_check_branch
        %519 = sbr.rel (%p517) target = $region40
      $region39: #{_lambda_.8} parent=35 // pred_region
        %s520 = smul.u32 32, %s14
        %p521 = scmp.lt.s32.totalorder %s520, 63
        %s522 = scalar_select %p521, %s520, 63
        %s523 = smul.addr %s522, 2
        %s524 = smul.addr %s523, 8
        %s525 = scalar_lea.vmem %s2, %s524
      $region40: #{_lambda_.8} parent=35 // pred_fallthru
        _
    $region36: #{_lambda_.8} parent=5 // pred_fallthru
      _
  $region6: #{_lambda_.8} parent=0 // loop_footer
    %s12 = sadd.s32 1, %s8
  $region7: #{_lambda_.8} parent=0 // loop_footer_branch
    %7 = sbr.rel target = $region3
  $region8: #{_lambda_.8} parent=0 // loop_exit
    _

// kernel: _lambda_.10
$region0: #{_lambda_.10}
  #allocation0 [shape = 'u32[]', space=smem, size = 0x4, offset = 0x4, fixed_abs, tag = 'smem constant byte address 0x4 - core index']
  #allocation1 [shape = 'u32[72,128]{1,0:T(1,128)}', space=vmem, size = 0x9000, scoped, tag = 'internal scratch']
  %s0 = inlined_call_operand.vmem [shape: f32[512,16], index: 0, kind: input, shape index: {}]
  %s1 = inlined_call_operand.vmem [shape: f32[1,16], index: 1, kind: input, shape index: {}]
  %s2 = inlined_call_operand.vmem [shape: f32[1,16], index: 2, kind: input, shape index: {}]
  %s3 = inlined_call_operand.vmem [shape: bf16[16,8], index: 3, kind: input, shape index: {}]
  %s4 = inlined_call_operand.vmem [shape: f32[512,8], index: 4, kind: output, shape index: {}]
  %s5 = sld [smem:[#allocation0]]
  $region49: #{_lambda_.10} parent=0
    _
  %s7 = ssub.s32 1, %s5
  %s8 = scalar_select 0, %s7, %s5
  loop: start=0, step=1, limit=4
  $region2: #{_lambda_.10} parent=0 // loop_pre_header
    _
  $region3: #{_lambda_.10} parent=0 // loop_header
    %s10 = sphi 0, %s14
    %p11 = scmp.ge.s32.totalorder %s10, 4
    %s20 = sphi 0, %s22
    %s23 = sphi 0, %s20
    %s24 = sphi 0, %s23
    %s40 = sphi 0, %s24
    %s44 = sphi 0, %s44
    %s46 = sphi 0, %s44
    %s47 = sphi 0, %s46
    %s61 = sphi 0, %s47
    %s65 = sphi 0, %s65
    %s67 = sphi 0, %s65
    %s68 = sphi 0, %s67
    %s82 = sphi 0, %s68
    %s86 = sphi 0, %s86
    %s88 = sphi 0, %s86
    %s89 = sphi 0, %s88
    %s103 = sphi 0, %s89
    %s109 = sphi 0, %s111
    %s112 = sphi 0, %s109
    %s113 = sphi 0, %s112
    %s129 = sphi 0, %s113
  $region4: #{_lambda_.10} parent=0 // loop_header_branch
    %13 = sbr.rel (%p11) target = $region8
  $region5: #{_lambda_.10} parent=0 // loop_body
    %s15 = ssub.s32 %s10, 1
    %s16 = ssub.s32 %s10, 2
    %s17 = sadd.s32 %s10, 1
    %s18 = ssub.s32 %s10, %s17
    %p19 = scmp.eq.s32.totalorder %s18, 0
    %s21 = sadd.s32 %s20, 1
    %s22 = scalar_select %p19, %s20, %s21
    %p25 = pneg %p19
    %p26 = scmp.eq.s32.totalorder %s10, 1
    %p27 = por %p25, %p26
    %p28 = scmp.ne.s32.totalorder %s20, %s23
    %p29 = scmp.eq.s32.totalorder %s10, 0
    %p30 = por %p28, %p29
    %p31 = scmp.ne.s32.totalorder %s20, %s23
    %p32 = scmp.eq.s32.totalorder %s15, 1
    %p33 = por %p31, %p32
    %p34 = scmp.ne.s32.totalorder %s23, %s24
    %p35 = scmp.eq.s32.totalorder %s15, 0
    %p36 = por %p34, %p35
    %p37 = scmp.ne.s32.totalorder %s23, %s24
    %p38 = scmp.eq.s32.totalorder %s16, 1
    %p39 = por %p37, %p38
    %p41 = scmp.ne.s32.totalorder %s24, %s40
    %p42 = scmp.eq.s32.totalorder %s16, 0
    %p43 = por %p41, %p42
    %s45 = sadd.s32 %s44, 1
    %p48 = scmp.eq.s32.totalorder %s10, 1
    %p49 = scmp.ne.s32.totalorder %s44, %s46
    %p50 = scmp.eq.s32.totalorder %s10, 0
    %p51 = por %p49, %p50
    %p52 = scmp.ne.s32.totalorder %s44, %s46
    %p53 = scmp.eq.s32.totalorder %s15, 1
    %p54 = por %p52, %p53
    %p55 = scmp.ne.s32.totalorder %s46, %s47
    %p56 = scmp.eq.s32.totalorder %s15, 0
    %p57 = por %p55, %p56
    %p58 = scmp.ne.s32.totalorder %s46, %s47
    %p59 = scmp.eq.s32.totalorder %s16, 1
    %p60 = por %p58, %p59
    %p62 = scmp.ne.s32.totalorder %s47, %s61
    %p63 = scmp.eq.s32.totalorder %s16, 0
    %p64 = por %p62, %p63
    %s66 = sadd.s32 %s65, 1
    %p69 = scmp.eq.s32.totalorder %s10, 1
    %p70 = scmp.ne.s32.totalorder %s65, %s67
    %p71 = scmp.eq.s32.totalorder %s10, 0
    %p72 = por %p70, %p71
    %p73 = scmp.ne.s32.totalorder %s65, %s67
    %p74 = scmp.eq.s32.totalorder %s15, 1
    %p75 = por %p73, %p74
    %p76 = scmp.ne.s32.totalorder %s67, %s68
    %p77 = scmp.eq.s32.totalorder %s15, 0
    %p78 = por %p76, %p77
    %p79 = scmp.ne.s32.totalorder %s67, %s68
    %p80 = scmp.eq.s32.totalorder %s16, 1
    %p81 = por %p79, %p80
    %p83 = scmp.ne.s32.totalorder %s68, %s82
    %p84 = scmp.eq.s32.totalorder %s16, 0
    %p85 = por %p83, %p84
    %s87 = sadd.s32 %s86, 1
    %p90 = scmp.eq.s32.totalorder %s10, 1
    %p91 = scmp.ne.s32.totalorder %s86, %s88
    %p92 = scmp.eq.s32.totalorder %s10, 0
    %p93 = por %p91, %p92
    %p94 = scmp.ne.s32.totalorder %s86, %s88
    %p95 = scmp.eq.s32.totalorder %s15, 1
    %p96 = por %p94, %p95
    %p97 = scmp.ne.s32.totalorder %s88, %s89
    %p98 = scmp.eq.s32.totalorder %s15, 0
    %p99 = por %p97, %p98
    %p100 = scmp.ne.s32.totalorder %s88, %s89
    %p101 = scmp.eq.s32.totalorder %s16, 1
    %p102 = por %p100, %p101
    %p104 = scmp.ne.s32.totalorder %s89, %s103
    %p105 = scmp.eq.s32.totalorder %s16, 0
    %p106 = por %p104, %p105
    %s107 = ssub.s32 %s10, %s17
    %p108 = scmp.eq.s32.totalorder %s107, 0
    %s110 = sadd.s32 %s109, 1
    %s111 = scalar_select %p108, %s109, %s110
    %p114 = pneg %p108
    %p115 = scmp.eq.s32.totalorder %s10, 1
    %p116 = por %p114, %p115
    %p117 = scmp.ne.s32.totalorder %s109, %s112
    %p118 = scmp.eq.s32.totalorder %s10, 0
    %p119 = por %p117, %p118
    %p120 = scmp.ne.s32.totalorder %s109, %s112
    %p121 = scmp.eq.s32.totalorder %s15, 1
    %p122 = por %p120, %p121
    %p123 = scmp.ne.s32.totalorder %s112, %s113
    %p124 = scmp.eq.s32.totalorder %s15, 0
    %p125 = por %p123, %p124
    %p126 = scmp.ne.s32.totalorder %s112, %s113
    %p127 = scmp.eq.s32.totalorder %s16, 1
    %p128 = por %p126, %p127
    %p130 = scmp.ne.s32.totalorder %s113, %s129
    %p131 = scmp.eq.s32.totalorder %s16, 0
    %p132 = por %p130, %p131
    %p133 = scmp.le.s32.totalorder 1, %s10
    %p134 = scmp.lt.s32.totalorder %s10, 3
    %p135 = pnand %p133, %p134
    %p136 = pneg %p135
    // Predicated region
    $region9: #{_lambda_.10} parent=5 // pred_check
      _
    $region10: #{_lambda_.10} parent=5 // pred_check_branch
      %138 = sbr.rel (%p135) target = $region12
    $region11: #{_lambda_.10} parent=5 // pred_region
      %s139 = ssub.s32 %s10, 1
      // Predicated region
      $region13: #{_lambda_.10} parent=11 // pred_check
        %p140 = pneg %p57
      $region14: #{_lambda_.10} parent=11 // pred_check_branch
        %142 = sbr.rel (%p140) target = $region16
      $region15: #{_lambda_.10} parent=11 // pred_region
        _
      $region16: #{_lambda_.10} parent=11 // pred_fallthru
        _
      // Predicated region
      $region17: #{_lambda_.10} parent=11 // pred_check
        %p143 = pneg %p78
      $region18: #{_lambda_.10} parent=11 // pred_check_branch
        %145 = sbr.rel (%p143) target = $region20
      $region19: #{_lambda_.10} parent=11 // pred_region
        _
      $region20: #{_lambda_.10} parent=11 // pred_fallthru
        _
      // Predicated region
      $region21: #{_lambda_.10} parent=11 // pred_check
        %p146 = pneg %p99
      $region22: #{_lambda_.10} parent=11 // pred_check_branch
        %148 = sbr.rel (%p146) target = $region24
      $region23: #{_lambda_.10} parent=11 // pred_region
        _
      $region24: #{_lambda_.10} parent=11 // pred_fallthru
        _
    $region12: #{_lambda_.10} parent=5 // pred_fallthru
      _
    %p149 = scmp.lt.s32.totalorder %s10, 2
    // Predicated region
    $region25: #{_lambda_.10} parent=5 // pred_check
      %p150 = pneg %p149
    $region26: #{_lambda_.10} parent=5 // pred_check_branch
      %152 = sbr.rel (%p150) target = $region28
    $region27: #{_lambda_.10} parent=5 // pred_region
      // Predicated region
      $region29: #{_lambda_.10} parent=27 // pred_check
        %p153 = pneg %p30
      $region30: #{_lambda_.10} parent=27 // pred_check_branch
        %155 = sbr.rel (%p153) target = $region32
      $region31: #{_lambda_.10} parent=27 // pred_region
        %s156 = smul.u32 32, %s10
        %p157 = scmp.lt.s32.totalorder %s156, 63
        %s158 = scalar_select %p157, %s156, 63
        %s159 = smul.addr %s158, 8
        %s160 = scalar_lea.vmem %s0, %s159
        %s161 = smul.u32 32, %s10
      $region32: #{_lambda_.10} parent=27 // pred_fallthru
        _
    $region28: #{_lambda_.10} parent=5 // pred_fallthru
      _
    %p162 = scmp.le.s32.totalorder 1, %s10
    %p163 = scmp.lt.s32.totalorder %s10, 3
    %p164 = pnand %p162, %p163
    %p165 = pneg %p164
    // Predicated region
    $region33: #{_lambda_.10} parent=5 // pred_check
      _
    $region34: #{_lambda_.10} parent=5 // pred_check_branch
      %167 = sbr.rel (%p164) target = $region36
    $region35: #{_lambda_.10} parent=5 // pred_region
      %s168 = ssub.s32 %s10, 1
      %s169 = smul.u32 32, %s15
      %p170 = scmp.lt.s32.totalorder %s169, 63
      %s171 = scalar_select %p170, %s169, 63
      %s172 = smul.addr %s171, 8
      %s173 = scalar_lea.vmem %s0, %s172
      %p174 = pneg %p36
      %p175 = pneg %p33
      %p176 = pneg %p57
      %p177 = pneg %p54
      %p178 = pneg %p78
      %p179 = pneg %p75
      %p180 = pneg %p99
      %p181 = pneg %p96
      %p182 = pneg %p125
      %p183 = pneg %p122
      %s184 = smul.u32 32, %s15
      %p185 = scmp.lt.s32.totalorder %s184, 63
      %s186 = scalar_select %p185, %s184, 63
      %s187 = smul.addr %s186, 8
      %s188 = scalar_lea.vmem %s4, %s187
      %s189 = smul.u32 32, %s15
      %p190 = scmp.lt.s32.totalorder %s189, 63
      %s191 = scalar_select %p190, %s189, 63
      %s192 = smul.addr %s191, 8
      %s193 = scalar_lea.vmem %s0, %s192
      %s194 = smul.u32 32, %s15
      %s195 = smul.u32 32, %s15
      %p196 = scmp.lt.s32.totalorder %s195, 63
      %s197 = scalar_select %p196, %s195, 63
      %s198 = smul.addr %s197, 8
      %s199 = scalar_lea.vmem %s4, %s198
      %s200 = smul.u32 32, %s15
      %v202 = vld [vmem:[%s193] sm:$0xff]
      %v203 = vld [vmem:[%s193 + $0x8] sm:$0xff]
      %v204 = vld [vmem:[%s193 + $0x10] sm:$0xff]
      %v205 = vld [vmem:[%s193 + $0x18] sm:$0xff]
      %v206 = vld [vmem:[%s193 + $0x20] sm:$0xff]
      %v207 = vld [vmem:[%s193 + $0x28] sm:$0xff]
      %v208 = vld [vmem:[%s193 + $0x30] sm:$0xff]
      %v209 = vld [vmem:[%s193 + $0x38] sm:$0xff]
      %v210 = vld [vmem:[%s193 + $0x40] sm:$0xff]
      %v211 = vld [vmem:[%s193 + $0x48] sm:$0xff]
      %v212 = vld [vmem:[%s193 + $0x50] sm:$0xff]
      %v213 = vld [vmem:[%s193 + $0x58] sm:$0xff]
      %v214 = vld [vmem:[%s193 + $0x60] sm:$0xff]
      %v215 = vld [vmem:[%s193 + $0x68] sm:$0xff]
      %v216 = vld [vmem:[%s193 + $0x70] sm:$0xff]
      %v217 = vld [vmem:[%s193 + $0x78] sm:$0xff]
      %v218 = vld [vmem:[%s193 + $0x80] sm:$0xff]
      %v219 = vld [vmem:[%s193 + $0x88] sm:$0xff]
      %v220 = vld [vmem:[%s193 + $0x90] sm:$0xff]
      %v221 = vld [vmem:[%s193 + $0x98] sm:$0xff]
      %v222 = vld [vmem:[%s193 + $0xa0] sm:$0xff]
      %v223 = vld [vmem:[%s193 + $0xa8] sm:$0xff]
      %v224 = vld [vmem:[%s193 + $0xb0] sm:$0xff]
      %v225 = vld [vmem:[%s193 + $0xb8] sm:$0xff]
      %v226 = vld [vmem:[%s193 + $0xc0] sm:$0xff]
      %v227 = vld [vmem:[%s193 + $0xc8] sm:$0xff]
      %v228 = vld [vmem:[%s193 + $0xd0] sm:$0xff]
      %v229 = vld [vmem:[%s193 + $0xd8] sm:$0xff]
      %v230 = vld [vmem:[%s193 + $0xe0] sm:$0xff]
      %v231 = vld [vmem:[%s193 + $0xe8] sm:$0xff]
      %v232 = vld [vmem:[%s193 + $0xf0] sm:$0xff]
      %v233 = vld [vmem:[%s193 + $0xf8] sm:$0xff]
      %v234 = vld [vmem:[%s1] sm:$0x1]
      %v235 = vld [vmem:[%s2] sm:$0x1]
      %vm236 = vcmask 130048
      %v237 = vsel %vm236, %v202, 0.0
      %238 = vadd.xlane.f32.xlu0 %v237
      %v239 = vpop.xlane.xlu0 %238
      %v240 = vsel %vm236, %v203, 0.0
      %241 = vadd.xlane.f32.xlu0 %v240
      %v242 = vpop.xlane.xlu0 %241
      %v243 = vsel %vm236, %v204, 0.0
      %244 = vadd.xlane.f32.xlu0 %v243
      %v245 = vpop.xlane.xlu0 %244
      %v246 = vsel %vm236, %v205, 0.0
      %247 = vadd.xlane.f32.xlu0 %v246
      %v248 = vpop.xlane.xlu0 %247
      %v249 = vsel %vm236, %v206, 0.0
      %250 = vadd.xlane.f32.xlu0 %v249
      %v251 = vpop.xlane.xlu0 %250
      %v252 = vsel %vm236, %v207, 0.0
      %253 = vadd.xlane.f32.xlu0 %v252
      %v254 = vpop.xlane.xlu0 %253
      %v255 = vsel %vm236, %v208, 0.0
      %256 = vadd.xlane.f32.xlu0 %v255
      %v257 = vpop.xlane.xlu0 %256
      %v258 = vsel %vm236, %v209, 0.0
      %259 = vadd.xlane.f32.xlu0 %v258
      %v260 = vpop.xlane.xlu0 %259
      %v261 = vsel %vm236, %v210, 0.0
      %262 = vadd.xlane.f32.xlu0 %v261
      %v263 = vpop.xlane.xlu0 %262
      %v264 = vsel %vm236, %v211, 0.0
      %265 = vadd.xlane.f32.xlu0 %v264
      %v266 = vpop.xlane.xlu0 %265
      %v267 = vsel %vm236, %v212, 0.0
      %268 = vadd.xlane.f32.xlu0 %v267
      %v269 = vpop.xlane.xlu0 %268
      %v270 = vsel %vm236, %v213, 0.0
      %271 = vadd.xlane.f32.xlu0 %v270
      %v272 = vpop.xlane.xlu0 %271
      %v273 = vsel %vm236, %v214, 0.0
      %274 = vadd.xlane.f32.xlu0 %v273
      %v275 = vpop.xlane.xlu0 %274
      %v276 = vsel %vm236, %v215, 0.0
      %277 = vadd.xlane.f32.xlu0 %v276
      %v278 = vpop.xlane.xlu0 %277
      %v279 = vsel %vm236, %v216, 0.0
      %280 = vadd.xlane.f32.xlu0 %v279
      %v281 = vpop.xlane.xlu0 %280
      %v282 = vsel %vm236, %v217, 0.0
      %283 = vadd.xlane.f32.xlu0 %v282
      %v284 = vpop.xlane.xlu0 %283
      %v285 = vsel %vm236, %v218, 0.0
      %286 = vadd.xlane.f32.xlu0 %v285
      %v287 = vpop.xlane.xlu0 %286
      %v288 = vsel %vm236, %v219, 0.0
      %289 = vadd.xlane.f32.xlu0 %v288
      %v290 = vpop.xlane.xlu0 %289
      %v291 = vsel %vm236, %v220, 0.0
      %292 = vadd.xlane.f32.xlu0 %v291
      %v293 = vpop.xlane.xlu0 %292
      %v294 = vsel %vm236, %v221, 0.0
      %295 = vadd.xlane.f32.xlu0 %v294
      %v296 = vpop.xlane.xlu0 %295
      %v297 = vsel %vm236, %v222, 0.0
      %298 = vadd.xlane.f32.xlu0 %v297
      %v299 = vpop.xlane.xlu0 %298
      %v300 = vsel %vm236, %v223, 0.0
      %301 = vadd.xlane.f32.xlu0 %v300
      %v302 = vpop.xlane.xlu0 %301
      %v303 = vsel %vm236, %v224, 0.0
      %304 = vadd.xlane.f32.xlu0 %v303
      %v305 = vpop.xlane.xlu0 %304
      %v306 = vsel %vm236, %v225, 0.0
      %307 = vadd.xlane.f32.xlu0 %v306
      %v308 = vpop.xlane.xlu0 %307
      %v309 = vsel %vm236, %v226, 0.0
      %310 = vadd.xlane.f32.xlu0 %v309
      %v311 = vpop.xlane.xlu0 %310
      %v312 = vsel %vm236, %v227, 0.0
      %313 = vadd.xlane.f32.xlu0 %v312
      %v314 = vpop.xlane.xlu0 %313
      %v315 = vsel %vm236, %v228, 0.0
      %316 = vadd.xlane.f32.xlu0 %v315
      %v317 = vpop.xlane.xlu0 %316
      %v318 = vsel %vm236, %v229, 0.0
      %319 = vadd.xlane.f32.xlu0 %v318
      %v320 = vpop.xlane.xlu0 %319
      %v321 = vsel %vm236, %v230, 0.0
      %322 = vadd.xlane.f32.xlu0 %v321
      %v323 = vpop.xlane.xlu0 %322
      %v324 = vsel %vm236, %v231, 0.0
      %325 = vadd.xlane.f32.xlu0 %v324
      %v326 = vpop.xlane.xlu0 %325
      %v327 = vsel %vm236, %v232, 0.0
      %328 = vadd.xlane.f32.xlu0 %v327
      %v329 = vpop.xlane.xlu0 %328
      %v330 = vsel %vm236, %v233, 0.0
      %331 = vadd.xlane.f32.xlu0 %v330
      %v332 = vpop.xlane.xlu0 %331
      %v333 = vrcp.pop 16.0
      %v334 = vmul.f32 16.0, %v333
      %v335 = vsub.f32 1.0, %v334
      %v336 = vmul.f32 %v333, %v335
      %v337 = vadd.f32 %v333, %v336
      %vm338 = vweird.f32 %v333
      %v339 = vsel %vm338, %v333, %v337
      %v340 = vmul.f32 %v239, %v339
      %v341 = vmul.f32 %v242, %v339
      %v342 = vmul.f32 %v245, %v339
      %v343 = vmul.f32 %v248, %v339
      %v344 = vmul.f32 %v251, %v339
      %v345 = vmul.f32 %v254, %v339
      %v346 = vmul.f32 %v257, %v339
      %v347 = vmul.f32 %v260, %v339
      %v348 = vmul.f32 %v263, %v339
      %v349 = vmul.f32 %v266, %v339
      %v350 = vmul.f32 %v269, %v339
      %v351 = vmul.f32 %v272, %v339
      %v352 = vmul.f32 %v275, %v339
      %v353 = vmul.f32 %v278, %v339
      %v354 = vmul.f32 %v281, %v339
      %v355 = vmul.f32 %v284, %v339
      %v356 = vmul.f32 %v287, %v339
      %v357 = vmul.f32 %v290, %v339
      %v358 = vmul.f32 %v293, %v339
      %v359 = vmul.f32 %v296, %v339
      %v360 = vmul.f32 %v299, %v339
      %v361 = vmul.f32 %v302, %v339
      %v362 = vmul.f32 %v305, %v339
      %v363 = vmul.f32 %v308, %v339
      %v364 = vmul.f32 %v311, %v339
      %v365 = vmul.f32 %v314, %v339
      %v366 = vmul.f32 %v317, %v339
      %v367 = vmul.f32 %v320, %v339
      %v368 = vmul.f32 %v323, %v339
      %v369 = vmul.f32 %v326, %v339
      %v370 = vmul.f32 %v329, %v339
      %v371 = vmul.f32 %v332, %v339
      %v372 = vsub.f32 %v202, %v340
      %v373 = vsub.f32 %v203, %v341
      %v374 = vsub.f32 %v204, %v342
      %v375 = vsub.f32 %v205, %v343
      %v376 = vsub.f32 %v206, %v344
      %v377 = vsub.f32 %v207, %v345
      %v378 = vsub.f32 %v208, %v346
      %v379 = vsub.f32 %v209, %v347
      %v380 = vsub.f32 %v210, %v348
      %v381 = vsub.f32 %v211, %v349
      %v382 = vsub.f32 %v212, %v350
      %v383 = vsub.f32 %v213, %v351
      %v384 = vsub.f32 %v214, %v352
      %v385 = vsub.f32 %v215, %v353
      %v386 = vsub.f32 %v216, %v354
      %v387 = vsub.f32 %v217, %v355
      %v388 = vsub.f32 %v218, %v356
      %v389 = vsub.f32 %v219, %v357
      %v390 = vsub.f32 %v220, %v358
      %v391 = vsub.f32 %v221, %v359
      %v392 = vsub.f32 %v222, %v360
      %v393 = vsub.f32 %v223, %v361
      %v394 = vsub.f32 %v224, %v362
      %v395 = vsub.f32 %v225, %v363
      %v396 = vsub.f32 %v226, %v364
      %v397 = vsub.f32 %v227, %v365
      %v398 = vsub.f32 %v228, %v366
      %v399 = vsub.f32 %v229, %v367
      %v400 = vsub.f32 %v230, %v368
      %v401 = vsub.f32 %v231, %v369
      %v402 = vsub.f32 %v232, %v370
      %v403 = vsub.f32 %v233, %v371
      %v404 = vmul.f32 %v372, %v372
      %v405 = vmul.f32 %v373, %v373
      %v406 = vmul.f32 %v374, %v374
      %v407 = vmul.f32 %v375, %v375
      %v408 = vmul.f32 %v376, %v376
      %v409 = vmul.f32 %v377, %v377
      %v410 = vmul.f32 %v378, %v378
      %v411 = vmul.f32 %v379, %v379
      %v412 = vmul.f32 %v380, %v380
      %v413 = vmul.f32 %v381, %v381
      %v414 = vmul.f32 %v382, %v382
      %v415 = vmul.f32 %v383, %v383
      %v416 = vmul.f32 %v384, %v384
      %v417 = vmul.f32 %v385, %v385
      %v418 = vmul.f32 %v386, %v386
      %v419 = vmul.f32 %v387, %v387
      %v420 = vmul.f32 %v388, %v388
      %v421 = vmul.f32 %v389, %v389
      %v422 = vmul.f32 %v390, %v390
      %v423 = vmul.f32 %v391, %v391
      %v424 = vmul.f32 %v392, %v392
      %v425 = vmul.f32 %v393, %v393
      %v426 = vmul.f32 %v394, %v394
      %v427 = vmul.f32 %v395, %v395
      %v428 = vmul.f32 %v396, %v396
      %v429 = vmul.f32 %v397, %v397
      %v430 = vmul.f32 %v398, %v398
      %v431 = vmul.f32 %v399, %v399
      %v432 = vmul.f32 %v400, %v400
      %v433 = vmul.f32 %v401, %v401
      %v434 = vmul.f32 %v402, %v402
      %v435 = vmul.f32 %v403, %v403
      %v436 = vsel %vm236, %v404, 0.0
      %437 = vadd.xlane.f32.xlu0 %v436
      %v438 = vpop.xlane.xlu0 %437
      %v439 = vsel %vm236, %v405, 0.0
      %440 = vadd.xlane.f32.xlu0 %v439
      %v441 = vpop.xlane.xlu0 %440
      %v442 = vsel %vm236, %v406, 0.0
      %443 = vadd.xlane.f32.xlu0 %v442
      %v444 = vpop.xlane.xlu0 %443
      %v445 = vsel %vm236, %v407, 0.0
      %446 = vadd.xlane.f32.xlu0 %v445
      %v447 = vpop.xlane.xlu0 %446
      %v448 = vsel %vm236, %v408, 0.0
      %449 = vadd.xlane.f32.xlu0 %v448
      %v450 = vpop.xlane.xlu0 %449
      %v451 = vsel %vm236, %v409, 0.0
      %452 = vadd.xlane.f32.xlu0 %v451
      %v453 = vpop.xlane.xlu0 %452
      %v454 = vsel %vm236, %v410, 0.0
      %455 = vadd.xlane.f32.xlu0 %v454
      %v456 = vpop.xlane.xlu0 %455
      %v457 = vsel %vm236, %v411, 0.0
      %458 = vadd.xlane.f32.xlu0 %v457
      %v459 = vpop.xlane.xlu0 %458
      %v460 = vsel %vm236, %v412, 0.0
      %461 = vadd.xlane.f32.xlu0 %v460
      %v462 = vpop.xlane.xlu0 %461
      %v463 = vsel %vm236, %v413, 0.0
      %464 = vadd.xlane.f32.xlu0 %v463
      %v465 = vpop.xlane.xlu0 %464
      %v466 = vsel %vm236, %v414, 0.0
      %467 = vadd.xlane.f32.xlu0 %v466
      %v468 = vpop.xlane.xlu0 %467
      %v469 = vsel %vm236, %v415, 0.0
      %470 = vadd.xlane.f32.xlu0 %v469
      %v471 = vpop.xlane.xlu0 %470
      %v472 = vsel %vm236, %v416, 0.0
      %473 = vadd.xlane.f32.xlu0 %v472
      %v474 = vpop.xlane.xlu0 %473
      %v475 = vsel %vm236, %v417, 0.0
      %476 = vadd.xlane.f32.xlu0 %v475
      %v477 = vpop.xlane.xlu0 %476
      %v478 = vsel %vm236, %v418, 0.0
      %479 = vadd.xlane.f32.xlu0 %v478
      %v480 = vpop.xlane.xlu0 %479
      %v481 = vsel %vm236, %v419, 0.0
      %482 = vadd.xlane.f32.xlu0 %v481
      %v483 = vpop.xlane.xlu0 %482
      %v484 = vsel %vm236, %v420, 0.0
      %485 = vadd.xlane.f32.xlu0 %v484
      %v486 = vpop.xlane.xlu0 %485
      %v487 = vsel %vm236, %v421, 0.0
      %488 = vadd.xlane.f32.xlu0 %v487
      %v489 = vpop.xlane.xlu0 %488
      %v490 = vsel %vm236, %v422, 0.0
      %491 = vadd.xlane.f32.xlu0 %v490
      %v492 = vpop.xlane.xlu0 %491
      %v493 = vsel %vm236, %v423, 0.0
      %494 = vadd.xlane.f32.xlu0 %v493
      %v495 = vpop.xlane.xlu0 %494
      %v496 = vsel %vm236, %v424, 0.0
      %497 = vadd.xlane.f32.xlu0 %v496
      %v498 = vpop.xlane.xlu0 %497
      %v499 = vsel %vm236, %v425, 0.0
      %500 = vadd.xlane.f32.xlu0 %v499
      %v501 = vpop.xlane.xlu0 %500
      %v502 = vsel %vm236, %v426, 0.0
      %503 = vadd.xlane.f32.xlu0 %v502
      %v504 = vpop.xlane.xlu0 %503
      %v505 = vsel %vm236, %v427, 0.0
      %506 = vadd.xlane.f32.xlu0 %v505
      %v507 = vpop.xlane.xlu0 %506
      %v508 = vsel %vm236, %v428, 0.0
      %509 = vadd.xlane.f32.xlu0 %v508
      %v510 = vpop.xlane.xlu0 %509
      %v511 = vsel %vm236, %v429, 0.0
      %512 = vadd.xlane.f32.xlu0 %v511
      %v513 = vpop.xlane.xlu0 %512
      %v514 = vsel %vm236, %v430, 0.0
      %515 = vadd.xlane.f32.xlu0 %v514
      %v516 = vpop.xlane.xlu0 %515
      %v517 = vsel %vm236, %v431, 0.0
      %518 = vadd.xlane.f32.xlu0 %v517
      %v519 = vpop.xlane.xlu0 %518
      %v520 = vsel %vm236, %v432, 0.0
      %521 = vadd.xlane.f32.xlu0 %v520
      %v522 = vpop.xlane.xlu0 %521
      %v523 = vsel %vm236, %v433, 0.0
      %524 = vadd.xlane.f32.xlu0 %v523
      %v525 = vpop.xlane.xlu0 %524
      %v526 = vsel %vm236, %v434, 0.0
      %527 = vadd.xlane.f32.xlu0 %v526
      %v528 = vpop.xlane.xlu0 %527
      %v529 = vsel %vm236, %v435, 0.0
      %530 = vadd.xlane.f32.xlu0 %v529
      %v531 = vpop.xlane.xlu0 %530
      %v532 = vmul.f32 %v438, %v339
      %v533 = vmul.f32 %v441, %v339
      %v534 = vmul.f32 %v444, %v339
      %v535 = vmul.f32 %v447, %v339
      %v536 = vmul.f32 %v450, %v339
      %v537 = vmul.f32 %v453, %v339
      %v538 = vmul.f32 %v456, %v339
      %v539 = vmul.f32 %v459, %v339
      %v540 = vmul.f32 %v462, %v339
      %v541 = vmul.f32 %v465, %v339
      %v542 = vmul.f32 %v468, %v339
      %v543 = vmul.f32 %v471, %v339
      %v544 = vmul.f32 %v474, %v339
      %v545 = vmul.f32 %v477, %v339
      %v546 = vmul.f32 %v480, %v339
      %v547 = vmul.f32 %v483, %v339
      %v548 = vmul.f32 %v486, %v339
      %v549 = vmul.f32 %v489, %v339
      %v550 = vmul.f32 %v492, %v339
      %v551 = vmul.f32 %v495, %v339
      %v552 = vmul.f32 %v498, %v339
      %v553 = vmul.f32 %v501, %v339
      %v554 = vmul.f32 %v504, %v339
      %v555 = vmul.f32 %v507, %v339
      %v556 = vmul.f32 %v510, %v339
      %v557 = vmul.f32 %v513, %v339
      %v558 = vmul.f32 %v516, %v339
      %v559 = vmul.f32 %v519, %v339
      %v560 = vmul.f32 %v522, %v339
      %v561 = vmul.f32 %v525, %v339
      %v562 = vmul.f32 %v528, %v339
      %v563 = vmul.f32 %v531, %v339
      %v564 = vadd.f32 %v532, 1e-05
      %v565 = vadd.f32 %v533, 1e-05
      %v566 = vadd.f32 %v534, 1e-05
      %v567 = vadd.f32 %v535, 1e-05
      %v568 = vadd.f32 %v536, 1e-05
      %v569 = vadd.f32 %v537, 1e-05
      %v570 = vadd.f32 %v538, 1e-05
      %v571 = vadd.f32 %v539, 1e-05
      %v572 = vadd.f32 %v540, 1e-05
      %v573 = vadd.f32 %v541, 1e-05
      %v574 = vadd.f32 %v542, 1e-05
      %v575 = vadd.f32 %v543, 1e-05
      %v576 = vadd.f32 %v544, 1e-05
      %v577 = vadd.f32 %v545, 1e-05
      %v578 = vadd.f32 %v546, 1e-05
      %v579 = vadd.f32 %v547, 1e-05
      %v580 = vadd.f32 %v548, 1e-05
      %v581 = vadd.f32 %v549, 1e-05
      %v582 = vadd.f32 %v550, 1e-05
      %v583 = vadd.f32 %v551, 1e-05
      %v584 = vadd.f32 %v552, 1e-05
      %v585 = vadd.f32 %v553, 1e-05
      %v586 = vadd.f32 %v554, 1e-05
      %v587 = vadd.f32 %v555, 1e-05
      %v588 = vadd.f32 %v556, 1e-05
      %v589 = vadd.f32 %v557, 1e-05
      %v590 = vadd.f32 %v558, 1e-05
      %v591 = vadd.f32 %v559, 1e-05
      %v592 = vadd.f32 %v560, 1e-05
      %v593 = vadd.f32 %v561, 1e-05
      %v594 = vadd.f32 %v562, 1e-05
      %v595 = vadd.f32 %v563, 1e-05
      %v596 = vrsqrt.pop %v564
      %v597 = vmul.f32 %v596, %v564
      %v598 = vmul.f32 %v597, %v596
      %v599 = vmul.f32 0.5, %v598
      %v600 = vsub.f32 1.5, %v599
      %v601 = vmul.f32 %v596, %v600
      %vm602 = vweird.f32 %v564
      %vm603 = vweird.f32 %v596
      %vm604 = vmor %vm602, %vm603
      %v605 = vsel %vm604, %v596, %v601
      %v606 = vrsqrt.pop %v565
      %v607 = vmul.f32 %v606, %v565
      %v608 = vmul.f32 %v607, %v606
      %v609 = vmul.f32 0.5, %v608
      %v610 = vsub.f32 1.5, %v609
      %v611 = vmul.f32 %v606, %v610
      %vm612 = vweird.f32 %v565
      %vm613 = vweird.f32 %v606
      %vm614 = vmor %vm612, %vm613
      %v615 = vsel %vm614, %v606, %v611
      %v616 = vrsqrt.pop %v566
      %v617 = vmul.f32 %v616, %v566
      %v618 = vmul.f32 %v617, %v616
      %v619 = vmul.f32 0.5, %v618
      %v620 = vsub.f32 1.5, %v619
      %v621 = vmul.f32 %v616, %v620
      %vm622 = vweird.f32 %v566
      %vm623 = vweird.f32 %v616
      %vm624 = vmor %vm622, %vm623
      %v625 = vsel %vm624, %v616, %v621
      %v626 = vrsqrt.pop %v567
      %v627 = vmul.f32 %v626, %v567
      %v628 = vmul.f32 %v627, %v626
      %v629 = vmul.f32 0.5, %v628
      %v630 = vsub.f32 1.5, %v629
      %v631 = vmul.f32 %v626, %v630
      %vm632 = vweird.f32 %v567
      %vm633 = vweird.f32 %v626
      %vm634 = vmor %vm632, %vm633
      %v635 = vsel %vm634, %v626, %v631
      %v636 = vrsqrt.pop %v568
      %v637 = vmul.f32 %v636, %v568
      %v638 = vmul.f32 %v637, %v636
      %v639 = vmul.f32 0.5, %v638
      %v640 = vsub.f32 1.5, %v639
      %v641 = vmul.f32 %v636, %v640
      %vm642 = vweird.f32 %v568
      %vm643 = vweird.f32 %v636
      %vm644 = vmor %vm642, %vm643
      %v645 = vsel %vm644, %v636, %v641
      %v646 = vrsqrt.pop %v569
      %v647 = vmul.f32 %v646, %v569
      %v648 = vmul.f32 %v647, %v646
      %v649 = vmul.f32 0.5, %v648
      %v650 = vsub.f32 1.5, %v649
      %v651 = vmul.f32 %v646, %v650
      %vm652 = vweird.f32 %v569
      %vm653 = vweird.f32 %v646
      %vm654 = vmor %vm652, %vm653
      %v655 = vsel %vm654, %v646, %v651
      %v656 = vrsqrt.pop %v570
      %v657 = vmul.f32 %v656, %v570
      %v658 = vmul.f32 %v657, %v656
      %v659 = vmul.f32 0.5, %v658
      %v660 = vsub.f32 1.5, %v659
      %v661 = vmul.f32 %v656, %v660
      %vm662 = vweird.f32 %v570
      %vm663 = vweird.f32 %v656
      %vm664 = vmor %vm662, %vm663
      %v665 = vsel %vm664, %v656, %v661
      %v666 = vrsqrt.pop %v571
      %v667 = vmul.f32 %v666, %v571
      %v668 = vmul.f32 %v667, %v666
      %v669 = vmul.f32 0.5, %v668
      %v670 = vsub.f32 1.5, %v669
      %v671 = vmul.f32 %v666, %v670
      %vm672 = vweird.f32 %v571
      %vm673 = vweird.f32 %v666
      %vm674 = vmor %vm672, %vm673
      %v675 = vsel %vm674, %v666, %v671
      %v676 = vrsqrt.pop %v572
      %v677 = vmul.f32 %v676, %v572
      %v678 = vmul.f32 %v677, %v676
      %v679 = vmul.f32 0.5, %v678
      %v680 = vsub.f32 1.5, %v679
      %v681 = vmul.f32 %v676, %v680
      %vm682 = vweird.f32 %v572
      %vm683 = vweird.f32 %v676
      %vm684 = vmor %vm682, %vm683
      %v685 = vsel %vm684, %v676, %v681
      %v686 = vrsqrt.pop %v573
      %v687 = vmul.f32 %v686, %v573
      %v688 = vmul.f32 %v687, %v686
      %v689 = vmul.f32 0.5, %v688
      %v690 = vsub.f32 1.5, %v689
      %v691 = vmul.f32 %v686, %v690
      %vm692 = vweird.f32 %v573
      %vm693 = vweird.f32 %v686
      %vm694 = vmor %vm692, %vm693
      %v695 = vsel %vm694, %v686, %v691
      %v696 = vrsqrt.pop %v574
      %v697 = vmul.f32 %v696, %v574
      %v698 = vmul.f32 %v697, %v696
      %v699 = vmul.f32 0.5, %v698
      %v700 = vsub.f32 1.5, %v699
      %v701 = vmul.f32 %v696, %v700
      %vm702 = vweird.f32 %v574
      %vm703 = vweird.f32 %v696
      %vm704 = vmor %vm702, %vm703
      %v705 = vsel %vm704, %v696, %v701
      %v706 = vrsqrt.pop %v575
      %v707 = vmul.f32 %v706, %v575
      %v708 = vmul.f32 %v707, %v706
      %v709 = vmul.f32 0.5, %v708
      %v710 = vsub.f32 1.5, %v709
      %v711 = vmul.f32 %v706, %v710
      %vm712 = vweird.f32 %v575
      %vm713 = vweird.f32 %v706
      %vm714 = vmor %vm712, %vm713
      %v715 = vsel %vm714, %v706, %v711
      %v716 = vrsqrt.pop %v576
      %v717 = vmul.f32 %v716, %v576
      %v718 = vmul.f32 %v717, %v716
      %v719 = vmul.f32 0.5, %v718
      %v720 = vsub.f32 1.5, %v719
      %v721 = vmul.f32 %v716, %v720
      %vm722 = vweird.f32 %v576
      %vm723 = vweird.f32 %v716
      %vm724 = vmor %vm722, %vm723
      %v725 = vsel %vm724, %v716, %v721
      %v726 = vrsqrt.pop %v577
      %v727 = vmul.f32 %v726, %v577
      %v728 = vmul.f32 %v727, %v726
      %v729 = vmul.f32 0.5, %v728
      %v730 = vsub.f32 1.5, %v729
      %v731 = vmul.f32 %v726, %v730
      %vm732 = vweird.f32 %v577
      %vm733 = vweird.f32 %v726
      %vm734 = vmor %vm732, %vm733
      %v735 = vsel %vm734, %v726, %v731
      %v736 = vrsqrt.pop %v578
      %v737 = vmul.f32 %v736, %v578
      %v738 = vmul.f32 %v737, %v736
      %v739 = vmul.f32 0.5, %v738
      %v740 = vsub.f32 1.5, %v739
      %v741 = vmul.f32 %v736, %v740
      %vm742 = vweird.f32 %v578
      %vm743 = vweird.f32 %v736
      %vm744 = vmor %vm742, %vm743
      %v745 = vsel %vm744, %v736, %v741
      %v746 = vrsqrt.pop %v579
      %v747 = vmul.f32 %v746, %v579
      %v748 = vmul.f32 %v747, %v746
      %v749 = vmul.f32 0.5, %v748
      %v750 = vsub.f32 1.5, %v749
      %v751 = vmul.f32 %v746, %v750
      %vm752 = vweird.f32 %v579
      %vm753 = vweird.f32 %v746
      %vm754 = vmor %vm752, %vm753
      %v755 = vsel %vm754, %v746, %v751
      %v756 = vrsqrt.pop %v580
      %v757 = vmul.f32 %v756, %v580
      %v758 = vmul.f32 %v757, %v756
      %v759 = vmul.f32 0.5, %v758
      %v760 = vsub.f32 1.5, %v759
      %v761 = vmul.f32 %v756, %v760
      %vm762 = vweird.f32 %v580
      %vm763 = vweird.f32 %v756
      %vm764 = vmor %vm762, %vm763
      %v765 = vsel %vm764, %v756, %v761
      %v766 = vrsqrt.pop %v581
      %v767 = vmul.f32 %v766, %v581
      %v768 = vmul.f32 %v767, %v766
      %v769 = vmul.f32 0.5, %v768
      %v770 = vsub.f32 1.5, %v769
      %v771 = vmul.f32 %v766, %v770
      %vm772 = vweird.f32 %v581
      %vm773 = vweird.f32 %v766
      %vm774 = vmor %vm772, %vm773
      %v775 = vsel %vm774, %v766, %v771
      %v776 = vrsqrt.pop %v582
      %v777 = vmul.f32 %v776, %v582
      %v778 = vmul.f32 %v777, %v776
      %v779 = vmul.f32 0.5, %v778
      %v780 = vsub.f32 1.5, %v779
      %v781 = vmul.f32 %v776, %v780
      %vm782 = vweird.f32 %v582
      %vm783 = vweird.f32 %v776
      %vm784 = vmor %vm782, %vm783
      %v785 = vsel %vm784, %v776, %v781
      %v786 = vrsqrt.pop %v583
      %v787 = vmul.f32 %v786, %v583
      %v788 = vmul.f32 %v787, %v786
      %v789 = vmul.f32 0.5, %v788
      %v790 = vsub.f32 1.5, %v789
      %v791 = vmul.f32 %v786, %v790
      %vm792 = vweird.f32 %v583
      %vm793 = vweird.f32 %v786
      %vm794 = vmor %vm792, %vm793
      %v795 = vsel %vm794, %v786, %v791
      %v796 = vrsqrt.pop %v584
      %v797 = vmul.f32 %v796, %v584
      %v798 = vmul.f32 %v797, %v796
      %v799 = vmul.f32 0.5, %v798
      %v800 = vsub.f32 1.5, %v799
      %v801 = vmul.f32 %v796, %v800
      %vm802 = vweird.f32 %v584
      %vm803 = vweird.f32 %v796
      %vm804 = vmor %vm802, %vm803
      %v805 = vsel %vm804, %v796, %v801
      %v806 = vrsqrt.pop %v585
      %v807 = vmul.f32 %v806, %v585
      %v808 = vmul.f32 %v807, %v806
      %v809 = vmul.f32 0.5, %v808
      %v810 = vsub.f32 1.5, %v809
      %v811 = vmul.f32 %v806, %v810
      %vm812 = vweird.f32 %v585
      %vm813 = vweird.f32 %v806
      %vm814 = vmor %vm812, %vm813
      %v815 = vsel %vm814, %v806, %v811
      %v816 = vrsqrt.pop %v586
      %v817 = vmul.f32 %v816, %v586
      %v818 = vmul.f32 %v817, %v816
      %v819 = vmul.f32 0.5, %v818
      %v820 = vsub.f32 1.5, %v819
      %v821 = vmul.f32 %v816, %v820
      %vm822 = vweird.f32 %v586
      %vm823 = vweird.f32 %v816
      %vm824 = vmor %vm822, %vm823
      %v825 = vsel %vm824, %v816, %v821
      %v826 = vrsqrt.pop %v587
      %v827 = vmul.f32 %v826, %v587
      %v828 = vmul.f32 %v827, %v826
      %v829 = vmul.f32 0.5, %v828
      %v830 = vsub.f32 1.5, %v829
      %v831 = vmul.f32 %v826, %v830
      %vm832 = vweird.f32 %v587
      %vm833 = vweird.f32 %v826
      %vm834 = vmor %vm832, %vm833
      %v835 = vsel %vm834, %v826, %v831
      %v836 = vrsqrt.pop %v588
      %v837 = vmul.f32 %v836, %v588
      %v838 = vmul.f32 %v837, %v836
      %v839 = vmul.f32 0.5, %v838
      %v840 = vsub.f32 1.5, %v839
      %v841 = vmul.f32 %v836, %v840
      %vm842 = vweird.f32 %v588
      %vm843 = vweird.f32 %v836
      %vm844 = vmor %vm842, %vm843
      %v845 = vsel %vm844, %v836, %v841
      %v846 = vrsqrt.pop %v589
      %v847 = vmul.f32 %v846, %v589
      %v848 = vmul.f32 %v847, %v846
      %v849 = vmul.f32 0.5, %v848
      %v850 = vsub.f32 1.5, %v849
      %v851 = vmul.f32 %v846, %v850
      %vm852 = vweird.f32 %v589
      %vm853 = vweird.f32 %v846
      %vm854 = vmor %vm852, %vm853
      %v855 = vsel %vm854, %v846, %v851
      %v856 = vrsqrt.pop %v590
      %v857 = vmul.f32 %v856, %v590
      %v858 = vmul.f32 %v857, %v856
      %v859 = vmul.f32 0.5, %v858
      %v860 = vsub.f32 1.5, %v859
      %v861 = vmul.f32 %v856, %v860
      %vm862 = vweird.f32 %v590
      %vm863 = vweird.f32 %v856
      %vm864 = vmor %vm862, %vm863
      %v865 = vsel %vm864, %v856, %v861
      %v866 = vrsqrt.pop %v591
      %v867 = vmul.f32 %v866, %v591
      %v868 = vmul.f32 %v867, %v866
      %v869 = vmul.f32 0.5, %v868
      %v870 = vsub.f32 1.5, %v869
      %v871 = vmul.f32 %v866, %v870
      %vm872 = vweird.f32 %v591
      %vm873 = vweird.f32 %v866
      %vm874 = vmor %vm872, %vm873
      %v875 = vsel %vm874, %v866, %v871
      %v876 = vrsqrt.pop %v592
      %v877 = vmul.f32 %v876, %v592
      %v878 = vmul.f32 %v877, %v876
      %v879 = vmul.f32 0.5, %v878
      %v880 = vsub.f32 1.5, %v879
      %v881 = vmul.f32 %v876, %v880
      %vm882 = vweird.f32 %v592
      %vm883 = vweird.f32 %v876
      %vm884 = vmor %vm882, %vm883
      %v885 = vsel %vm884, %v876, %v881
      %v886 = vrsqrt.pop %v593
      %v887 = vmul.f32 %v886, %v593
      %v888 = vmul.f32 %v887, %v886
      %v889 = vmul.f32 0.5, %v888
      %v890 = vsub.f32 1.5, %v889
      %v891 = vmul.f32 %v886, %v890
      %vm892 = vweird.f32 %v593
      %vm893 = vweird.f32 %v886
      %vm894 = vmor %vm892, %vm893
      %v895 = vsel %vm894, %v886, %v891
      %v896 = vrsqrt.pop %v594
      %v897 = vmul.f32 %v896, %v594
      %v898 = vmul.f32 %v897, %v896
      %v899 = vmul.f32 0.5, %v898
      %v900 = vsub.f32 1.5, %v899
      %v901 = vmul.f32 %v896, %v900
      %vm902 = vweird.f32 %v594
      %vm903 = vweird.f32 %v896
      %vm904 = vmor %vm902, %vm903
      %v905 = vsel %vm904, %v896, %v901
      %v906 = vrsqrt.pop %v595
      %v907 = vmul.f32 %v906, %v595
      %v908 = vmul.f32 %v907, %v906
      %v909 = vmul.f32 0.5, %v908
      %v910 = vsub.f32 1.5, %v909
      %v911 = vmul.f32 %v906, %v910
      %vm912 = vweird.f32 %v595
      %vm913 = vweird.f32 %v906
      %vm914 = vmor %vm912, %vm913
      %v915 = vsel %vm914, %v906, %v911
      %v916 = vmul.f32 %v372, %v605
      %v917 = vmul.f32 %v373, %v615
      %v918 = vmul.f32 %v374, %v625
      %v919 = vmul.f32 %v375, %v635
      %v920 = vmul.f32 %v376, %v645
      %v921 = vmul.f32 %v377, %v655
      %v922 = vmul.f32 %v378, %v665
      %v923 = vmul.f32 %v379, %v675
      %v924 = vmul.f32 %v380, %v685
      %v925 = vmul.f32 %v381, %v695
      %v926 = vmul.f32 %v382, %v705
      %v927 = vmul.f32 %v383, %v715
      %v928 = vmul.f32 %v384, %v725
      %v929 = vmul.f32 %v385, %v735
      %v930 = vmul.f32 %v386, %v745
      %v931 = vmul.f32 %v387, %v755
      %v932 = vmul.f32 %v388, %v765
      %v933 = vmul.f32 %v389, %v775
      %v934 = vmul.f32 %v390, %v785
      %v935 = vmul.f32 %v391, %v795
      %v936 = vmul.f32 %v392, %v805
      %v937 = vmul.f32 %v393, %v815
      %v938 = vmul.f32 %v394, %v825
      %v939 = vmul.f32 %v395, %v835
      %v940 = vmul.f32 %v396, %v845
      %v941 = vmul.f32 %v397, %v855
      %v942 = vmul.f32 %v398, %v865
      %v943 = vmul.f32 %v399, %v875
      %v944 = vmul.f32 %v400, %v885
      %v945 = vmul.f32 %v401, %v895
      %v946 = vmul.f32 %v402, %v905
      %v947 = vmul.f32 %v403, %v915
      %v949 = vperm.slane %v234, 0
      %v951 = vmul.f32 %v916, %v949
      %v952 = vmul.f32 %v917, %v949
      %v953 = vmul.f32 %v918, %v949
      %v954 = vmul.f32 %v919, %v949
      %v955 = vmul.f32 %v920, %v949
      %v956 = vmul.f32 %v921, %v949
      %v957 = vmul.f32 %v922, %v949
      %v958 = vmul.f32 %v923, %v949
      %v959 = vmul.f32 %v924, %v949
      %v960 = vmul.f32 %v925, %v949
      %v961 = vmul.f32 %v926, %v949
      %v962 = vmul.f32 %v927, %v949
      %v963 = vmul.f32 %v928, %v949
      %v964 = vmul.f32 %v929, %v949
      %v965 = vmul.f32 %v930, %v949
      %v966 = vmul.f32 %v931, %v949
      %v967 = vmul.f32 %v932, %v949
      %v968 = vmul.f32 %v933, %v949
      %v969 = vmul.f32 %v934, %v949
      %v970 = vmul.f32 %v935, %v949
      %v971 = vmul.f32 %v936, %v949
      %v972 = vmul.f32 %v937, %v949
      %v973 = vmul.f32 %v938, %v949
      %v974 = vmul.f32 %v939, %v949
      %v975 = vmul.f32 %v940, %v949
      %v976 = vmul.f32 %v941, %v949
      %v977 = vmul.f32 %v942, %v949
      %v978 = vmul.f32 %v943, %v949
      %v979 = vmul.f32 %v944, %v949
      %v980 = vmul.f32 %v945, %v949
      %v981 = vmul.f32 %v946, %v949
      %v982 = vmul.f32 %v947, %v949
      %v984 = vperm.slane %v235, 0
      %v986 = vadd.f32 %v951, %v984
      %v987 = vadd.f32 %v952, %v984
      %v988 = vadd.f32 %v953, %v984
      %v989 = vadd.f32 %v954, %v984
      %v990 = vadd.f32 %v955, %v984
      %v991 = vadd.f32 %v956, %v984
      %v992 = vadd.f32 %v957, %v984
      %v993 = vadd.f32 %v958, %v984
      %v994 = vadd.f32 %v959, %v984
      %v995 = vadd.f32 %v960, %v984
      %v996 = vadd.f32 %v961, %v984
      %v997 = vadd.f32 %v962, %v984
      %v998 = vadd.f32 %v963, %v984
      %v999 = vadd.f32 %v964, %v984
      %v1000 = vadd.f32 %v965, %v984
      %v1001 = vadd.f32 %v966, %v984
      %v1002 = vadd.f32 %v967, %v984
      %v1003 = vadd.f32 %v968, %v984
      %v1004 = vadd.f32 %v969, %v984
      %v1005 = vadd.f32 %v970, %v984
      %v1006 = vadd.f32 %v971, %v984
      %v1007 = vadd.f32 %v972, %v984
      %v1008 = vadd.f32 %v973, %v984
      %v1009 = vadd.f32 %v974, %v984
      %v1010 = vadd.f32 %v975, %v984
      %v1011 = vadd.f32 %v976, %v984
      %v1012 = vadd.f32 %v977, %v984
      %v1013 = vadd.f32 %v978, %v984
      %v1014 = vadd.f32 %v979, %v984
      %v1015 = vadd.f32 %v980, %v984
      %v1016 = vadd.f32 %v981, %v984
      %v1017 = vadd.f32 %v982, %v984
      %v1018 = vpack.c.bf16 %v987, %v986
      %v1019 = vpack.c.bf16 %v989, %v988
      %v1020 = vpack.c.bf16 %v991, %v990
      %v1021 = vpack.c.bf16 %v993, %v992
      %v1022 = vpack.c.bf16 %v995, %v994
      %v1023 = vpack.c.bf16 %v997, %v996
      %v1024 = vpack.c.bf16 %v999, %v998
      %v1025 = vpack.c.bf16 %v1001, %v1000
      %v1026 = vpack.c.bf16 %v1003, %v1002
      %v1027 = vpack.c.bf16 %v1005, %v1004
      %v1028 = vpack.c.bf16 %v1007, %v1006
      %v1029 = vpack.c.bf16 %v1009, %v1008
      %v1030 = vpack.c.bf16 %v1011, %v1010
      %v1031 = vpack.c.bf16 %v1013, %v1012
      %v1032 = vpack.c.bf16 %v1015, %v1014
      %v1033 = vpack.c.bf16 %v1017, %v1016
      %v1034 = vld [vmem:[%s3] sm:$0xf]
      %v1035 = vld [vmem:[%s3 + $0x4] sm:$0xf]
      %v1038 = vunpack.c.l.b16 %v1034
      %v1039 = vunpack.c.l.b16 %v1035
      %v1040 = vpack.c.b16 %v1039, %v1038
      %v1043 = vsel %vm236, %v1018, 0
      %v1046 = vsel %vm236, %v1019, 0
      %v1049 = vsel %vm236, %v1020, 0
      %v1052 = vsel %vm236, %v1021, 0
      %v1055 = vsel %vm236, %v1022, 0
      %v1058 = vsel %vm236, %v1023, 0
      %v1061 = vsel %vm236, %v1024, 0
      %v1064 = vsel %vm236, %v1025, 0
      %v1067 = vsel %vm236, %v1026, 0
      %v1070 = vsel %vm236, %v1027, 0
      %v1073 = vsel %vm236, %v1028, 0
      %v1076 = vsel %vm236, %v1029, 0
      %v1079 = vsel %vm236, %v1030, 0
      %v1082 = vsel %vm236, %v1031, 0
      %v1085 = vsel %vm236, %v1032, 0
      %v1088 = vsel %vm236, %v1033, 0
      %1090 = vmatpush.bf16.msra.mxu0 0
      %1091 = vmatpush.bf16.msra.mxu0 0
      %1092 = vmatpush.bf16.msra.mxu0 0
      %1093 = vmatpush.bf16.msra.mxu0 0
      %1094 = vmatpush.bf16.msra.mxu0 0
      %1095 = vmatpush.bf16.msra.mxu0 0
      %1096 = vmatpush.bf16.msra.mxu0 0
      %1097 = vmatpush.bf16.msra.mxu0 %v1040
      %1098 = vmatmul.bf16.gmra.mxu0 %v1043
      %v1099 = vpop.f32.mrf.mxu0
      %v1100 = vadd.f32 0.0, %v1099
      %v1101 = vpop.f32.mrf.mxu0
      %v1102 = vadd.f32 0.0, %v1101
      %1103 = vmatmul.bf16.gmra.mxu0 %v1046
      %v1104 = vpop.f32.mrf.mxu0
      %v1105 = vadd.f32 0.0, %v1104
      %v1106 = vpop.f32.mrf.mxu0
      %v1107 = vadd.f32 0.0, %v1106
      %1108 = vmatmul.bf16.gmra.mxu0 %v1049
      %v1109 = vpop.f32.mrf.mxu0
      %v1110 = vadd.f32 0.0, %v1109
      %v1111 = vpop.f32.mrf.mxu0
      %v1112 = vadd.f32 0.0, %v1111
      %1113 = vmatmul.bf16.gmra.mxu0 %v1052
      %v1114 = vpop.f32.mrf.mxu0
      %v1115 = vadd.f32 0.0, %v1114
      %v1116 = vpop.f32.mrf.mxu0
      %v1117 = vadd.f32 0.0, %v1116
      %1118 = vmatmul.bf16.gmra.mxu0 %v1055
      %v1119 = vpop.f32.mrf.mxu0
      %v1120 = vadd.f32 0.0, %v1119
      %v1121 = vpop.f32.mrf.mxu0
      %v1122 = vadd.f32 0.0, %v1121
      %1123 = vmatmul.bf16.gmra.mxu0 %v1058
      %v1124 = vpop.f32.mrf.mxu0
      %v1125 = vadd.f32 0.0, %v1124
      %v1126 = vpop.f32.mrf.mxu0
      %v1127 = vadd.f32 0.0, %v1126
      %1128 = vmatmul.bf16.gmra.mxu0 %v1061
      %v1129 = vpop.f32.mrf.mxu0
      %v1130 = vadd.f32 0.0, %v1129
      %v1131 = vpop.f32.mrf.mxu0
      %v1132 = vadd.f32 0.0, %v1131
      %1133 = vmatmul.bf16.gmra.mxu0 %v1064
      %v1134 = vpop.f32.mrf.mxu0
      %v1135 = vadd.f32 0.0, %v1134
      %v1136 = vpop.f32.mrf.mxu0
      %v1137 = vadd.f32 0.0, %v1136
      %1138 = vmatmul.bf16.gmra.mxu0 %v1067
      %v1139 = vpop.f32.mrf.mxu0
      %v1140 = vadd.f32 0.0, %v1139
      %v1141 = vpop.f32.mrf.mxu0
      %v1142 = vadd.f32 0.0, %v1141
      %1143 = vmatmul.bf16.gmra.mxu0 %v1070
      %v1144 = vpop.f32.mrf.mxu0
      %v1145 = vadd.f32 0.0, %v1144
      %v1146 = vpop.f32.mrf.mxu0
      %v1147 = vadd.f32 0.0, %v1146
      %1148 = vmatmul.bf16.gmra.mxu0 %v1073
      %v1149 = vpop.f32.mrf.mxu0
      %v1150 = vadd.f32 0.0, %v1149
      %v1151 = vpop.f32.mrf.mxu0
      %v1152 = vadd.f32 0.0, %v1151
      %1153 = vmatmul.bf16.gmra.mxu0 %v1076
      %v1154 = vpop.f32.mrf.mxu0
      %v1155 = vadd.f32 0.0, %v1154
      %v1156 = vpop.f32.mrf.mxu0
      %v1157 = vadd.f32 0.0, %v1156
      %1158 = vmatmul.bf16.gmra.mxu0 %v1079
      %v1159 = vpop.f32.mrf.mxu0
      %v1160 = vadd.f32 0.0, %v1159
      %v1161 = vpop.f32.mrf.mxu0
      %v1162 = vadd.f32 0.0, %v1161
      %1163 = vmatmul.bf16.gmra.mxu0 %v1082
      %v1164 = vpop.f32.mrf.mxu0
      %v1165 = vadd.f32 0.0, %v1164
      %v1166 = vpop.f32.mrf.mxu0
      %v1167 = vadd.f32 0.0, %v1166
      %1168 = vmatmul.bf16.gmra.mxu0 %v1085
      %v1169 = vpop.f32.mrf.mxu0
      %v1170 = vadd.f32 0.0, %v1169
      %v1171 = vpop.f32.mrf.mxu0
      %v1172 = vadd.f32 0.0, %v1171
      %1173 = vmatmul.bf16.gmra.mxu0 %v1088
      %v1174 = vpop.f32.mrf.mxu0
      %v1175 = vadd.f32 0.0, %v1174
      %v1176 = vpop.f32.mrf.mxu0
      %v1177 = vadd.f32 0.0, %v1176
      %1178 = vdwg.mxu0
      %vm1179 = vcmask 64512
      %1180 = vst.msk [vmem:[%s199] sm:$0xff] %vm1179, %v1100
      %1181 = vst.msk [vmem:[%s199 + $0x8] sm:$0xff] %vm1179, %v1102
      %1182 = vst.msk [vmem:[%s199 + $0x10] sm:$0xff] %vm1179, %v1105
      %1183 = vst.msk [vmem:[%s199 + $0x18] sm:$0xff] %vm1179, %v1107
      %1184 = vst.msk [vmem:[%s199 + $0x20] sm:$0xff] %vm1179, %v1110
      %1185 = vst.msk [vmem:[%s199 + $0x28] sm:$0xff] %vm1179, %v1112
      %1186 = vst.msk [vmem:[%s199 + $0x30] sm:$0xff] %vm1179, %v1115
      %1187 = vst.msk [vmem:[%s199 + $0x38] sm:$0xff] %vm1179, %v1117
      %1188 = vst.msk [vmem:[%s199 + $0x40] sm:$0xff] %vm1179, %v1120
      %1189 = vst.msk [vmem:[%s199 + $0x48] sm:$0xff] %vm1179, %v1122
      %1190 = vst.msk [vmem:[%s199 + $0x50] sm:$0xff] %vm1179, %v1125
      %1191 = vst.msk [vmem:[%s199 + $0x58] sm:$0xff] %vm1179, %v1127
      %1192 = vst.msk [vmem:[%s199 + $0x60] sm:$0xff] %vm1179, %v1130
      %1193 = vst.msk [vmem:[%s199 + $0x68] sm:$0xff] %vm1179, %v1132
      %1194 = vst.msk [vmem:[%s199 + $0x70] sm:$0xff] %vm1179, %v1135
      %1195 = vst.msk [vmem:[%s199 + $0x78] sm:$0xff] %vm1179, %v1137
      %1196 = vst.msk [vmem:[%s199 + $0x80] sm:$0xff] %vm1179, %v1140
      %1197 = vst.msk [vmem:[%s199 + $0x88] sm:$0xff] %vm1179, %v1142
      %1198 = vst.msk [vmem:[%s199 + $0x90] sm:$0xff] %vm1179, %v1145
      %1199 = vst.msk [vmem:[%s199 + $0x98] sm:$0xff] %vm1179, %v1147
      %1200 = vst.msk [vmem:[%s199 + $0xa0] sm:$0xff] %vm1179, %v1150
      %1201 = vst.msk [vmem:[%s199 + $0xa8] sm:$0xff] %vm1179, %v1152
      %1202 = vst.msk [vmem:[%s199 + $0xb0] sm:$0xff] %vm1179, %v1155
      %1203 = vst.msk [vmem:[%s199 + $0xb8] sm:$0xff] %vm1179, %v1157
      %1204 = vst.msk [vmem:[%s199 + $0xc0] sm:$0xff] %vm1179, %v1160
      %1205 = vst.msk [vmem:[%s199 + $0xc8] sm:$0xff] %vm1179, %v1162
      %1206 = vst.msk [vmem:[%s199 + $0xd0] sm:$0xff] %vm1179, %v1165
      %1207 = vst.msk [vmem:[%s199 + $0xd8] sm:$0xff] %vm1179, %v1167
      %1208 = vst.msk [vmem:[%s199 + $0xe0] sm:$0xff] %vm1179, %v1170
      %1209 = vst.msk [vmem:[%s199 + $0xe8] sm:$0xff] %vm1179, %v1172
      %1210 = vst.msk [vmem:[%s199 + $0xf0] sm:$0xff] %vm1179, %v1175
      %1211 = vst.msk [vmem:[%s199 + $0xf8] sm:$0xff] %vm1179, %v1177
      %s1212 = smul.u32 32, %s15
      %p1213 = scmp.lt.s32.totalorder %s1212, 63
      %s1214 = scalar_select %p1213, %s1212, 63
      %s1215 = smul.addr %s1214, 8
      %s1216 = scalar_lea.vmem %s4, %s1215
      // Predicated region
      $region37: #{_lambda_.10} parent=35 // pred_check
        %p1217 = pneg %p122
      $region38: #{_lambda_.10} parent=35 // pred_check_branch
        %1219 = sbr.rel (%p1217) target = $region40
      $region39: #{_lambda_.10} parent=35 // pred_region
        %s1220 = smul.u32 32, %s15
      $region40: #{_lambda_.10} parent=35 // pred_fallthru
        _
    $region36: #{_lambda_.10} parent=5 // pred_fallthru
      _
    %p1221 = scmp.le.s32.totalorder 2, %s10
    // Predicated region
    $region41: #{_lambda_.10} parent=5 // pred_check
      %p1222 = pneg %p1221
    $region42: #{_lambda_.10} parent=5 // pred_check_branch
      %1224 = sbr.rel (%p1222) target = $region44
    $region43: #{_lambda_.10} parent=5 // pred_region
      %s1225 = ssub.s32 %s10, 2
      // Predicated region
      $region45: #{_lambda_.10} parent=43 // pred_check
        %p1226 = pneg %p128
      $region46: #{_lambda_.10} parent=43 // pred_check_branch
        %1228 = sbr.rel (%p1226) target = $region48
      $region47: #{_lambda_.10} parent=43 // pred_region
        %s1229 = smul.u32 32, %s16
        %p1230 = scmp.lt.s32.totalorder %s1229, 63
        %s1231 = scalar_select %p1230, %s1229, 63
        %s1232 = smul.addr %s1231, 8
        %s1233 = scalar_lea.vmem %s4, %s1232
      $region48: #{_lambda_.10} parent=43 // pred_fallthru
        _
    $region44: #{_lambda_.10} parent=5 // pred_fallthru
      _
  $region6: #{_lambda_.10} parent=0 // loop_footer
    %s14 = sadd.s32 1, %s10
  $region7: #{_lambda_.10} parent=0 // loop_footer_branch
    %9 = sbr.rel target = $region3
  $region8: #{_lambda_.10} parent=0 // loop_exit
    _

// kernel: _lambda_.9
$region0: #{_lambda_.9}
  #allocation0 [shape = 'u32[]', space=smem, size = 0x4, offset = 0x4, fixed_abs, tag = 'smem constant byte address 0x4 - core index']
  #allocation1 [shape = 'u32[72,128]{1,0:T(1,128)}', space=vmem, size = 0x9000, scoped, tag = 'internal scratch']
  #allocation2 [shape = 'f32[16,128]{1,0:T(8,128)}', space=vmem, size = 0x2000, scoped, tag = 'scratch operand']
  %s0 = inlined_call_operand.vmem [shape: f32[4,64,128], index: 0, kind: input, shape index: {}]
  %s1 = inlined_call_operand.vmem [shape: f32[4,64,128], index: 1, kind: input, shape index: {}]
  %s2 = inlined_call_operand.vmem [shape: bf16[4,64,16,128], index: 2, kind: input, shape index: {}]
  %s3 = inlined_call_operand.vmem [shape: bf16[4,64,16,128], index: 3, kind: input, shape index: {}]
  %s4 = inlined_call_operand.vmem [shape: f32[16,128], index: 4, kind: input, shape index: {}]
  %s5 = inlined_call_operand.vmem [shape: f32[1,128], index: 5, kind: input, shape index: {}]
  %s6 = inlined_call_operand.vmem [shape: f32[1,128], index: 6, kind: input, shape index: {}]
  %s7 = inlined_call_operand.vmem [shape: f32[4,64,128], index: 7, kind: output, shape index: {}]
  %s8 = sld [smem:[#allocation0]]
  $region65: #{_lambda_.9} parent=0
    _
  %s10 = ssub.s32 1, %s8
  %s11 = scalar_select 0, %s10, %s8
  loop: start=0, step=1, limit=6
  $region2: #{_lambda_.9} parent=0 // loop_pre_header
    _
  $region3: #{_lambda_.9} parent=0 // loop_header
    %s13 = sphi 0, %s17
    %p14 = scmp.ge.s32.totalorder %s13, 6
    %s20 = sphi 0, %s32
    %s21 = sphi 0, %s28
    %s22 = sphi 0, %s20
    %s23 = sphi 0, %s21
    %s24 = sphi 0, %s22
    %s25 = sphi 0, %s23
    %s37 = sphi 0, %s39
    %s40 = sphi 0, %s37
    %s41 = sphi 0, %s40
    %s57 = sphi 0, %s41
    %s65 = sphi 0, %s67
    %s68 = sphi 0, %s65
    %s69 = sphi 0, %s68
    %s85 = sphi 0, %s69
    %s93 = sphi 0, %s95
    %s96 = sphi 0, %s93
    %s97 = sphi 0, %s96
    %s113 = sphi 0, %s97
    %s121 = sphi 0, %s123
    %s124 = sphi 0, %s121
    %s125 = sphi 0, %s124
    %s141 = sphi 0, %s125
    %s145 = sphi 0, %s145
    %s147 = sphi 0, %s145
    %s148 = sphi 0, %s147
    %s162 = sphi 0, %s148
    %s166 = sphi 0, %s166
    %s168 = sphi 0, %s166
    %s169 = sphi 0, %s168
    %s183 = sphi 0, %s169
    %s187 = sphi 0, %s187
    %s189 = sphi 0, %s187
    %s190 = sphi 0, %s189
    %s204 = sphi 0, %s190
    %s212 = sphi 0, %s214
    %s215 = sphi 0, %s212
    %s216 = sphi 0, %s215
    %s232 = sphi 0, %s216
  $region4: #{_lambda_.9} parent=0 // loop_header_branch
    %16 = sbr.rel (%p14) target = $region8
  $region5: #{_lambda_.9} parent=0 // loop_body
    %s18 = ssub.s32 %s13, 1
    %s19 = ssub.s32 %s13, 2
    %s26 = sadd.s32 1, %s21
    %p27 = scmp.ge.s32.totalorder %s26, 1
    %s28 = scalar_select %p27, 0, %s26
    %s29 = sadd.s32 1, %s20
    %s30 = scalar_select %p27, %s29, %s20
    %p31 = scmp.ge.s32.totalorder %s30, 4
    %s32 = scalar_select %p31, 0, %s30
    %s33 = ssub.s32 %s20, %s32
    %s34 = ssub.s32 %s21, %s28
    %s35 = sor.u32 %s33, %s34
    %p36 = scmp.eq.s32.totalorder %s35, 0
    %s38 = sadd.s32 %s37, 1
    %s39 = scalar_select %p36, %s37, %s38
    %p42 = pneg %p36
    %p43 = scmp.eq.s32.totalorder %s13, 3
    %p44 = por %p42, %p43
    %p45 = scmp.ne.s32.totalorder %s37, %s40
    %p46 = scmp.eq.s32.totalorder %s13, 0
    %p47 = por %p45, %p46
    %p48 = scmp.ne.s32.totalorder %s37, %s40
    %p49 = scmp.eq.s32.totalorder %s18, 3
    %p50 = por %p48, %p49
    %p51 = scmp.ne.s32.totalorder %s40, %s41
    %p52 = scmp.eq.s32.totalorder %s18, 0
    %p53 = por %p51, %p52
    %p54 = scmp.ne.s32.totalorder %s40, %s41
    %p55 = scmp.eq.s32.totalorder %s19, 3
    %p56 = por %p54, %p55
    %p58 = scmp.ne.s32.totalorder %s41, %s57
    %p59 = scmp.eq.s32.totalorder %s19, 0
    %p60 = por %p58, %p59
    %s61 = ssub.s32 %s20, %s32
    %s62 = ssub.s32 %s21, %s28
    %s63 = sor.u32 %s61, %s62
    %p64 = scmp.eq.s32.totalorder %s63, 0
    %s66 = sadd.s32 %s65, 1
    %s67 = scalar_select %p64, %s65, %s66
    %p70 = pneg %p64
    %p71 = scmp.eq.s32.totalorder %s13, 3
    %p72 = por %p70, %p71
    %p73 = scmp.ne.s32.totalorder %s65, %s68
    %p74 = scmp.eq.s32.totalorder %s13, 0
    %p75 = por %p73, %p74
    %p76 = scmp.ne.s32.totalorder %s65, %s68
    %p77 = scmp.eq.s32.totalorder %s18, 3
    %p78 = por %p76, %p77
    %p79 = scmp.ne.s32.totalorder %s68, %s69
    %p80 = scmp.eq.s32.totalorder %s18, 0
    %p81 = por %p79, %p80
    %p82 = scmp.ne.s32.totalorder %s68, %s69
    %p83 = scmp.eq.s32.totalorder %s19, 3
    %p84 = por %p82, %p83
    %p86 = scmp.ne.s32.totalorder %s69, %s85
    %p87 = scmp.eq.s32.totalorder %s19, 0
    %p88 = por %p86, %p87
    %s89 = ssub.s32 %s20, %s32
    %s90 = ssub.s32 %s21, %s28
    %s91 = sor.u32 %s89, %s90
    %p92 = scmp.eq.s32.totalorder %s91, 0
    %s94 = sadd.s32 %s93, 1
    %s95 = scalar_select %p92, %s93, %s94
    %p98 = pneg %p92
    %p99 = scmp.eq.s32.totalorder %s13, 3
    %p100 = por %p98, %p99
    %p101 = scmp.ne.s32.totalorder %s93, %s96
    %p102 = scmp.eq.s32.totalorder %s13, 0
    %p103 = por %p101, %p102
    %p104 = scmp.ne.s32.totalorder %s93, %s96
    %p105 = scmp.eq.s32.totalorder %s18, 3
    %p106 = por %p104, %p105
    %p107 = scmp.ne.s32.totalorder %s96, %s97
    %p108 = scmp.eq.s32.totalorder %s18, 0
    %p109 = por %p107, %p108
    %p110 = scmp.ne.s32.totalorder %s96, %s97
    %p111 = scmp.eq.s32.totalorder %s19, 3
    %p112 = por %p110, %p111
    %p114 = scmp.ne.s32.totalorder %s97, %s113
    %p115 = scmp.eq.s32.totalorder %s19, 0
    %p116 = por %p114, %p115
    %s117 = ssub.s32 %s20, %s32
    %s118 = ssub.s32 %s21, %s28
    %s119 = sor.u32 %s117, %s118
    %p120 = scmp.eq.s32.totalorder %s119, 0
    %s122 = sadd.s32 %s121, 1
    %s123 = scalar_select %p120, %s121, %s122
    %p126 = pneg %p120
    %p127 = scmp.eq.s32.totalorder %s13, 3
    %p128 = por %p126, %p127
    %p129 = scmp.ne.s32.totalorder %s121, %s124
    %p130 = scmp.eq.s32.totalorder %s13, 0
    %p131 = por %p129, %p130
    %p132 = scmp.ne.s32.totalorder %s121, %s124
    %p133 = scmp.eq.s32.totalorder %s18, 3
    %p134 = por %p132, %p133
    %p135 = scmp.ne.s32.totalorder %s124, %s125
    %p136 = scmp.eq.s32.totalorder %s18, 0
    %p137 = por %p135, %p136
    %p138 = scmp.ne.s32.totalorder %s124, %s125
    %p139 = scmp.eq.s32.totalorder %s19, 3
    %p140 = por %p138, %p139
    %p142 = scmp.ne.s32.totalorder %s125, %s141
    %p143 = scmp.eq.s32.totalorder %s19, 0
    %p144 = por %p142, %p143
    %s146 = sadd.s32 %s145, 1
    %p149 = scmp.eq.s32.totalorder %s13, 3
    %p150 = scmp.ne.s32.totalorder %s145, %s147
    %p151 = scmp.eq.s32.totalorder %s13, 0
    %p152 = por %p150, %p151
    %p153 = scmp.ne.s32.totalorder %s145, %s147
    %p154 = scmp.eq.s32.totalorder %s18, 3
    %p155 = por %p153, %p154
    %p156 = scmp.ne.s32.totalorder %s147, %s148
    %p157 = scmp.eq.s32.totalorder %s18, 0
    %p158 = por %p156, %p157
    %p159 = scmp.ne.s32.totalorder %s147, %s148
    %p160 = scmp.eq.s32.totalorder %s19, 3
    %p161 = por %p159, %p160
    %p163 = scmp.ne.s32.totalorder %s148, %s162
    %p164 = scmp.eq.s32.totalorder %s19, 0
    %p165 = por %p163, %p164
    %s167 = sadd.s32 %s166, 1
    %p170 = scmp.eq.s32.totalorder %s13, 3
    %p171 = scmp.ne.s32.totalorder %s166, %s168
    %p172 = scmp.eq.s32.totalorder %s13, 0
    %p173 = por %p171, %p172
    %p174 = scmp.ne.s32.totalorder %s166, %s168
    %p175 = scmp.eq.s32.totalorder %s18, 3
    %p176 = por %p174, %p175
    %p177 = scmp.ne.s32.totalorder %s168, %s169
    %p178 = scmp.eq.s32.totalorder %s18, 0
    %p179 = por %p177, %p178
    %p180 = scmp.ne.s32.totalorder %s168, %s169
    %p181 = scmp.eq.s32.totalorder %s19, 3
    %p182 = por %p180, %p181
    %p184 = scmp.ne.s32.totalorder %s169, %s183
    %p185 = scmp.eq.s32.totalorder %s19, 0
    %p186 = por %p184, %p185
    %s188 = sadd.s32 %s187, 1
    %p191 = scmp.eq.s32.totalorder %s13, 3
    %p192 = scmp.ne.s32.totalorder %s187, %s189
    %p193 = scmp.eq.s32.totalorder %s13, 0
    %p194 = por %p192, %p193
    %p195 = scmp.ne.s32.totalorder %s187, %s189
    %p196 = scmp.eq.s32.totalorder %s18, 3
    %p197 = por %p195, %p196
    %p198 = scmp.ne.s32.totalorder %s189, %s190
    %p199 = scmp.eq.s32.totalorder %s18, 0
    %p200 = por %p198, %p199
    %p201 = scmp.ne.s32.totalorder %s189, %s190
    %p202 = scmp.eq.s32.totalorder %s19, 3
    %p203 = por %p201, %p202
    %p205 = scmp.ne.s32.totalorder %s190, %s204
    %p206 = scmp.eq.s32.totalorder %s19, 0
    %p207 = por %p205, %p206
    %s208 = ssub.s32 %s20, %s32
    %s209 = ssub.s32 %s21, %s28
    %s210 = sor.u32 %s208, %s209
    %p211 = scmp.eq.s32.totalorder %s210, 0
    %s213 = sadd.s32 %s212, 1
    %s214 = scalar_select %p211, %s212, %s213
    %p217 = pneg %p211
    %p218 = scmp.eq.s32.totalorder %s13, 3
    %p219 = por %p217, %p218
    %p220 = scmp.ne.s32.totalorder %s212, %s215
    %p221 = scmp.eq.s32.totalorder %s13, 0
    %p222 = por %p220, %p221
    %p223 = scmp.ne.s32.totalorder %s212, %s215
    %p224 = scmp.eq.s32.totalorder %s18, 3
    %p225 = por %p223, %p224
    %p226 = scmp.ne.s32.totalorder %s215, %s216
    %p227 = scmp.eq.s32.totalorder %s18, 0
    %p228 = por %p226, %p227
    %p229 = scmp.ne.s32.totalorder %s215, %s216
    %p230 = scmp.eq.s32.totalorder %s19, 3
    %p231 = por %p229, %p230
    %p233 = scmp.ne.s32.totalorder %s216, %s232
    %p234 = scmp.eq.s32.totalorder %s19, 0
    %p235 = por %p233, %p234
    %p236 = scmp.le.s32.totalorder 1, %s13
    %p237 = scmp.lt.s32.totalorder %s13, 5
    %p238 = pnand %p236, %p237
    %p239 = pneg %p238
    // Predicated region
    $region9: #{_lambda_.9} parent=5 // pred_check
      _
    $region10: #{_lambda_.9} parent=5 // pred_check_branch
      %241 = sbr.rel (%p238) target = $region12
    $region11: #{_lambda_.9} parent=5 // pred_region
      %s242 = ssub.s32 %s13, 1
      // Predicated region
      $region13: #{_lambda_.9} parent=11 // pred_check
        %p243 = pneg %p158
      $region14: #{_lambda_.9} parent=11 // pred_check_branch
        %245 = sbr.rel (%p243) target = $region16
      $region15: #{_lambda_.9} parent=11 // pred_region
        _
      $region16: #{_lambda_.9} parent=11 // pred_fallthru
        _
      // Predicated region
      $region17: #{_lambda_.9} parent=11 // pred_check
        %p246 = pneg %p179
      $region18: #{_lambda_.9} parent=11 // pred_check_branch
        %248 = sbr.rel (%p246) target = $region20
      $region19: #{_lambda_.9} parent=11 // pred_region
        _
      $region20: #{_lambda_.9} parent=11 // pred_fallthru
        _
      // Predicated region
      $region21: #{_lambda_.9} parent=11 // pred_check
        %p249 = pneg %p200
      $region22: #{_lambda_.9} parent=11 // pred_check_branch
        %251 = sbr.rel (%p249) target = $region24
      $region23: #{_lambda_.9} parent=11 // pred_region
        _
      $region24: #{_lambda_.9} parent=11 // pred_fallthru
        _
    $region12: #{_lambda_.9} parent=5 // pred_fallthru
      _
    %p252 = scmp.lt.s32.totalorder %s13, 4
    // Predicated region
    $region25: #{_lambda_.9} parent=5 // pred_check
      %p253 = pneg %p252
    $region26: #{_lambda_.9} parent=5 // pred_check_branch
      %255 = sbr.rel (%p253) target = $region28
    $region27: #{_lambda_.9} parent=5 // pred_region
      // Predicated region
      $region29: #{_lambda_.9} parent=27 // pred_check
        %p256 = pneg %p47
      $region30: #{_lambda_.9} parent=27 // pred_check_branch
        %258 = sbr.rel (%p256) target = $region32
      $region31: #{_lambda_.9} parent=27 // pred_region
        %s259 = smul.u32 8, %s21
        %p260 = scmp.lt.s32.totalorder %s20, 3
        %s261 = scalar_select %p260, %s20, 3
        %p262 = scmp.lt.s32.totalorder %s259, 7
        %s263 = scalar_select %p262, %s259, 7
        %s264 = smul.addr %s261, 8
        %s265 = sadd.s32 %s263, %s264
        %s266 = smul.addr %s265, 8
        %s267 = scalar_lea.vmem %s0, %s266
        %s268 = smul.u32 8, %s21
      $region32: #{_lambda_.9} parent=27 // pred_fallthru
        _
      // Predicated region
      $region33: #{_lambda_.9} parent=27 // pred_check
        %p269 = pneg %p75
      $region34: #{_lambda_.9} parent=27 // pred_check_branch
        %271 = sbr.rel (%p269) target = $region36
      $region35: #{_lambda_.9} parent=27 // pred_region
        %s272 = smul.u32 8, %s21
        %p273 = scmp.lt.s32.totalorder %s20, 3
        %s274 = scalar_select %p273, %s20, 3
        %p275 = scmp.lt.s32.totalorder %s272, 7
        %s276 = scalar_select %p275, %s272, 7
        %s277 = smul.addr %s274, 8
        %s278 = sadd.s32 %s276, %s277
        %s279 = smul.addr %s278, 8
        %s280 = scalar_lea.vmem %s1, %s279
        %s281 = smul.u32 8, %s21
      $region36: #{_lambda_.9} parent=27 // pred_fallthru
        _
      // Predicated region
      $region37: #{_lambda_.9} parent=27 // pred_check
        %p282 = pneg %p103
      $region38: #{_lambda_.9} parent=27 // pred_check_branch
        %284 = sbr.rel (%p282) target = $region40
      $region39: #{_lambda_.9} parent=27 // pred_region
        %s285 = smul.u32 64, %s21
        %p286 = scmp.lt.s32.totalorder %s20, 3
        %s287 = scalar_select %p286, %s20, 3
        %p288 = scmp.lt.s32.totalorder %s285, 63
        %s289 = scalar_select %p288, %s285, 63
        %s290 = smul.addr %s289, 2
        %s291 = smul.addr %s287, 128
        %s292 = sadd.s32 %s290, %s291
        %s293 = smul.addr %s292, 4
        %s294 = scalar_lea.vmem %s2, %s293
        %s295 = smul.u32 64, %s21
      $region40: #{_lambda_.9} parent=27 // pred_fallthru
        _
      // Predicated region
      $region41: #{_lambda_.9} parent=27 // pred_check
        %p296 = pneg %p131
      $region42: #{_lambda_.9} parent=27 // pred_check_branch
        %298 = sbr.rel (%p296) target = $region44
      $region43: #{_lambda_.9} parent=27 // pred_region
        %s299 = smul.u32 64, %s21
        %p300 = scmp.lt.s32.totalorder %s20, 3
        %s301 = scalar_select %p300, %s20, 3
        %p302 = scmp.lt.s32.totalorder %s299, 63
        %s303 = scalar_select %p302, %s299, 63
        %s304 = smul.addr %s303, 2
        %s305 = smul.addr %s301, 128
        %s306 = sadd.s32 %s304, %s305
        %s307 = smul.addr %s306, 4
        %s308 = scalar_lea.vmem %s3, %s307
        %s309 = smul.u32 64, %s21
      $region44: #{_lambda_.9} parent=27 // pred_fallthru
        _
    $region28: #{_lambda_.9} parent=5 // pred_fallthru
      _
    %p310 = scmp.le.s32.totalorder 1, %s13
    %p311 = scmp.lt.s32.totalorder %s13, 5
    %p312 = pnand %p310, %p311
    %p313 = pneg %p312
    // Predicated region
    $region45: #{_lambda_.9} parent=5 // pred_check
      _
    $region46: #{_lambda_.9} parent=5 // pred_check_branch
      %315 = sbr.rel (%p312) target = $region48
    $region47: #{_lambda_.9} parent=5 // pred_region
      %s316 = ssub.s32 %s13, 1
      %s317 = smul.u32 8, %s23
      %p318 = scmp.lt.s32.totalorder %s22, 3
      %s319 = scalar_select %p318, %s22, 3
      %p320 = scmp.lt.s32.totalorder %s317, 7
      %s321 = scalar_select %p320, %s317, 7
      %s322 = smul.addr %s319, 8
      %s323 = sadd.s32 %s321, %s322
      %s324 = smul.addr %s323, 8
      %s325 = scalar_lea.vmem %s0, %s324
      %p326 = pneg %p53
      %p327 = pneg %p50
      %s328 = smul.u32 8, %s23
      %p329 = scmp.lt.s32.totalorder %s22, 3
      %s330 = scalar_select %p329, %s22, 3
      %p331 = scmp.lt.s32.totalorder %s328, 7
      %s332 = scalar_select %p331, %s328, 7
      %s333 = smul.addr %s330, 8
      %s334 = sadd.s32 %s332, %s333
      %s335 = smul.addr %s334, 8
      %s336 = scalar_lea.vmem %s1, %s335
      %p337 = pneg %p81
      %p338 = pneg %p78
      %s339 = smul.u32 64, %s23
      %p340 = scmp.lt.s32.totalorder %s22, 3
      %s341 = scalar_select %p340, %s22, 3
      %p342 = scmp.lt.s32.totalorder %s339, 63
      %s343 = scalar_select %p342, %s339, 63
      %s344 = smul.addr %s343, 2
      %s345 = smul.addr %s341, 128
      %s346 = sadd.s32 %s344, %s345
      %s347 = smul.addr %s346, 4
      %s348 = scalar_lea.vmem %s2, %s347
      %p349 = pneg %p109
      %p350 = pneg %p106
      %s351 = smul.u32 64, %s23
      %p352 = scmp.lt.s32.totalorder %s22, 3
      %s353 = scalar_select %p352, %s22, 3
      %p354 = scmp.lt.s32.totalorder %s351, 63
      %s355 = scalar_select %p354, %s351, 63
      %s356 = smul.addr %s355, 2
      %s357 = smul.addr %s353, 128
      %s358 = sadd.s32 %s356, %s357
      %s359 = smul.addr %s358, 4
      %s360 = scalar_lea.vmem %s3, %s359
      %p361 = pneg %p137
      %p362 = pneg %p134
      %p363 = pneg %p158
      %p364 = pneg %p155
      %p365 = pneg %p179
      %p366 = pneg %p176
      %p367 = pneg %p200
      %p368 = pneg %p197
      %p369 = pneg %p228
      %p370 = pneg %p225
      %s371 = smul.u32 8, %s23
      %p372 = scmp.lt.s32.totalorder %s22, 3
      %s373 = scalar_select %p372, %s22, 3
      %p374 = scmp.lt.s32.totalorder %s371, 7
      %s375 = scalar_select %p374, %s371, 7
      %s376 = smul.addr %s373, 8
      %s377 = sadd.s32 %s375, %s376
      %s378 = smul.addr %s377, 8
      %s379 = scalar_lea.vmem %s7, %s378
      %s380 = smul.u32 8, %s23
      %p381 = scmp.lt.s32.totalorder %s22, 3
      %s382 = scalar_select %p381, %s22, 3
      %p383 = scmp.lt.s32.totalorder %s380, 7
      %s384 = scalar_select %p383, %s380, 7
      %s385 = smul.addr %s382, 8
      %s386 = sadd.s32 %s384, %s385
      %s387 = smul.addr %s386, 8
      %s388 = scalar_lea.vmem %s0, %s387
      %s389 = smul.u32 8, %s23
      %s390 = smul.u32 8, %s23
      %p391 = scmp.lt.s32.totalorder %s22, 3
      %s392 = scalar_select %p391, %s22, 3
      %p393 = scmp.lt.s32.totalorder %s390, 7
      %s394 = scalar_select %p393, %s390, 7
      %s395 = smul.addr %s392, 8
      %s396 = sadd.s32 %s394, %s395
      %s397 = smul.addr %s396, 8
      %s398 = scalar_lea.vmem %s1, %s397
      %s399 = smul.u32 8, %s23
      %s400 = smul.u32 64, %s23
      %p401 = scmp.lt.s32.totalorder %s22, 3
      %s402 = scalar_select %p401, %s22, 3
      %p403 = scmp.lt.s32.totalorder %s400, 63
      %s404 = scalar_select %p403, %s400, 63
      %s405 = smul.addr %s404, 2
      %s406 = smul.addr %s402, 128
      %s407 = sadd.s32 %s405, %s406
      %s408 = smul.addr %s407, 4
      %s409 = scalar_lea.vmem %s2, %s408
      %s410 = smul.u32 64, %s23
      %s411 = smul.u32 64, %s23
      %p412 = scmp.lt.s32.totalorder %s22, 3
      %s413 = scalar_select %p412, %s22, 3
      %p414 = scmp.lt.s32.totalorder %s411, 63
      %s415 = scalar_select %p414, %s411, 63
      %s416 = smul.addr %s415, 2
      %s417 = smul.addr %s413, 128
      %s418 = sadd.s32 %s416, %s417
      %s419 = smul.addr %s418, 4
      %s420 = scalar_lea.vmem %s3, %s419
      %s421 = smul.u32 64, %s23
      %s422 = smul.u32 8, %s23
      %p423 = scmp.lt.s32.totalorder %s22, 3
      %s424 = scalar_select %p423, %s22, 3
      %p425 = scmp.lt.s32.totalorder %s422, 7
      %s426 = scalar_select %p425, %s422, 7
      %s427 = smul.addr %s424, 8
      %s428 = sadd.s32 %s426, %s427
      %s429 = smul.addr %s428, 8
      %s430 = scalar_lea.vmem %s7, %s429
      %s431 = smul.u32 8, %s23
      %p432 = scmp.eq.s32.totalorder %s23, 0
      // Predicated region
      $region49: #{_lambda_.9} parent=47 // pred_check
        %p433 = pneg %p432
      $region50: #{_lambda_.9} parent=47 // pred_check_branch
        %435 = sbr.rel (%p433) target = $region52
      $region51: #{_lambda_.9} parent=47 // pred_region
        %436 = vst [vmem:[#allocation2] sm:$0xff] 0.0
        %437 = vst [vmem:[#allocation2 + $0x8] sm:$0xff] 0.0
      $region52: #{_lambda_.9} parent=47 // pred_fallthru
        _
      %v438 = vld [vmem:[%s4] sm:$0xff]
      %v439 = vld [vmem:[%s4 + $0x8] sm:$0xff]
      %v440 = vld [vmem:[%s5] sm:$0x1]
      %v441 = vld [vmem:[%s6] sm:$0x1]
      %v442 = vld [vmem:[#allocation2] sm:$0xff]
      %v443 = vld [vmem:[#allocation2 + $0x8] sm:$0xff]
      %v444 = vld [vmem:[%s388] sm:$0xff]
      %v445 = vld [vmem:[%s398] sm:$0xff]
      %v446 = vld [vmem:[%s409] sm:$0xf]
      %v447 = vld [vmem:[%s409 + $0x4] sm:$0xf]
      %v448 = vld [vmem:[%s409 + $0x8] sm:$0xf]
      %v449 = vld [vmem:[%s409 + $0xc] sm:$0xf]
      %v450 = vld [vmem:[%s409 + $0x10] sm:$0xf]
      %v451 = vld [vmem:[%s409 + $0x14] sm:$0xf]
      %v452 = vld [vmem:[%s409 + $0x18] sm:$0xf]
      %v453 = vld [vmem:[%s409 + $0x1c] sm:$0xf]
      %v454 = vld [vmem:[%s409 + $0x20] sm:$0xf]
      %v455 = vld [vmem:[%s409 + $0x24] sm:$0xf]
      %v456 = vld [vmem:[%s409 + $0x28] sm:$0xf]
      %v457 = vld [vmem:[%s409 + $0x2c] sm:$0xf]
      %v458 = vld [vmem:[%s409 + $0x30] sm:$0xf]
      %v459 = vld [vmem:[%s409 + $0x34] sm:$0xf]
      %v460 = vld [vmem:[%s409 + $0x38] sm:$0xf]
      %v461 = vld [vmem:[%s409 + $0x3c] sm:$0xf]
      %v462 = vunpack.c.l.bf16 %v446
      %v463 = vunpack.c.l.bf16 %v447
      %v464 = vunpack.c.l.bf16 %v448
      %v465 = vunpack.c.l.bf16 %v449
      %v466 = vunpack.c.l.bf16 %v450
      %v467 = vunpack.c.l.bf16 %v451
      %v468 = vunpack.c.l.bf16 %v452
      %v469 = vunpack.c.l.bf16 %v453
      %v470 = vunpack.c.l.bf16 %v454
      %v471 = vunpack.c.l.bf16 %v455
      %v472 = vunpack.c.l.bf16 %v456
      %v473 = vunpack.c.l.bf16 %v457
      %v474 = vunpack.c.l.bf16 %v458
      %v475 = vunpack.c.l.bf16 %v459
      %v476 = vunpack.c.l.bf16 %v460
      %v477 = vunpack.c.l.bf16 %v461
      %v478 = vld [vmem:[%s420] sm:$0xf]
      %v479 = vld [vmem:[%s420 + $0x4] sm:$0xf]
      %v480 = vld [vmem:[%s420 + $0x8] sm:$0xf]
      %v481 = vld [vmem:[%s420 + $0xc] sm:$0xf]
      %v482 = vld [vmem:[%s420 + $0x10] sm:$0xf]
      %v483 = vld [vmem:[%s420 + $0x14] sm:$0xf]
      %v484 = vld [vmem:[%s420 + $0x18] sm:$0xf]
      %v485 = vld [vmem:[%s420 + $0x1c] sm:$0xf]
      %v486 = vld [vmem:[%s420 + $0x20] sm:$0xf]
      %v487 = vld [vmem:[%s420 + $0x24] sm:$0xf]
      %v488 = vld [vmem:[%s420 + $0x28] sm:$0xf]
      %v489 = vld [vmem:[%s420 + $0x2c] sm:$0xf]
      %v490 = vld [vmem:[%s420 + $0x30] sm:$0xf]
      %v491 = vld [vmem:[%s420 + $0x34] sm:$0xf]
      %v492 = vld [vmem:[%s420 + $0x38] sm:$0xf]
      %v493 = vld [vmem:[%s420 + $0x3c] sm:$0xf]
      %v494 = vunpack.c.l.bf16 %v478
      %v495 = vunpack.c.l.bf16 %v479
      %v496 = vunpack.c.l.bf16 %v480
      %v497 = vunpack.c.l.bf16 %v481
      %v498 = vunpack.c.l.bf16 %v482
      %v499 = vunpack.c.l.bf16 %v483
      %v500 = vunpack.c.l.bf16 %v484
      %v501 = vunpack.c.l.bf16 %v485
      %v502 = vunpack.c.l.bf16 %v486
      %v503 = vunpack.c.l.bf16 %v487
      %v504 = vunpack.c.l.bf16 %v488
      %v505 = vunpack.c.l.bf16 %v489
      %v506 = vunpack.c.l.bf16 %v490
      %v507 = vunpack.c.l.bf16 %v491
      %v508 = vunpack.c.l.bf16 %v492
      %v509 = vunpack.c.l.bf16 %v493
      %v511 = vperm.slane %v441, 0
      %v513 = vadd.f32 %v445, %v511
      %vm514 = vcmp.gt.f32.partialorder %v513, 20.0
      %v515 = vmin.f32 %v513, 20.0
      %v516 = vmul.f32 %v515, 1.442695
      %v517 = vpow.pop %v516
      %v518 = vadd.f32 %v517, 1.0
      %v519 = vlog2.pop %v518
      %v520 = vmul.f32 %v519, 0.6931472
      %v521 = vmul.f32 -0.5, %v517
      %v522 = vadd.f32 %v521, 1.0
      %v523 = vmul.f32 %v522, %v517
      %v524 = vand.u32 2147483647, %v517
      %vm525 = vcmp.lt.f32.partialorder %v524, 0.0004427343
      %v526 = vsel %vm525, %v523, %v520
      %v527 = vsel %vm514, %v513, %v526
      %v529 = vrot.slane %v527, 1
      %v530 = vrot.slane %v527, 2
      %v531 = vrot.slane %v527, 3
      %v532 = vrot.slane %v527, 4
      %v533 = vrot.slane %v527, 5
      %v534 = vrot.slane %v527, 6
      %v535 = vrot.slane %v527, 7
      %v536 = vperm.slane %v527, 0
      %v537 = vperm.slane %v529, 0
      %v538 = vperm.slane %v530, 0
      %v539 = vperm.slane %v531, 0
      %v540 = vperm.slane %v532, 0
      %v541 = vperm.slane %v533, 0
      %v542 = vperm.slane %v534, 0
      %v543 = vperm.slane %v535, 0
      %v552 = vmul.f32 %v536, %v438
      %v553 = vmul.f32 %v536, %v439
      %v554 = vmul.f32 %v537, %v438
      %v555 = vmul.f32 %v537, %v439
      %v556 = vmul.f32 %v538, %v438
      %v557 = vmul.f32 %v538, %v439
      %v558 = vmul.f32 %v539, %v438
      %v559 = vmul.f32 %v539, %v439
      %v560 = vmul.f32 %v540, %v438
      %v561 = vmul.f32 %v540, %v439
      %v562 = vmul.f32 %v541, %v438
      %v563 = vmul.f32 %v541, %v439
      %v564 = vmul.f32 %v542, %v438
      %v565 = vmul.f32 %v542, %v439
      %v566 = vmul.f32 %v543, %v438
      %v567 = vmul.f32 %v543, %v439
      %v568 = vmul.f32 %v552, 1.442695
      %v569 = vpow.pop %v568
      %v570 = vmul.f32 %v553, 1.442695
      %v571 = vpow.pop %v570
      %v572 = vmul.f32 %v554, 1.442695
      %v573 = vpow.pop %v572
      %v574 = vmul.f32 %v555, 1.442695
      %v575 = vpow.pop %v574
      %v576 = vmul.f32 %v556, 1.442695
      %v577 = vpow.pop %v576
      %v578 = vmul.f32 %v557, 1.442695
      %v579 = vpow.pop %v578
      %v580 = vmul.f32 %v558, 1.442695
      %v581 = vpow.pop %v580
      %v582 = vmul.f32 %v559, 1.442695
      %v583 = vpow.pop %v582
      %v584 = vmul.f32 %v560, 1.442695
      %v585 = vpow.pop %v584
      %v586 = vmul.f32 %v561, 1.442695
      %v587 = vpow.pop %v586
      %v588 = vmul.f32 %v562, 1.442695
      %v589 = vpow.pop %v588
      %v590 = vmul.f32 %v563, 1.442695
      %v591 = vpow.pop %v590
      %v592 = vmul.f32 %v564, 1.442695
      %v593 = vpow.pop %v592
      %v594 = vmul.f32 %v565, 1.442695
      %v595 = vpow.pop %v594
      %v596 = vmul.f32 %v566, 1.442695
      %v597 = vpow.pop %v596
      %v598 = vmul.f32 %v567, 1.442695
      %v599 = vpow.pop %v598
      %v600 = vmul.f32 %v527, %v444
      %v602 = vrot.slane %v600, 1
      %v603 = vrot.slane %v600, 2
      %v604 = vrot.slane %v600, 3
      %v605 = vrot.slane %v600, 4
      %v606 = vrot.slane %v600, 5
      %v607 = vrot.slane %v600, 6
      %v608 = vrot.slane %v600, 7
      %v609 = vperm.slane %v600, 0
      %v610 = vperm.slane %v602, 0
      %v611 = vperm.slane %v603, 0
      %v612 = vperm.slane %v604, 0
      %v613 = vperm.slane %v605, 0
      %v614 = vperm.slane %v606, 0
      %v615 = vperm.slane %v607, 0
      %v616 = vperm.slane %v608, 0
      %v625 = vmul.f32 %v609, %v462
      %v626 = vmul.f32 %v609, %v463
      %v627 = vmul.f32 %v610, %v464
      %v628 = vmul.f32 %v610, %v465
      %v629 = vmul.f32 %v611, %v466
      %v630 = vmul.f32 %v611, %v467
      %v631 = vmul.f32 %v612, %v468
      %v632 = vmul.f32 %v612, %v469
      %v633 = vmul.f32 %v613, %v470
      %v634 = vmul.f32 %v613, %v471
      %v635 = vmul.f32 %v614, %v472
      %v636 = vmul.f32 %v614, %v473
      %v637 = vmul.f32 %v615, %v474
      %v638 = vmul.f32 %v615, %v475
      %v639 = vmul.f32 %v616, %v476
      %v640 = vmul.f32 %v616, %v477
      %v642 = vperm.slane %v440, 0
      %v644 = vmul.f32 %v642, %v444
      %v645 = vmul.f32 %v569, %v442
      %v646 = vmul.f32 %v571, %v443
      %v647 = vadd.f32 %v645, %v625
      %v648 = vadd.f32 %v646, %v626
      %v649 = vmul.f32 %v647, %v494
      %v650 = vmul.f32 %v648, %v495
      %v651 = vadd.f32 %v649, %v650
      %v652 = vrot.slane %v651, 4
      %v653 = vadd.f32 %v651, %v652
      %v654 = vrot.slane %v653, 2
      %v655 = vadd.f32 %v653, %v654
      %v656 = vrot.slane %v655, 1
      %v657 = vadd.f32 %v655, %v656
      %v658 = vmul.f32 %v573, %v647
      %v659 = vmul.f32 %v575, %v648
      %v660 = vadd.f32 %v658, %v627
      %v661 = vadd.f32 %v659, %v628
      %v662 = vmul.f32 %v660, %v496
      %v663 = vmul.f32 %v661, %v497
      %v664 = vadd.f32 %v662, %v663
      %v665 = vrot.slane %v664, 4
      %v666 = vadd.f32 %v664, %v665
      %v667 = vrot.slane %v666, 2
      %v668 = vadd.f32 %v666, %v667
      %v669 = vrot.slane %v668, 1
      %v670 = vadd.f32 %v668, %v669
      %v671 = vmul.f32 %v577, %v660
      %v672 = vmul.f32 %v579, %v661
      %v673 = vadd.f32 %v671, %v629
      %v674 = vadd.f32 %v672, %v630
      %v675 = vmul.f32 %v673, %v498
      %v676 = vmul.f32 %v674, %v499
      %v677 = vadd.f32 %v675, %v676
      %v678 = vrot.slane %v677, 4
      %v679 = vadd.f32 %v677, %v678
      %v680 = vrot.slane %v679, 2
      %v681 = vadd.f32 %v679, %v680
      %v682 = vrot.slane %v681, 1
      %v683 = vadd.f32 %v681, %v682
      %v684 = vmul.f32 %v581, %v673
      %v685 = vmul.f32 %v583, %v674
      %v686 = vadd.f32 %v684, %v631
      %v687 = vadd.f32 %v685, %v632
      %v688 = vmul.f32 %v686, %v500
      %v689 = vmul.f32 %v687, %v501
      %v690 = vadd.f32 %v688, %v689
      %v691 = vrot.slane %v690, 4
      %v692 = vadd.f32 %v690, %v691
      %v693 = vrot.slane %v692, 2
      %v694 = vadd.f32 %v692, %v693
      %v695 = vrot.slane %v694, 1
      %v696 = vadd.f32 %v694, %v695
      %v697 = vmul.f32 %v585, %v686
      %v698 = vmul.f32 %v587, %v687
      %v699 = vadd.f32 %v697, %v633
      %v700 = vadd.f32 %v698, %v634
      %v701 = vmul.f32 %v699, %v502
      %v702 = vmul.f32 %v700, %v503
      %v703 = vadd.f32 %v701, %v702
      %v704 = vrot.slane %v703, 4
      %v705 = vadd.f32 %v703, %v704
      %v706 = vrot.slane %v705, 2
      %v707 = vadd.f32 %v705, %v706
      %v708 = vrot.slane %v707, 1
      %v709 = vadd.f32 %v707, %v708
      %v710 = vmul.f32 %v589, %v699
      %v711 = vmul.f32 %v591, %v700
      %v712 = vadd.f32 %v710, %v635
      %v713 = vadd.f32 %v711, %v636
      %v714 = vmul.f32 %v712, %v504
      %v715 = vmul.f32 %v713, %v505
      %v716 = vadd.f32 %v714, %v715
      %v717 = vrot.slane %v716, 4
      %v718 = vadd.f32 %v716, %v717
      %v719 = vrot.slane %v718, 2
      %v720 = vadd.f32 %v718, %v719
      %v721 = vrot.slane %v720, 1
      %v722 = vadd.f32 %v720, %v721
      %v723 = vmul.f32 %v593, %v712
      %v724 = vmul.f32 %v595, %v713
      %v725 = vadd.f32 %v723, %v637
      %v726 = vadd.f32 %v724, %v638
      %v727 = vmul.f32 %v725, %v506
      %v728 = vmul.f32 %v726, %v507
      %v729 = vadd.f32 %v727, %v728
      %v730 = vrot.slane %v729, 4
      %v731 = vadd.f32 %v729, %v730
      %v732 = vrot.slane %v731, 2
      %v733 = vadd.f32 %v731, %v732
      %v734 = vrot.slane %v733, 1
      %v735 = vadd.f32 %v733, %v734
      %v736 = vmul.f32 %v597, %v725
      %v737 = vmul.f32 %v599, %v726
      %v738 = vadd.f32 %v736, %v639
      %v739 = vadd.f32 %v737, %v640
      %v740 = vmul.f32 %v738, %v508
      %v741 = vmul.f32 %v739, %v509
      %v742 = vadd.f32 %v740, %v741
      %v743 = vrot.slane %v742, 4
      %v744 = vadd.f32 %v742, %v743
      %v745 = vrot.slane %v744, 2
      %v746 = vadd.f32 %v744, %v745
      %v747 = vrot.slane %v746, 1
      %v748 = vadd.f32 %v746, %v747
      %vm749 = vcmask 1040384
      %v750 = vsel %vm749, %v657, %v670
      %vm751 = vcmask 1041408
      %v752 = vsel %vm751, %v750, %v683
      %vm753 = vcmask 1042432
      %v754 = vsel %vm753, %v752, %v696
      %vm755 = vcmask 1043456
      %v756 = vsel %vm755, %v754, %v709
      %vm757 = vcmask 1044480
      %v758 = vsel %vm757, %v756, %v722
      %vm759 = vcmask 1045504
      %v760 = vsel %vm759, %v758, %v735
      %vm761 = vcmask 1046528
      %v762 = vsel %vm761, %v760, %v748
      %v763 = vadd.f32 %v762, %v644
      %764 = vst [vmem:[%s430] sm:$0xff] %v763
      %v765 = vld [vmem:[%s388 + $0x8] sm:$0xff]
      %v766 = vld [vmem:[%s398 + $0x8] sm:$0xff]
      %s767 = scalar_lea.vmem %s409, 64
      %v768 = vld [vmem:[%s767] sm:$0xf]
      %v769 = vld [vmem:[%s767 + $0x4] sm:$0xf]
      %v770 = vld [vmem:[%s767 + $0x8] sm:$0xf]
      %v771 = vld [vmem:[%s767 + $0xc] sm:$0xf]
      %v772 = vld [vmem:[%s767 + $0x10] sm:$0xf]
      %v773 = vld [vmem:[%s767 + $0x14] sm:$0xf]
      %v774 = vld [vmem:[%s767 + $0x18] sm:$0xf]
      %v775 = vld [vmem:[%s767 + $0x1c] sm:$0xf]
      %v776 = vld [vmem:[%s767 + $0x20] sm:$0xf]
      %v777 = vld [vmem:[%s767 + $0x24] sm:$0xf]
      %v778 = vld [vmem:[%s767 + $0x28] sm:$0xf]
      %v779 = vld [vmem:[%s767 + $0x2c] sm:$0xf]
      %v780 = vld [vmem:[%s767 + $0x30] sm:$0xf]
      %v781 = vld [vmem:[%s767 + $0x34] sm:$0xf]
      %v782 = vld [vmem:[%s767 + $0x38] sm:$0xf]
      %v783 = vld [vmem:[%s767 + $0x3c] sm:$0xf]
      %v784 = vunpack.c.l.bf16 %v768
      %v785 = vunpack.c.l.bf16 %v769
      %v786 = vunpack.c.l.bf16 %v770
      %v787 = vunpack.c.l.bf16 %v771
      %v788 = vunpack.c.l.bf16 %v772
      %v789 = vunpack.c.l.bf16 %v773
      %v790 = vunpack.c.l.bf16 %v774
      %v791 = vunpack.c.l.bf16 %v775
      %v792 = vunpack.c.l.bf16 %v776
      %v793 = vunpack.c.l.bf16 %v777
      %v794 = vunpack.c.l.bf16 %v778
      %v795 = vunpack.c.l.bf16 %v779
      %v796 = vunpack.c.l.bf16 %v780
      %v797 = vunpack.c.l.bf16 %v781
      %v798 = vunpack.c.l.bf16 %v782
      %v799 = vunpack.c.l.bf16 %v783
      %s800 = scalar_lea.vmem %s420, 64
      %v801 = vld [vmem:[%s800] sm:$0xf]
      %v802 = vld [vmem:[%s800 + $0x4] sm:$0xf]
      %v803 = vld [vmem:[%s800 + $0x8] sm:$0xf]
      %v804 = vld [vmem:[%s800 + $0xc] sm:$0xf]
      %v805 = vld [vmem:[%s800 + $0x10] sm:$0xf]
      %v806 = vld [vmem:[%s800 + $0x14] sm:$0xf]
      %v807 = vld [vmem:[%s800 + $0x18] sm:$0xf]
      %v808 = vld [vmem:[%s800 + $0x1c] sm:$0xf]
      %v809 = vld [vmem:[%s800 + $0x20] sm:$0xf]
      %v810 = vld [vmem:[%s800 + $0x24] sm:$0xf]
      %v811 = vld [vmem:[%s800 + $0x28] sm:$0xf]
      %v812 = vld [vmem:[%s800 + $0x2c] sm:$0xf]
      %v813 = vld [vmem:[%s800 + $0x30] sm:$0xf]
      %v814 = vld [vmem:[%s800 + $0x34] sm:$0xf]
      %v815 = vld [vmem:[%s800 + $0x38] sm:$0xf]
      %v816 = vld [vmem:[%s800 + $0x3c] sm:$0xf]
      %v817 = vunpack.c.l.bf16 %v801
      %v818 = vunpack.c.l.bf16 %v802
      %v819 = vunpack.c.l.bf16 %v803
      %v820 = vunpack.c.l.bf16 %v804
      %v821 = vunpack.c.l.bf16 %v805
      %v822 = vunpack.c.l.bf16 %v806
      %v823 = vunpack.c.l.bf16 %v807
      %v824 = vunpack.c.l.bf16 %v808
      %v825 = vunpack.c.l.bf16 %v809
      %v826 = vunpack.c.l.bf16 %v810
      %v827 = vunpack.c.l.bf16 %v811
      %v828 = vunpack.c.l.bf16 %v812
      %v829 = vunpack.c.l.bf16 %v813
      %v830 = vunpack.c.l.bf16 %v814
      %v831 = vunpack.c.l.bf16 %v815
      %v832 = vunpack.c.l.bf16 %v816
      %v833 = vadd.f32 %v766, %v511
      %vm834 = vcmp.gt.f32.partialorder %v833, 20.0
      %v835 = vmin.f32 %v833, 20.0
      %v836 = vmul.f32 %v835, 1.442695
      %v837 = vpow.pop %v836
      %v838 = vadd.f32 %v837, 1.0
      %v839 = vlog2.pop %v838
      %v840 = vmul.f32 %v839, 0.6931472
      %v841 = vmul.f32 -0.5, %v837
      %v842 = vadd.f32 %v841, 1.0
      %v843 = vmul.f32 %v842, %v837
      %v844 = vand.u32 2147483647, %v837
      %vm845 = vcmp.lt.f32.partialorder %v844, 0.0004427343
      %v846 = vsel %vm845, %v843, %v840
      %v847 = vsel %vm834, %v833, %v846
      %v849 = vrot.slane %v847, 1
      %v850 = vrot.slane %v847, 2
      %v851 = vrot.slane %v847, 3
      %v852 = vrot.slane %v847, 4
      %v853 = vrot.slane %v847, 5
      %v854 = vrot.slane %v847, 6
      %v855 = vrot.slane %v847, 7
      %v856 = vperm.slane %v847, 0
      %v857 = vperm.slane %v849, 0
      %v858 = vperm.slane %v850, 0
      %v859 = vperm.slane %v851, 0
      %v860 = vperm.slane %v852, 0
      %v861 = vperm.slane %v853, 0
      %v862 = vperm.slane %v854, 0
      %v863 = vperm.slane %v855, 0
      %v872 = vmul.f32 %v856, %v438
      %v873 = vmul.f32 %v856, %v439
      %v874 = vmul.f32 %v857, %v438
      %v875 = vmul.f32 %v857, %v439
      %v876 = vmul.f32 %v858, %v438
      %v877 = vmul.f32 %v858, %v439
      %v878 = vmul.f32 %v859, %v438
      %v879 = vmul.f32 %v859, %v439
      %v880 = vmul.f32 %v860, %v438
      %v881 = vmul.f32 %v860, %v439
      %v882 = vmul.f32 %v861, %v438
      %v883 = vmul.f32 %v861, %v439
      %v884 = vmul.f32 %v862, %v438
      %v885 = vmul.f32 %v862, %v439
      %v886 = vmul.f32 %v863, %v438
      %v887 = vmul.f32 %v863, %v439
      %v888 = vmul.f32 %v872, 1.442695
      %v889 = vpow.pop %v888
      %v890 = vmul.f32 %v873, 1.442695
      %v891 = vpow.pop %v890
      %v892 = vmul.f32 %v874, 1.442695
      %v893 = vpow.pop %v892
      %v894 = vmul.f32 %v875, 1.442695
      %v895 = vpow.pop %v894
      %v896 = vmul.f32 %v876, 1.442695
      %v897 = vpow.pop %v896
      %v898 = vmul.f32 %v877, 1.442695
      %v899 = vpow.pop %v898
      %v900 = vmul.f32 %v878, 1.442695
      %v901 = vpow.pop %v900
      %v902 = vmul.f32 %v879, 1.442695
      %v903 = vpow.pop %v902
      %v904 = vmul.f32 %v880, 1.442695
      %v905 = vpow.pop %v904
      %v906 = vmul.f32 %v881, 1.442695
      %v907 = vpow.pop %v906
      %v908 = vmul.f32 %v882, 1.442695
      %v909 = vpow.pop %v908
      %v910 = vmul.f32 %v883, 1.442695
      %v911 = vpow.pop %v910
      %v912 = vmul.f32 %v884, 1.442695
      %v913 = vpow.pop %v912
      %v914 = vmul.f32 %v885, 1.442695
      %v915 = vpow.pop %v914
      %v916 = vmul.f32 %v886, 1.442695
      %v917 = vpow.pop %v916
      %v918 = vmul.f32 %v887, 1.442695
      %v919 = vpow.pop %v918
      %v920 = vmul.f32 %v847, %v765
      %v922 = vrot.slane %v920, 1
      %v923 = vrot.slane %v920, 2
      %v924 = vrot.slane %v920, 3
      %v925 = vrot.slane %v920, 4
      %v926 = vrot.slane %v920, 5
      %v927 = vrot.slane %v920, 6
      %v928 = vrot.slane %v920, 7
      %v929 = vperm.slane %v920, 0
      %v930 = vperm.slane %v922, 0
      %v931 = vperm.slane %v923, 0
      %v932 = vperm.slane %v924, 0
      %v933 = vperm.slane %v925, 0
      %v934 = vperm.slane %v926, 0
      %v935 = vperm.slane %v927, 0
      %v936 = vperm.slane %v928, 0
      %v945 = vmul.f32 %v929, %v784
      %v946 = vmul.f32 %v929, %v785
      %v947 = vmul.f32 %v930, %v786
      %v948 = vmul.f32 %v930, %v787
      %v949 = vmul.f32 %v931, %v788
      %v950 = vmul.f32 %v931, %v789
      %v951 = vmul.f32 %v932, %v790
      %v952 = vmul.f32 %v932, %v791
      %v953 = vmul.f32 %v933, %v792
      %v954 = vmul.f32 %v933, %v793
      %v955 = vmul.f32 %v934, %v794
      %v956 = vmul.f32 %v934, %v795
      %v957 = vmul.f32 %v935, %v796
      %v958 = vmul.f32 %v935, %v797
      %v959 = vmul.f32 %v936, %v798
      %v960 = vmul.f32 %v936, %v799
      %v961 = vmul.f32 %v642, %v765
      %v962 = vmul.f32 %v889, %v738
      %v963 = vmul.f32 %v891, %v739
      %v964 = vadd.f32 %v962, %v945
      %v965 = vadd.f32 %v963, %v946
      %v966 = vmul.f32 %v964, %v817
      %v967 = vmul.f32 %v965, %v818
      %v968 = vadd.f32 %v966, %v967
      %v969 = vrot.slane %v968, 4
      %v970 = vadd.f32 %v968, %v969
      %v971 = vrot.slane %v970, 2
      %v972 = vadd.f32 %v970, %v971
      %v973 = vrot.slane %v972, 1
      %v974 = vadd.f32 %v972, %v973
      %v975 = vmul.f32 %v893, %v964
      %v976 = vmul.f32 %v895, %v965
      %v977 = vadd.f32 %v975, %v947
      %v978 = vadd.f32 %v976, %v948
      %v979 = vmul.f32 %v977, %v819
      %v980 = vmul.f32 %v978, %v820
      %v981 = vadd.f32 %v979, %v980
      %v982 = vrot.slane %v981, 4
      %v983 = vadd.f32 %v981, %v982
      %v984 = vrot.slane %v983, 2
      %v985 = vadd.f32 %v983, %v984
      %v986 = vrot.slane %v985, 1
      %v987 = vadd.f32 %v985, %v986
      %v988 = vmul.f32 %v897, %v977
      %v989 = vmul.f32 %v899, %v978
      %v990 = vadd.f32 %v988, %v949
      %v991 = vadd.f32 %v989, %v950
      %v992 = vmul.f32 %v990, %v821
      %v993 = vmul.f32 %v991, %v822
      %v994 = vadd.f32 %v992, %v993
      %v995 = vrot.slane %v994, 4
      %v996 = vadd.f32 %v994, %v995
      %v997 = vrot.slane %v996, 2
      %v998 = vadd.f32 %v996, %v997
      %v999 = vrot.slane %v998, 1
      %v1000 = vadd.f32 %v998, %v999
      %v1001 = vmul.f32 %v901, %v990
      %v1002 = vmul.f32 %v903, %v991
      %v1003 = vadd.f32 %v1001, %v951
      %v1004 = vadd.f32 %v1002, %v952
      %v1005 = vmul.f32 %v1003, %v823
      %v1006 = vmul.f32 %v1004, %v824
      %v1007 = vadd.f32 %v1005, %v1006
      %v1008 = vrot.slane %v1007, 4
      %v1009 = vadd.f32 %v1007, %v1008
      %v1010 = vrot.slane %v1009, 2
      %v1011 = vadd.f32 %v1009, %v1010
      %v1012 = vrot.slane %v1011, 1
      %v1013 = vadd.f32 %v1011, %v1012
      %v1014 = vmul.f32 %v905, %v1003
      %v1015 = vmul.f32 %v907, %v1004
      %v1016 = vadd.f32 %v1014, %v953
      %v1017 = vadd.f32 %v1015, %v954
      %v1018 = vmul.f32 %v1016, %v825
      %v1019 = vmul.f32 %v1017, %v826
      %v1020 = vadd.f32 %v1018, %v1019
      %v1021 = vrot.slane %v1020, 4
      %v1022 = vadd.f32 %v1020, %v1021
      %v1023 = vrot.slane %v1022, 2
      %v1024 = vadd.f32 %v1022, %v1023
      %v1025 = vrot.slane %v1024, 1
      %v1026 = vadd.f32 %v1024, %v1025
      %v1027 = vmul.f32 %v909, %v1016
      %v1028 = vmul.f32 %v911, %v1017
      %v1029 = vadd.f32 %v1027, %v955
      %v1030 = vadd.f32 %v1028, %v956
      %v1031 = vmul.f32 %v1029, %v827
      %v1032 = vmul.f32 %v1030, %v828
      %v1033 = vadd.f32 %v1031, %v1032
      %v1034 = vrot.slane %v1033, 4
      %v1035 = vadd.f32 %v1033, %v1034
      %v1036 = vrot.slane %v1035, 2
      %v1037 = vadd.f32 %v1035, %v1036
      %v1038 = vrot.slane %v1037, 1
      %v1039 = vadd.f32 %v1037, %v1038
      %v1040 = vmul.f32 %v913, %v1029
      %v1041 = vmul.f32 %v915, %v1030
      %v1042 = vadd.f32 %v1040, %v957
      %v1043 = vadd.f32 %v1041, %v958
      %v1044 = vmul.f32 %v1042, %v829
      %v1045 = vmul.f32 %v1043, %v830
      %v1046 = vadd.f32 %v1044, %v1045
      %v1047 = vrot.slane %v1046, 4
      %v1048 = vadd.f32 %v1046, %v1047
      %v1049 = vrot.slane %v1048, 2
      %v1050 = vadd.f32 %v1048, %v1049
      %v1051 = vrot.slane %v1050, 1
      %v1052 = vadd.f32 %v1050, %v1051
      %v1053 = vmul.f32 %v917, %v1042
      %v1054 = vmul.f32 %v919, %v1043
      %v1055 = vadd.f32 %v1053, %v959
      %v1056 = vadd.f32 %v1054, %v960
      %v1057 = vmul.f32 %v1055, %v831
      %v1058 = vmul.f32 %v1056, %v832
      %v1059 = vadd.f32 %v1057, %v1058
      %v1060 = vrot.slane %v1059, 4
      %v1061 = vadd.f32 %v1059, %v1060
      %v1062 = vrot.slane %v1061, 2
      %v1063 = vadd.f32 %v1061, %v1062
      %v1064 = vrot.slane %v1063, 1
      %v1065 = vadd.f32 %v1063, %v1064
      %v1066 = vsel %vm749, %v974, %v987
      %v1067 = vsel %vm751, %v1066, %v1000
      %v1068 = vsel %vm753, %v1067, %v1013
      %v1069 = vsel %vm755, %v1068, %v1026
      %v1070 = vsel %vm757, %v1069, %v1039
      %v1071 = vsel %vm759, %v1070, %v1052
      %v1072 = vsel %vm761, %v1071, %v1065
      %v1073 = vadd.f32 %v1072, %v961
      %1074 = vst [vmem:[%s430 + $0x8] sm:$0xff] %v1073
      %v1075 = vld [vmem:[%s388 + $0x10] sm:$0xff]
      %v1076 = vld [vmem:[%s398 + $0x10] sm:$0xff]
      %s1077 = scalar_lea.vmem %s409, 128
      %v1078 = vld [vmem:[%s1077] sm:$0xf]
      %v1079 = vld [vmem:[%s1077 + $0x4] sm:$0xf]
      %v1080 = vld [vmem:[%s1077 + $0x8] sm:$0xf]
      %v1081 = vld [vmem:[%s1077 + $0xc] sm:$0xf]
      %v1082 = vld [vmem:[%s1077 + $0x10] sm:$0xf]
      %v1083 = vld [vmem:[%s1077 + $0x14] sm:$0xf]
      %v1084 = vld [vmem:[%s1077 + $0x18] sm:$0xf]
      %v1085 = vld [vmem:[%s1077 + $0x1c] sm:$0xf]
      %v1086 = vld [vmem:[%s1077 + $0x20] sm:$0xf]
      %v1087 = vld [vmem:[%s1077 + $0x24] sm:$0xf]
      %v1088 = vld [vmem:[%s1077 + $0x28] sm:$0xf]
      %v1089 = vld [vmem:[%s1077 + $0x2c] sm:$0xf]
      %v1090 = vld [vmem:[%s1077 + $0x30] sm:$0xf]
      %v1091 = vld [vmem:[%s1077 + $0x34] sm:$0xf]
      %v1092 = vld [vmem:[%s1077 + $0x38] sm:$0xf]
      %v1093 = vld [vmem:[%s1077 + $0x3c] sm:$0xf]
      %v1094 = vunpack.c.l.bf16 %v1078
      %v1095 = vunpack.c.l.bf16 %v1079
      %v1096 = vunpack.c.l.bf16 %v1080
      %v1097 = vunpack.c.l.bf16 %v1081
      %v1098 = vunpack.c.l.bf16 %v1082
      %v1099 = vunpack.c.l.bf16 %v1083
      %v1100 = vunpack.c.l.bf16 %v1084
      %v1101 = vunpack.c.l.bf16 %v1085
      %v1102 = vunpack.c.l.bf16 %v1086
      %v1103 = vunpack.c.l.bf16 %v1087
      %v1104 = vunpack.c.l.bf16 %v1088
      %v1105 = vunpack.c.l.bf16 %v1089
      %v1106 = vunpack.c.l.bf16 %v1090
      %v1107 = vunpack.c.l.bf16 %v1091
      %v1108 = vunpack.c.l.bf16 %v1092
      %v1109 = vunpack.c.l.bf16 %v1093
      %s1110 = scalar_lea.vmem %s420, 128
      %v1111 = vld [vmem:[%s1110] sm:$0xf]
      %v1112 = vld [vmem:[%s1110 + $0x4] sm:$0xf]
      %v1113 = vld [vmem:[%s1110 + $0x8] sm:$0xf]
      %v1114 = vld [vmem:[%s1110 + $0xc] sm:$0xf]
      %v1115 = vld [vmem:[%s1110 + $0x10] sm:$0xf]
      %v1116 = vld [vmem:[%s1110 + $0x14] sm:$0xf]
      %v1117 = vld [vmem:[%s1110 + $0x18] sm:$0xf]
      %v1118 = vld [vmem:[%s1110 + $0x1c] sm:$0xf]
      %v1119 = vld [vmem:[%s1110 + $0x20] sm:$0xf]
      %v1120 = vld [vmem:[%s1110 + $0x24] sm:$0xf]
      %v1121 = vld [vmem:[%s1110 + $0x28] sm:$0xf]
      %v1122 = vld [vmem:[%s1110 + $0x2c] sm:$0xf]
      %v1123 = vld [vmem:[%s1110 + $0x30] sm:$0xf]
      %v1124 = vld [vmem:[%s1110 + $0x34] sm:$0xf]
      %v1125 = vld [vmem:[%s1110 + $0x38] sm:$0xf]
      %v1126 = vld [vmem:[%s1110 + $0x3c] sm:$0xf]
      %v1127 = vunpack.c.l.bf16 %v1111
      %v1128 = vunpack.c.l.bf16 %v1112
      %v1129 = vunpack.c.l.bf16 %v1113
      %v1130 = vunpack.c.l.bf16 %v1114
      %v1131 = vunpack.c.l.bf16 %v1115
      %v1132 = vunpack.c.l.bf16 %v1116
      %v1133 = vunpack.c.l.bf16 %v1117
      %v1134 = vunpack.c.l.bf16 %v1118
      %v1135 = vunpack.c.l.bf16 %v1119
      %v1136 = vunpack.c.l.bf16 %v1120
      %v1137 = vunpack.c.l.bf16 %v1121
      %v1138 = vunpack.c.l.bf16 %v1122
      %v1139 = vunpack.c.l.bf16 %v1123
      %v1140 = vunpack.c.l.bf16 %v1124
      %v1141 = vunpack.c.l.bf16 %v1125
      %v1142 = vunpack.c.l.bf16 %v1126
      %v1143 = vadd.f32 %v1076, %v511
      %vm1144 = vcmp.gt.f32.partialorder %v1143, 20.0
      %v1145 = vmin.f32 %v1143, 20.0
      %v1146 = vmul.f32 %v1145, 1.442695
      %v1147 = vpow.pop %v1146
      %v1148 = vadd.f32 %v1147, 1.0
      %v1149 = vlog2.pop %v1148
      %v1150 = vmul.f32 %v1149, 0.6931472
      %v1151 = vmul.f32 -0.5, %v1147
      %v1152 = vadd.f32 %v1151, 1.0
      %v1153 = vmul.f32 %v1152, %v1147
      %v1154 = vand.u32 2147483647, %v1147
      %vm1155 = vcmp.lt.f32.partialorder %v1154, 0.0004427343
      %v1156 = vsel %vm1155, %v1153, %v1150
      %v1157 = vsel %vm1144, %v1143, %v1156
      %v1159 = vrot.slane %v1157, 1
      %v1160 = vrot.slane %v1157, 2
      %v1161 = vrot.slane %v1157, 3
      %v1162 = vrot.slane %v1157, 4
      %v1163 = vrot.slane %v1157, 5
      %v1164 = vrot.slane %v1157, 6
      %v1165 = vrot.slane %v1157, 7
      %v1166 = vperm.slane %v1157, 0
      %v1167 = vperm.slane %v1159, 0
      %v1168 = vperm.slane %v1160, 0
      %v1169 = vperm.slane %v1161, 0
      %v1170 = vperm.slane %v1162, 0
      %v1171 = vperm.slane %v1163, 0
      %v1172 = vperm.slane %v1164, 0
      %v1173 = vperm.slane %v1165, 0
      %v1182 = vmul.f32 %v1166, %v438
      %v1183 = vmul.f32 %v1166, %v439
      %v1184 = vmul.f32 %v1167, %v438
      %v1185 = vmul.f32 %v1167, %v439
      %v1186 = vmul.f32 %v1168, %v438
      %v1187 = vmul.f32 %v1168, %v439
      %v1188 = vmul.f32 %v1169, %v438
      %v1189 = vmul.f32 %v1169, %v439
      %v1190 = vmul.f32 %v1170, %v438
      %v1191 = vmul.f32 %v1170, %v439
      %v1192 = vmul.f32 %v1171, %v438
      %v1193 = vmul.f32 %v1171, %v439
      %v1194 = vmul.f32 %v1172, %v438
      %v1195 = vmul.f32 %v1172, %v439
      %v1196 = vmul.f32 %v1173, %v438
      %v1197 = vmul.f32 %v1173, %v439
      %v1198 = vmul.f32 %v1182, 1.442695
      %v1199 = vpow.pop %v1198
      %v1200 = vmul.f32 %v1183, 1.442695
      %v1201 = vpow.pop %v1200
      %v1202 = vmul.f32 %v1184, 1.442695
      %v1203 = vpow.pop %v1202
      %v1204 = vmul.f32 %v1185, 1.442695
      %v1205 = vpow.pop %v1204
      %v1206 = vmul.f32 %v1186, 1.442695
      %v1207 = vpow.pop %v1206
      %v1208 = vmul.f32 %v1187, 1.442695
      %v1209 = vpow.pop %v1208
      %v1210 = vmul.f32 %v1188, 1.442695
      %v1211 = vpow.pop %v1210
      %v1212 = vmul.f32 %v1189, 1.442695
      %v1213 = vpow.pop %v1212
      %v1214 = vmul.f32 %v1190, 1.442695
      %v1215 = vpow.pop %v1214
      %v1216 = vmul.f32 %v1191, 1.442695
      %v1217 = vpow.pop %v1216
      %v1218 = vmul.f32 %v1192, 1.442695
      %v1219 = vpow.pop %v1218
      %v1220 = vmul.f32 %v1193, 1.442695
      %v1221 = vpow.pop %v1220
      %v1222 = vmul.f32 %v1194, 1.442695
      %v1223 = vpow.pop %v1222
      %v1224 = vmul.f32 %v1195, 1.442695
      %v1225 = vpow.pop %v1224
      %v1226 = vmul.f32 %v1196, 1.442695
      %v1227 = vpow.pop %v1226
      %v1228 = vmul.f32 %v1197, 1.442695
      %v1229 = vpow.pop %v1228
      %v1230 = vmul.f32 %v1157, %v1075
      %v1232 = vrot.slane %v1230, 1
      %v1233 = vrot.slane %v1230, 2
      %v1234 = vrot.slane %v1230, 3
      %v1235 = vrot.slane %v1230, 4
      %v1236 = vrot.slane %v1230, 5
      %v1237 = vrot.slane %v1230, 6
      %v1238 = vrot.slane %v1230, 7
      %v1239 = vperm.slane %v1230, 0
      %v1240 = vperm.slane %v1232, 0
      %v1241 = vperm.slane %v1233, 0
      %v1242 = vperm.slane %v1234, 0
      %v1243 = vperm.slane %v1235, 0
      %v1244 = vperm.slane %v1236, 0
      %v1245 = vperm.slane %v1237, 0
      %v1246 = vperm.slane %v1238, 0
      %v1255 = vmul.f32 %v1239, %v1094
      %v1256 = vmul.f32 %v1239, %v1095
      %v1257 = vmul.f32 %v1240, %v1096
      %v1258 = vmul.f32 %v1240, %v1097
      %v1259 = vmul.f32 %v1241, %v1098
      %v1260 = vmul.f32 %v1241, %v1099
      %v1261 = vmul.f32 %v1242, %v1100
      %v1262 = vmul.f32 %v1242, %v1101
      %v1263 = vmul.f32 %v1243, %v1102
      %v1264 = vmul.f32 %v1243, %v1103
      %v1265 = vmul.f32 %v1244, %v1104
      %v1266 = vmul.f32 %v1244, %v1105
      %v1267 = vmul.f32 %v1245, %v1106
      %v1268 = vmul.f32 %v1245, %v1107
      %v1269 = vmul.f32 %v1246, %v1108
      %v1270 = vmul.f32 %v1246, %v1109
      %v1271 = vmul.f32 %v642, %v1075
      %v1272 = vmul.f32 %v1199, %v1055
      %v1273 = vmul.f32 %v1201, %v1056
      %v1274 = vadd.f32 %v1272, %v1255
      %v1275 = vadd.f32 %v1273, %v1256
      %v1276 = vmul.f32 %v1274, %v1127
      %v1277 = vmul.f32 %v1275, %v1128
      %v1278 = vadd.f32 %v1276, %v1277
      %v1279 = vrot.slane %v1278, 4
      %v1280 = vadd.f32 %v1278, %v1279
      %v1281 = vrot.slane %v1280, 2
      %v1282 = vadd.f32 %v1280, %v1281
      %v1283 = vrot.slane %v1282, 1
      %v1284 = vadd.f32 %v1282, %v1283
      %v1285 = vmul.f32 %v1203, %v1274
      %v1286 = vmul.f32 %v1205, %v1275
      %v1287 = vadd.f32 %v1285, %v1257
      %v1288 = vadd.f32 %v1286, %v1258
      %v1289 = vmul.f32 %v1287, %v1129
      %v1290 = vmul.f32 %v1288, %v1130
      %v1291 = vadd.f32 %v1289, %v1290
      %v1292 = vrot.slane %v1291, 4
      %v1293 = vadd.f32 %v1291, %v1292
      %v1294 = vrot.slane %v1293, 2
      %v1295 = vadd.f32 %v1293, %v1294
      %v1296 = vrot.slane %v1295, 1
      %v1297 = vadd.f32 %v1295, %v1296
      %v1298 = vmul.f32 %v1207, %v1287
      %v1299 = vmul.f32 %v1209, %v1288
      %v1300 = vadd.f32 %v1298, %v1259
      %v1301 = vadd.f32 %v1299, %v1260
      %v1302 = vmul.f32 %v1300, %v1131
      %v1303 = vmul.f32 %v1301, %v1132
      %v1304 = vadd.f32 %v1302, %v1303
      %v1305 = vrot.slane %v1304, 4
      %v1306 = vadd.f32 %v1304, %v1305
      %v1307 = vrot.slane %v1306, 2
      %v1308 = vadd.f32 %v1306, %v1307
      %v1309 = vrot.slane %v1308, 1
      %v1310 = vadd.f32 %v1308, %v1309
      %v1311 = vmul.f32 %v1211, %v1300
      %v1312 = vmul.f32 %v1213, %v1301
      %v1313 = vadd.f32 %v1311, %v1261
      %v1314 = vadd.f32 %v1312, %v1262
      %v1315 = vmul.f32 %v1313, %v1133
      %v1316 = vmul.f32 %v1314, %v1134
      %v1317 = vadd.f32 %v1315, %v1316
      %v1318 = vrot.slane %v1317, 4
      %v1319 = vadd.f32 %v1317, %v1318
      %v1320 = vrot.slane %v1319, 2
      %v1321 = vadd.f32 %v1319, %v1320
      %v1322 = vrot.slane %v1321, 1
      %v1323 = vadd.f32 %v1321, %v1322
      %v1324 = vmul.f32 %v1215, %v1313
      %v1325 = vmul.f32 %v1217, %v1314
      %v1326 = vadd.f32 %v1324, %v1263
      %v1327 = vadd.f32 %v1325, %v1264
      %v1328 = vmul.f32 %v1326, %v1135
      %v1329 = vmul.f32 %v1327, %v1136
      %v1330 = vadd.f32 %v1328, %v1329
      %v1331 = vrot.slane %v1330, 4
      %v1332 = vadd.f32 %v1330, %v1331
      %v1333 = vrot.slane %v1332, 2
      %v1334 = vadd.f32 %v1332, %v1333
      %v1335 = vrot.slane %v1334, 1
      %v1336 = vadd.f32 %v1334, %v1335
      %v1337 = vmul.f32 %v1219, %v1326
      %v1338 = vmul.f32 %v1221, %v1327
      %v1339 = vadd.f32 %v1337, %v1265
      %v1340 = vadd.f32 %v1338, %v1266
      %v1341 = vmul.f32 %v1339, %v1137
      %v1342 = vmul.f32 %v1340, %v1138
      %v1343 = vadd.f32 %v1341, %v1342
      %v1344 = vrot.slane %v1343, 4
      %v1345 = vadd.f32 %v1343, %v1344
      %v1346 = vrot.slane %v1345, 2
      %v1347 = vadd.f32 %v1345, %v1346
      %v1348 = vrot.slane %v1347, 1
      %v1349 = vadd.f32 %v1347, %v1348
      %v1350 = vmul.f32 %v1223, %v1339
      %v1351 = vmul.f32 %v1225, %v1340
      %v1352 = vadd.f32 %v1350, %v1267
      %v1353 = vadd.f32 %v1351, %v1268
      %v1354 = vmul.f32 %v1352, %v1139
      %v1355 = vmul.f32 %v1353, %v1140
      %v1356 = vadd.f32 %v1354, %v1355
      %v1357 = vrot.slane %v1356, 4
      %v1358 = vadd.f32 %v1356, %v1357
      %v1359 = vrot.slane %v1358, 2
      %v1360 = vadd.f32 %v1358, %v1359
      %v1361 = vrot.slane %v1360, 1
      %v1362 = vadd.f32 %v1360, %v1361
      %v1363 = vmul.f32 %v1227, %v1352
      %v1364 = vmul.f32 %v1229, %v1353
      %v1365 = vadd.f32 %v1363, %v1269
      %v1366 = vadd.f32 %v1364, %v1270
      %v1367 = vmul.f32 %v1365, %v1141
      %v1368 = vmul.f32 %v1366, %v1142
      %v1369 = vadd.f32 %v1367, %v1368
      %v1370 = vrot.slane %v1369, 4
      %v1371 = vadd.f32 %v1369, %v1370
      %v1372 = vrot.slane %v1371, 2
      %v1373 = vadd.f32 %v1371, %v1372
      %v1374 = vrot.slane %v1373, 1
      %v1375 = vadd.f32 %v1373, %v1374
      %v1376 = vsel %vm749, %v1284, %v1297
      %v1377 = vsel %vm751, %v1376, %v1310
      %v1378 = vsel %vm753, %v1377, %v1323
      %v1379 = vsel %vm755, %v1378, %v1336
      %v1380 = vsel %vm757, %v1379, %v1349
      %v1381 = vsel %vm759, %v1380, %v1362
      %v1382 = vsel %vm761, %v1381, %v1375
      %v1383 = vadd.f32 %v1382, %v1271
      %1384 = vst [vmem:[%s430 + $0x10] sm:$0xff] %v1383
      %v1385 = vld [vmem:[%s388 + $0x18] sm:$0xff]
      %v1386 = vld [vmem:[%s398 + $0x18] sm:$0xff]
      %s1387 = scalar_lea.vmem %s409, 192
      %v1388 = vld [vmem:[%s1387] sm:$0xf]
      %v1389 = vld [vmem:[%s1387 + $0x4] sm:$0xf]
      %v1390 = vld [vmem:[%s1387 + $0x8] sm:$0xf]
      %v1391 = vld [vmem:[%s1387 + $0xc] sm:$0xf]
      %v1392 = vld [vmem:[%s1387 + $0x10] sm:$0xf]
      %v1393 = vld [vmem:[%s1387 + $0x14] sm:$0xf]
      %v1394 = vld [vmem:[%s1387 + $0x18] sm:$0xf]
      %v1395 = vld [vmem:[%s1387 + $0x1c] sm:$0xf]
      %v1396 = vld [vmem:[%s1387 + $0x20] sm:$0xf]
      %v1397 = vld [vmem:[%s1387 + $0x24] sm:$0xf]
      %v1398 = vld [vmem:[%s1387 + $0x28] sm:$0xf]
      %v1399 = vld [vmem:[%s1387 + $0x2c] sm:$0xf]
      %v1400 = vld [vmem:[%s1387 + $0x30] sm:$0xf]
      %v1401 = vld [vmem:[%s1387 + $0x34] sm:$0xf]
      %v1402 = vld [vmem:[%s1387 + $0x38] sm:$0xf]
      %v1403 = vld [vmem:[%s1387 + $0x3c] sm:$0xf]
      %v1404 = vunpack.c.l.bf16 %v1388
      %v1405 = vunpack.c.l.bf16 %v1389
      %v1406 = vunpack.c.l.bf16 %v1390
      %v1407 = vunpack.c.l.bf16 %v1391
      %v1408 = vunpack.c.l.bf16 %v1392
      %v1409 = vunpack.c.l.bf16 %v1393
      %v1410 = vunpack.c.l.bf16 %v1394
      %v1411 = vunpack.c.l.bf16 %v1395
      %v1412 = vunpack.c.l.bf16 %v1396
      %v1413 = vunpack.c.l.bf16 %v1397
      %v1414 = vunpack.c.l.bf16 %v1398
      %v1415 = vunpack.c.l.bf16 %v1399
      %v1416 = vunpack.c.l.bf16 %v1400
      %v1417 = vunpack.c.l.bf16 %v1401
      %v1418 = vunpack.c.l.bf16 %v1402
      %v1419 = vunpack.c.l.bf16 %v1403
      %s1420 = scalar_lea.vmem %s420, 192
      %v1421 = vld [vmem:[%s1420] sm:$0xf]
      %v1422 = vld [vmem:[%s1420 + $0x4] sm:$0xf]
      %v1423 = vld [vmem:[%s1420 + $0x8] sm:$0xf]
      %v1424 = vld [vmem:[%s1420 + $0xc] sm:$0xf]
      %v1425 = vld [vmem:[%s1420 + $0x10] sm:$0xf]
      %v1426 = vld [vmem:[%s1420 + $0x14] sm:$0xf]
      %v1427 = vld [vmem:[%s1420 + $0x18] sm:$0xf]
      %v1428 = vld [vmem:[%s1420 + $0x1c] sm:$0xf]
      %v1429 = vld [vmem:[%s1420 + $0x20] sm:$0xf]
      %v1430 = vld [vmem:[%s1420 + $0x24] sm:$0xf]
      %v1431 = vld [vmem:[%s1420 + $0x28] sm:$0xf]
      %v1432 = vld [vmem:[%s1420 + $0x2c] sm:$0xf]
      %v1433 = vld [vmem:[%s1420 + $0x30] sm:$0xf]
      %v1434 = vld [vmem:[%s1420 + $0x34] sm:$0xf]
      %v1435 = vld [vmem:[%s1420 + $0x38] sm:$0xf]
      %v1436 = vld [vmem:[%s1420 + $0x3c] sm:$0xf]
      %v1437 = vunpack.c.l.bf16 %v1421
      %v1438 = vunpack.c.l.bf16 %v1422
      %v1439 = vunpack.c.l.bf16 %v1423
      %v1440 = vunpack.c.l.bf16 %v1424
      %v1441 = vunpack.c.l.bf16 %v1425
      %v1442 = vunpack.c.l.bf16 %v1426
      %v1443 = vunpack.c.l.bf16 %v1427
      %v1444 = vunpack.c.l.bf16 %v1428
      %v1445 = vunpack.c.l.bf16 %v1429
      %v1446 = vunpack.c.l.bf16 %v1430
      %v1447 = vunpack.c.l.bf16 %v1431
      %v1448 = vunpack.c.l.bf16 %v1432
      %v1449 = vunpack.c.l.bf16 %v1433
      %v1450 = vunpack.c.l.bf16 %v1434
      %v1451 = vunpack.c.l.bf16 %v1435
      %v1452 = vunpack.c.l.bf16 %v1436
      %v1453 = vadd.f32 %v1386, %v511
      %vm1454 = vcmp.gt.f32.partialorder %v1453, 20.0
      %v1455 = vmin.f32 %v1453, 20.0
      %v1456 = vmul.f32 %v1455, 1.442695
      %v1457 = vpow.pop %v1456
      %v1458 = vadd.f32 %v1457, 1.0
      %v1459 = vlog2.pop %v1458
      %v1460 = vmul.f32 %v1459, 0.6931472
      %v1461 = vmul.f32 -0.5, %v1457
      %v1462 = vadd.f32 %v1461, 1.0
      %v1463 = vmul.f32 %v1462, %v1457
      %v1464 = vand.u32 2147483647, %v1457
      %vm1465 = vcmp.lt.f32.partialorder %v1464, 0.0004427343
      %v1466 = vsel %vm1465, %v1463, %v1460
      %v1467 = vsel %vm1454, %v1453, %v1466
      %v1469 = vrot.slane %v1467, 1
      %v1470 = vrot.slane %v1467, 2
      %v1471 = vrot.slane %v1467, 3
      %v1472 = vrot.slane %v1467, 4
      %v1473 = vrot.slane %v1467, 5
      %v1474 = vrot.slane %v1467, 6
      %v1475 = vrot.slane %v1467, 7
      %v1476 = vperm.slane %v1467, 0
      %v1477 = vperm.slane %v1469, 0
      %v1478 = vperm.slane %v1470, 0
      %v1479 = vperm.slane %v1471, 0
      %v1480 = vperm.slane %v1472, 0
      %v1481 = vperm.slane %v1473, 0
      %v1482 = vperm.slane %v1474, 0
      %v1483 = vperm.slane %v1475, 0
      %v1492 = vmul.f32 %v1476, %v438
      %v1493 = vmul.f32 %v1476, %v439
      %v1494 = vmul.f32 %v1477, %v438
      %v1495 = vmul.f32 %v1477, %v439
      %v1496 = vmul.f32 %v1478, %v438
      %v1497 = vmul.f32 %v1478, %v439
      %v1498 = vmul.f32 %v1479, %v438
      %v1499 = vmul.f32 %v1479, %v439
      %v1500 = vmul.f32 %v1480, %v438
      %v1501 = vmul.f32 %v1480, %v439
      %v1502 = vmul.f32 %v1481, %v438
      %v1503 = vmul.f32 %v1481, %v439
      %v1504 = vmul.f32 %v1482, %v438
      %v1505 = vmul.f32 %v1482, %v439
      %v1506 = vmul.f32 %v1483, %v438
      %v1507 = vmul.f32 %v1483, %v439
      %v1508 = vmul.f32 %v1492, 1.442695
      %v1509 = vpow.pop %v1508
      %v1510 = vmul.f32 %v1493, 1.442695
      %v1511 = vpow.pop %v1510
      %v1512 = vmul.f32 %v1494, 1.442695
      %v1513 = vpow.pop %v1512
      %v1514 = vmul.f32 %v1495, 1.442695
      %v1515 = vpow.pop %v1514
      %v1516 = vmul.f32 %v1496, 1.442695
      %v1517 = vpow.pop %v1516
      %v1518 = vmul.f32 %v1497, 1.442695
      %v1519 = vpow.pop %v1518
      %v1520 = vmul.f32 %v1498, 1.442695
      %v1521 = vpow.pop %v1520
      %v1522 = vmul.f32 %v1499, 1.442695
      %v1523 = vpow.pop %v1522
      %v1524 = vmul.f32 %v1500, 1.442695
      %v1525 = vpow.pop %v1524
      %v1526 = vmul.f32 %v1501, 1.442695
      %v1527 = vpow.pop %v1526
      %v1528 = vmul.f32 %v1502, 1.442695
      %v1529 = vpow.pop %v1528
      %v1530 = vmul.f32 %v1503, 1.442695
      %v1531 = vpow.pop %v1530
      %v1532 = vmul.f32 %v1504, 1.442695
      %v1533 = vpow.pop %v1532
      %v1534 = vmul.f32 %v1505, 1.442695
      %v1535 = vpow.pop %v1534
      %v1536 = vmul.f32 %v1506, 1.442695
      %v1537 = vpow.pop %v1536
      %v1538 = vmul.f32 %v1507, 1.442695
      %v1539 = vpow.pop %v1538
      %v1540 = vmul.f32 %v1467, %v1385
      %v1542 = vrot.slane %v1540, 1
      %v1543 = vrot.slane %v1540, 2
      %v1544 = vrot.slane %v1540, 3
      %v1545 = vrot.slane %v1540, 4
      %v1546 = vrot.slane %v1540, 5
      %v1547 = vrot.slane %v1540, 6
      %v1548 = vrot.slane %v1540, 7
      %v1549 = vperm.slane %v1540, 0
      %v1550 = vperm.slane %v1542, 0
      %v1551 = vperm.slane %v1543, 0
      %v1552 = vperm.slane %v1544, 0
      %v1553 = vperm.slane %v1545, 0
      %v1554 = vperm.slane %v1546, 0
      %v1555 = vperm.slane %v1547, 0
      %v1556 = vperm.slane %v1548, 0
      %v1565 = vmul.f32 %v1549, %v1404
      %v1566 = vmul.f32 %v1549, %v1405
      %v1567 = vmul.f32 %v1550, %v1406
      %v1568 = vmul.f32 %v1550, %v1407
      %v1569 = vmul.f32 %v1551, %v1408
      %v1570 = vmul.f32 %v1551, %v1409
      %v1571 = vmul.f32 %v1552, %v1410
      %v1572 = vmul.f32 %v1552, %v1411
      %v1573 = vmul.f32 %v1553, %v1412
      %v1574 = vmul.f32 %v1553, %v1413
      %v1575 = vmul.f32 %v1554, %v1414
      %v1576 = vmul.f32 %v1554, %v1415
      %v1577 = vmul.f32 %v1555, %v1416
      %v1578 = vmul.f32 %v1555, %v1417
      %v1579 = vmul.f32 %v1556, %v1418
      %v1580 = vmul.f32 %v1556, %v1419
      %v1581 = vmul.f32 %v642, %v1385
      %v1582 = vmul.f32 %v1509, %v1365
      %v1583 = vmul.f32 %v1511, %v1366
      %v1584 = vadd.f32 %v1582, %v1565
      %v1585 = vadd.f32 %v1583, %v1566
      %v1586 = vmul.f32 %v1584, %v1437
      %v1587 = vmul.f32 %v1585, %v1438
      %v1588 = vadd.f32 %v1586, %v1587
      %v1589 = vrot.slane %v1588, 4
      %v1590 = vadd.f32 %v1588, %v1589
      %v1591 = vrot.slane %v1590, 2
      %v1592 = vadd.f32 %v1590, %v1591
      %v1593 = vrot.slane %v1592, 1
      %v1594 = vadd.f32 %v1592, %v1593
      %v1595 = vmul.f32 %v1513, %v1584
      %v1596 = vmul.f32 %v1515, %v1585
      %v1597 = vadd.f32 %v1595, %v1567
      %v1598 = vadd.f32 %v1596, %v1568
      %v1599 = vmul.f32 %v1597, %v1439
      %v1600 = vmul.f32 %v1598, %v1440
      %v1601 = vadd.f32 %v1599, %v1600
      %v1602 = vrot.slane %v1601, 4
      %v1603 = vadd.f32 %v1601, %v1602
      %v1604 = vrot.slane %v1603, 2
      %v1605 = vadd.f32 %v1603, %v1604
      %v1606 = vrot.slane %v1605, 1
      %v1607 = vadd.f32 %v1605, %v1606
      %v1608 = vmul.f32 %v1517, %v1597
      %v1609 = vmul.f32 %v1519, %v1598
      %v1610 = vadd.f32 %v1608, %v1569
      %v1611 = vadd.f32 %v1609, %v1570
      %v1612 = vmul.f32 %v1610, %v1441
      %v1613 = vmul.f32 %v1611, %v1442
      %v1614 = vadd.f32 %v1612, %v1613
      %v1615 = vrot.slane %v1614, 4
      %v1616 = vadd.f32 %v1614, %v1615
      %v1617 = vrot.slane %v1616, 2
      %v1618 = vadd.f32 %v1616, %v1617
      %v1619 = vrot.slane %v1618, 1
      %v1620 = vadd.f32 %v1618, %v1619
      %v1621 = vmul.f32 %v1521, %v1610
      %v1622 = vmul.f32 %v1523, %v1611
      %v1623 = vadd.f32 %v1621, %v1571
      %v1624 = vadd.f32 %v1622, %v1572
      %v1625 = vmul.f32 %v1623, %v1443
      %v1626 = vmul.f32 %v1624, %v1444
      %v1627 = vadd.f32 %v1625, %v1626
      %v1628 = vrot.slane %v1627, 4
      %v1629 = vadd.f32 %v1627, %v1628
      %v1630 = vrot.slane %v1629, 2
      %v1631 = vadd.f32 %v1629, %v1630
      %v1632 = vrot.slane %v1631, 1
      %v1633 = vadd.f32 %v1631, %v1632
      %v1634 = vmul.f32 %v1525, %v1623
      %v1635 = vmul.f32 %v1527, %v1624
      %v1636 = vadd.f32 %v1634, %v1573
      %v1637 = vadd.f32 %v1635, %v1574
      %v1638 = vmul.f32 %v1636, %v1445
      %v1639 = vmul.f32 %v1637, %v1446
      %v1640 = vadd.f32 %v1638, %v1639
      %v1641 = vrot.slane %v1640, 4
      %v1642 = vadd.f32 %v1640, %v1641
      %v1643 = vrot.slane %v1642, 2
      %v1644 = vadd.f32 %v1642, %v1643
      %v1645 = vrot.slane %v1644, 1
      %v1646 = vadd.f32 %v1644, %v1645
      %v1647 = vmul.f32 %v1529, %v1636
      %v1648 = vmul.f32 %v1531, %v1637
      %v1649 = vadd.f32 %v1647, %v1575
      %v1650 = vadd.f32 %v1648, %v1576
      %v1651 = vmul.f32 %v1649, %v1447
      %v1652 = vmul.f32 %v1650, %v1448
      %v1653 = vadd.f32 %v1651, %v1652
      %v1654 = vrot.slane %v1653, 4
      %v1655 = vadd.f32 %v1653, %v1654
      %v1656 = vrot.slane %v1655, 2
      %v1657 = vadd.f32 %v1655, %v1656
      %v1658 = vrot.slane %v1657, 1
      %v1659 = vadd.f32 %v1657, %v1658
      %v1660 = vmul.f32 %v1533, %v1649
      %v1661 = vmul.f32 %v1535, %v1650
      %v1662 = vadd.f32 %v1660, %v1577
      %v1663 = vadd.f32 %v1661, %v1578
      %v1664 = vmul.f32 %v1662, %v1449
      %v1665 = vmul.f32 %v1663, %v1450
      %v1666 = vadd.f32 %v1664, %v1665
      %v1667 = vrot.slane %v1666, 4
      %v1668 = vadd.f32 %v1666, %v1667
      %v1669 = vrot.slane %v1668, 2
      %v1670 = vadd.f32 %v1668, %v1669
      %v1671 = vrot.slane %v1670, 1
      %v1672 = vadd.f32 %v1670, %v1671
      %v1673 = vmul.f32 %v1537, %v1662
      %v1674 = vmul.f32 %v1539, %v1663
      %v1675 = vadd.f32 %v1673, %v1579
      %v1676 = vadd.f32 %v1674, %v1580
      %v1677 = vmul.f32 %v1675, %v1451
      %v1678 = vmul.f32 %v1676, %v1452
      %v1679 = vadd.f32 %v1677, %v1678
      %v1680 = vrot.slane %v1679, 4
      %v1681 = vadd.f32 %v1679, %v1680
      %v1682 = vrot.slane %v1681, 2
      %v1683 = vadd.f32 %v1681, %v1682
      %v1684 = vrot.slane %v1683, 1
      %v1685 = vadd.f32 %v1683, %v1684
      %v1686 = vsel %vm749, %v1594, %v1607
      %v1687 = vsel %vm751, %v1686, %v1620
      %v1688 = vsel %vm753, %v1687, %v1633
      %v1689 = vsel %vm755, %v1688, %v1646
      %v1690 = vsel %vm757, %v1689, %v1659
      %v1691 = vsel %vm759, %v1690, %v1672
      %v1692 = vsel %vm761, %v1691, %v1685
      %v1693 = vadd.f32 %v1692, %v1581
      %1694 = vst [vmem:[%s430 + $0x18] sm:$0xff] %v1693
      %v1695 = vld [vmem:[%s388 + $0x20] sm:$0xff]
      %v1696 = vld [vmem:[%s398 + $0x20] sm:$0xff]
      %s1697 = scalar_lea.vmem %s409, 256
      %v1698 = vld [vmem:[%s1697] sm:$0xf]
      %v1699 = vld [vmem:[%s1697 + $0x4] sm:$0xf]
      %v1700 = vld [vmem:[%s1697 + $0x8] sm:$0xf]
      %v1701 = vld [vmem:[%s1697 + $0xc] sm:$0xf]
      %v1702 = vld [vmem:[%s1697 + $0x10] sm:$0xf]
      %v1703 = vld [vmem:[%s1697 + $0x14] sm:$0xf]
      %v1704 = vld [vmem:[%s1697 + $0x18] sm:$0xf]
      %v1705 = vld [vmem:[%s1697 + $0x1c] sm:$0xf]
      %v1706 = vld [vmem:[%s1697 + $0x20] sm:$0xf]
      %v1707 = vld [vmem:[%s1697 + $0x24] sm:$0xf]
      %v1708 = vld [vmem:[%s1697 + $0x28] sm:$0xf]
      %v1709 = vld [vmem:[%s1697 + $0x2c] sm:$0xf]
      %v1710 = vld [vmem:[%s1697 + $0x30] sm:$0xf]
      %v1711 = vld [vmem:[%s1697 + $0x34] sm:$0xf]
      %v1712 = vld [vmem:[%s1697 + $0x38] sm:$0xf]
      %v1713 = vld [vmem:[%s1697 + $0x3c] sm:$0xf]
      %v1714 = vunpack.c.l.bf16 %v1698
      %v1715 = vunpack.c.l.bf16 %v1699
      %v1716 = vunpack.c.l.bf16 %v1700
      %v1717 = vunpack.c.l.bf16 %v1701
      %v1718 = vunpack.c.l.bf16 %v1702
      %v1719 = vunpack.c.l.bf16 %v1703
      %v1720 = vunpack.c.l.bf16 %v1704
      %v1721 = vunpack.c.l.bf16 %v1705
      %v1722 = vunpack.c.l.bf16 %v1706
      %v1723 = vunpack.c.l.bf16 %v1707
      %v1724 = vunpack.c.l.bf16 %v1708
      %v1725 = vunpack.c.l.bf16 %v1709
      %v1726 = vunpack.c.l.bf16 %v1710
      %v1727 = vunpack.c.l.bf16 %v1711
      %v1728 = vunpack.c.l.bf16 %v1712
      %v1729 = vunpack.c.l.bf16 %v1713
      %s1730 = scalar_lea.vmem %s420, 256
      %v1731 = vld [vmem:[%s1730] sm:$0xf]
      %v1732 = vld [vmem:[%s1730 + $0x4] sm:$0xf]
      %v1733 = vld [vmem:[%s1730 + $0x8] sm:$0xf]
      %v1734 = vld [vmem:[%s1730 + $0xc] sm:$0xf]
      %v1735 = vld [vmem:[%s1730 + $0x10] sm:$0xf]
      %v1736 = vld [vmem:[%s1730 + $0x14] sm:$0xf]
      %v1737 = vld [vmem:[%s1730 + $0x18] sm:$0xf]
      %v1738 = vld [vmem:[%s1730 + $0x1c] sm:$0xf]
      %v1739 = vld [vmem:[%s1730 + $0x20] sm:$0xf]
      %v1740 = vld [vmem:[%s1730 + $0x24] sm:$0xf]
      %v1741 = vld [vmem:[%s1730 + $0x28] sm:$0xf]
      %v1742 = vld [vmem:[%s1730 + $0x2c] sm:$0xf]
      %v1743 = vld [vmem:[%s1730 + $0x30] sm:$0xf]
      %v1744 = vld [vmem:[%s1730 + $0x34] sm:$0xf]
      %v1745 = vld [vmem:[%s1730 + $0x38] sm:$0xf]
      %v1746 = vld [vmem:[%s1730 + $0x3c] sm:$0xf]
      %v1747 = vunpack.c.l.bf16 %v1731
      %v1748 = vunpack.c.l.bf16 %v1732
      %v1749 = vunpack.c.l.bf16 %v1733
      %v1750 = vunpack.c.l.bf16 %v1734
      %v1751 = vunpack.c.l.bf16 %v1735
      %v1752 = vunpack.c.l.bf16 %v1736
      %v1753 = vunpack.c.l.bf16 %v1737
      %v1754 = vunpack.c.l.bf16 %v1738
      %v1755 = vunpack.c.l.bf16 %v1739
      %v1756 = vunpack.c.l.bf16 %v1740
      %v1757 = vunpack.c.l.bf16 %v1741
      %v1758 = vunpack.c.l.bf16 %v1742
      %v1759 = vunpack.c.l.bf16 %v1743
      %v1760 = vunpack.c.l.bf16 %v1744
      %v1761 = vunpack.c.l.bf16 %v1745
      %v1762 = vunpack.c.l.bf16 %v1746
      %v1763 = vadd.f32 %v1696, %v511
      %vm1764 = vcmp.gt.f32.partialorder %v1763, 20.0
      %v1765 = vmin.f32 %v1763, 20.0
      %v1766 = vmul.f32 %v1765, 1.442695
      %v1767 = vpow.pop %v1766
      %v1768 = vadd.f32 %v1767, 1.0
      %v1769 = vlog2.pop %v1768
      %v1770 = vmul.f32 %v1769, 0.6931472
      %v1771 = vmul.f32 -0.5, %v1767
      %v1772 = vadd.f32 %v1771, 1.0
      %v1773 = vmul.f32 %v1772, %v1767
      %v1774 = vand.u32 2147483647, %v1767
      %vm1775 = vcmp.lt.f32.partialorder %v1774, 0.0004427343
      %v1776 = vsel %vm1775, %v1773, %v1770
      %v1777 = vsel %vm1764, %v1763, %v1776
      %v1779 = vrot.slane %v1777, 1
      %v1780 = vrot.slane %v1777, 2
      %v1781 = vrot.slane %v1777, 3
      %v1782 = vrot.slane %v1777, 4
      %v1783 = vrot.slane %v1777, 5
      %v1784 = vrot.slane %v1777, 6
      %v1785 = vrot.slane %v1777, 7
      %v1786 = vperm.slane %v1777, 0
      %v1787 = vperm.slane %v1779, 0
      %v1788 = vperm.slane %v1780, 0
      %v1789 = vperm.slane %v1781, 0
      %v1790 = vperm.slane %v1782, 0
      %v1791 = vperm.slane %v1783, 0
      %v1792 = vperm.slane %v1784, 0
      %v1793 = vperm.slane %v1785, 0
      %v1802 = vmul.f32 %v1786, %v438
      %v1803 = vmul.f32 %v1786, %v439
      %v1804 = vmul.f32 %v1787, %v438
      %v1805 = vmul.f32 %v1787, %v439
      %v1806 = vmul.f32 %v1788, %v438
      %v1807 = vmul.f32 %v1788, %v439
      %v1808 = vmul.f32 %v1789, %v438
      %v1809 = vmul.f32 %v1789, %v439
      %v1810 = vmul.f32 %v1790, %v438
      %v1811 = vmul.f32 %v1790, %v439
      %v1812 = vmul.f32 %v1791, %v438
      %v1813 = vmul.f32 %v1791, %v439
      %v1814 = vmul.f32 %v1792, %v438
      %v1815 = vmul.f32 %v1792, %v439
      %v1816 = vmul.f32 %v1793, %v438
      %v1817 = vmul.f32 %v1793, %v439
      %v1818 = vmul.f32 %v1802, 1.442695
      %v1819 = vpow.pop %v1818
      %v1820 = vmul.f32 %v1803, 1.442695
      %v1821 = vpow.pop %v1820
      %v1822 = vmul.f32 %v1804, 1.442695
      %v1823 = vpow.pop %v1822
      %v1824 = vmul.f32 %v1805, 1.442695
      %v1825 = vpow.pop %v1824
      %v1826 = vmul.f32 %v1806, 1.442695
      %v1827 = vpow.pop %v1826
      %v1828 = vmul.f32 %v1807, 1.442695
      %v1829 = vpow.pop %v1828
      %v1830 = vmul.f32 %v1808, 1.442695
      %v1831 = vpow.pop %v1830
      %v1832 = vmul.f32 %v1809, 1.442695
      %v1833 = vpow.pop %v1832
      %v1834 = vmul.f32 %v1810, 1.442695
      %v1835 = vpow.pop %v1834
      %v1836 = vmul.f32 %v1811, 1.442695
      %v1837 = vpow.pop %v1836
      %v1838 = vmul.f32 %v1812, 1.442695
      %v1839 = vpow.pop %v1838
      %v1840 = vmul.f32 %v1813, 1.442695
      %v1841 = vpow.pop %v1840
      %v1842 = vmul.f32 %v1814, 1.442695
      %v1843 = vpow.pop %v1842
      %v1844 = vmul.f32 %v1815, 1.442695
      %v1845 = vpow.pop %v1844
      %v1846 = vmul.f32 %v1816, 1.442695
      %v1847 = vpow.pop %v1846
      %v1848 = vmul.f32 %v1817, 1.442695
      %v1849 = vpow.pop %v1848
      %v1850 = vmul.f32 %v1777, %v1695
      %v1852 = vrot.slane %v1850, 1
      %v1853 = vrot.slane %v1850, 2
      %v1854 = vrot.slane %v1850, 3
      %v1855 = vrot.slane %v1850, 4
      %v1856 = vrot.slane %v1850, 5
      %v1857 = vrot.slane %v1850, 6
      %v1858 = vrot.slane %v1850, 7
      %v1859 = vperm.slane %v1850, 0
      %v1860 = vperm.slane %v1852, 0
      %v1861 = vperm.slane %v1853, 0
      %v1862 = vperm.slane %v1854, 0
      %v1863 = vperm.slane %v1855, 0
      %v1864 = vperm.slane %v1856, 0
      %v1865 = vperm.slane %v1857, 0
      %v1866 = vperm.slane %v1858, 0
      %v1875 = vmul.f32 %v1859, %v1714
      %v1876 = vmul.f32 %v1859, %v1715
      %v1877 = vmul.f32 %v1860, %v1716
      %v1878 = vmul.f32 %v1860, %v1717
      %v1879 = vmul.f32 %v1861, %v1718
      %v1880 = vmul.f32 %v1861, %v1719
      %v1881 = vmul.f32 %v1862, %v1720
      %v1882 = vmul.f32 %v1862, %v1721
      %v1883 = vmul.f32 %v1863, %v1722
      %v1884 = vmul.f32 %v1863, %v1723
      %v1885 = vmul.f32 %v1864, %v1724
      %v1886 = vmul.f32 %v1864, %v1725
      %v1887 = vmul.f32 %v1865, %v1726
      %v1888 = vmul.f32 %v1865, %v1727
      %v1889 = vmul.f32 %v1866, %v1728
      %v1890 = vmul.f32 %v1866, %v1729
      %v1891 = vmul.f32 %v642, %v1695
      %v1892 = vmul.f32 %v1819, %v1675
      %v1893 = vmul.f32 %v1821, %v1676
      %v1894 = vadd.f32 %v1892, %v1875
      %v1895 = vadd.f32 %v1893, %v1876
      %v1896 = vmul.f32 %v1894, %v1747
      %v1897 = vmul.f32 %v1895, %v1748
      %v1898 = vadd.f32 %v1896, %v1897
      %v1899 = vrot.slane %v1898, 4
      %v1900 = vadd.f32 %v1898, %v1899
      %v1901 = vrot.slane %v1900, 2
      %v1902 = vadd.f32 %v1900, %v1901
      %v1903 = vrot.slane %v1902, 1
      %v1904 = vadd.f32 %v1902, %v1903
      %v1905 = vmul.f32 %v1823, %v1894
      %v1906 = vmul.f32 %v1825, %v1895
      %v1907 = vadd.f32 %v1905, %v1877
      %v1908 = vadd.f32 %v1906, %v1878
      %v1909 = vmul.f32 %v1907, %v1749
      %v1910 = vmul.f32 %v1908, %v1750
      %v1911 = vadd.f32 %v1909, %v1910
      %v1912 = vrot.slane %v1911, 4
      %v1913 = vadd.f32 %v1911, %v1912
      %v1914 = vrot.slane %v1913, 2
      %v1915 = vadd.f32 %v1913, %v1914
      %v1916 = vrot.slane %v1915, 1
      %v1917 = vadd.f32 %v1915, %v1916
      %v1918 = vmul.f32 %v1827, %v1907
      %v1919 = vmul.f32 %v1829, %v1908
      %v1920 = vadd.f32 %v1918, %v1879
      %v1921 = vadd.f32 %v1919, %v1880
      %v1922 = vmul.f32 %v1920, %v1751
      %v1923 = vmul.f32 %v1921, %v1752
      %v1924 = vadd.f32 %v1922, %v1923
      %v1925 = vrot.slane %v1924, 4
      %v1926 = vadd.f32 %v1924, %v1925
      %v1927 = vrot.slane %v1926, 2
      %v1928 = vadd.f32 %v1926, %v1927
      %v1929 = vrot.slane %v1928, 1
      %v1930 = vadd.f32 %v1928, %v1929
      %v1931 = vmul.f32 %v1831, %v1920
      %v1932 = vmul.f32 %v1833, %v1921
      %v1933 = vadd.f32 %v1931, %v1881
      %v1934 = vadd.f32 %v1932, %v1882
      %v1935 = vmul.f32 %v1933, %v1753
      %v1936 = vmul.f32 %v1934, %v1754
      %v1937 = vadd.f32 %v1935, %v1936
      %v1938 = vrot.slane %v1937, 4
      %v1939 = vadd.f32 %v1937, %v1938
      %v1940 = vrot.slane %v1939, 2
      %v1941 = vadd.f32 %v1939, %v1940
      %v1942 = vrot.slane %v1941, 1
      %v1943 = vadd.f32 %v1941, %v1942
      %v1944 = vmul.f32 %v1835, %v1933
      %v1945 = vmul.f32 %v1837, %v1934
      %v1946 = vadd.f32 %v1944, %v1883
      %v1947 = vadd.f32 %v1945, %v1884
      %v1948 = vmul.f32 %v1946, %v1755
      %v1949 = vmul.f32 %v1947, %v1756
      %v1950 = vadd.f32 %v1948, %v1949
      %v1951 = vrot.slane %v1950, 4
      %v1952 = vadd.f32 %v1950, %v1951
      %v1953 = vrot.slane %v1952, 2
      %v1954 = vadd.f32 %v1952, %v1953
      %v1955 = vrot.slane %v1954, 1
      %v1956 = vadd.f32 %v1954, %v1955
      %v1957 = vmul.f32 %v1839, %v1946
      %v1958 = vmul.f32 %v1841, %v1947
      %v1959 = vadd.f32 %v1957, %v1885
      %v1960 = vadd.f32 %v1958, %v1886
      %v1961 = vmul.f32 %v1959, %v1757
      %v1962 = vmul.f32 %v1960, %v1758
      %v1963 = vadd.f32 %v1961, %v1962
      %v1964 = vrot.slane %v1963, 4
      %v1965 = vadd.f32 %v1963, %v1964
      %v1966 = vrot.slane %v1965, 2
      %v1967 = vadd.f32 %v1965, %v1966
      %v1968 = vrot.slane %v1967, 1
      %v1969 = vadd.f32 %v1967, %v1968
      %v1970 = vmul.f32 %v1843, %v1959
      %v1971 = vmul.f32 %v1845, %v1960
      %v1972 = vadd.f32 %v1970, %v1887
      %v1973 = vadd.f32 %v1971, %v1888
      %v1974 = vmul.f32 %v1972, %v1759
      %v1975 = vmul.f32 %v1973, %v1760
      %v1976 = vadd.f32 %v1974, %v1975
      %v1977 = vrot.slane %v1976, 4
      %v1978 = vadd.f32 %v1976, %v1977
      %v1979 = vrot.slane %v1978, 2
      %v1980 = vadd.f32 %v1978, %v1979
      %v1981 = vrot.slane %v1980, 1
      %v1982 = vadd.f32 %v1980, %v1981
      %v1983 = vmul.f32 %v1847, %v1972
      %v1984 = vmul.f32 %v1849, %v1973
      %v1985 = vadd.f32 %v1983, %v1889
      %v1986 = vadd.f32 %v1984, %v1890
      %v1987 = vmul.f32 %v1985, %v1761
      %v1988 = vmul.f32 %v1986, %v1762
      %v1989 = vadd.f32 %v1987, %v1988
      %v1990 = vrot.slane %v1989, 4
      %v1991 = vadd.f32 %v1989, %v1990
      %v1992 = vrot.slane %v1991, 2
      %v1993 = vadd.f32 %v1991, %v1992
      %v1994 = vrot.slane %v1993, 1
      %v1995 = vadd.f32 %v1993, %v1994
      %v1996 = vsel %vm749, %v1904, %v1917
      %v1997 = vsel %vm751, %v1996, %v1930
      %v1998 = vsel %vm753, %v1997, %v1943
      %v1999 = vsel %vm755, %v1998, %v1956
      %v2000 = vsel %vm757, %v1999, %v1969
      %v2001 = vsel %vm759, %v2000, %v1982
      %v2002 = vsel %vm761, %v2001, %v1995
      %v2003 = vadd.f32 %v2002, %v1891
      %2004 = vst [vmem:[%s430 + $0x20] sm:$0xff] %v2003
      %v2005 = vld [vmem:[%s388 + $0x28] sm:$0xff]
      %v2006 = vld [vmem:[%s398 + $0x28] sm:$0xff]
      %s2007 = scalar_lea.vmem %s409, 320
      %v2008 = vld [vmem:[%s2007] sm:$0xf]
      %v2009 = vld [vmem:[%s2007 + $0x4] sm:$0xf]
      %v2010 = vld [vmem:[%s2007 + $0x8] sm:$0xf]
      %v2011 = vld [vmem:[%s2007 + $0xc] sm:$0xf]
      %v2012 = vld [vmem:[%s2007 + $0x10] sm:$0xf]
      %v2013 = vld [vmem:[%s2007 + $0x14] sm:$0xf]
      %v2014 = vld [vmem:[%s2007 + $0x18] sm:$0xf]
      %v2015 = vld [vmem:[%s2007 + $0x1c] sm:$0xf]
      %v2016 = vld [vmem:[%s2007 + $0x20] sm:$0xf]
      %v2017 = vld [vmem:[%s2007 + $0x24] sm:$0xf]
      %v2018 = vld [vmem:[%s2007 + $0x28] sm:$0xf]
      %v2019 = vld [vmem:[%s2007 + $0x2c] sm:$0xf]
      %v2020 = vld [vmem:[%s2007 + $0x30] sm:$0xf]
      %v2021 = vld [vmem:[%s2007 + $0x34] sm:$0xf]
      %v2022 = vld [vmem:[%s2007 + $0x38] sm:$0xf]
      %v2023 = vld [vmem:[%s2007 + $0x3c] sm:$0xf]
      %v2024 = vunpack.c.l.bf16 %v2008
      %v2025 = vunpack.c.l.bf16 %v2009
      %v2026 = vunpack.c.l.bf16 %v2010
      %v2027 = vunpack.c.l.bf16 %v2011
      %v2028 = vunpack.c.l.bf16 %v2012
      %v2029 = vunpack.c.l.bf16 %v2013
      %v2030 = vunpack.c.l.bf16 %v2014
      %v2031 = vunpack.c.l.bf16 %v2015
      %v2032 = vunpack.c.l.bf16 %v2016
      %v2033 = vunpack.c.l.bf16 %v2017
      %v2034 = vunpack.c.l.bf16 %v2018
      %v2035 = vunpack.c.l.bf16 %v2019
      %v2036 = vunpack.c.l.bf16 %v2020
      %v2037 = vunpack.c.l.bf16 %v2021
      %v2038 = vunpack.c.l.bf16 %v2022
      %v2039 = vunpack.c.l.bf16 %v2023
      %s2040 = scalar_lea.vmem %s420, 320
      %v2041 = vld [vmem:[%s2040] sm:$0xf]
      %v2042 = vld [vmem:[%s2040 + $0x4] sm:$0xf]
      %v2043 = vld [vmem:[%s2040 + $0x8] sm:$0xf]
      %v2044 = vld [vmem:[%s2040 + $0xc] sm:$0xf]
      %v2045 = vld [vmem:[%s2040 + $0x10] sm:$0xf]
      %v2046 = vld [vmem:[%s2040 + $0x14] sm:$0xf]
      %v2047 = vld [vmem:[%s2040 + $0x18] sm:$0xf]
      %v2048 = vld [vmem:[%s2040 + $0x1c] sm:$0xf]
      %v2049 = vld [vmem:[%s2040 + $0x20] sm:$0xf]
      %v2050 = vld [vmem:[%s2040 + $0x24] sm:$0xf]
      %v2051 = vld [vmem:[%s2040 + $0x28] sm:$0xf]
      %v2052 = vld [vmem:[%s2040 + $0x2c] sm:$0xf]
      %v2053 = vld [vmem:[%s2040 + $0x30] sm:$0xf]
      %v2054 = vld [vmem:[%s2040 + $0x34] sm:$0xf]
      %v2055 = vld [vmem:[%s2040 + $0x38] sm:$0xf]
      %v2056 = vld [vmem:[%s2040 + $0x3c] sm:$0xf]
      %v2057 = vunpack.c.l.bf16 %v2041
      %v2058 = vunpack.c.l.bf16 %v2042
      %v2059 = vunpack.c.l.bf16 %v2043
      %v2060 = vunpack.c.l.bf16 %v2044
      %v2061 = vunpack.c.l.bf16 %v2045
      %v2062 = vunpack.c.l.bf16 %v2046
      %v2063 = vunpack.c.l.bf16 %v2047
      %v2064 = vunpack.c.l.bf16 %v2048
      %v2065 = vunpack.c.l.bf16 %v2049
      %v2066 = vunpack.c.l.bf16 %v2050
      %v2067 = vunpack.c.l.bf16 %v2051
      %v2068 = vunpack.c.l.bf16 %v2052
      %v2069 = vunpack.c.l.bf16 %v2053
      %v2070 = vunpack.c.l.bf16 %v2054
      %v2071 = vunpack.c.l.bf16 %v2055
      %v2072 = vunpack.c.l.bf16 %v2056
      %v2073 = vadd.f32 %v2006, %v511
      %vm2074 = vcmp.gt.f32.partialorder %v2073, 20.0
      %v2075 = vmin.f32 %v2073, 20.0
      %v2076 = vmul.f32 %v2075, 1.442695
      %v2077 = vpow.pop %v2076
      %v2078 = vadd.f32 %v2077, 1.0
      %v2079 = vlog2.pop %v2078
      %v2080 = vmul.f32 %v2079, 0.6931472
      %v2081 = vmul.f32 -0.5, %v2077
      %v2082 = vadd.f32 %v2081, 1.0
      %v2083 = vmul.f32 %v2082, %v2077
      %v2084 = vand.u32 2147483647, %v2077
      %vm2085 = vcmp.lt.f32.partialorder %v2084, 0.0004427343
      %v2086 = vsel %vm2085, %v2083, %v2080
      %v2087 = vsel %vm2074, %v2073, %v2086
      %v2089 = vrot.slane %v2087, 1
      %v2090 = vrot.slane %v2087, 2
      %v2091 = vrot.slane %v2087, 3
      %v2092 = vrot.slane %v2087, 4
      %v2093 = vrot.slane %v2087, 5
      %v2094 = vrot.slane %v2087, 6
      %v2095 = vrot.slane %v2087, 7
      %v2096 = vperm.slane %v2087, 0
      %v2097 = vperm.slane %v2089, 0
      %v2098 = vperm.slane %v2090, 0
      %v2099 = vperm.slane %v2091, 0
      %v2100 = vperm.slane %v2092, 0
      %v2101 = vperm.slane %v2093, 0
      %v2102 = vperm.slane %v2094, 0
      %v2103 = vperm.slane %v2095, 0
      %v2112 = vmul.f32 %v2096, %v438
      %v2113 = vmul.f32 %v2096, %v439
      %v2114 = vmul.f32 %v2097, %v438
      %v2115 = vmul.f32 %v2097, %v439
      %v2116 = vmul.f32 %v2098, %v438
      %v2117 = vmul.f32 %v2098, %v439
      %v2118 = vmul.f32 %v2099, %v438
      %v2119 = vmul.f32 %v2099, %v439
      %v2120 = vmul.f32 %v2100, %v438
      %v2121 = vmul.f32 %v2100, %v439
      %v2122 = vmul.f32 %v2101, %v438
      %v2123 = vmul.f32 %v2101, %v439
      %v2124 = vmul.f32 %v2102, %v438
      %v2125 = vmul.f32 %v2102, %v439
      %v2126 = vmul.f32 %v2103, %v438
      %v2127 = vmul.f32 %v2103, %v439
      %v2128 = vmul.f32 %v2112, 1.442695
      %v2129 = vpow.pop %v2128
      %v2130 = vmul.f32 %v2113, 1.442695
      %v2131 = vpow.pop %v2130
      %v2132 = vmul.f32 %v2114, 1.442695
      %v2133 = vpow.pop %v2132
      %v2134 = vmul.f32 %v2115, 1.442695
      %v2135 = vpow.pop %v2134
      %v2136 = vmul.f32 %v2116, 1.442695
      %v2137 = vpow.pop %v2136
      %v2138 = vmul.f32 %v2117, 1.442695
      %v2139 = vpow.pop %v2138
      %v2140 = vmul.f32 %v2118, 1.442695
      %v2141 = vpow.pop %v2140
      %v2142 = vmul.f32 %v2119, 1.442695
      %v2143 = vpow.pop %v2142
      %v2144 = vmul.f32 %v2120, 1.442695
      %v2145 = vpow.pop %v2144
      %v2146 = vmul.f32 %v2121, 1.442695
      %v2147 = vpow.pop %v2146
      %v2148 = vmul.f32 %v2122, 1.442695
      %v2149 = vpow.pop %v2148
      %v2150 = vmul.f32 %v2123, 1.442695
      %v2151 = vpow.pop %v2150
      %v2152 = vmul.f32 %v2124, 1.442695
      %v2153 = vpow.pop %v2152
      %v2154 = vmul.f32 %v2125, 1.442695
      %v2155 = vpow.pop %v2154
      %v2156 = vmul.f32 %v2126, 1.442695
      %v2157 = vpow.pop %v2156
      %v2158 = vmul.f32 %v2127, 1.442695
      %v2159 = vpow.pop %v2158
      %v2160 = vmul.f32 %v2087, %v2005
      %v2162 = vrot.slane %v2160, 1
      %v2163 = vrot.slane %v2160, 2
      %v2164 = vrot.slane %v2160, 3
      %v2165 = vrot.slane %v2160, 4
      %v2166 = vrot.slane %v2160, 5
      %v2167 = vrot.slane %v2160, 6
      %v2168 = vrot.slane %v2160, 7
      %v2169 = vperm.slane %v2160, 0
      %v2170 = vperm.slane %v2162, 0
      %v2171 = vperm.slane %v2163, 0
      %v2172 = vperm.slane %v2164, 0
      %v2173 = vperm.slane %v2165, 0
      %v2174 = vperm.slane %v2166, 0
      %v2175 = vperm.slane %v2167, 0
      %v2176 = vperm.slane %v2168, 0
      %v2185 = vmul.f32 %v2169, %v2024
      %v2186 = vmul.f32 %v2169, %v2025
      %v2187 = vmul.f32 %v2170, %v2026
      %v2188 = vmul.f32 %v2170, %v2027
      %v2189 = vmul.f32 %v2171, %v2028
      %v2190 = vmul.f32 %v2171, %v2029
      %v2191 = vmul.f32 %v2172, %v2030
      %v2192 = vmul.f32 %v2172, %v2031
      %v2193 = vmul.f32 %v2173, %v2032
      %v2194 = vmul.f32 %v2173, %v2033
      %v2195 = vmul.f32 %v2174, %v2034
      %v2196 = vmul.f32 %v2174, %v2035
      %v2197 = vmul.f32 %v2175, %v2036
      %v2198 = vmul.f32 %v2175, %v2037
      %v2199 = vmul.f32 %v2176, %v2038
      %v2200 = vmul.f32 %v2176, %v2039
      %v2201 = vmul.f32 %v642, %v2005
      %v2202 = vmul.f32 %v2129, %v1985
      %v2203 = vmul.f32 %v2131, %v1986
      %v2204 = vadd.f32 %v2202, %v2185
      %v2205 = vadd.f32 %v2203, %v2186
      %v2206 = vmul.f32 %v2204, %v2057
      %v2207 = vmul.f32 %v2205, %v2058
      %v2208 = vadd.f32 %v2206, %v2207
      %v2209 = vrot.slane %v2208, 4
      %v2210 = vadd.f32 %v2208, %v2209
      %v2211 = vrot.slane %v2210, 2
      %v2212 = vadd.f32 %v2210, %v2211
      %v2213 = vrot.slane %v2212, 1
      %v2214 = vadd.f32 %v2212, %v2213
      %v2215 = vmul.f32 %v2133, %v2204
      %v2216 = vmul.f32 %v2135, %v2205
      %v2217 = vadd.f32 %v2215, %v2187
      %v2218 = vadd.f32 %v2216, %v2188
      %v2219 = vmul.f32 %v2217, %v2059
      %v2220 = vmul.f32 %v2218, %v2060
      %v2221 = vadd.f32 %v2219, %v2220
      %v2222 = vrot.slane %v2221, 4
      %v2223 = vadd.f32 %v2221, %v2222
      %v2224 = vrot.slane %v2223, 2
      %v2225 = vadd.f32 %v2223, %v2224
      %v2226 = vrot.slane %v2225, 1
      %v2227 = vadd.f32 %v2225, %v2226
      %v2228 = vmul.f32 %v2137, %v2217
      %v2229 = vmul.f32 %v2139, %v2218
      %v2230 = vadd.f32 %v2228, %v2189
      %v2231 = vadd.f32 %v2229, %v2190
      %v2232 = vmul.f32 %v2230, %v2061
      %v2233 = vmul.f32 %v2231, %v2062
      %v2234 = vadd.f32 %v2232, %v2233
      %v2235 = vrot.slane %v2234, 4
      %v2236 = vadd.f32 %v2234, %v2235
      %v2237 = vrot.slane %v2236, 2
      %v2238 = vadd.f32 %v2236, %v2237
      %v2239 = vrot.slane %v2238, 1
      %v2240 = vadd.f32 %v2238, %v2239
      %v2241 = vmul.f32 %v2141, %v2230
      %v2242 = vmul.f32 %v2143, %v2231
      %v2243 = vadd.f32 %v2241, %v2191
      %v2244 = vadd.f32 %v2242, %v2192
      %v2245 = vmul.f32 %v2243, %v2063
      %v2246 = vmul.f32 %v2244, %v2064
      %v2247 = vadd.f32 %v2245, %v2246
      %v2248 = vrot.slane %v2247, 4
      %v2249 = vadd.f32 %v2247, %v2248
      %v2250 = vrot.slane %v2249, 2
      %v2251 = vadd.f32 %v2249, %v2250
      %v2252 = vrot.slane %v2251, 1
      %v2253 = vadd.f32 %v2251, %v2252
      %v2254 = vmul.f32 %v2145, %v2243
      %v2255 = vmul.f32 %v2147, %v2244
      %v2256 = vadd.f32 %v2254, %v2193
      %v2257 = vadd.f32 %v2255, %v2194
      %v2258 = vmul.f32 %v2256, %v2065
      %v2259 = vmul.f32 %v2257, %v2066
      %v2260 = vadd.f32 %v2258, %v2259
      %v2261 = vrot.slane %v2260, 4
      %v2262 = vadd.f32 %v2260, %v2261
      %v2263 = vrot.slane %v2262, 2
      %v2264 = vadd.f32 %v2262, %v2263
      %v2265 = vrot.slane %v2264, 1
      %v2266 = vadd.f32 %v2264, %v2265
      %v2267 = vmul.f32 %v2149, %v2256
      %v2268 = vmul.f32 %v2151, %v2257
      %v2269 = vadd.f32 %v2267, %v2195
      %v2270 = vadd.f32 %v2268, %v2196
      %v2271 = vmul.f32 %v2269, %v2067
      %v2272 = vmul.f32 %v2270, %v2068
      %v2273 = vadd.f32 %v2271, %v2272
      %v2274 = vrot.slane %v2273, 4
      %v2275 = vadd.f32 %v2273, %v2274
      %v2276 = vrot.slane %v2275, 2
      %v2277 = vadd.f32 %v2275, %v2276
      %v2278 = vrot.slane %v2277, 1
      %v2279 = vadd.f32 %v2277, %v2278
      %v2280 = vmul.f32 %v2153, %v2269
      %v2281 = vmul.f32 %v2155, %v2270
      %v2282 = vadd.f32 %v2280, %v2197
      %v2283 = vadd.f32 %v2281, %v2198
      %v2284 = vmul.f32 %v2282, %v2069
      %v2285 = vmul.f32 %v2283, %v2070
      %v2286 = vadd.f32 %v2284, %v2285
      %v2287 = vrot.slane %v2286, 4
      %v2288 = vadd.f32 %v2286, %v2287
      %v2289 = vrot.slane %v2288, 2
      %v2290 = vadd.f32 %v2288, %v2289
      %v2291 = vrot.slane %v2290, 1
      %v2292 = vadd.f32 %v2290, %v2291
      %v2293 = vmul.f32 %v2157, %v2282
      %v2294 = vmul.f32 %v2159, %v2283
      %v2295 = vadd.f32 %v2293, %v2199
      %v2296 = vadd.f32 %v2294, %v2200
      %v2297 = vmul.f32 %v2295, %v2071
      %v2298 = vmul.f32 %v2296, %v2072
      %v2299 = vadd.f32 %v2297, %v2298
      %v2300 = vrot.slane %v2299, 4
      %v2301 = vadd.f32 %v2299, %v2300
      %v2302 = vrot.slane %v2301, 2
      %v2303 = vadd.f32 %v2301, %v2302
      %v2304 = vrot.slane %v2303, 1
      %v2305 = vadd.f32 %v2303, %v2304
      %v2306 = vsel %vm749, %v2214, %v2227
      %v2307 = vsel %vm751, %v2306, %v2240
      %v2308 = vsel %vm753, %v2307, %v2253
      %v2309 = vsel %vm755, %v2308, %v2266
      %v2310 = vsel %vm757, %v2309, %v2279
      %v2311 = vsel %vm759, %v2310, %v2292
      %v2312 = vsel %vm761, %v2311, %v2305
      %v2313 = vadd.f32 %v2312, %v2201
      %2314 = vst [vmem:[%s430 + $0x28] sm:$0xff] %v2313
      %v2315 = vld [vmem:[%s388 + $0x30] sm:$0xff]
      %v2316 = vld [vmem:[%s398 + $0x30] sm:$0xff]
      %s2317 = scalar_lea.vmem %s409, 384
      %v2318 = vld [vmem:[%s2317] sm:$0xf]
      %v2319 = vld [vmem:[%s2317 + $0x4] sm:$0xf]
      %v2320 = vld [vmem:[%s2317 + $0x8] sm:$0xf]
      %v2321 = vld [vmem:[%s2317 + $0xc] sm:$0xf]
      %v2322 = vld [vmem:[%s2317 + $0x10] sm:$0xf]
      %v2323 = vld [vmem:[%s2317 + $0x14] sm:$0xf]
      %v2324 = vld [vmem:[%s2317 + $0x18] sm:$0xf]
      %v2325 = vld [vmem:[%s2317 + $0x1c] sm:$0xf]
      %v2326 = vld [vmem:[%s2317 + $0x20] sm:$0xf]
      %v2327 = vld [vmem:[%s2317 + $0x24] sm:$0xf]
      %v2328 = vld [vmem:[%s2317 + $0x28] sm:$0xf]
      %v2329 = vld [vmem:[%s2317 + $0x2c] sm:$0xf]
      %v2330 = vld [vmem:[%s2317 + $0x30] sm:$0xf]
      %v2331 = vld [vmem:[%s2317 + $0x34] sm:$0xf]
      %v2332 = vld [vmem:[%s2317 + $0x38] sm:$0xf]
      %v2333 = vld [vmem:[%s2317 + $0x3c] sm:$0xf]
      %v2334 = vunpack.c.l.bf16 %v2318
      %v2335 = vunpack.c.l.bf16 %v2319
      %v2336 = vunpack.c.l.bf16 %v2320
      %v2337 = vunpack.c.l.bf16 %v2321
      %v2338 = vunpack.c.l.bf16 %v2322
      %v2339 = vunpack.c.l.bf16 %v2323
      %v2340 = vunpack.c.l.bf16 %v2324
      %v2341 = vunpack.c.l.bf16 %v2325
      %v2342 = vunpack.c.l.bf16 %v2326
      %v2343 = vunpack.c.l.bf16 %v2327
      %v2344 = vunpack.c.l.bf16 %v2328
      %v2345 = vunpack.c.l.bf16 %v2329
      %v2346 = vunpack.c.l.bf16 %v2330
      %v2347 = vunpack.c.l.bf16 %v2331
      %v2348 = vunpack.c.l.bf16 %v2332
      %v2349 = vunpack.c.l.bf16 %v2333
      %s2350 = scalar_lea.vmem %s420, 384
      %v2351 = vld [vmem:[%s2350] sm:$0xf]
      %v2352 = vld [vmem:[%s2350 + $0x4] sm:$0xf]
      %v2353 = vld [vmem:[%s2350 + $0x8] sm:$0xf]
      %v2354 = vld [vmem:[%s2350 + $0xc] sm:$0xf]
      %v2355 = vld [vmem:[%s2350 + $0x10] sm:$0xf]
      %v2356 = vld [vmem:[%s2350 + $0x14] sm:$0xf]
      %v2357 = vld [vmem:[%s2350 + $0x18] sm:$0xf]
      %v2358 = vld [vmem:[%s2350 + $0x1c] sm:$0xf]
      %v2359 = vld [vmem:[%s2350 + $0x20] sm:$0xf]
      %v2360 = vld [vmem:[%s2350 + $0x24] sm:$0xf]
      %v2361 = vld [vmem:[%s2350 + $0x28] sm:$0xf]
      %v2362 = vld [vmem:[%s2350 + $0x2c] sm:$0xf]
      %v2363 = vld [vmem:[%s2350 + $0x30] sm:$0xf]
      %v2364 = vld [vmem:[%s2350 + $0x34] sm:$0xf]
      %v2365 = vld [vmem:[%s2350 + $0x38] sm:$0xf]
      %v2366 = vld [vmem:[%s2350 + $0x3c] sm:$0xf]
      %v2367 = vunpack.c.l.bf16 %v2351
      %v2368 = vunpack.c.l.bf16 %v2352
      %v2369 = vunpack.c.l.bf16 %v2353
      %v2370 = vunpack.c.l.bf16 %v2354
      %v2371 = vunpack.c.l.bf16 %v2355
      %v2372 = vunpack.c.l.bf16 %v2356
      %v2373 = vunpack.c.l.bf16 %v2357
      %v2374 = vunpack.c.l.bf16 %v2358
      %v2375 = vunpack.c.l.bf16 %v2359
      %v2376 = vunpack.c.l.bf16 %v2360
      %v2377 = vunpack.c.l.bf16 %v2361
      %v2378 = vunpack.c.l.bf16 %v2362
      %v2379 = vunpack.c.l.bf16 %v2363
      %v2380 = vunpack.c.l.bf16 %v2364
      %v2381 = vunpack.c.l.bf16 %v2365
      %v2382 = vunpack.c.l.bf16 %v2366
      %v2383 = vadd.f32 %v2316, %v511
      %vm2384 = vcmp.gt.f32.partialorder %v2383, 20.0
      %v2385 = vmin.f32 %v2383, 20.0
      %v2386 = vmul.f32 %v2385, 1.442695
      %v2387 = vpow.pop %v2386
      %v2388 = vadd.f32 %v2387, 1.0
      %v2389 = vlog2.pop %v2388
      %v2390 = vmul.f32 %v2389, 0.6931472
      %v2391 = vmul.f32 -0.5, %v2387
      %v2392 = vadd.f32 %v2391, 1.0
      %v2393 = vmul.f32 %v2392, %v2387
      %v2394 = vand.u32 2147483647, %v2387
      %vm2395 = vcmp.lt.f32.partialorder %v2394, 0.0004427343
      %v2396 = vsel %vm2395, %v2393, %v2390
      %v2397 = vsel %vm2384, %v2383, %v2396
      %v2399 = vrot.slane %v2397, 1
      %v2400 = vrot.slane %v2397, 2
      %v2401 = vrot.slane %v2397, 3
      %v2402 = vrot.slane %v2397, 4
      %v2403 = vrot.slane %v2397, 5
      %v2404 = vrot.slane %v2397, 6
      %v2405 = vrot.slane %v2397, 7
      %v2406 = vperm.slane %v2397, 0
      %v2407 = vperm.slane %v2399, 0
      %v2408 = vperm.slane %v2400, 0
      %v2409 = vperm.slane %v2401, 0
      %v2410 = vperm.slane %v2402, 0
      %v2411 = vperm.slane %v2403, 0
      %v2412 = vperm.slane %v2404, 0
      %v2413 = vperm.slane %v2405, 0
      %v2422 = vmul.f32 %v2406, %v438
      %v2423 = vmul.f32 %v2406, %v439
      %v2424 = vmul.f32 %v2407, %v438
      %v2425 = vmul.f32 %v2407, %v439
      %v2426 = vmul.f32 %v2408, %v438
      %v2427 = vmul.f32 %v2408, %v439
      %v2428 = vmul.f32 %v2409, %v438
      %v2429 = vmul.f32 %v2409, %v439
      %v2430 = vmul.f32 %v2410, %v438
      %v2431 = vmul.f32 %v2410, %v439
      %v2432 = vmul.f32 %v2411, %v438
      %v2433 = vmul.f32 %v2411, %v439
      %v2434 = vmul.f32 %v2412, %v438
      %v2435 = vmul.f32 %v2412, %v439
      %v2436 = vmul.f32 %v2413, %v438
      %v2437 = vmul.f32 %v2413, %v439
      %v2438 = vmul.f32 %v2422, 1.442695
      %v2439 = vpow.pop %v2438
      %v2440 = vmul.f32 %v2423, 1.442695
      %v2441 = vpow.pop %v2440
      %v2442 = vmul.f32 %v2424, 1.442695
      %v2443 = vpow.pop %v2442
      %v2444 = vmul.f32 %v2425, 1.442695
      %v2445 = vpow.pop %v2444
      %v2446 = vmul.f32 %v2426, 1.442695
      %v2447 = vpow.pop %v2446
      %v2448 = vmul.f32 %v2427, 1.442695
      %v2449 = vpow.pop %v2448
      %v2450 = vmul.f32 %v2428, 1.442695
      %v2451 = vpow.pop %v2450
      %v2452 = vmul.f32 %v2429, 1.442695
      %v2453 = vpow.pop %v2452
      %v2454 = vmul.f32 %v2430, 1.442695
      %v2455 = vpow.pop %v2454
      %v2456 = vmul.f32 %v2431, 1.442695
      %v2457 = vpow.pop %v2456
      %v2458 = vmul.f32 %v2432, 1.442695
      %v2459 = vpow.pop %v2458
      %v2460 = vmul.f32 %v2433, 1.442695
      %v2461 = vpow.pop %v2460
      %v2462 = vmul.f32 %v2434, 1.442695
      %v2463 = vpow.pop %v2462
      %v2464 = vmul.f32 %v2435, 1.442695
      %v2465 = vpow.pop %v2464
      %v2466 = vmul.f32 %v2436, 1.442695
      %v2467 = vpow.pop %v2466
      %v2468 = vmul.f32 %v2437, 1.442695
      %v2469 = vpow.pop %v2468
      %v2470 = vmul.f32 %v2397, %v2315
      %v2472 = vrot.slane %v2470, 1
      %v2473 = vrot.slane %v2470, 2
      %v2474 = vrot.slane %v2470, 3
      %v2475 = vrot.slane %v2470, 4
      %v2476 = vrot.slane %v2470, 5
      %v2477 = vrot.slane %v2470, 6
      %v2478 = vrot.slane %v2470, 7
      %v2479 = vperm.slane %v2470, 0
      %v2480 = vperm.slane %v2472, 0
      %v2481 = vperm.slane %v2473, 0
      %v2482 = vperm.slane %v2474, 0
      %v2483 = vperm.slane %v2475, 0
      %v2484 = vperm.slane %v2476, 0
      %v2485 = vperm.slane %v2477, 0
      %v2486 = vperm.slane %v2478, 0
      %v2495 = vmul.f32 %v2479, %v2334
      %v2496 = vmul.f32 %v2479, %v2335
      %v2497 = vmul.f32 %v2480, %v2336
      %v2498 = vmul.f32 %v2480, %v2337
      %v2499 = vmul.f32 %v2481, %v2338
      %v2500 = vmul.f32 %v2481, %v2339
      %v2501 = vmul.f32 %v2482, %v2340
      %v2502 = vmul.f32 %v2482, %v2341
      %v2503 = vmul.f32 %v2483, %v2342
      %v2504 = vmul.f32 %v2483, %v2343
      %v2505 = vmul.f32 %v2484, %v2344
      %v2506 = vmul.f32 %v2484, %v2345
      %v2507 = vmul.f32 %v2485, %v2346
      %v2508 = vmul.f32 %v2485, %v2347
      %v2509 = vmul.f32 %v2486, %v2348
      %v2510 = vmul.f32 %v2486, %v2349
      %v2511 = vmul.f32 %v642, %v2315
      %v2512 = vmul.f32 %v2439, %v2295
      %v2513 = vmul.f32 %v2441, %v2296
      %v2514 = vadd.f32 %v2512, %v2495
      %v2515 = vadd.f32 %v2513, %v2496
      %v2516 = vmul.f32 %v2514, %v2367
      %v2517 = vmul.f32 %v2515, %v2368
      %v2518 = vadd.f32 %v2516, %v2517
      %v2519 = vrot.slane %v2518, 4
      %v2520 = vadd.f32 %v2518, %v2519
      %v2521 = vrot.slane %v2520, 2
      %v2522 = vadd.f32 %v2520, %v2521
      %v2523 = vrot.slane %v2522, 1
      %v2524 = vadd.f32 %v2522, %v2523
      %v2525 = vmul.f32 %v2443, %v2514
      %v2526 = vmul.f32 %v2445, %v2515
      %v2527 = vadd.f32 %v2525, %v2497
      %v2528 = vadd.f32 %v2526, %v2498
      %v2529 = vmul.f32 %v2527, %v2369
      %v2530 = vmul.f32 %v2528, %v2370
      %v2531 = vadd.f32 %v2529, %v2530
      %v2532 = vrot.slane %v2531, 4
      %v2533 = vadd.f32 %v2531, %v2532
      %v2534 = vrot.slane %v2533, 2
      %v2535 = vadd.f32 %v2533, %v2534
      %v2536 = vrot.slane %v2535, 1
      %v2537 = vadd.f32 %v2535, %v2536
      %v2538 = vmul.f32 %v2447, %v2527
      %v2539 = vmul.f32 %v2449, %v2528
      %v2540 = vadd.f32 %v2538, %v2499
      %v2541 = vadd.f32 %v2539, %v2500
      %v2542 = vmul.f32 %v2540, %v2371
      %v2543 = vmul.f32 %v2541, %v2372
      %v2544 = vadd.f32 %v2542, %v2543
      %v2545 = vrot.slane %v2544, 4
      %v2546 = vadd.f32 %v2544, %v2545
      %v2547 = vrot.slane %v2546, 2
      %v2548 = vadd.f32 %v2546, %v2547
      %v2549 = vrot.slane %v2548, 1
      %v2550 = vadd.f32 %v2548, %v2549
      %v2551 = vmul.f32 %v2451, %v2540
      %v2552 = vmul.f32 %v2453, %v2541
      %v2553 = vadd.f32 %v2551, %v2501
      %v2554 = vadd.f32 %v2552, %v2502
      %v2555 = vmul.f32 %v2553, %v2373
      %v2556 = vmul.f32 %v2554, %v2374
      %v2557 = vadd.f32 %v2555, %v2556
      %v2558 = vrot.slane %v2557, 4
      %v2559 = vadd.f32 %v2557, %v2558
      %v2560 = vrot.slane %v2559, 2
      %v2561 = vadd.f32 %v2559, %v2560
      %v2562 = vrot.slane %v2561, 1
      %v2563 = vadd.f32 %v2561, %v2562
      %v2564 = vmul.f32 %v2455, %v2553
      %v2565 = vmul.f32 %v2457, %v2554
      %v2566 = vadd.f32 %v2564, %v2503
      %v2567 = vadd.f32 %v2565, %v2504
      %v2568 = vmul.f32 %v2566, %v2375
      %v2569 = vmul.f32 %v2567, %v2376
      %v2570 = vadd.f32 %v2568, %v2569
      %v2571 = vrot.slane %v2570, 4
      %v2572 = vadd.f32 %v2570, %v2571
      %v2573 = vrot.slane %v2572, 2
      %v2574 = vadd.f32 %v2572, %v2573
      %v2575 = vrot.slane %v2574, 1
      %v2576 = vadd.f32 %v2574, %v2575
      %v2577 = vmul.f32 %v2459, %v2566
      %v2578 = vmul.f32 %v2461, %v2567
      %v2579 = vadd.f32 %v2577, %v2505
      %v2580 = vadd.f32 %v2578, %v2506
      %v2581 = vmul.f32 %v2579, %v2377
      %v2582 = vmul.f32 %v2580, %v2378
      %v2583 = vadd.f32 %v2581, %v2582
      %v2584 = vrot.slane %v2583, 4
      %v2585 = vadd.f32 %v2583, %v2584
      %v2586 = vrot.slane %v2585, 2
      %v2587 = vadd.f32 %v2585, %v2586
      %v2588 = vrot.slane %v2587, 1
      %v2589 = vadd.f32 %v2587, %v2588
      %v2590 = vmul.f32 %v2463, %v2579
      %v2591 = vmul.f32 %v2465, %v2580
      %v2592 = vadd.f32 %v2590, %v2507
      %v2593 = vadd.f32 %v2591, %v2508
      %v2594 = vmul.f32 %v2592, %v2379
      %v2595 = vmul.f32 %v2593, %v2380
      %v2596 = vadd.f32 %v2594, %v2595
      %v2597 = vrot.slane %v2596, 4
      %v2598 = vadd.f32 %v2596, %v2597
      %v2599 = vrot.slane %v2598, 2
      %v2600 = vadd.f32 %v2598, %v2599
      %v2601 = vrot.slane %v2600, 1
      %v2602 = vadd.f32 %v2600, %v2601
      %v2603 = vmul.f32 %v2467, %v2592
      %v2604 = vmul.f32 %v2469, %v2593
      %v2605 = vadd.f32 %v2603, %v2509
      %v2606 = vadd.f32 %v2604, %v2510
      %v2607 = vmul.f32 %v2605, %v2381
      %v2608 = vmul.f32 %v2606, %v2382
      %v2609 = vadd.f32 %v2607, %v2608
      %v2610 = vrot.slane %v2609, 4
      %v2611 = vadd.f32 %v2609, %v2610
      %v2612 = vrot.slane %v2611, 2
      %v2613 = vadd.f32 %v2611, %v2612
      %v2614 = vrot.slane %v2613, 1
      %v2615 = vadd.f32 %v2613, %v2614
      %v2616 = vsel %vm749, %v2524, %v2537
      %v2617 = vsel %vm751, %v2616, %v2550
      %v2618 = vsel %vm753, %v2617, %v2563
      %v2619 = vsel %vm755, %v2618, %v2576
      %v2620 = vsel %vm757, %v2619, %v2589
      %v2621 = vsel %vm759, %v2620, %v2602
      %v2622 = vsel %vm761, %v2621, %v2615
      %v2623 = vadd.f32 %v2622, %v2511
      %2624 = vst [vmem:[%s430 + $0x30] sm:$0xff] %v2623
      %v2625 = vld [vmem:[%s388 + $0x38] sm:$0xff]
      %v2626 = vld [vmem:[%s398 + $0x38] sm:$0xff]
      %s2627 = scalar_lea.vmem %s409, 448
      %v2628 = vld [vmem:[%s2627] sm:$0xf]
      %v2629 = vld [vmem:[%s2627 + $0x4] sm:$0xf]
      %v2630 = vld [vmem:[%s2627 + $0x8] sm:$0xf]
      %v2631 = vld [vmem:[%s2627 + $0xc] sm:$0xf]
      %v2632 = vld [vmem:[%s2627 + $0x10] sm:$0xf]
      %v2633 = vld [vmem:[%s2627 + $0x14] sm:$0xf]
      %v2634 = vld [vmem:[%s2627 + $0x18] sm:$0xf]
      %v2635 = vld [vmem:[%s2627 + $0x1c] sm:$0xf]
      %v2636 = vld [vmem:[%s2627 + $0x20] sm:$0xf]
      %v2637 = vld [vmem:[%s2627 + $0x24] sm:$0xf]
      %v2638 = vld [vmem:[%s2627 + $0x28] sm:$0xf]
      %v2639 = vld [vmem:[%s2627 + $0x2c] sm:$0xf]
      %v2640 = vld [vmem:[%s2627 + $0x30] sm:$0xf]
      %v2641 = vld [vmem:[%s2627 + $0x34] sm:$0xf]
      %v2642 = vld [vmem:[%s2627 + $0x38] sm:$0xf]
      %v2643 = vld [vmem:[%s2627 + $0x3c] sm:$0xf]
      %v2644 = vunpack.c.l.bf16 %v2628
      %v2645 = vunpack.c.l.bf16 %v2629
      %v2646 = vunpack.c.l.bf16 %v2630
      %v2647 = vunpack.c.l.bf16 %v2631
      %v2648 = vunpack.c.l.bf16 %v2632
      %v2649 = vunpack.c.l.bf16 %v2633
      %v2650 = vunpack.c.l.bf16 %v2634
      %v2651 = vunpack.c.l.bf16 %v2635
      %v2652 = vunpack.c.l.bf16 %v2636
      %v2653 = vunpack.c.l.bf16 %v2637
      %v2654 = vunpack.c.l.bf16 %v2638
      %v2655 = vunpack.c.l.bf16 %v2639
      %v2656 = vunpack.c.l.bf16 %v2640
      %v2657 = vunpack.c.l.bf16 %v2641
      %v2658 = vunpack.c.l.bf16 %v2642
      %v2659 = vunpack.c.l.bf16 %v2643
      %s2660 = scalar_lea.vmem %s420, 448
      %v2661 = vld [vmem:[%s2660] sm:$0xf]
      %v2662 = vld [vmem:[%s2660 + $0x4] sm:$0xf]
      %v2663 = vld [vmem:[%s2660 + $0x8] sm:$0xf]
      %v2664 = vld [vmem:[%s2660 + $0xc] sm:$0xf]
      %v2665 = vld [vmem:[%s2660 + $0x10] sm:$0xf]
      %v2666 = vld [vmem:[%s2660 + $0x14] sm:$0xf]
      %v2667 = vld [vmem:[%s2660 + $0x18] sm:$0xf]
      %v2668 = vld [vmem:[%s2660 + $0x1c] sm:$0xf]
      %v2669 = vld [vmem:[%s2660 + $0x20] sm:$0xf]
      %v2670 = vld [vmem:[%s2660 + $0x24] sm:$0xf]
      %v2671 = vld [vmem:[%s2660 + $0x28] sm:$0xf]
      %v2672 = vld [vmem:[%s2660 + $0x2c] sm:$0xf]
      %v2673 = vld [vmem:[%s2660 + $0x30] sm:$0xf]
      %v2674 = vld [vmem:[%s2660 + $0x34] sm:$0xf]
      %v2675 = vld [vmem:[%s2660 + $0x38] sm:$0xf]
      %v2676 = vld [vmem:[%s2660 + $0x3c] sm:$0xf]
      %v2677 = vunpack.c.l.bf16 %v2661
      %v2678 = vunpack.c.l.bf16 %v2662
      %v2679 = vunpack.c.l.bf16 %v2663
      %v2680 = vunpack.c.l.bf16 %v2664
      %v2681 = vunpack.c.l.bf16 %v2665
      %v2682 = vunpack.c.l.bf16 %v2666
      %v2683 = vunpack.c.l.bf16 %v2667
      %v2684 = vunpack.c.l.bf16 %v2668
      %v2685 = vunpack.c.l.bf16 %v2669
      %v2686 = vunpack.c.l.bf16 %v2670
      %v2687 = vunpack.c.l.bf16 %v2671
      %v2688 = vunpack.c.l.bf16 %v2672
      %v2689 = vunpack.c.l.bf16 %v2673
      %v2690 = vunpack.c.l.bf16 %v2674
      %v2691 = vunpack.c.l.bf16 %v2675
      %v2692 = vunpack.c.l.bf16 %v2676
      %v2693 = vadd.f32 %v2626, %v511
      %vm2694 = vcmp.gt.f32.partialorder %v2693, 20.0
      %v2695 = vmin.f32 %v2693, 20.0
      %v2696 = vmul.f32 %v2695, 1.442695
      %v2697 = vpow.pop %v2696
      %v2698 = vadd.f32 %v2697, 1.0
      %v2699 = vlog2.pop %v2698
      %v2700 = vmul.f32 %v2699, 0.6931472
      %v2701 = vmul.f32 -0.5, %v2697
      %v2702 = vadd.f32 %v2701, 1.0
      %v2703 = vmul.f32 %v2702, %v2697
      %v2704 = vand.u32 2147483647, %v2697
      %vm2705 = vcmp.lt.f32.partialorder %v2704, 0.0004427343
      %v2706 = vsel %vm2705, %v2703, %v2700
      %v2707 = vsel %vm2694, %v2693, %v2706
      %v2709 = vrot.slane %v2707, 1
      %v2710 = vrot.slane %v2707, 2
      %v2711 = vrot.slane %v2707, 3
      %v2712 = vrot.slane %v2707, 4
      %v2713 = vrot.slane %v2707, 5
      %v2714 = vrot.slane %v2707, 6
      %v2715 = vrot.slane %v2707, 7
      %v2716 = vperm.slane %v2707, 0
      %v2717 = vperm.slane %v2709, 0
      %v2718 = vperm.slane %v2710, 0
      %v2719 = vperm.slane %v2711, 0
      %v2720 = vperm.slane %v2712, 0
      %v2721 = vperm.slane %v2713, 0
      %v2722 = vperm.slane %v2714, 0
      %v2723 = vperm.slane %v2715, 0
      %v2732 = vmul.f32 %v2716, %v438
      %v2733 = vmul.f32 %v2716, %v439
      %v2734 = vmul.f32 %v2717, %v438
      %v2735 = vmul.f32 %v2717, %v439
      %v2736 = vmul.f32 %v2718, %v438
      %v2737 = vmul.f32 %v2718, %v439
      %v2738 = vmul.f32 %v2719, %v438
      %v2739 = vmul.f32 %v2719, %v439
      %v2740 = vmul.f32 %v2720, %v438
      %v2741 = vmul.f32 %v2720, %v439
      %v2742 = vmul.f32 %v2721, %v438
      %v2743 = vmul.f32 %v2721, %v439
      %v2744 = vmul.f32 %v2722, %v438
      %v2745 = vmul.f32 %v2722, %v439
      %v2746 = vmul.f32 %v2723, %v438
      %v2747 = vmul.f32 %v2723, %v439
      %v2748 = vmul.f32 %v2732, 1.442695
      %v2749 = vpow.pop %v2748
      %v2750 = vmul.f32 %v2733, 1.442695
      %v2751 = vpow.pop %v2750
      %v2752 = vmul.f32 %v2734, 1.442695
      %v2753 = vpow.pop %v2752
      %v2754 = vmul.f32 %v2735, 1.442695
      %v2755 = vpow.pop %v2754
      %v2756 = vmul.f32 %v2736, 1.442695
      %v2757 = vpow.pop %v2756
      %v2758 = vmul.f32 %v2737, 1.442695
      %v2759 = vpow.pop %v2758
      %v2760 = vmul.f32 %v2738, 1.442695
      %v2761 = vpow.pop %v2760
      %v2762 = vmul.f32 %v2739, 1.442695
      %v2763 = vpow.pop %v2762
      %v2764 = vmul.f32 %v2740, 1.442695
      %v2765 = vpow.pop %v2764
      %v2766 = vmul.f32 %v2741, 1.442695
      %v2767 = vpow.pop %v2766
      %v2768 = vmul.f32 %v2742, 1.442695
      %v2769 = vpow.pop %v2768
      %v2770 = vmul.f32 %v2743, 1.442695
      %v2771 = vpow.pop %v2770
      %v2772 = vmul.f32 %v2744, 1.442695
      %v2773 = vpow.pop %v2772
      %v2774 = vmul.f32 %v2745, 1.442695
      %v2775 = vpow.pop %v2774
      %v2776 = vmul.f32 %v2746, 1.442695
      %v2777 = vpow.pop %v2776
      %v2778 = vmul.f32 %v2747, 1.442695
      %v2779 = vpow.pop %v2778
      %v2780 = vmul.f32 %v2707, %v2625
      %v2782 = vrot.slane %v2780, 1
      %v2783 = vrot.slane %v2780, 2
      %v2784 = vrot.slane %v2780, 3
      %v2785 = vrot.slane %v2780, 4
      %v2786 = vrot.slane %v2780, 5
      %v2787 = vrot.slane %v2780, 6
      %v2788 = vrot.slane %v2780, 7
      %v2789 = vperm.slane %v2780, 0
      %v2790 = vperm.slane %v2782, 0
      %v2791 = vperm.slane %v2783, 0
      %v2792 = vperm.slane %v2784, 0
      %v2793 = vperm.slane %v2785, 0
      %v2794 = vperm.slane %v2786, 0
      %v2795 = vperm.slane %v2787, 0
      %v2796 = vperm.slane %v2788, 0
      %v2805 = vmul.f32 %v2789, %v2644
      %v2806 = vmul.f32 %v2789, %v2645
      %v2807 = vmul.f32 %v2790, %v2646
      %v2808 = vmul.f32 %v2790, %v2647
      %v2809 = vmul.f32 %v2791, %v2648
      %v2810 = vmul.f32 %v2791, %v2649
      %v2811 = vmul.f32 %v2792, %v2650
      %v2812 = vmul.f32 %v2792, %v2651
      %v2813 = vmul.f32 %v2793, %v2652
      %v2814 = vmul.f32 %v2793, %v2653
      %v2815 = vmul.f32 %v2794, %v2654
      %v2816 = vmul.f32 %v2794, %v2655
      %v2817 = vmul.f32 %v2795, %v2656
      %v2818 = vmul.f32 %v2795, %v2657
      %v2819 = vmul.f32 %v2796, %v2658
      %v2820 = vmul.f32 %v2796, %v2659
      %v2821 = vmul.f32 %v642, %v2625
      %v2822 = vmul.f32 %v2749, %v2605
      %v2823 = vmul.f32 %v2751, %v2606
      %v2824 = vadd.f32 %v2822, %v2805
      %v2825 = vadd.f32 %v2823, %v2806
      %v2826 = vmul.f32 %v2824, %v2677
      %v2827 = vmul.f32 %v2825, %v2678
      %v2828 = vadd.f32 %v2826, %v2827
      %v2829 = vrot.slane %v2828, 4
      %v2830 = vadd.f32 %v2828, %v2829
      %v2831 = vrot.slane %v2830, 2
      %v2832 = vadd.f32 %v2830, %v2831
      %v2833 = vrot.slane %v2832, 1
      %v2834 = vadd.f32 %v2832, %v2833
      %v2835 = vmul.f32 %v2753, %v2824
      %v2836 = vmul.f32 %v2755, %v2825
      %v2837 = vadd.f32 %v2835, %v2807
      %v2838 = vadd.f32 %v2836, %v2808
      %v2839 = vmul.f32 %v2837, %v2679
      %v2840 = vmul.f32 %v2838, %v2680
      %v2841 = vadd.f32 %v2839, %v2840
      %v2842 = vrot.slane %v2841, 4
      %v2843 = vadd.f32 %v2841, %v2842
      %v2844 = vrot.slane %v2843, 2
      %v2845 = vadd.f32 %v2843, %v2844
      %v2846 = vrot.slane %v2845, 1
      %v2847 = vadd.f32 %v2845, %v2846
      %v2848 = vmul.f32 %v2757, %v2837
      %v2849 = vmul.f32 %v2759, %v2838
      %v2850 = vadd.f32 %v2848, %v2809
      %v2851 = vadd.f32 %v2849, %v2810
      %v2852 = vmul.f32 %v2850, %v2681
      %v2853 = vmul.f32 %v2851, %v2682
      %v2854 = vadd.f32 %v2852, %v2853
      %v2855 = vrot.slane %v2854, 4
      %v2856 = vadd.f32 %v2854, %v2855
      %v2857 = vrot.slane %v2856, 2
      %v2858 = vadd.f32 %v2856, %v2857
      %v2859 = vrot.slane %v2858, 1
      %v2860 = vadd.f32 %v2858, %v2859
      %v2861 = vmul.f32 %v2761, %v2850
      %v2862 = vmul.f32 %v2763, %v2851
      %v2863 = vadd.f32 %v2861, %v2811
      %v2864 = vadd.f32 %v2862, %v2812
      %v2865 = vmul.f32 %v2863, %v2683
      %v2866 = vmul.f32 %v2864, %v2684
      %v2867 = vadd.f32 %v2865, %v2866
      %v2868 = vrot.slane %v2867, 4
      %v2869 = vadd.f32 %v2867, %v2868
      %v2870 = vrot.slane %v2869, 2
      %v2871 = vadd.f32 %v2869, %v2870
      %v2872 = vrot.slane %v2871, 1
      %v2873 = vadd.f32 %v2871, %v2872
      %v2874 = vmul.f32 %v2765, %v2863
      %v2875 = vmul.f32 %v2767, %v2864
      %v2876 = vadd.f32 %v2874, %v2813
      %v2877 = vadd.f32 %v2875, %v2814
      %v2878 = vmul.f32 %v2876, %v2685
      %v2879 = vmul.f32 %v2877, %v2686
      %v2880 = vadd.f32 %v2878, %v2879
      %v2881 = vrot.slane %v2880, 4
      %v2882 = vadd.f32 %v2880, %v2881
      %v2883 = vrot.slane %v2882, 2
      %v2884 = vadd.f32 %v2882, %v2883
      %v2885 = vrot.slane %v2884, 1
      %v2886 = vadd.f32 %v2884, %v2885
      %v2887 = vmul.f32 %v2769, %v2876
      %v2888 = vmul.f32 %v2771, %v2877
      %v2889 = vadd.f32 %v2887, %v2815
      %v2890 = vadd.f32 %v2888, %v2816
      %v2891 = vmul.f32 %v2889, %v2687
      %v2892 = vmul.f32 %v2890, %v2688
      %v2893 = vadd.f32 %v2891, %v2892
      %v2894 = vrot.slane %v2893, 4
      %v2895 = vadd.f32 %v2893, %v2894
      %v2896 = vrot.slane %v2895, 2
      %v2897 = vadd.f32 %v2895, %v2896
      %v2898 = vrot.slane %v2897, 1
      %v2899 = vadd.f32 %v2897, %v2898
      %v2900 = vmul.f32 %v2773, %v2889
      %v2901 = vmul.f32 %v2775, %v2890
      %v2902 = vadd.f32 %v2900, %v2817
      %v2903 = vadd.f32 %v2901, %v2818
      %v2904 = vmul.f32 %v2902, %v2689
      %v2905 = vmul.f32 %v2903, %v2690
      %v2906 = vadd.f32 %v2904, %v2905
      %v2907 = vrot.slane %v2906, 4
      %v2908 = vadd.f32 %v2906, %v2907
      %v2909 = vrot.slane %v2908, 2
      %v2910 = vadd.f32 %v2908, %v2909
      %v2911 = vrot.slane %v2910, 1
      %v2912 = vadd.f32 %v2910, %v2911
      %v2913 = vmul.f32 %v2777, %v2902
      %v2914 = vmul.f32 %v2779, %v2903
      %v2915 = vadd.f32 %v2913, %v2819
      %v2916 = vadd.f32 %v2914, %v2820
      %v2917 = vmul.f32 %v2915, %v2691
      %v2918 = vmul.f32 %v2916, %v2692
      %v2919 = vadd.f32 %v2917, %v2918
      %v2920 = vrot.slane %v2919, 4
      %v2921 = vadd.f32 %v2919, %v2920
      %v2922 = vrot.slane %v2921, 2
      %v2923 = vadd.f32 %v2921, %v2922
      %v2924 = vrot.slane %v2923, 1
      %v2925 = vadd.f32 %v2923, %v2924
      %v2926 = vsel %vm749, %v2834, %v2847
      %v2927 = vsel %vm751, %v2926, %v2860
      %v2928 = vsel %vm753, %v2927, %v2873
      %v2929 = vsel %vm755, %v2928, %v2886
      %v2930 = vsel %vm757, %v2929, %v2899
      %v2931 = vsel %vm759, %v2930, %v2912
      %v2932 = vsel %vm761, %v2931, %v2925
      %v2933 = vadd.f32 %v2932, %v2821
      %2934 = vst [vmem:[%s430 + $0x38] sm:$0xff] %v2933
      %2935 = vst [vmem:[#allocation2] sm:$0xff] %v2915
      %2936 = vst [vmem:[#allocation2 + $0x8] sm:$0xff] %v2916
      %s2937 = smul.u32 8, %s23
      %p2938 = scmp.lt.s32.totalorder %s22, 3
      %s2939 = scalar_select %p2938, %s22, 3
      %p2940 = scmp.lt.s32.totalorder %s2937, 7
      %s2941 = scalar_select %p2940, %s2937, 7
      %s2942 = smul.addr %s2939, 8
      %s2943 = sadd.s32 %s2941, %s2942
      %s2944 = smul.addr %s2943, 8
      %s2945 = scalar_lea.vmem %s7, %s2944
      // Predicated region
      $region53: #{_lambda_.9} parent=47 // pred_check
        %p2946 = pneg %p225
      $region54: #{_lambda_.9} parent=47 // pred_check_branch
        %2948 = sbr.rel (%p2946) target = $region56
      $region55: #{_lambda_.9} parent=47 // pred_region
        %s2949 = smul.u32 8, %s23
      $region56: #{_lambda_.9} parent=47 // pred_fallthru
        _
    $region48: #{_lambda_.9} parent=5 // pred_fallthru
      _
    %p2950 = scmp.le.s32.totalorder 2, %s13
    // Predicated region
    $region57: #{_lambda_.9} parent=5 // pred_check
      %p2951 = pneg %p2950
    $region58: #{_lambda_.9} parent=5 // pred_check_branch
      %2953 = sbr.rel (%p2951) target = $region60
    $region59: #{_lambda_.9} parent=5 // pred_region
      %s2954 = ssub.s32 %s13, 2
      // Predicated region
      $region61: #{_lambda_.9} parent=59 // pred_check
        %p2955 = pneg %p231
      $region62: #{_lambda_.9} parent=59 // pred_check_branch
        %2957 = sbr.rel (%p2955) target = $region64
      $region63: #{_lambda_.9} parent=59 // pred_region
        %s2958 = smul.u32 8, %s25
        %p2959 = scmp.lt.s32.totalorder %s24, 3
        %s2960 = scalar_select %p2959, %s24, 3
        %p2961 = scmp.lt.s32.totalorder %s2958, 7
        %s2962 = scalar_select %p2961, %s2958, 7
        %s2963 = smul.addr %s2960, 8
        %s2964 = sadd.s32 %s2962, %s2963
        %s2965 = smul.addr %s2964, 8
        %s2966 = scalar_lea.vmem %s7, %s2965
      $region64: #{_lambda_.9} parent=59 // pred_fallthru
        _
    $region60: #{_lambda_.9} parent=5 // pred_fallthru
      _
  $region6: #{_lambda_.9} parent=0 // loop_footer
    %s17 = sadd.s32 1, %s13
  $region7: #{_lambda_.9} parent=0 // loop_footer_branch
    %12 = sbr.rel target = $region3
  $region8: #{_lambda_.9} parent=0 // loop_exit
    _

// kernel: _lambda_.11
$region0: #{_lambda_.11}
  #allocation0 [shape = 'u32[]', space=smem, size = 0x4, offset = 0x4, fixed_abs, tag = 'smem constant byte address 0x4 - core index']
  #allocation1 [shape = 'u32[72,128]{1,0:T(1,128)}', space=vmem, size = 0x9000, scoped, tag = 'internal scratch']
  #allocation2 [shape = 'f32[1]{0:T(128)S(6)}', space=smem, size = 0x200, scoped, tag = 'scoped memory for _lambda_.11']
  %s0 = inlined_call_operand.<no memory space> [shape: f32[1], index: 0, kind: input, shape index: {}]
  %s1 = inlined_call_operand.vmem [shape: f32[128,32], index: 1, kind: input, shape index: {}]
  %s2 = inlined_call_operand.vmem [shape: f32[128,32], index: 2, kind: input, shape index: {}]
  %s3 = inlined_call_operand.vmem [shape: f32[1,32], index: 3, kind: input, shape index: {}]
  %s4 = inlined_call_operand.vmem [shape: f32[1,32], index: 4, kind: input, shape index: {}, may-alias: {4,6}]
  %s5 = inlined_call_operand.vmem [shape: bf16[32,32], index: 5, kind: input, shape index: {}]
  %s6 = inlined_call_operand.vmem [shape: f32[1,32], index: 6, kind: input, shape index: {}, may-alias: {4,6}]
  %s7 = inlined_call_operand.hbm [shape: f32[128,32], index: 7, kind: output, shape index: {}]
  %s8 = sld [smem:[#allocation0]]
  $region38: #{_lambda_.11} parent=0
    _
  %s10 = ssub.s32 1, %s8
  %s11 = scalar_select 0, %s10, %s8
  %12 = sst [smem:[#allocation2]] %s0
  $region1: #{_lambda_.11} parent=0
    #allocation3 [shape = 'u8[65536]{0}', space=vmem, size = 0x10000, scoped, tag = 'output window, operand 0, single buffered']
    #allocation4 [shape = 's32[1]{0}', space=sflag, size = 0x4, scoped, tag = 'scoped memory for _lambda_.11']
    %13 = vsyncpa [#allocation4], 0
    // Predicated region
    $region2: #{_lambda_.11} parent=1 // pred_check
      _
    $region3: #{_lambda_.11} parent=1 // pred_check_branch
      %15 = sbr.rel (0) target = $region5
    $region4: #{_lambda_.11} parent=1 // pred_region
      _
    $region5: #{_lambda_.11} parent=1 // pred_fallthru
      _
    // Predicated region
    $region6: #{_lambda_.11} parent=1 // pred_check
      _
    $region7: #{_lambda_.11} parent=1 // pred_check_branch
      %17 = sbr.rel (0) target = $region9
    $region8: #{_lambda_.11} parent=1 // pred_region
      _
    $region9: #{_lambda_.11} parent=1 // pred_fallthru
      _
    // Predicated region
    $region10: #{_lambda_.11} parent=1 // pred_check
      _
    $region11: #{_lambda_.11} parent=1 // pred_check_branch
      %19 = sbr.rel (0) target = $region13
    $region12: #{_lambda_.11} parent=1 // pred_region
      _
    $region13: #{_lambda_.11} parent=1 // pred_fallthru
      _
    // Predicated region
    $region14: #{_lambda_.11} parent=1 // pred_check
      _
    $region15: #{_lambda_.11} parent=1 // pred_check_branch
      %21 = sbr.rel (0) target = $region17
    $region16: #{_lambda_.11} parent=1 // pred_region
      _
    $region17: #{_lambda_.11} parent=1 // pred_fallthru
      _
    // Predicated region
    $region18: #{_lambda_.11} parent=1 // pred_check
      _
    $region19: #{_lambda_.11} parent=1 // pred_check_branch
      %23 = sbr.rel (0) target = $region21
    $region20: #{_lambda_.11} parent=1 // pred_region
      _
    $region21: #{_lambda_.11} parent=1 // pred_fallthru
      _
    // Predicated region
    $region22: #{_lambda_.11} parent=1 // pred_check
      _
    $region23: #{_lambda_.11} parent=1 // pred_check_branch
      %25 = sbr.rel (0) target = $region25
    $region24: #{_lambda_.11} parent=1 // pred_region
      _
    $region25: #{_lambda_.11} parent=1 // pred_fallthru
      _
    // Predicated region
    $region26: #{_lambda_.11} parent=1 // pred_check
      _
    $region27: #{_lambda_.11} parent=1 // pred_check_branch
      %27 = sbr.rel (0) target = $region29
    $region28: #{_lambda_.11} parent=1 // pred_region
      _
    $region29: #{_lambda_.11} parent=1 // pred_fallthru
      _
    %v29 = vld [vmem:[%s1] sm:$0xff]
    %v30 = vld [vmem:[%s1 + $0x8] sm:$0xff]
    %v31 = vld [vmem:[%s1 + $0x10] sm:$0xff]
    %v32 = vld [vmem:[%s1 + $0x18] sm:$0xff]
    %v33 = vld [vmem:[%s1 + $0x20] sm:$0xff]
    %v34 = vld [vmem:[%s1 + $0x28] sm:$0xff]
    %v35 = vld [vmem:[%s1 + $0x30] sm:$0xff]
    %v36 = vld [vmem:[%s1 + $0x38] sm:$0xff]
    %v37 = vld [vmem:[%s1 + $0x40] sm:$0xff]
    %v38 = vld [vmem:[%s1 + $0x48] sm:$0xff]
    %v39 = vld [vmem:[%s1 + $0x50] sm:$0xff]
    %v40 = vld [vmem:[%s1 + $0x58] sm:$0xff]
    %v41 = vld [vmem:[%s1 + $0x60] sm:$0xff]
    %v42 = vld [vmem:[%s1 + $0x68] sm:$0xff]
    %v43 = vld [vmem:[%s1 + $0x70] sm:$0xff]
    %v44 = vld [vmem:[%s1 + $0x78] sm:$0xff]
    %s45 = sld [smem:[#allocation2]]
    %v46 = vld [vmem:[%s2] sm:$0xff]
    %v47 = vld [vmem:[%s2 + $0x8] sm:$0xff]
    %v48 = vld [vmem:[%s2 + $0x10] sm:$0xff]
    %v49 = vld [vmem:[%s2 + $0x18] sm:$0xff]
    %v50 = vld [vmem:[%s2 + $0x20] sm:$0xff]
    %v51 = vld [vmem:[%s2 + $0x28] sm:$0xff]
    %v52 = vld [vmem:[%s2 + $0x30] sm:$0xff]
    %v53 = vld [vmem:[%s2 + $0x38] sm:$0xff]
    %v54 = vld [vmem:[%s2 + $0x40] sm:$0xff]
    %v55 = vld [vmem:[%s2 + $0x48] sm:$0xff]
    %v56 = vld [vmem:[%s2 + $0x50] sm:$0xff]
    %v57 = vld [vmem:[%s2 + $0x58] sm:$0xff]
    %v58 = vld [vmem:[%s2 + $0x60] sm:$0xff]
    %v59 = vld [vmem:[%s2 + $0x68] sm:$0xff]
    %v60 = vld [vmem:[%s2 + $0x70] sm:$0xff]
    %v61 = vld [vmem:[%s2 + $0x78] sm:$0xff]
    %v62 = vstv %s45
    %v63 = vmul.f32 %v62, %v46
    %v64 = vmul.f32 %v62, %v47
    %v65 = vmul.f32 %v62, %v48
    %v66 = vmul.f32 %v62, %v49
    %v67 = vmul.f32 %v62, %v50
    %v68 = vmul.f32 %v62, %v51
    %v69 = vmul.f32 %v62, %v52
    %v70 = vmul.f32 %v62, %v53
    %v71 = vmul.f32 %v62, %v54
    %v72 = vmul.f32 %v62, %v55
    %v73 = vmul.f32 %v62, %v56
    %v74 = vmul.f32 %v62, %v57
    %v75 = vmul.f32 %v62, %v58
    %v76 = vmul.f32 %v62, %v59
    %v77 = vmul.f32 %v62, %v60
    %v78 = vmul.f32 %v62, %v61
    %v79 = vadd.f32 %v29, %v63
    %v80 = vadd.f32 %v30, %v64
    %v81 = vadd.f32 %v31, %v65
    %v82 = vadd.f32 %v32, %v66
    %v83 = vadd.f32 %v33, %v67
    %v84 = vadd.f32 %v34, %v68
    %v85 = vadd.f32 %v35, %v69
    %v86 = vadd.f32 %v36, %v70
    %v87 = vadd.f32 %v37, %v71
    %v88 = vadd.f32 %v38, %v72
    %v89 = vadd.f32 %v39, %v73
    %v90 = vadd.f32 %v40, %v74
    %v91 = vadd.f32 %v41, %v75
    %v92 = vadd.f32 %v42, %v76
    %v93 = vadd.f32 %v43, %v77
    %v94 = vadd.f32 %v44, %v78
    %v95 = vld [vmem:[%s3] sm:$0x1]
    %v96 = vld [vmem:[%s4] sm:$0x1]
    %vm97 = vcmask 261120
    %v98 = vsel %vm97, %v79, 0.0
    %99 = vadd.xlane.f32.xlu0 %v98
    %v100 = vpop.xlane.xlu0 %99
    %v101 = vsel %vm97, %v80, 0.0
    %102 = vadd.xlane.f32.xlu0 %v101
    %v103 = vpop.xlane.xlu0 %102
    %v104 = vsel %vm97, %v81, 0.0
    %105 = vadd.xlane.f32.xlu0 %v104
    %v106 = vpop.xlane.xlu0 %105
    %v107 = vsel %vm97, %v82, 0.0
    %108 = vadd.xlane.f32.xlu0 %v107
    %v109 = vpop.xlane.xlu0 %108
    %v110 = vsel %vm97, %v83, 0.0
    %111 = vadd.xlane.f32.xlu0 %v110
    %v112 = vpop.xlane.xlu0 %111
    %v113 = vsel %vm97, %v84, 0.0
    %114 = vadd.xlane.f32.xlu0 %v113
    %v115 = vpop.xlane.xlu0 %114
    %v116 = vsel %vm97, %v85, 0.0
    %117 = vadd.xlane.f32.xlu0 %v116
    %v118 = vpop.xlane.xlu0 %117
    %v119 = vsel %vm97, %v86, 0.0
    %120 = vadd.xlane.f32.xlu0 %v119
    %v121 = vpop.xlane.xlu0 %120
    %v122 = vsel %vm97, %v87, 0.0
    %123 = vadd.xlane.f32.xlu0 %v122
    %v124 = vpop.xlane.xlu0 %123
    %v125 = vsel %vm97, %v88, 0.0
    %126 = vadd.xlane.f32.xlu0 %v125
    %v127 = vpop.xlane.xlu0 %126
    %v128 = vsel %vm97, %v89, 0.0
    %129 = vadd.xlane.f32.xlu0 %v128
    %v130 = vpop.xlane.xlu0 %129
    %v131 = vsel %vm97, %v90, 0.0
    %132 = vadd.xlane.f32.xlu0 %v131
    %v133 = vpop.xlane.xlu0 %132
    %v134 = vsel %vm97, %v91, 0.0
    %135 = vadd.xlane.f32.xlu0 %v134
    %v136 = vpop.xlane.xlu0 %135
    %v137 = vsel %vm97, %v92, 0.0
    %138 = vadd.xlane.f32.xlu0 %v137
    %v139 = vpop.xlane.xlu0 %138
    %v140 = vsel %vm97, %v93, 0.0
    %141 = vadd.xlane.f32.xlu0 %v140
    %v142 = vpop.xlane.xlu0 %141
    %v143 = vsel %vm97, %v94, 0.0
    %144 = vadd.xlane.f32.xlu0 %v143
    %v145 = vpop.xlane.xlu0 %144
    %v146 = vrcp.pop 32.0
    %v147 = vmul.f32 32.0, %v146
    %v148 = vsub.f32 1.0, %v147
    %v149 = vmul.f32 %v146, %v148
    %v150 = vadd.f32 %v146, %v149
    %vm151 = vweird.f32 %v146
    %v152 = vsel %vm151, %v146, %v150
    %v153 = vmul.f32 %v100, %v152
    %v154 = vmul.f32 %v103, %v152
    %v155 = vmul.f32 %v106, %v152
    %v156 = vmul.f32 %v109, %v152
    %v157 = vmul.f32 %v112, %v152
    %v158 = vmul.f32 %v115, %v152
    %v159 = vmul.f32 %v118, %v152
    %v160 = vmul.f32 %v121, %v152
    %v161 = vmul.f32 %v124, %v152
    %v162 = vmul.f32 %v127, %v152
    %v163 = vmul.f32 %v130, %v152
    %v164 = vmul.f32 %v133, %v152
    %v165 = vmul.f32 %v136, %v152
    %v166 = vmul.f32 %v139, %v152
    %v167 = vmul.f32 %v142, %v152
    %v168 = vmul.f32 %v145, %v152
    %v169 = vsub.f32 %v79, %v153
    %v170 = vsub.f32 %v80, %v154
    %v171 = vsub.f32 %v81, %v155
    %v172 = vsub.f32 %v82, %v156
    %v173 = vsub.f32 %v83, %v157
    %v174 = vsub.f32 %v84, %v158
    %v175 = vsub.f32 %v85, %v159
    %v176 = vsub.f32 %v86, %v160
    %v177 = vsub.f32 %v87, %v161
    %v178 = vsub.f32 %v88, %v162
    %v179 = vsub.f32 %v89, %v163
    %v180 = vsub.f32 %v90, %v164
    %v181 = vsub.f32 %v91, %v165
    %v182 = vsub.f32 %v92, %v166
    %v183 = vsub.f32 %v93, %v167
    %v184 = vsub.f32 %v94, %v168
    %v185 = vmul.f32 %v169, %v169
    %v186 = vmul.f32 %v170, %v170
    %v187 = vmul.f32 %v171, %v171
    %v188 = vmul.f32 %v172, %v172
    %v189 = vmul.f32 %v173, %v173
    %v190 = vmul.f32 %v174, %v174
    %v191 = vmul.f32 %v175, %v175
    %v192 = vmul.f32 %v176, %v176
    %v193 = vmul.f32 %v177, %v177
    %v194 = vmul.f32 %v178, %v178
    %v195 = vmul.f32 %v179, %v179
    %v196 = vmul.f32 %v180, %v180
    %v197 = vmul.f32 %v181, %v181
    %v198 = vmul.f32 %v182, %v182
    %v199 = vmul.f32 %v183, %v183
    %v200 = vmul.f32 %v184, %v184
    %v201 = vsel %vm97, %v185, 0.0
    %202 = vadd.xlane.f32.xlu0 %v201
    %v203 = vpop.xlane.xlu0 %202
    %v204 = vsel %vm97, %v186, 0.0
    %205 = vadd.xlane.f32.xlu0 %v204
    %v206 = vpop.xlane.xlu0 %205
    %v207 = vsel %vm97, %v187, 0.0
    %208 = vadd.xlane.f32.xlu0 %v207
    %v209 = vpop.xlane.xlu0 %208
    %v210 = vsel %vm97, %v188, 0.0
    %211 = vadd.xlane.f32.xlu0 %v210
    %v212 = vpop.xlane.xlu0 %211
    %v213 = vsel %vm97, %v189, 0.0
    %214 = vadd.xlane.f32.xlu0 %v213
    %v215 = vpop.xlane.xlu0 %214
    %v216 = vsel %vm97, %v190, 0.0
    %217 = vadd.xlane.f32.xlu0 %v216
    %v218 = vpop.xlane.xlu0 %217
    %v219 = vsel %vm97, %v191, 0.0
    %220 = vadd.xlane.f32.xlu0 %v219
    %v221 = vpop.xlane.xlu0 %220
    %v222 = vsel %vm97, %v192, 0.0
    %223 = vadd.xlane.f32.xlu0 %v222
    %v224 = vpop.xlane.xlu0 %223
    %v225 = vsel %vm97, %v193, 0.0
    %226 = vadd.xlane.f32.xlu0 %v225
    %v227 = vpop.xlane.xlu0 %226
    %v228 = vsel %vm97, %v194, 0.0
    %229 = vadd.xlane.f32.xlu0 %v228
    %v230 = vpop.xlane.xlu0 %229
    %v231 = vsel %vm97, %v195, 0.0
    %232 = vadd.xlane.f32.xlu0 %v231
    %v233 = vpop.xlane.xlu0 %232
    %v234 = vsel %vm97, %v196, 0.0
    %235 = vadd.xlane.f32.xlu0 %v234
    %v236 = vpop.xlane.xlu0 %235
    %v237 = vsel %vm97, %v197, 0.0
    %238 = vadd.xlane.f32.xlu0 %v237
    %v239 = vpop.xlane.xlu0 %238
    %v240 = vsel %vm97, %v198, 0.0
    %241 = vadd.xlane.f32.xlu0 %v240
    %v242 = vpop.xlane.xlu0 %241
    %v243 = vsel %vm97, %v199, 0.0
    %244 = vadd.xlane.f32.xlu0 %v243
    %v245 = vpop.xlane.xlu0 %244
    %v246 = vsel %vm97, %v200, 0.0
    %247 = vadd.xlane.f32.xlu0 %v246
    %v248 = vpop.xlane.xlu0 %247
    %v249 = vmul.f32 %v203, %v152
    %v250 = vmul.f32 %v206, %v152
    %v251 = vmul.f32 %v209, %v152
    %v252 = vmul.f32 %v212, %v152
    %v253 = vmul.f32 %v215, %v152
    %v254 = vmul.f32 %v218, %v152
    %v255 = vmul.f32 %v221, %v152
    %v256 = vmul.f32 %v224, %v152
    %v257 = vmul.f32 %v227, %v152
    %v258 = vmul.f32 %v230, %v152
    %v259 = vmul.f32 %v233, %v152
    %v260 = vmul.f32 %v236, %v152
    %v261 = vmul.f32 %v239, %v152
    %v262 = vmul.f32 %v242, %v152
    %v263 = vmul.f32 %v245, %v152
    %v264 = vmul.f32 %v248, %v152
    %v265 = vadd.f32 %v249, 1e-05
    %v266 = vadd.f32 %v250, 1e-05
    %v267 = vadd.f32 %v251, 1e-05
    %v268 = vadd.f32 %v252, 1e-05
    %v269 = vadd.f32 %v253, 1e-05
    %v270 = vadd.f32 %v254, 1e-05
    %v271 = vadd.f32 %v255, 1e-05
    %v272 = vadd.f32 %v256, 1e-05
    %v273 = vadd.f32 %v257, 1e-05
    %v274 = vadd.f32 %v258, 1e-05
    %v275 = vadd.f32 %v259, 1e-05
    %v276 = vadd.f32 %v260, 1e-05
    %v277 = vadd.f32 %v261, 1e-05
    %v278 = vadd.f32 %v262, 1e-05
    %v279 = vadd.f32 %v263, 1e-05
    %v280 = vadd.f32 %v264, 1e-05
    %v281 = vrsqrt.pop %v265
    %v282 = vmul.f32 %v281, %v265
    %v283 = vmul.f32 %v282, %v281
    %v284 = vmul.f32 0.5, %v283
    %v285 = vsub.f32 1.5, %v284
    %v286 = vmul.f32 %v281, %v285
    %vm287 = vweird.f32 %v265
    %vm288 = vweird.f32 %v281
    %vm289 = vmor %vm287, %vm288
    %v290 = vsel %vm289, %v281, %v286
    %v291 = vrsqrt.pop %v266
    %v292 = vmul.f32 %v291, %v266
    %v293 = vmul.f32 %v292, %v291
    %v294 = vmul.f32 0.5, %v293
    %v295 = vsub.f32 1.5, %v294
    %v296 = vmul.f32 %v291, %v295
    %vm297 = vweird.f32 %v266
    %vm298 = vweird.f32 %v291
    %vm299 = vmor %vm297, %vm298
    %v300 = vsel %vm299, %v291, %v296
    %v301 = vrsqrt.pop %v267
    %v302 = vmul.f32 %v301, %v267
    %v303 = vmul.f32 %v302, %v301
    %v304 = vmul.f32 0.5, %v303
    %v305 = vsub.f32 1.5, %v304
    %v306 = vmul.f32 %v301, %v305
    %vm307 = vweird.f32 %v267
    %vm308 = vweird.f32 %v301
    %vm309 = vmor %vm307, %vm308
    %v310 = vsel %vm309, %v301, %v306
    %v311 = vrsqrt.pop %v268
    %v312 = vmul.f32 %v311, %v268
    %v313 = vmul.f32 %v312, %v311
    %v314 = vmul.f32 0.5, %v313
    %v315 = vsub.f32 1.5, %v314
    %v316 = vmul.f32 %v311, %v315
    %vm317 = vweird.f32 %v268
    %vm318 = vweird.f32 %v311
    %vm319 = vmor %vm317, %vm318
    %v320 = vsel %vm319, %v311, %v316
    %v321 = vrsqrt.pop %v269
    %v322 = vmul.f32 %v321, %v269
    %v323 = vmul.f32 %v322, %v321
    %v324 = vmul.f32 0.5, %v323
    %v325 = vsub.f32 1.5, %v324
    %v326 = vmul.f32 %v321, %v325
    %vm327 = vweird.f32 %v269
    %vm328 = vweird.f32 %v321
    %vm329 = vmor %vm327, %vm328
    %v330 = vsel %vm329, %v321, %v326
    %v331 = vrsqrt.pop %v270
    %v332 = vmul.f32 %v331, %v270
    %v333 = vmul.f32 %v332, %v331
    %v334 = vmul.f32 0.5, %v333
    %v335 = vsub.f32 1.5, %v334
    %v336 = vmul.f32 %v331, %v335
    %vm337 = vweird.f32 %v270
    %vm338 = vweird.f32 %v331
    %vm339 = vmor %vm337, %vm338
    %v340 = vsel %vm339, %v331, %v336
    %v341 = vrsqrt.pop %v271
    %v342 = vmul.f32 %v341, %v271
    %v343 = vmul.f32 %v342, %v341
    %v344 = vmul.f32 0.5, %v343
    %v345 = vsub.f32 1.5, %v344
    %v346 = vmul.f32 %v341, %v345
    %vm347 = vweird.f32 %v271
    %vm348 = vweird.f32 %v341
    %vm349 = vmor %vm347, %vm348
    %v350 = vsel %vm349, %v341, %v346
    %v351 = vrsqrt.pop %v272
    %v352 = vmul.f32 %v351, %v272
    %v353 = vmul.f32 %v352, %v351
    %v354 = vmul.f32 0.5, %v353
    %v355 = vsub.f32 1.5, %v354
    %v356 = vmul.f32 %v351, %v355
    %vm357 = vweird.f32 %v272
    %vm358 = vweird.f32 %v351
    %vm359 = vmor %vm357, %vm358
    %v360 = vsel %vm359, %v351, %v356
    %v361 = vrsqrt.pop %v273
    %v362 = vmul.f32 %v361, %v273
    %v363 = vmul.f32 %v362, %v361
    %v364 = vmul.f32 0.5, %v363
    %v365 = vsub.f32 1.5, %v364
    %v366 = vmul.f32 %v361, %v365
    %vm367 = vweird.f32 %v273
    %vm368 = vweird.f32 %v361
    %vm369 = vmor %vm367, %vm368
    %v370 = vsel %vm369, %v361, %v366
    %v371 = vrsqrt.pop %v274
    %v372 = vmul.f32 %v371, %v274
    %v373 = vmul.f32 %v372, %v371
    %v374 = vmul.f32 0.5, %v373
    %v375 = vsub.f32 1.5, %v374
    %v376 = vmul.f32 %v371, %v375
    %vm377 = vweird.f32 %v274
    %vm378 = vweird.f32 %v371
    %vm379 = vmor %vm377, %vm378
    %v380 = vsel %vm379, %v371, %v376
    %v381 = vrsqrt.pop %v275
    %v382 = vmul.f32 %v381, %v275
    %v383 = vmul.f32 %v382, %v381
    %v384 = vmul.f32 0.5, %v383
    %v385 = vsub.f32 1.5, %v384
    %v386 = vmul.f32 %v381, %v385
    %vm387 = vweird.f32 %v275
    %vm388 = vweird.f32 %v381
    %vm389 = vmor %vm387, %vm388
    %v390 = vsel %vm389, %v381, %v386
    %v391 = vrsqrt.pop %v276
    %v392 = vmul.f32 %v391, %v276
    %v393 = vmul.f32 %v392, %v391
    %v394 = vmul.f32 0.5, %v393
    %v395 = vsub.f32 1.5, %v394
    %v396 = vmul.f32 %v391, %v395
    %vm397 = vweird.f32 %v276
    %vm398 = vweird.f32 %v391
    %vm399 = vmor %vm397, %vm398
    %v400 = vsel %vm399, %v391, %v396
    %v401 = vrsqrt.pop %v277
    %v402 = vmul.f32 %v401, %v277
    %v403 = vmul.f32 %v402, %v401
    %v404 = vmul.f32 0.5, %v403
    %v405 = vsub.f32 1.5, %v404
    %v406 = vmul.f32 %v401, %v405
    %vm407 = vweird.f32 %v277
    %vm408 = vweird.f32 %v401
    %vm409 = vmor %vm407, %vm408
    %v410 = vsel %vm409, %v401, %v406
    %v411 = vrsqrt.pop %v278
    %v412 = vmul.f32 %v411, %v278
    %v413 = vmul.f32 %v412, %v411
    %v414 = vmul.f32 0.5, %v413
    %v415 = vsub.f32 1.5, %v414
    %v416 = vmul.f32 %v411, %v415
    %vm417 = vweird.f32 %v278
    %vm418 = vweird.f32 %v411
    %vm419 = vmor %vm417, %vm418
    %v420 = vsel %vm419, %v411, %v416
    %v421 = vrsqrt.pop %v279
    %v422 = vmul.f32 %v421, %v279
    %v423 = vmul.f32 %v422, %v421
    %v424 = vmul.f32 0.5, %v423
    %v425 = vsub.f32 1.5, %v424
    %v426 = vmul.f32 %v421, %v425
    %vm427 = vweird.f32 %v279
    %vm428 = vweird.f32 %v421
    %vm429 = vmor %vm427, %vm428
    %v430 = vsel %vm429, %v421, %v426
    %v431 = vrsqrt.pop %v280
    %v432 = vmul.f32 %v431, %v280
    %v433 = vmul.f32 %v432, %v431
    %v434 = vmul.f32 0.5, %v433
    %v435 = vsub.f32 1.5, %v434
    %v436 = vmul.f32 %v431, %v435
    %vm437 = vweird.f32 %v280
    %vm438 = vweird.f32 %v431
    %vm439 = vmor %vm437, %vm438
    %v440 = vsel %vm439, %v431, %v436
    %v441 = vmul.f32 %v169, %v290
    %v442 = vmul.f32 %v170, %v300
    %v443 = vmul.f32 %v171, %v310
    %v444 = vmul.f32 %v172, %v320
    %v445 = vmul.f32 %v173, %v330
    %v446 = vmul.f32 %v174, %v340
    %v447 = vmul.f32 %v175, %v350
    %v448 = vmul.f32 %v176, %v360
    %v449 = vmul.f32 %v177, %v370
    %v450 = vmul.f32 %v178, %v380
    %v451 = vmul.f32 %v179, %v390
    %v452 = vmul.f32 %v180, %v400
    %v453 = vmul.f32 %v181, %v410
    %v454 = vmul.f32 %v182, %v420
    %v455 = vmul.f32 %v183, %v430
    %v456 = vmul.f32 %v184, %v440
    %v458 = vperm.slane %v95, 0
    %v460 = vmul.f32 %v441, %v458
    %v461 = vmul.f32 %v442, %v458
    %v462 = vmul.f32 %v443, %v458
    %v463 = vmul.f32 %v444, %v458
    %v464 = vmul.f32 %v445, %v458
    %v465 = vmul.f32 %v446, %v458
    %v466 = vmul.f32 %v447, %v458
    %v467 = vmul.f32 %v448, %v458
    %v468 = vmul.f32 %v449, %v458
    %v469 = vmul.f32 %v450, %v458
    %v470 = vmul.f32 %v451, %v458
    %v471 = vmul.f32 %v452, %v458
    %v472 = vmul.f32 %v453, %v458
    %v473 = vmul.f32 %v454, %v458
    %v474 = vmul.f32 %v455, %v458
    %v475 = vmul.f32 %v456, %v458
    %v477 = vperm.slane %v96, 0
    %v479 = vadd.f32 %v460, %v477
    %v480 = vadd.f32 %v461, %v477
    %v481 = vadd.f32 %v462, %v477
    %v482 = vadd.f32 %v463, %v477
    %v483 = vadd.f32 %v464, %v477
    %v484 = vadd.f32 %v465, %v477
    %v485 = vadd.f32 %v466, %v477
    %v486 = vadd.f32 %v467, %v477
    %v487 = vadd.f32 %v468, %v477
    %v488 = vadd.f32 %v469, %v477
    %v489 = vadd.f32 %v470, %v477
    %v490 = vadd.f32 %v471, %v477
    %v491 = vadd.f32 %v472, %v477
    %v492 = vadd.f32 %v473, %v477
    %v493 = vadd.f32 %v474, %v477
    %v494 = vadd.f32 %v475, %v477
    %v495 = vpack.c.bf16 %v480, %v479
    %v496 = vpack.c.bf16 %v482, %v481
    %v497 = vpack.c.bf16 %v484, %v483
    %v498 = vpack.c.bf16 %v486, %v485
    %v499 = vpack.c.bf16 %v488, %v487
    %v500 = vpack.c.bf16 %v490, %v489
    %v501 = vpack.c.bf16 %v492, %v491
    %v502 = vpack.c.bf16 %v494, %v493
    %v503 = vld [vmem:[%s5] sm:$0xf]
    %v504 = vld [vmem:[%s5 + $0x4] sm:$0xf]
    %v505 = vld [vmem:[%s5 + $0x8] sm:$0xf]
    %v506 = vld [vmem:[%s5 + $0xc] sm:$0xf]
    %v507 = vld [vmem:[%s6] sm:$0x1]
    %v509 = vperm.slane %v507, 0
    %v515 = vunpack.c.l.b16 %v503
    %v516 = vunpack.c.l.b16 %v504
    %v517 = vunpack.c.l.b16 %v505
    %v518 = vunpack.c.l.b16 %v506
    %v519 = vpack.c.b16 %v516, %v515
    %v520 = vpack.c.b16 %v518, %v517
    %v524 = vsel %vm97, %v495, 0
    %v527 = vsel %vm97, %v496, 0
    %v530 = vsel %vm97, %v497, 0
    %v533 = vsel %vm97, %v498, 0
    %v536 = vsel %vm97, %v499, 0
    %v539 = vsel %vm97, %v500, 0
    %v542 = vsel %vm97, %v501, 0
    %v545 = vsel %vm97, %v502, 0
    %547 = vmatpush.bf16.msra.mxu0 0
    %548 = vmatpush.bf16.msra.mxu0 0
    %549 = vmatpush.bf16.msra.mxu0 0
    %550 = vmatpush.bf16.msra.mxu0 0
    %551 = vmatpush.bf16.msra.mxu0 0
    %552 = vmatpush.bf16.msra.mxu0 0
    %553 = vmatpush.bf16.msra.mxu0 %v520
    %554 = vmatpush.bf16.msra.mxu0 %v519
    %555 = vmatmul.bf16.gmra.mxu0 %v524
    %v556 = vpop.f32.mrf.mxu0
    %v557 = vadd.f32 %v509, %v556
    %v558 = vpop.f32.mrf.mxu0
    %v559 = vadd.f32 %v509, %v558
    %560 = vmatmul.bf16.gmra.mxu0 %v527
    %v561 = vpop.f32.mrf.mxu0
    %v562 = vadd.f32 %v509, %v561
    %v563 = vpop.f32.mrf.mxu0
    %v564 = vadd.f32 %v509, %v563
    %565 = vmatmul.bf16.gmra.mxu0 %v530
    %v566 = vpop.f32.mrf.mxu0
    %v567 = vadd.f32 %v509, %v566
    %v568 = vpop.f32.mrf.mxu0
    %v569 = vadd.f32 %v509, %v568
    %570 = vmatmul.bf16.gmra.mxu0 %v533
    %v571 = vpop.f32.mrf.mxu0
    %v572 = vadd.f32 %v509, %v571
    %v573 = vpop.f32.mrf.mxu0
    %v574 = vadd.f32 %v509, %v573
    %575 = vmatmul.bf16.gmra.mxu0 %v536
    %v576 = vpop.f32.mrf.mxu0
    %v577 = vadd.f32 %v509, %v576
    %v578 = vpop.f32.mrf.mxu0
    %v579 = vadd.f32 %v509, %v578
    %580 = vmatmul.bf16.gmra.mxu0 %v539
    %v581 = vpop.f32.mrf.mxu0
    %v582 = vadd.f32 %v509, %v581
    %v583 = vpop.f32.mrf.mxu0
    %v584 = vadd.f32 %v509, %v583
    %585 = vmatmul.bf16.gmra.mxu0 %v542
    %v586 = vpop.f32.mrf.mxu0
    %v587 = vadd.f32 %v509, %v586
    %v588 = vpop.f32.mrf.mxu0
    %v589 = vadd.f32 %v509, %v588
    %590 = vmatmul.bf16.gmra.mxu0 %v545
    %v591 = vpop.f32.mrf.mxu0
    %v592 = vadd.f32 %v509, %v591
    %v593 = vpop.f32.mrf.mxu0
    %v594 = vadd.f32 %v509, %v593
    %595 = vdwg.mxu0
    %596 = vst.msk [vmem:[#allocation3] sm:$0xff] %vm97, %v557
    %597 = vst.msk [vmem:[#allocation3 + $0x8] sm:$0xff] %vm97, %v559
    %598 = vst.msk [vmem:[#allocation3 + $0x10] sm:$0xff] %vm97, %v562
    %599 = vst.msk [vmem:[#allocation3 + $0x18] sm:$0xff] %vm97, %v564
    %600 = vst.msk [vmem:[#allocation3 + $0x20] sm:$0xff] %vm97, %v567
    %601 = vst.msk [vmem:[#allocation3 + $0x28] sm:$0xff] %vm97, %v569
    %602 = vst.msk [vmem:[#allocation3 + $0x30] sm:$0xff] %vm97, %v572
    %603 = vst.msk [vmem:[#allocation3 + $0x38] sm:$0xff] %vm97, %v574
    %604 = vst.msk [vmem:[#allocation3 + $0x40] sm:$0xff] %vm97, %v577
    %605 = vst.msk [vmem:[#allocation3 + $0x48] sm:$0xff] %vm97, %v579
    %606 = vst.msk [vmem:[#allocation3 + $0x50] sm:$0xff] %vm97, %v582
    %607 = vst.msk [vmem:[#allocation3 + $0x58] sm:$0xff] %vm97, %v584
    %608 = vst.msk [vmem:[#allocation3 + $0x60] sm:$0xff] %vm97, %v587
    %609 = vst.msk [vmem:[#allocation3 + $0x68] sm:$0xff] %vm97, %v589
    %610 = vst.msk [vmem:[#allocation3 + $0x70] sm:$0xff] %vm97, %v592
    %611 = vst.msk [vmem:[#allocation3 + $0x78] sm:$0xff] %vm97, %v594
    // Predicated region
    $region30: #{_lambda_.11} parent=1 // pred_check
      _
    $region31: #{_lambda_.11} parent=1 // pred_check_branch
      %613 = sbr.rel (0) target = $region33
    $region32: #{_lambda_.11} parent=1 // pred_region
      %615 = vsyncadd [#allocation4], 0
      %s616 = sshll.u32 [#allocation3], 4
      %s617 = int_to_ptr.vmem [resolvable:$true] %s616
      %s618 = sshll.u32 %s7, 4
      %s619 = int_to_ptr.hbm [resolvable:$true] %s618
      %624 = dma.vmem_to_hbm [thread:$0]  %s617, 2048, %s619, [#allocation4], 128, 128, 8
    $region33: #{_lambda_.11} parent=1 // pred_fallthru
      _
    // Predicated region
    $region34: #{_lambda_.11} parent=1 // pred_check
      _
    $region35: #{_lambda_.11} parent=1 // pred_check_branch
      %626 = sbr.rel (0) target = $region37
    $region36: #{_lambda_.11} parent=1 // pred_region
      %628 = dma.done [#allocation4], 2048
    $region37: #{_lambda_.11} parent=1 // pred_fallthru
      _
    %629 = vsyncpa [#allocation4], 1

</llo_original>
